<compile_context>
chip_gen: v5e
topology: v5e:2x2
jax: 0.10.0
libtpu: 0.0.40
codegen_flags: <defaults>
</compile_context>

<pallas_src>
import functools
import math

import jax
import jax.numpy as jnp
import numpy as np
from jax.experimental import pallas as pl
from jax.experimental.pallas import tpu as pltpu

# ------------------------- small EdgeViT configuration ---------------------------------
IN_CHANNELS = 256          # EdgeViT.__init__ hardcodes in_channels = 256
STAGE_CHANNELS = 32        # channels=[32]
STAGE_HEADS = 2            # heads=[2]
STAGE_R = 2                # r=[2]   (sparse-attention sample ratio)
DS_R = 4                   # stage-0 ConvDownsampling ratio
NUM_CLASSES = 10
EPS = 1e-5
PAD0 = 8                   # aligned top border of the dwconv slab (multiple of 8 sublanes)


# =========================== the single fused Pallas kernel =============================
def _edgevit_kernel(patches_ref, ds_w, ds_gn_g, ds_gn_b, tap_mask,
                    cpe1_w, la_bn0_s, la_bn0_b, la_pw0_w, la_dw_w,
                    la_bn1_s, la_bn1_b, la_pw1_w, mlp1_w0, mlp1_w1,
                    cpe2_w, samp_s, attn_a, attn_v, attn_bias,
                    scat_g, lp_kmat, lp_b, gsa_gn_g, gsa_gn_b, proj_w,
                    mlp2_w0, mlp2_w1, seg_sum, seg_bcast, cls_w, cls_b,
                    o_ref, pad_ref, *, B_blk, H, W, C, heads):
    """One grid step == B_blk samples; activations live as (N, C) f32 values, N = B_blk*H*W."""
    HW = H * W
    N = B_blk * HW
    inv_hwc = 1.0 / float(HW * C)
    inv_hw = 1.0 / float(HW)

    # Zero the never-rewritten borders of the dwconv slab every step (cheap, and safe however
    # grid steps are split across TensorCores; the interior is fully rewritten by each dwconv).
    pad_ref[0:PAD0, :] = jnp.zeros((PAD0, C), jnp.float32)
    pad_ref[PAD0 + N:PAD0 + N + PAD0, :] = jnp.zeros((PAD0, C), jnp.float32)

    tmask = tap_mask[...]                                   # (9, N, 1)  dwconv boundary masks
    segs = seg_sum[...]                                     # (B_blk, N) per-sample indicator
    segb = seg_bcast[...]                                   # (N, B_blk) its transpose
    ones_c = jnp.ones((1, C), jnp.float32)

    def fdot(a, b):
        return jnp.dot(a, b, preferred_element_type=jnp.float32)

    def erf(z):     # Abramowitz-Stegun 7.1.26 (|err| < 1.5e-7) -> exact-GELU without lax.erf
        t = 1.0 / (1.0 + 0.3275911 * jnp.abs(z))
        poly = ((((1.061405429 * t - 1.453152027) * t + 1.421413741) * t
                 - 0.284496736) * t + 0.254829592) * t
        e = 1.0 - poly * jnp.exp(-z * z)
        return jnp.where(z >= 0.0, e, -e)

    def gelu(t):    # nn.GELU() default (erf form)
        return 0.5 * t * (1.0 + erf(t * 0.7071067811865476))

    def group_norm(t, g_ref, b_ref):
        # GroupNorm(num_groups=1): per-sample stats over (H*W, C) via constant segment matmuls.
        mean = jnp.sum(fdot(segs, t), axis=1, keepdims=True) * inv_hwc       # (B_blk, 1)
        mean_full = fdot(segb, mean * ones_c)                                # (N, C)
        d = t - mean_full
        var = jnp.sum(fdot(segs, d * d), axis=1, keepdims=True) * inv_hwc
        var_full = fdot(segb, var * ones_c)
        return d * jax.lax.rsqrt(var_full + EPS) * g_ref[...] + b_ref[...]

    def dwconv3(t, w_ref):
        # Depthwise 3x3, padding=1, no bias: one aligned bulk store into the zero-bordered slab,
        # then 9 shifted bulk loads accumulated in registers (masks zero row-wrap / cross-sample
        # taps).  Replaces the old per-row masked stores + strided 3-D loads.
        pad_ref[PAD0:PAD0 + N, :] = t
        w = w_ref[...]                                      # (3, 3, C)
        acc = jnp.zeros((N, C), jnp.float32)
        for dy in (-1, 0, 1):
            for dx in (-1, 0, 1):
                o = dy * W + dx
                k = (dy + 1) * 3 + (dx + 1)
                i, j = dy + 1, dx + 1
                tap = pad_ref[PAD0 + o:PAD0 + o + N, :]     # shifted bulk load
                acc = acc + tap * tmask[k] * w[i, j:j + 1, :]
        return acc

    def gsa(t):
        # GlobalSparseAttetionModule. NOTE: the reference forward never multiplies by self.scale.
        xs = fdot(samp_s[...], t)                           # (Ns, C) stride-r sampler as matmul
        bias = attn_bias[...]                               # (Ns, Ns) block-diag: per-sample attn
        out = jnp.zeros(xs.shape, jnp.float32)
        for h in range(heads):
            qe = fdot(xs, attn_a[h])                        # folded Wq @ Wk^T (wrapper-side)
            sc = jax.lax.dot_general(qe, xs, (((1,), (1,)), ((), ())),
                                     preferred_element_type=jnp.float32) + bias
            sc = sc - jnp.max(sc, axis=-1, keepdims=True)
            pr = jnp.exp(sc)
            pr = pr / jnp.sum(pr, axis=-1, keepdims=True)
            out = out + fdot(pr, fdot(xs, attn_v[h]))       # head lane-block pre-embedded in attn_v
        # local_prop: depthwise ConvTranspose2d(k=r, s=r, groups=C, bias=True) as gather-matmul
        # times a per-token kernel row, plus bias.
        y = fdot(scat_g[...], out) * lp_kmat[...] + lp_b[...]
        y = group_norm(y, gsa_gn_g, gsa_gn_b)
        return fdot(y, proj_w[...])

    # ---- stage 0: ConvDownsampling (bf16 patch matmul, f32 accumulate) + GroupNorm(1, C)
    x = fdot(patches_ref[...], ds_w[...])
    x = group_norm(x, ds_gn_g, ds_gn_b)

    # ---- one EdgeViT block (all residuals stay in registers)
    x = x + dwconv3(x, cpe1_w)                                            # CPE #1
    y = x * la_bn0_s[...] + la_bn0_b[...]                                 # LocalAggModule
    y = fdot(y, la_pw0_w[...])
    y = dwconv3(y, la_dw_w)
    y = y * la_bn1_s[...] + la_bn1_b[...]
    y = fdot(y, la_pw1_w[...])
    x = x + y
    x = x + fdot(gelu(fdot(x, mlp1_w0[...])), mlp1_w1[...])               # MLP #1
    x = x + dwconv3(x, cpe2_w)                                            # CPE #2
    x = x + gsa(x)                                                        # GSA
    x = x + fdot(gelu(fdot(x, mlp2_w0[...])), mlp2_w1[...])               # MLP #2

    # ---- head: per-sample AdaptiveAvgPool2d(1) (segment matmul) + Linear (dropout skipped)
    pooled = fdot(segs, x) * inv_hw                                       # (B_blk, C)
    o_ref[...] = fdot(pooled, cls_w[...]) + cls_b[...]                    # (B_blk, num_classes)


# =========================== trace-time constant matrices ================================
def _derived_constants(B_blk, H, W, r):
    """Gather/scatter/mask matrices for one batch block (built with numpy at trace time)."""
    HW = H * W
    N = B_blk * HW
    Hs, Ws = H // r, W // r
    n = Hs * Ws
    Ns = B_blk * n

    tap_mask = np.zeros((9, N, 1), np.float32)   # 3x3 dwconv boundary validity per tap
    samp = np.zeros((Ns, N), np.float32)         # sparse_sampler (stride-r subsample)
    scat = np.zeros((N, Ns), np.float32)         # local_prop token gather (sampled -> full grid)
    kidx = np.zeros((N,), np.int64)              # ConvTranspose kernel tap feeding each token
    seg = np.zeros((B_blk, N), np.float32)       # per-sample segment indicator
    for b in range(B_blk):
        for h in range(H):
            for w in range(W):
                t = b * HW + h * W + w
                seg[b, t] = 1.0
                s = b * n + (h // r) * Ws + (w // r)
                scat[t, s] = 1.0
                kidx[t] = (h % r) * r + (w % r)
                if h % r == 0 and w % r == 0:
                    samp[s, t] = 1.0
                for dy in (-1, 0, 1):
                    for dx in (-1, 0, 1):
                        if 0 <= h + dy < H and 0 <= w + dx < W:
                            tap_mask[(dy + 1) * 3 + (dx + 1), t, 0] = 1.0
    blk = np.arange(Ns) // n                     # block-diagonal bias: no cross-sample attention
    attn_bias = np.where(blk[:, None] == blk[None, :], 0.0, -1e30).astype(np.float32)
    j = jnp.asarray
    return (j(tap_mask), j(samp), j(scat), kidx, j(attn_bias), j(seg), j(seg.T.copy()))


# =========================== wrapper =====================================================
def edgevit_forward(params, x_nchw, *, block_batch=8):
    p = params
    B, Cin, H_in, W_in = x_nchw.shape
    C = STAGE_CHANNELS
    heads, hd, r_att = STAGE_HEADS, STAGE_CHANNELS // STAGE_HEADS, STAGE_R
    r = DS_R
    Ho, Wo = H_in // r, W_in // r
    HW = Ho * Wo
    K = r * r * Cin

    B_blk = max(1, min(block_batch, B))
    nb = -(-B // B_blk)                      # number of grid steps (keep >= 2 for v7x if possible)
    B_pad = nb * B_blk
    N = B_blk * HW

    # Patch extraction for the stride-4 conv; cast to bf16 BEFORE the 6-D transpose so the XLA
    # shuffle only moves half the bytes.  Flattened K order is (kh, kw, Cin) to match ds_w.
    xb = x_nchw.astype(jnp.bfloat16)
    patches = (xb.reshape(B, Cin, Ho, r, Wo, r)
                 .transpose(0, 2, 4, 3, 5, 1)          # (B, ho, wo, kh, kw, Cin)
                 .reshape(B, HW, K))
    if B_pad != B:
        patches = jnp.concatenate(
            [patches, jnp.zeros((B_pad - B, HW, K), patches.dtype)], axis=0)
    patches2d = patches.reshape(B_pad * HW, K)

    tap_mask, samp_s, scat_g, kidx, attn_bias, seg_sum, seg_bcast = _derived_constants(
        B_blk, Ho, Wo, r_att)

    # Fold the qkv projections per head: A_h = Wq_h @ Wk_h^T for scores, Wv_h embedded into its
    # output lane block so head outputs can simply be summed in the kernel.
    qkv = p["gsa_qkv_w"]                                   # (C, 3C), cols = (head, q|k|v, hd)
    a_list, v_list = [], []
    for h in range(heads):
        base = h * 3 * hd
        wq = qkv[:, base:base + hd]
        wk = qkv[:, base + hd:base + 2 * hd]
        wv = qkv[:, base + 2 * hd:base + 3 * hd]
        a_list.append(wq @ wk.T)
        v_list.append(jnp.zeros((C, C), jnp.float32).at[:, h * hd:(h + 1) * hd].set(wv))
    attn_a = jnp.stack(a_list)                             # (heads, C, C)
    attn_v = jnp.stack(v_list)                             # (heads, C, C)
    lp_kmat = p["gsa_lp_w"][kidx]                          # (N, C): per-token ConvTranspose tap

    weights = [
        p["ds_w"].astype(jnp.bfloat16),
        p["ds_gn_g"].reshape(1, C), p["ds_gn_b"].reshape(1, C),
        tap_mask,
        p["cpe1_w"],
        p["la_bn0_scale"].reshape(1, C), p["la_bn0_shift"].reshape(1, C),
        p["la_pw0_w"], p["la_dw_w"],
        p["la_bn1_scale"].reshape(1, C), p["la_bn1_shift"].reshape(1, C),
        p["la_pw1_w"],
        p["mlp1_w0"], p["mlp1_w1"],
        p["cpe2_w"],
        samp_s, attn_a, attn_v, attn_bias, scat_g, lp_kmat,
        p["gsa_lp_b"].reshape(1, C),
        p["gsa_gn_g"].reshape(1, C), p["gsa_gn_b"].reshape(1, C),
        p["gsa_proj_w"],
        p["mlp2_w0"], p["mlp2_w1"],
        seg_sum, seg_bcast,
        p["cls_w"], p["cls_b"].reshape(1, NUM_CLASSES),
    ]

    in_specs = [pl.BlockSpec((B_blk * HW, K), lambda b: (b, 0))]
    in_specs += [pl.BlockSpec(w.shape, (lambda b, nd=w.ndim: (0,) * nd)) for w in weights]

    kernel = functools.partial(_edgevit_kernel, B_blk=B_blk, H=Ho, W=Wo, C=C, heads=heads)

    out = pl.pallas_call(
        kernel,
        out_shape=jax.ShapeDtypeStruct((nb, B_blk, NUM_CLASSES), jnp.float32),
        grid=(nb,),
        in_specs=in_specs,
        out_specs=pl.BlockSpec((None, B_blk, NUM_CLASSES), lambda b: (b, 0, 0)),
        scratch_shapes=[pltpu.VMEM((N + 2 * PAD0, C), jnp.float32)],   # zero-bordered dwconv slab
        compiler_params=pltpu.CompilerParams(
            dimension_semantics=("parallel",)),      # independent batch blocks -> both TCs on v7x
    )(patches2d, *weights)
    return out.reshape(B_pad, NUM_CLASSES)[:B]


# =========================== deterministic parameter init ===============================
def init_params(key):
    C = STAGE_CHANNELS
    hidden = 4 * C
    keys = jax.random.split(key, 32)
    it = iter(keys)

    def w(shape, fan_in):
        return jax.random.normal(next(it), shape, jnp.float32) / math.sqrt(fan_in)

    def vec(scale=0.1, base=0.0):
        return base + scale * jax.random.normal(next(it), (C,), jnp.float32)

    p = {}
    # ConvDownsampling: Conv2d(256, C, k=4, s=4, bias=False) [+ GroupNorm(1, C)]
    p["ds_w"] = w((DS_R * DS_R * IN_CHANNELS, C), DS_R * DS_R * IN_CHANNELS)
    p["ds_gn_g"] = vec(base=1.0)
    p["ds_gn_b"] = vec()
    # ConditionalPositionalEncoding #1: depthwise 3x3, no bias
    p["cpe1_w"] = w((3, 3, C), 9)
    # LocalAggModule: eval-mode BatchNorm2d folded into per-channel scale/shift
    for tag in ("bn0", "bn1"):
        gamma, beta = vec(base=1.0), vec()
        rmean, rvar = vec(), 0.5 + jnp.abs(vec(base=1.0))
        scale = gamma / jnp.sqrt(rvar + EPS)
        p[f"la_{tag}_scale"] = scale
        p[f"la_{tag}_shift"] = beta - rmean * scale
    p["la_pw0_w"] = w((C, C), C)
    p["la_dw_w"] = w((3, 3, C), 9)
    p["la_pw1_w"] = w((C, C), C)
    # MLP #1
    p["mlp1_w0"] = w((C, hidden), C)
    p["mlp1_w1"] = w((hidden, C), hidden)
    # ConditionalPositionalEncoding #2
    p["cpe2_w"] = w((3, 3, C), 9)
    # GlobalSparseAttetionModule
    p["gsa_qkv_w"] = w((C, 3 * C), C)
    p["gsa_lp_w"] = w((STAGE_R * STAGE_R, C), STAGE_R * STAGE_R)   # depthwise ConvTranspose2d
    p["gsa_lp_b"] = vec()
    p["gsa_gn_g"] = vec(base=1.0)
    p["gsa_gn_b"] = vec()
    p["gsa_proj_w"] = w((C, C), C)
    # MLP #2
    p["mlp2_w0"] = w((C, hidden), C)
    p["mlp2_w1"] = w((hidden, C), hidden)
    # classifier: Linear(C, num_classes, bias=True)
    p["cls_w"] = w((C, NUM_CLASSES), C)
    p["cls_b"] = 0.1 * jax.random.normal(next(it), (NUM_CLASSES,), jnp.float32)
    return p


# =========================== driver =====================================================
if __name__ == "__main__":
    key = jax.random.PRNGKey(0)
    k_x, k_p = jax.random.split(key)
    # NCHW like PyTorch; EdgeViT hardcodes in_channels=256.  B=8 with block_batch=4 gives a
    # 2-step "parallel" grid (both v7x TensorCores busy) with M = 64 rows per downsample matmul.
    x = jax.random.normal(k_x, (8, IN_CHANNELS, 16, 16), jnp.float32)
    params = init_params(k_p)

    fwd = jax.jit(functools.partial(edgevit_forward, block_batch=4))
    logits = jax.block_until_ready(fwd(params, x))
    assert logits.shape == (8, NUM_CLASSES)
    assert bool(jnp.all(jnp.isfinite(logits)))
    print("KERNEL_OK")
</pallas_src>

<mosaic_0001>
module attributes {stable_mosaic.version = 11 : i64} {
  func.func @_edgevit_kernel(%arg0: i32, %arg1: memref<64x4096xbf16, #tpu.memory_space<vmem>>, %arg2: memref<4096x32xbf16, #tpu.memory_space<vmem>>, %arg3: memref<1x32xf32, #tpu.memory_space<vmem>>, %arg4: memref<1x32xf32, #tpu.memory_space<vmem>>, %arg5: memref<9x64x1xf32, #tpu.memory_space<vmem>>, %arg6: memref<3x3x32xf32, #tpu.memory_space<vmem>>, %arg7: memref<1x32xf32, #tpu.memory_space<vmem>>, %arg8: memref<1x32xf32, #tpu.memory_space<vmem>>, %arg9: memref<32x32xf32, #tpu.memory_space<vmem>>, %arg10: memref<3x3x32xf32, #tpu.memory_space<vmem>>, %arg11: memref<1x32xf32, #tpu.memory_space<vmem>>, %arg12: memref<1x32xf32, #tpu.memory_space<vmem>>, %arg13: memref<32x32xf32, #tpu.memory_space<vmem>>, %arg14: memref<32x128xf32, #tpu.memory_space<vmem>>, %arg15: memref<128x32xf32, #tpu.memory_space<vmem>>, %arg16: memref<3x3x32xf32, #tpu.memory_space<vmem>>, %arg17: memref<16x64xf32, #tpu.memory_space<vmem>>, %arg18: memref<2x32x32xf32, #tpu.memory_space<vmem>>, %arg19: memref<2x32x32xf32, #tpu.memory_space<vmem>>, %arg20: memref<16x16xf32, #tpu.memory_space<vmem>>, %arg21: memref<64x16xf32, #tpu.memory_space<vmem>>, %arg22: memref<64x32xf32, #tpu.memory_space<vmem>>, %arg23: memref<1x32xf32, #tpu.memory_space<vmem>>, %arg24: memref<1x32xf32, #tpu.memory_space<vmem>>, %arg25: memref<1x32xf32, #tpu.memory_space<vmem>>, %arg26: memref<32x32xf32, #tpu.memory_space<vmem>>, %arg27: memref<32x128xf32, #tpu.memory_space<vmem>>, %arg28: memref<128x32xf32, #tpu.memory_space<vmem>>, %arg29: memref<4x64xf32, #tpu.memory_space<vmem>>, %arg30: memref<64x4xf32, #tpu.memory_space<vmem>>, %arg31: memref<32x10xf32, #tpu.memory_space<vmem>>, %arg32: memref<1x10xf32, #tpu.memory_space<vmem>>, %arg33: memref<1x4x10xf32, #tpu.memory_space<vmem>>, %arg34: memref<80x32xf32, #tpu.memory_space<vmem>>) attributes {dimension_semantics = [#tpu.dimension_semantics<parallel>], iteration_bounds = array<i64: 2>, scalar_prefetch = 0 : i64, scratch_operands = 1 : i64, tpu.core_type = #tpu.core_type<tc>, window_params = [{transform_indices = @transform_0, window_bounds = array<i64: 64, 4096>}, {pipeline_mode = #tpu.pipeline_mode<synchronous>, transform_indices = @transform_1, window_bounds = array<i64: 4096, 32>}, {pipeline_mode = #tpu.pipeline_mode<synchronous>, transform_indices = @transform_2, window_bounds = array<i64: 1, 32>}, {pipeline_mode = #tpu.pipeline_mode<synchronous>, transform_indices = @transform_3, window_bounds = array<i64: 1, 32>}, {pipeline_mode = #tpu.pipeline_mode<synchronous>, transform_indices = @transform_4, window_bounds = array<i64: 9, 64, 1>}, {pipeline_mode = #tpu.pipeline_mode<synchronous>, transform_indices = @transform_5, window_bounds = array<i64: 3, 3, 32>}, {pipeline_mode = #tpu.pipeline_mode<synchronous>, transform_indices = @transform_6, window_bounds = array<i64: 1, 32>}, {pipeline_mode = #tpu.pipeline_mode<synchronous>, transform_indices = @transform_7, window_bounds = array<i64: 1, 32>}, {pipeline_mode = #tpu.pipeline_mode<synchronous>, transform_indices = @transform_8, window_bounds = array<i64: 32, 32>}, {pipeline_mode = #tpu.pipeline_mode<synchronous>, transform_indices = @transform_9, window_bounds = array<i64: 3, 3, 32>}, {pipeline_mode = #tpu.pipeline_mode<synchronous>, transform_indices = @transform_10, window_bounds = array<i64: 1, 32>}, {pipeline_mode = #tpu.pipeline_mode<synchronous>, transform_indices = @transform_11, window_bounds = array<i64: 1, 32>}, {pipeline_mode = #tpu.pipeline_mode<synchronous>, transform_indices = @transform_12, window_bounds = array<i64: 32, 32>}, {pipeline_mode = #tpu.pipeline_mode<synchronous>, transform_indices = @transform_13, window_bounds = array<i64: 32, 128>}, {pipeline_mode = #tpu.pipeline_mode<synchronous>, transform_indices = @transform_14, window_bounds = array<i64: 128, 32>}, {pipeline_mode = #tpu.pipeline_mode<synchronous>, transform_indices = @transform_15, window_bounds = array<i64: 3, 3, 32>}, {pipeline_mode = #tpu.pipeline_mode<synchronous>, transform_indices = @transform_16, window_bounds = array<i64: 16, 64>}, {pipeline_mode = #tpu.pipeline_mode<synchronous>, transform_indices = @transform_17, window_bounds = array<i64: 2, 32, 32>}, {pipeline_mode = #tpu.pipeline_mode<synchronous>, transform_indices = @transform_18, window_bounds = array<i64: 2, 32, 32>}, {pipeline_mode = #tpu.pipeline_mode<synchronous>, transform_indices = @transform_19, window_bounds = array<i64: 16, 16>}, {pipeline_mode = #tpu.pipeline_mode<synchronous>, transform_indices = @transform_20, window_bounds = array<i64: 64, 16>}, {pipeline_mode = #tpu.pipeline_mode<synchronous>, transform_indices = @transform_21, window_bounds = array<i64: 64, 32>}, {pipeline_mode = #tpu.pipeline_mode<synchronous>, transform_indices = @transform_22, window_bounds = array<i64: 1, 32>}, {pipeline_mode = #tpu.pipeline_mode<synchronous>, transform_indices = @transform_23, window_bounds = array<i64: 1, 32>}, {pipeline_mode = #tpu.pipeline_mode<synchronous>, transform_indices = @transform_24, window_bounds = array<i64: 1, 32>}, {pipeline_mode = #tpu.pipeline_mode<synchronous>, transform_indices = @transform_25, window_bounds = array<i64: 32, 32>}, {pipeline_mode = #tpu.pipeline_mode<synchronous>, transform_indices = @transform_26, window_bounds = array<i64: 32, 128>}, {pipeline_mode = #tpu.pipeline_mode<synchronous>, transform_indices = @transform_27, window_bounds = array<i64: 128, 32>}, {pipeline_mode = #tpu.pipeline_mode<synchronous>, transform_indices = @transform_28, window_bounds = array<i64: 4, 64>}, {pipeline_mode = #tpu.pipeline_mode<synchronous>, transform_indices = @transform_29, window_bounds = array<i64: 64, 4>}, {pipeline_mode = #tpu.pipeline_mode<synchronous>, transform_indices = @transform_30, window_bounds = array<i64: 32, 10>}, {pipeline_mode = #tpu.pipeline_mode<synchronous>, transform_indices = @transform_31, window_bounds = array<i64: 1, 10>}, {transform_indices = @transform_32, window_bounds = array<i64: 1, 4, 10>}]} {
    %cst = arith.constant 0.000000e+00 : f32
    %0 = vector.broadcast %cst : f32 to vector<8x32xf32>
    %c0 = arith.constant 0 : index
    %c0_0 = arith.constant 0 : index
    %1 = vector.load %arg34[%c0, %c0_0] : memref<80x32xf32, #tpu.memory_space<vmem>>, vector<8x32xf32>
    tpu.vector_store %arg34[%c0, %c0_0], %0 {strides = array<i32>} : memref<80x32xf32, #tpu.memory_space<vmem>>, vector<8x32xf32>,
    %cst_1 = arith.constant 0.000000e+00 : f32
    %2 = vector.broadcast %cst_1 : f32 to vector<8x32xf32>
    %c72 = arith.constant 72 : index
    %c0_2 = arith.constant 0 : index
    %3 = vector.load %arg34[%c72, %c0_2] : memref<80x32xf32, #tpu.memory_space<vmem>>, vector<8x32xf32>
    tpu.vector_store %arg34[%c72, %c0_2], %2 {strides = array<i32>} : memref<80x32xf32, #tpu.memory_space<vmem>>, vector<8x32xf32>,
    %c0_3 = arith.constant 0 : index
    %c0_4 = arith.constant 0 : index
    %c0_5 = arith.constant 0 : index
    %4 = vector.load %arg5[%c0_3, %c0_4, %c0_5] : memref<9x64x1xf32, #tpu.memory_space<vmem>>, vector<9x64x1xf32>
    %c0_6 = arith.constant 0 : index
    %c0_7 = arith.constant 0 : index
    %5 = vector.load %arg29[%c0_6, %c0_7] : memref<4x64xf32, #tpu.memory_space<vmem>>, vector<4x64xf32>
    %c0_8 = arith.constant 0 : index
    %c0_9 = arith.constant 0 : index
    %6 = vector.load %arg30[%c0_8, %c0_9] : memref<64x4xf32, #tpu.memory_space<vmem>>, vector<64x4xf32>
    %cst_10 = arith.constant 1.000000e+00 : f32
    %7 = vector.broadcast %cst_10 : f32 to vector<1x32xf32>
    %c0_11 = arith.constant 0 : index
    %c0_12 = arith.constant 0 : index
    %8 = vector.load %arg1[%c0_11, %c0_12] : memref<64x4096xbf16, #tpu.memory_space<vmem>>, vector<64x4096xbf16>
    %c0_13 = arith.constant 0 : index
    %c0_14 = arith.constant 0 : index
    %9 = vector.load %arg2[%c0_13, %c0_14] : memref<4096x32xbf16, #tpu.memory_space<vmem>>, vector<4096x32xbf16>
    %cst_15 = arith.constant dense<0.000000e+00> : vector<64x32xf32>
    %10 = tpu.matmul %8, %9, %cst_15 {dimension_numbers = #tpu.dot_dimension_numbers<[1], [0], [0], [1], [0, 0, 1, 1], [], []>} : vector<64x4096xbf16>, vector<4096x32xbf16>, vector<64x32xf32> -> vector<64x32xf32>
    %cst_16 = arith.constant dense<0.000000e+00> : vector<4x32xf32>
    %11 = tpu.matmul %5, %10, %cst_16 {dimension_numbers = #tpu.dot_dimension_numbers<[1], [0], [0], [1], [0, 0, 1, 1], [], []>} : vector<4x64xf32>, vector<64x32xf32>, vector<4x32xf32> -> vector<4x32xf32>
    %cst_17 = arith.constant dense<0.000000e+00> : vector<4xf32>
    %12 = vector.multi_reduction <add>, %11, %cst_17 [1] : vector<4x32xf32> to vector<4xf32>
    %13 = vector.shape_cast %12 : vector<4xf32> to vector<4x1xf32>
    %cst_18 = arith.constant 0.001953125 : f32
    %14 = vector.broadcast %cst_18 : f32 to vector<4x1xf32>
    %15 = arith.mulf %13, %14 : vector<4x1xf32>
    %16 = vector.broadcast %15 : vector<4x1xf32> to vector<4x32xf32>
    %17 = vector.broadcast %7 : vector<1x32xf32> to vector<4x32xf32>
    %18 = arith.mulf %16, %17 : vector<4x32xf32>
    %cst_19 = arith.constant dense<0.000000e+00> : vector<64x32xf32>
    %19 = tpu.matmul %6, %18, %cst_19 {dimension_numbers = #tpu.dot_dimension_numbers<[1], [0], [0], [1], [0, 0, 1, 1], [], []>} : vector<64x4xf32>, vector<4x32xf32>, vector<64x32xf32> -> vector<64x32xf32>
    %20 = arith.subf %10, %19 : vector<64x32xf32>
    %21 = arith.mulf %20, %20 : vector<64x32xf32>
    %cst_20 = arith.constant dense<0.000000e+00> : vector<4x32xf32>
    %22 = tpu.matmul %5, %21, %cst_20 {dimension_numbers = #tpu.dot_dimension_numbers<[1], [0], [0], [1], [0, 0, 1, 1], [], []>} : vector<4x64xf32>, vector<64x32xf32>, vector<4x32xf32> -> vector<4x32xf32>
    %cst_21 = arith.constant dense<0.000000e+00> : vector<4xf32>
    %23 = vector.multi_reduction <add>, %22, %cst_21 [1] : vector<4x32xf32> to vector<4xf32>
    %24 = vector.shape_cast %23 : vector<4xf32> to vector<4x1xf32>
    %cst_22 = arith.constant 0.001953125 : f32
    %25 = vector.broadcast %cst_22 : f32 to vector<4x1xf32>
    %26 = arith.mulf %24, %25 : vector<4x1xf32>
    %27 = vector.broadcast %26 : vector<4x1xf32> to vector<4x32xf32>
    %28 = vector.broadcast %7 : vector<1x32xf32> to vector<4x32xf32>
    %29 = arith.mulf %27, %28 : vector<4x32xf32>
    %cst_23 = arith.constant dense<0.000000e+00> : vector<64x32xf32>
    %30 = tpu.matmul %6, %29, %cst_23 {dimension_numbers = #tpu.dot_dimension_numbers<[1], [0], [0], [1], [0, 0, 1, 1], [], []>} : vector<64x4xf32>, vector<4x32xf32>, vector<64x32xf32> -> vector<64x32xf32>
    %cst_24 = arith.constant 9.99999974E-6 : f32
    %31 = vector.broadcast %cst_24 : f32 to vector<64x32xf32>
    %32 = arith.addf %30, %31 : vector<64x32xf32>
    %33 = math.rsqrt %32 : vector<64x32xf32>
    %34 = arith.mulf %20, %33 : vector<64x32xf32>
    %c0_25 = arith.constant 0 : index
    %c0_26 = arith.constant 0 : index
    %35 = vector.load %arg3[%c0_25, %c0_26] : memref<1x32xf32, #tpu.memory_space<vmem>>, vector<1x32xf32>
    %36 = vector.broadcast %35 : vector<1x32xf32> to vector<64x32xf32>
    %37 = arith.mulf %34, %36 : vector<64x32xf32>
    %c0_27 = arith.constant 0 : index
    %c0_28 = arith.constant 0 : index
    %38 = vector.load %arg4[%c0_27, %c0_28] : memref<1x32xf32, #tpu.memory_space<vmem>>, vector<1x32xf32>
    %39 = vector.broadcast %38 : vector<1x32xf32> to vector<64x32xf32>
    %40 = arith.addf %37, %39 : vector<64x32xf32>
    %c8 = arith.constant 8 : index
    %c0_29 = arith.constant 0 : index
    %41 = vector.load %arg34[%c8, %c0_29] : memref<80x32xf32, #tpu.memory_space<vmem>>, vector<64x32xf32>
    tpu.vector_store %arg34[%c8, %c0_29], %40 {strides = array<i32>} : memref<80x32xf32, #tpu.memory_space<vmem>>, vector<64x32xf32>,
    %c0_30 = arith.constant 0 : index
    %c0_31 = arith.constant 0 : index
    %c0_32 = arith.constant 0 : index
    %42 = vector.load %arg6[%c0_30, %c0_31, %c0_32] : memref<3x3x32xf32, #tpu.memory_space<vmem>>, vector<3x3x32xf32>
    %cst_33 = arith.constant 0.000000e+00 : f32
    %43 = vector.broadcast %cst_33 : f32 to vector<64x32xf32>
    %c3 = arith.constant 3 : index
    %c0_34 = arith.constant 0 : index
    %44 = vector.load %arg34[%c3, %c0_34] : memref<80x32xf32, #tpu.memory_space<vmem>>, vector<64x32xf32>
    %45 = vector.extract_strided_slice %4 {offsets = [0, 0, 0], sizes = [1, 64, 1], strides = [1, 1, 1]} : vector<9x64x1xf32> to vector<1x64x1xf32>
    %46 = vector.shape_cast %45 : vector<1x64x1xf32> to vector<64x1xf32>
    %47 = vector.broadcast %46 : vector<64x1xf32> to vector<64x32xf32>
    %48 = arith.mulf %44, %47 : vector<64x32xf32>
    %49 = vector.extract_strided_slice %42 {offsets = [0, 0, 0], sizes = [1, 1, 32], strides = [1, 1, 1]} : vector<3x3x32xf32> to vector<1x1x32xf32>
    %50 = vector.shape_cast %49 : vector<1x1x32xf32> to vector<1x32xf32>
    %51 = vector.broadcast %50 : vector<1x32xf32> to vector<64x32xf32>
    %52 = arith.mulf %48, %51 : vector<64x32xf32>
    %53 = arith.addf %43, %52 : vector<64x32xf32>
    %c4 = arith.constant 4 : index
    %c0_35 = arith.constant 0 : index
    %54 = vector.load %arg34[%c4, %c0_35] : memref<80x32xf32, #tpu.memory_space<vmem>>, vector<64x32xf32>
    %55 = vector.extract_strided_slice %4 {offsets = [1, 0, 0], sizes = [1, 64, 1], strides = [1, 1, 1]} : vector<9x64x1xf32> to vector<1x64x1xf32>
    %56 = vector.shape_cast %55 : vector<1x64x1xf32> to vector<64x1xf32>
    %57 = vector.broadcast %56 : vector<64x1xf32> to vector<64x32xf32>
    %58 = arith.mulf %54, %57 : vector<64x32xf32>
    %59 = vector.extract_strided_slice %42 {offsets = [0, 1, 0], sizes = [1, 1, 32], strides = [1, 1, 1]} : vector<3x3x32xf32> to vector<1x1x32xf32>
    %60 = vector.shape_cast %59 : vector<1x1x32xf32> to vector<1x32xf32>
    %61 = vector.broadcast %60 : vector<1x32xf32> to vector<64x32xf32>
    %62 = arith.mulf %58, %61 : vector<64x32xf32>
    %63 = arith.addf %53, %62 : vector<64x32xf32>
    %c5 = arith.constant 5 : index
    %c0_36 = arith.constant 0 : index
    %64 = vector.load %arg34[%c5, %c0_36] : memref<80x32xf32, #tpu.memory_space<vmem>>, vector<64x32xf32>
    %65 = vector.extract_strided_slice %4 {offsets = [2, 0, 0], sizes = [1, 64, 1], strides = [1, 1, 1]} : vector<9x64x1xf32> to vector<1x64x1xf32>
    %66 = vector.shape_cast %65 : vector<1x64x1xf32> to vector<64x1xf32>
    %67 = vector.broadcast %66 : vector<64x1xf32> to vector<64x32xf32>
    %68 = arith.mulf %64, %67 : vector<64x32xf32>
    %69 = vector.extract_strided_slice %42 {offsets = [0, 2, 0], sizes = [1, 1, 32], strides = [1, 1, 1]} : vector<3x3x32xf32> to vector<1x1x32xf32>
    %70 = vector.shape_cast %69 : vector<1x1x32xf32> to vector<1x32xf32>
    %71 = vector.broadcast %70 : vector<1x32xf32> to vector<64x32xf32>
    %72 = arith.mulf %68, %71 : vector<64x32xf32>
    %73 = arith.addf %63, %72 : vector<64x32xf32>
    %c7 = arith.constant 7 : index
    %c0_37 = arith.constant 0 : index
    %74 = vector.load %arg34[%c7, %c0_37] : memref<80x32xf32, #tpu.memory_space<vmem>>, vector<64x32xf32>
    %75 = vector.extract_strided_slice %4 {offsets = [3, 0, 0], sizes = [1, 64, 1], strides = [1, 1, 1]} : vector<9x64x1xf32> to vector<1x64x1xf32>
    %76 = vector.shape_cast %75 : vector<1x64x1xf32> to vector<64x1xf32>
    %77 = vector.broadcast %76 : vector<64x1xf32> to vector<64x32xf32>
    %78 = arith.mulf %74, %77 : vector<64x32xf32>
    %79 = vector.extract_strided_slice %42 {offsets = [1, 0, 0], sizes = [1, 1, 32], strides = [1, 1, 1]} : vector<3x3x32xf32> to vector<1x1x32xf32>
    %80 = vector.shape_cast %79 : vector<1x1x32xf32> to vector<1x32xf32>
    %81 = vector.broadcast %80 : vector<1x32xf32> to vector<64x32xf32>
    %82 = arith.mulf %78, %81 : vector<64x32xf32>
    %83 = arith.addf %73, %82 : vector<64x32xf32>
    %c8_38 = arith.constant 8 : index
    %c0_39 = arith.constant 0 : index
    %84 = vector.load %arg34[%c8_38, %c0_39] : memref<80x32xf32, #tpu.memory_space<vmem>>, vector<64x32xf32>
    %85 = vector.extract_strided_slice %4 {offsets = [4, 0, 0], sizes = [1, 64, 1], strides = [1, 1, 1]} : vector<9x64x1xf32> to vector<1x64x1xf32>
    %86 = vector.shape_cast %85 : vector<1x64x1xf32> to vector<64x1xf32>
    %87 = vector.broadcast %86 : vector<64x1xf32> to vector<64x32xf32>
    %88 = arith.mulf %84, %87 : vector<64x32xf32>
    %89 = vector.extract_strided_slice %42 {offsets = [1, 1, 0], sizes = [1, 1, 32], strides = [1, 1, 1]} : vector<3x3x32xf32> to vector<1x1x32xf32>
    %90 = vector.shape_cast %89 : vector<1x1x32xf32> to vector<1x32xf32>
    %91 = vector.broadcast %90 : vector<1x32xf32> to vector<64x32xf32>
    %92 = arith.mulf %88, %91 : vector<64x32xf32>
    %93 = arith.addf %83, %92 : vector<64x32xf32>
    %c9 = arith.constant 9 : index
    %c0_40 = arith.constant 0 : index
    %94 = vector.load %arg34[%c9, %c0_40] : memref<80x32xf32, #tpu.memory_space<vmem>>, vector<64x32xf32>
    %95 = vector.extract_strided_slice %4 {offsets = [5, 0, 0], sizes = [1, 64, 1], strides = [1, 1, 1]} : vector<9x64x1xf32> to vector<1x64x1xf32>
    %96 = vector.shape_cast %95 : vector<1x64x1xf32> to vector<64x1xf32>
    %97 = vector.broadcast %96 : vector<64x1xf32> to vector<64x32xf32>
    %98 = arith.mulf %94, %97 : vector<64x32xf32>
    %99 = vector.extract_strided_slice %42 {offsets = [1, 2, 0], sizes = [1, 1, 32], strides = [1, 1, 1]} : vector<3x3x32xf32> to vector<1x1x32xf32>
    %100 = vector.shape_cast %99 : vector<1x1x32xf32> to vector<1x32xf32>
    %101 = vector.broadcast %100 : vector<1x32xf32> to vector<64x32xf32>
    %102 = arith.mulf %98, %101 : vector<64x32xf32>
    %103 = arith.addf %93, %102 : vector<64x32xf32>
    %c11 = arith.constant 11 : index
    %c0_41 = arith.constant 0 : index
    %104 = vector.load %arg34[%c11, %c0_41] : memref<80x32xf32, #tpu.memory_space<vmem>>, vector<64x32xf32>
    %105 = vector.extract_strided_slice %4 {offsets = [6, 0, 0], sizes = [1, 64, 1], strides = [1, 1, 1]} : vector<9x64x1xf32> to vector<1x64x1xf32>
    %106 = vector.shape_cast %105 : vector<1x64x1xf32> to vector<64x1xf32>
    %107 = vector.broadcast %106 : vector<64x1xf32> to vector<64x32xf32>
    %108 = arith.mulf %104, %107 : vector<64x32xf32>
    %109 = vector.extract_strided_slice %42 {offsets = [2, 0, 0], sizes = [1, 1, 32], strides = [1, 1, 1]} : vector<3x3x32xf32> to vector<1x1x32xf32>
    %110 = vector.shape_cast %109 : vector<1x1x32xf32> to vector<1x32xf32>
    %111 = vector.broadcast %110 : vector<1x32xf32> to vector<64x32xf32>
    %112 = arith.mulf %108, %111 : vector<64x32xf32>
    %113 = arith.addf %103, %112 : vector<64x32xf32>
    %c12 = arith.constant 12 : index
    %c0_42 = arith.constant 0 : index
    %114 = vector.load %arg34[%c12, %c0_42] : memref<80x32xf32, #tpu.memory_space<vmem>>, vector<64x32xf32>
    %115 = vector.extract_strided_slice %4 {offsets = [7, 0, 0], sizes = [1, 64, 1], strides = [1, 1, 1]} : vector<9x64x1xf32> to vector<1x64x1xf32>
    %116 = vector.shape_cast %115 : vector<1x64x1xf32> to vector<64x1xf32>
    %117 = vector.broadcast %116 : vector<64x1xf32> to vector<64x32xf32>
    %118 = arith.mulf %114, %117 : vector<64x32xf32>
    %119 = vector.extract_strided_slice %42 {offsets = [2, 1, 0], sizes = [1, 1, 32], strides = [1, 1, 1]} : vector<3x3x32xf32> to vector<1x1x32xf32>
    %120 = vector.shape_cast %119 : vector<1x1x32xf32> to vector<1x32xf32>
    %121 = vector.broadcast %120 : vector<1x32xf32> to vector<64x32xf32>
    %122 = arith.mulf %118, %121 : vector<64x32xf32>
    %123 = arith.addf %113, %122 : vector<64x32xf32>
    %c13 = arith.constant 13 : index
    %c0_43 = arith.constant 0 : index
    %124 = vector.load %arg34[%c13, %c0_43] : memref<80x32xf32, #tpu.memory_space<vmem>>, vector<64x32xf32>
    %125 = vector.extract_strided_slice %4 {offsets = [8, 0, 0], sizes = [1, 64, 1], strides = [1, 1, 1]} : vector<9x64x1xf32> to vector<1x64x1xf32>
    %126 = vector.shape_cast %125 : vector<1x64x1xf32> to vector<64x1xf32>
    %127 = vector.broadcast %126 : vector<64x1xf32> to vector<64x32xf32>
    %128 = arith.mulf %124, %127 : vector<64x32xf32>
    %129 = vector.extract_strided_slice %42 {offsets = [2, 2, 0], sizes = [1, 1, 32], strides = [1, 1, 1]} : vector<3x3x32xf32> to vector<1x1x32xf32>
    %130 = vector.shape_cast %129 : vector<1x1x32xf32> to vector<1x32xf32>
    %131 = vector.broadcast %130 : vector<1x32xf32> to vector<64x32xf32>
    %132 = arith.mulf %128, %131 : vector<64x32xf32>
    %133 = arith.addf %123, %132 : vector<64x32xf32>
    %134 = arith.addf %40, %133 : vector<64x32xf32>
    %c0_44 = arith.constant 0 : index
    %c0_45 = arith.constant 0 : index
    %135 = vector.load %arg7[%c0_44, %c0_45] : memref<1x32xf32, #tpu.memory_space<vmem>>, vector<1x32xf32>
    %136 = vector.broadcast %135 : vector<1x32xf32> to vector<64x32xf32>
    %137 = arith.mulf %134, %136 : vector<64x32xf32>
    %c0_46 = arith.constant 0 : index
    %c0_47 = arith.constant 0 : index
    %138 = vector.load %arg8[%c0_46, %c0_47] : memref<1x32xf32, #tpu.memory_space<vmem>>, vector<1x32xf32>
    %139 = vector.broadcast %138 : vector<1x32xf32> to vector<64x32xf32>
    %140 = arith.addf %137, %139 : vector<64x32xf32>
    %c0_48 = arith.constant 0 : index
    %c0_49 = arith.constant 0 : index
    %141 = vector.load %arg9[%c0_48, %c0_49] : memref<32x32xf32, #tpu.memory_space<vmem>>, vector<32x32xf32>
    %cst_50 = arith.constant dense<0.000000e+00> : vector<64x32xf32>
    %142 = tpu.matmul %140, %141, %cst_50 {dimension_numbers = #tpu.dot_dimension_numbers<[1], [0], [0], [1], [0, 0, 1, 1], [], []>} : vector<64x32xf32>, vector<32x32xf32>, vector<64x32xf32> -> vector<64x32xf32>
    %c8_51 = arith.constant 8 : index
    %c0_52 = arith.constant 0 : index
    %143 = vector.load %arg34[%c8_51, %c0_52] : memref<80x32xf32, #tpu.memory_space<vmem>>, vector<64x32xf32>
    tpu.vector_store %arg34[%c8_51, %c0_52], %142 {strides = array<i32>} : memref<80x32xf32, #tpu.memory_space<vmem>>, vector<64x32xf32>,
    %c0_53 = arith.constant 0 : index
    %c0_54 = arith.constant 0 : index
    %c0_55 = arith.constant 0 : index
    %144 = vector.load %arg10[%c0_53, %c0_54, %c0_55] : memref<3x3x32xf32, #tpu.memory_space<vmem>>, vector<3x3x32xf32>
    %cst_56 = arith.constant 0.000000e+00 : f32
    %145 = vector.broadcast %cst_56 : f32 to vector<64x32xf32>
    %c3_57 = arith.constant 3 : index
    %c0_58 = arith.constant 0 : index
    %146 = vector.load %arg34[%c3_57, %c0_58] : memref<80x32xf32, #tpu.memory_space<vmem>>, vector<64x32xf32>
    %147 = vector.extract_strided_slice %4 {offsets = [0, 0, 0], sizes = [1, 64, 1], strides = [1, 1, 1]} : vector<9x64x1xf32> to vector<1x64x1xf32>
    %148 = vector.shape_cast %147 : vector<1x64x1xf32> to vector<64x1xf32>
    %149 = vector.broadcast %148 : vector<64x1xf32> to vector<64x32xf32>
    %150 = arith.mulf %146, %149 : vector<64x32xf32>
    %151 = vector.extract_strided_slice %144 {offsets = [0, 0, 0], sizes = [1, 1, 32], strides = [1, 1, 1]} : vector<3x3x32xf32> to vector<1x1x32xf32>
    %152 = vector.shape_cast %151 : vector<1x1x32xf32> to vector<1x32xf32>
    %153 = vector.broadcast %152 : vector<1x32xf32> to vector<64x32xf32>
    %154 = arith.mulf %150, %153 : vector<64x32xf32>
    %155 = arith.addf %145, %154 : vector<64x32xf32>
    %c4_59 = arith.constant 4 : index
    %c0_60 = arith.constant 0 : index
    %156 = vector.load %arg34[%c4_59, %c0_60] : memref<80x32xf32, #tpu.memory_space<vmem>>, vector<64x32xf32>
    %157 = vector.extract_strided_slice %4 {offsets = [1, 0, 0], sizes = [1, 64, 1], strides = [1, 1, 1]} : vector<9x64x1xf32> to vector<1x64x1xf32>
    %158 = vector.shape_cast %157 : vector<1x64x1xf32> to vector<64x1xf32>
    %159 = vector.broadcast %158 : vector<64x1xf32> to vector<64x32xf32>
    %160 = arith.mulf %156, %159 : vector<64x32xf32>
    %161 = vector.extract_strided_slice %144 {offsets = [0, 1, 0], sizes = [1, 1, 32], strides = [1, 1, 1]} : vector<3x3x32xf32> to vector<1x1x32xf32>
    %162 = vector.shape_cast %161 : vector<1x1x32xf32> to vector<1x32xf32>
    %163 = vector.broadcast %162 : vector<1x32xf32> to vector<64x32xf32>
    %164 = arith.mulf %160, %163 : vector<64x32xf32>
    %165 = arith.addf %155, %164 : vector<64x32xf32>
    %c5_61 = arith.constant 5 : index
    %c0_62 = arith.constant 0 : index
    %166 = vector.load %arg34[%c5_61, %c0_62] : memref<80x32xf32, #tpu.memory_space<vmem>>, vector<64x32xf32>
    %167 = vector.extract_strided_slice %4 {offsets = [2, 0, 0], sizes = [1, 64, 1], strides = [1, 1, 1]} : vector<9x64x1xf32> to vector<1x64x1xf32>
    %168 = vector.shape_cast %167 : vector<1x64x1xf32> to vector<64x1xf32>
    %169 = vector.broadcast %168 : vector<64x1xf32> to vector<64x32xf32>
    %170 = arith.mulf %166, %169 : vector<64x32xf32>
    %171 = vector.extract_strided_slice %144 {offsets = [0, 2, 0], sizes = [1, 1, 32], strides = [1, 1, 1]} : vector<3x3x32xf32> to vector<1x1x32xf32>
    %172 = vector.shape_cast %171 : vector<1x1x32xf32> to vector<1x32xf32>
    %173 = vector.broadcast %172 : vector<1x32xf32> to vector<64x32xf32>
    %174 = arith.mulf %170, %173 : vector<64x32xf32>
    %175 = arith.addf %165, %174 : vector<64x32xf32>
    %c7_63 = arith.constant 7 : index
    %c0_64 = arith.constant 0 : index
    %176 = vector.load %arg34[%c7_63, %c0_64] : memref<80x32xf32, #tpu.memory_space<vmem>>, vector<64x32xf32>
    %177 = vector.extract_strided_slice %4 {offsets = [3, 0, 0], sizes = [1, 64, 1], strides = [1, 1, 1]} : vector<9x64x1xf32> to vector<1x64x1xf32>
    %178 = vector.shape_cast %177 : vector<1x64x1xf32> to vector<64x1xf32>
    %179 = vector.broadcast %178 : vector<64x1xf32> to vector<64x32xf32>
    %180 = arith.mulf %176, %179 : vector<64x32xf32>
    %181 = vector.extract_strided_slice %144 {offsets = [1, 0, 0], sizes = [1, 1, 32], strides = [1, 1, 1]} : vector<3x3x32xf32> to vector<1x1x32xf32>
    %182 = vector.shape_cast %181 : vector<1x1x32xf32> to vector<1x32xf32>
    %183 = vector.broadcast %182 : vector<1x32xf32> to vector<64x32xf32>
    %184 = arith.mulf %180, %183 : vector<64x32xf32>
    %185 = arith.addf %175, %184 : vector<64x32xf32>
    %c8_65 = arith.constant 8 : index
    %c0_66 = arith.constant 0 : index
    %186 = vector.load %arg34[%c8_65, %c0_66] : memref<80x32xf32, #tpu.memory_space<vmem>>, vector<64x32xf32>
    %187 = vector.extract_strided_slice %4 {offsets = [4, 0, 0], sizes = [1, 64, 1], strides = [1, 1, 1]} : vector<9x64x1xf32> to vector<1x64x1xf32>
    %188 = vector.shape_cast %187 : vector<1x64x1xf32> to vector<64x1xf32>
    %189 = vector.broadcast %188 : vector<64x1xf32> to vector<64x32xf32>
    %190 = arith.mulf %186, %189 : vector<64x32xf32>
    %191 = vector.extract_strided_slice %144 {offsets = [1, 1, 0], sizes = [1, 1, 32], strides = [1, 1, 1]} : vector<3x3x32xf32> to vector<1x1x32xf32>
    %192 = vector.shape_cast %191 : vector<1x1x32xf32> to vector<1x32xf32>
    %193 = vector.broadcast %192 : vector<1x32xf32> to vector<64x32xf32>
    %194 = arith.mulf %190, %193 : vector<64x32xf32>
    %195 = arith.addf %185, %194 : vector<64x32xf32>
    %c9_67 = arith.constant 9 : index
    %c0_68 = arith.constant 0 : index
    %196 = vector.load %arg34[%c9_67, %c0_68] : memref<80x32xf32, #tpu.memory_space<vmem>>, vector<64x32xf32>
    %197 = vector.extract_strided_slice %4 {offsets = [5, 0, 0], sizes = [1, 64, 1], strides = [1, 1, 1]} : vector<9x64x1xf32> to vector<1x64x1xf32>
    %198 = vector.shape_cast %197 : vector<1x64x1xf32> to vector<64x1xf32>
    %199 = vector.broadcast %198 : vector<64x1xf32> to vector<64x32xf32>
    %200 = arith.mulf %196, %199 : vector<64x32xf32>
    %201 = vector.extract_strided_slice %144 {offsets = [1, 2, 0], sizes = [1, 1, 32], strides = [1, 1, 1]} : vector<3x3x32xf32> to vector<1x1x32xf32>
    %202 = vector.shape_cast %201 : vector<1x1x32xf32> to vector<1x32xf32>
    %203 = vector.broadcast %202 : vector<1x32xf32> to vector<64x32xf32>
    %204 = arith.mulf %200, %203 : vector<64x32xf32>
    %205 = arith.addf %195, %204 : vector<64x32xf32>
    %c11_69 = arith.constant 11 : index
    %c0_70 = arith.constant 0 : index
    %206 = vector.load %arg34[%c11_69, %c0_70] : memref<80x32xf32, #tpu.memory_space<vmem>>, vector<64x32xf32>
    %207 = vector.extract_strided_slice %4 {offsets = [6, 0, 0], sizes = [1, 64, 1], strides = [1, 1, 1]} : vector<9x64x1xf32> to vector<1x64x1xf32>
    %208 = vector.shape_cast %207 : vector<1x64x1xf32> to vector<64x1xf32>
    %209 = vector.broadcast %208 : vector<64x1xf32> to vector<64x32xf32>
    %210 = arith.mulf %206, %209 : vector<64x32xf32>
    %211 = vector.extract_strided_slice %144 {offsets = [2, 0, 0], sizes = [1, 1, 32], strides = [1, 1, 1]} : vector<3x3x32xf32> to vector<1x1x32xf32>
    %212 = vector.shape_cast %211 : vector<1x1x32xf32> to vector<1x32xf32>
    %213 = vector.broadcast %212 : vector<1x32xf32> to vector<64x32xf32>
    %214 = arith.mulf %210, %213 : vector<64x32xf32>
    %215 = arith.addf %205, %214 : vector<64x32xf32>
    %c12_71 = arith.constant 12 : index
    %c0_72 = arith.constant 0 : index
    %216 = vector.load %arg34[%c12_71, %c0_72] : memref<80x32xf32, #tpu.memory_space<vmem>>, vector<64x32xf32>
    %217 = vector.extract_strided_slice %4 {offsets = [7, 0, 0], sizes = [1, 64, 1], strides = [1, 1, 1]} : vector<9x64x1xf32> to vector<1x64x1xf32>
    %218 = vector.shape_cast %217 : vector<1x64x1xf32> to vector<64x1xf32>
    %219 = vector.broadcast %218 : vector<64x1xf32> to vector<64x32xf32>
    %220 = arith.mulf %216, %219 : vector<64x32xf32>
    %221 = vector.extract_strided_slice %144 {offsets = [2, 1, 0], sizes = [1, 1, 32], strides = [1, 1, 1]} : vector<3x3x32xf32> to vector<1x1x32xf32>
    %222 = vector.shape_cast %221 : vector<1x1x32xf32> to vector<1x32xf32>
    %223 = vector.broadcast %222 : vector<1x32xf32> to vector<64x32xf32>
    %224 = arith.mulf %220, %223 : vector<64x32xf32>
    %225 = arith.addf %215, %224 : vector<64x32xf32>
    %c13_73 = arith.constant 13 : index
    %c0_74 = arith.constant 0 : index
    %226 = vector.load %arg34[%c13_73, %c0_74] : memref<80x32xf32, #tpu.memory_space<vmem>>, vector<64x32xf32>
    %227 = vector.extract_strided_slice %4 {offsets = [8, 0, 0], sizes = [1, 64, 1], strides = [1, 1, 1]} : vector<9x64x1xf32> to vector<1x64x1xf32>
    %228 = vector.shape_cast %227 : vector<1x64x1xf32> to vector<64x1xf32>
    %229 = vector.broadcast %228 : vector<64x1xf32> to vector<64x32xf32>
    %230 = arith.mulf %226, %229 : vector<64x32xf32>
    %231 = vector.extract_strided_slice %144 {offsets = [2, 2, 0], sizes = [1, 1, 32], strides = [1, 1, 1]} : vector<3x3x32xf32> to vector<1x1x32xf32>
    %232 = vector.shape_cast %231 : vector<1x1x32xf32> to vector<1x32xf32>
    %233 = vector.broadcast %232 : vector<1x32xf32> to vector<64x32xf32>
    %234 = arith.mulf %230, %233 : vector<64x32xf32>
    %235 = arith.addf %225, %234 : vector<64x32xf32>
    %c0_75 = arith.constant 0 : index
    %c0_76 = arith.constant 0 : index
    %236 = vector.load %arg11[%c0_75, %c0_76] : memref<1x32xf32, #tpu.memory_space<vmem>>, vector<1x32xf32>
    %237 = vector.broadcast %236 : vector<1x32xf32> to vector<64x32xf32>
    %238 = arith.mulf %235, %237 : vector<64x32xf32>
    %c0_77 = arith.constant 0 : index
    %c0_78 = arith.constant 0 : index
    %239 = vector.load %arg12[%c0_77, %c0_78] : memref<1x32xf32, #tpu.memory_space<vmem>>, vector<1x32xf32>
    %240 = vector.broadcast %239 : vector<1x32xf32> to vector<64x32xf32>
    %241 = arith.addf %238, %240 : vector<64x32xf32>
    %c0_79 = arith.constant 0 : index
    %c0_80 = arith.constant 0 : index
    %242 = vector.load %arg13[%c0_79, %c0_80] : memref<32x32xf32, #tpu.memory_space<vmem>>, vector<32x32xf32>
    %cst_81 = arith.constant dense<0.000000e+00> : vector<64x32xf32>
    %243 = tpu.matmul %241, %242, %cst_81 {dimension_numbers = #tpu.dot_dimension_numbers<[1], [0], [0], [1], [0, 0, 1, 1], [], []>} : vector<64x32xf32>, vector<32x32xf32>, vector<64x32xf32> -> vector<64x32xf32>
    %244 = arith.addf %134, %243 : vector<64x32xf32>
    %c0_82 = arith.constant 0 : index
    %c0_83 = arith.constant 0 : index
    %245 = vector.load %arg14[%c0_82, %c0_83] : memref<32x128xf32, #tpu.memory_space<vmem>>, vector<32x128xf32>
    %cst_84 = arith.constant dense<0.000000e+00> : vector<64x128xf32>
    %246 = tpu.matmul %244, %245, %cst_84 {dimension_numbers = #tpu.dot_dimension_numbers<[1], [0], [0], [1], [0, 0, 1, 1], [], []>} : vector<64x32xf32>, vector<32x128xf32>, vector<64x128xf32> -> vector<64x128xf32>
    %cst_85 = arith.constant 5.000000e-01 : f32
    %247 = vector.broadcast %cst_85 : f32 to vector<64x128xf32>
    %248 = arith.mulf %247, %246 : vector<64x128xf32>
    %cst_86 = arith.constant 0.707106769 : f32
    %249 = vector.broadcast %cst_86 : f32 to vector<64x128xf32>
    %250 = arith.mulf %246, %249 : vector<64x128xf32>
    %251 = math.absf %250 : vector<64x128xf32>
    %cst_87 = arith.constant 0.327591091 : f32
    %252 = vector.broadcast %cst_87 : f32 to vector<64x128xf32>
    %253 = arith.mulf %252, %251 : vector<64x128xf32>
    %cst_88 = arith.constant 1.000000e+00 : f32
    %254 = vector.broadcast %cst_88 : f32 to vector<64x128xf32>
    %255 = arith.addf %254, %253 : vector<64x128xf32>
    %cst_89 = arith.constant 1.000000e+00 : f32
    %256 = vector.broadcast %cst_89 : f32 to vector<64x128xf32>
    %257 = arith.divf %256, %255 : vector<64x128xf32>
    %cst_90 = arith.constant 1.06140542 : f32
    %258 = vector.broadcast %cst_90 : f32 to vector<64x128xf32>
    %259 = arith.mulf %258, %257 : vector<64x128xf32>
    %cst_91 = arith.constant 1.45315206 : f32
    %260 = vector.broadcast %cst_91 : f32 to vector<64x128xf32>
    %261 = arith.subf %259, %260 : vector<64x128xf32>
    %262 = arith.mulf %261, %257 : vector<64x128xf32>
    %cst_92 = arith.constant 1.42141378 : f32
    %263 = vector.broadcast %cst_92 : f32 to vector<64x128xf32>
    %264 = arith.addf %262, %263 : vector<64x128xf32>
    %265 = arith.mulf %264, %257 : vector<64x128xf32>
    %cst_93 = arith.constant 0.284496725 : f32
    %266 = vector.broadcast %cst_93 : f32 to vector<64x128xf32>
    %267 = arith.subf %265, %266 : vector<64x128xf32>
    %268 = arith.mulf %267, %257 : vector<64x128xf32>
    %cst_94 = arith.constant 0.254829586 : f32
    %269 = vector.broadcast %cst_94 : f32 to vector<64x128xf32>
    %270 = arith.addf %268, %269 : vector<64x128xf32>
    %271 = arith.mulf %270, %257 : vector<64x128xf32>
    %cst_95 = arith.constant 0.000000e+00 : f32
    %272 = vector.broadcast %cst_95 : f32 to vector<64x128xf32>
    %273 = arith.subf %272, %250 : vector<64x128xf32>
    %274 = arith.mulf %273, %250 : vector<64x128xf32>
    %275 = math.exp %274 : vector<64x128xf32>
    %276 = arith.mulf %271, %275 : vector<64x128xf32>
    %cst_96 = arith.constant 1.000000e+00 : f32
    %277 = vector.broadcast %cst_96 : f32 to vector<64x128xf32>
    %278 = arith.subf %277, %276 : vector<64x128xf32>
    %cst_97 = arith.constant 0.000000e+00 : f32
    %279 = vector.broadcast %cst_97 : f32 to vector<64x128xf32>
    %280 = arith.cmpf oge, %250, %279 : vector<64x128xf32>
    %cst_98 = arith.constant 0.000000e+00 : f32
    %281 = vector.broadcast %cst_98 : f32 to vector<64x128xf32>
    %282 = arith.subf %281, %278 : vector<64x128xf32>
    %283 = arith.select %280, %278, %282 : vector<64x128xi1>, vector<64x128xf32>
    %cst_99 = arith.constant 1.000000e+00 : f32
    %284 = vector.broadcast %cst_99 : f32 to vector<64x128xf32>
    %285 = arith.addf %284, %283 : vector<64x128xf32>
    %286 = arith.mulf %248, %285 : vector<64x128xf32>
    %c0_100 = arith.constant 0 : index
    %c0_101 = arith.constant 0 : index
    %287 = vector.load %arg15[%c0_100, %c0_101] : memref<128x32xf32, #tpu.memory_space<vmem>>, vector<128x32xf32>
    %cst_102 = arith.constant dense<0.000000e+00> : vector<64x32xf32>
    %288 = tpu.matmul %286, %287, %cst_102 {dimension_numbers = #tpu.dot_dimension_numbers<[1], [0], [0], [1], [0, 0, 1, 1], [], []>} : vector<64x128xf32>, vector<128x32xf32>, vector<64x32xf32> -> vector<64x32xf32>
    %289 = arith.addf %244, %288 : vector<64x32xf32>
    %c8_103 = arith.constant 8 : index
    %c0_104 = arith.constant 0 : index
    %290 = vector.load %arg34[%c8_103, %c0_104] : memref<80x32xf32, #tpu.memory_space<vmem>>, vector<64x32xf32>
    tpu.vector_store %arg34[%c8_103, %c0_104], %289 {strides = array<i32>} : memref<80x32xf32, #tpu.memory_space<vmem>>, vector<64x32xf32>,
    %c0_105 = arith.constant 0 : index
    %c0_106 = arith.constant 0 : index
    %c0_107 = arith.constant 0 : index
    %291 = vector.load %arg16[%c0_105, %c0_106, %c0_107] : memref<3x3x32xf32, #tpu.memory_space<vmem>>, vector<3x3x32xf32>
    %cst_108 = arith.constant 0.000000e+00 : f32
    %292 = vector.broadcast %cst_108 : f32 to vector<64x32xf32>
    %c3_109 = arith.constant 3 : index
    %c0_110 = arith.constant 0 : index
    %293 = vector.load %arg34[%c3_109, %c0_110] : memref<80x32xf32, #tpu.memory_space<vmem>>, vector<64x32xf32>
    %294 = vector.extract_strided_slice %4 {offsets = [0, 0, 0], sizes = [1, 64, 1], strides = [1, 1, 1]} : vector<9x64x1xf32> to vector<1x64x1xf32>
    %295 = vector.shape_cast %294 : vector<1x64x1xf32> to vector<64x1xf32>
    %296 = vector.broadcast %295 : vector<64x1xf32> to vector<64x32xf32>
    %297 = arith.mulf %293, %296 : vector<64x32xf32>
    %298 = vector.extract_strided_slice %291 {offsets = [0, 0, 0], sizes = [1, 1, 32], strides = [1, 1, 1]} : vector<3x3x32xf32> to vector<1x1x32xf32>
    %299 = vector.shape_cast %298 : vector<1x1x32xf32> to vector<1x32xf32>
    %300 = vector.broadcast %299 : vector<1x32xf32> to vector<64x32xf32>
    %301 = arith.mulf %297, %300 : vector<64x32xf32>
    %302 = arith.addf %292, %301 : vector<64x32xf32>
    %c4_111 = arith.constant 4 : index
    %c0_112 = arith.constant 0 : index
    %303 = vector.load %arg34[%c4_111, %c0_112] : memref<80x32xf32, #tpu.memory_space<vmem>>, vector<64x32xf32>
    %304 = vector.extract_strided_slice %4 {offsets = [1, 0, 0], sizes = [1, 64, 1], strides = [1, 1, 1]} : vector<9x64x1xf32> to vector<1x64x1xf32>
    %305 = vector.shape_cast %304 : vector<1x64x1xf32> to vector<64x1xf32>
    %306 = vector.broadcast %305 : vector<64x1xf32> to vector<64x32xf32>
    %307 = arith.mulf %303, %306 : vector<64x32xf32>
    %308 = vector.extract_strided_slice %291 {offsets = [0, 1, 0], sizes = [1, 1, 32], strides = [1, 1, 1]} : vector<3x3x32xf32> to vector<1x1x32xf32>
    %309 = vector.shape_cast %308 : vector<1x1x32xf32> to vector<1x32xf32>
    %310 = vector.broadcast %309 : vector<1x32xf32> to vector<64x32xf32>
    %311 = arith.mulf %307, %310 : vector<64x32xf32>
    %312 = arith.addf %302, %311 : vector<64x32xf32>
    %c5_113 = arith.constant 5 : index
    %c0_114 = arith.constant 0 : index
    %313 = vector.load %arg34[%c5_113, %c0_114] : memref<80x32xf32, #tpu.memory_space<vmem>>, vector<64x32xf32>
    %314 = vector.extract_strided_slice %4 {offsets = [2, 0, 0], sizes = [1, 64, 1], strides = [1, 1, 1]} : vector<9x64x1xf32> to vector<1x64x1xf32>
    %315 = vector.shape_cast %314 : vector<1x64x1xf32> to vector<64x1xf32>
    %316 = vector.broadcast %315 : vector<64x1xf32> to vector<64x32xf32>
    %317 = arith.mulf %313, %316 : vector<64x32xf32>
    %318 = vector.extract_strided_slice %291 {offsets = [0, 2, 0], sizes = [1, 1, 32], strides = [1, 1, 1]} : vector<3x3x32xf32> to vector<1x1x32xf32>
    %319 = vector.shape_cast %318 : vector<1x1x32xf32> to vector<1x32xf32>
    %320 = vector.broadcast %319 : vector<1x32xf32> to vector<64x32xf32>
    %321 = arith.mulf %317, %320 : vector<64x32xf32>
    %322 = arith.addf %312, %321 : vector<64x32xf32>
    %c7_115 = arith.constant 7 : index
    %c0_116 = arith.constant 0 : index
    %323 = vector.load %arg34[%c7_115, %c0_116] : memref<80x32xf32, #tpu.memory_space<vmem>>, vector<64x32xf32>
    %324 = vector.extract_strided_slice %4 {offsets = [3, 0, 0], sizes = [1, 64, 1], strides = [1, 1, 1]} : vector<9x64x1xf32> to vector<1x64x1xf32>
    %325 = vector.shape_cast %324 : vector<1x64x1xf32> to vector<64x1xf32>
    %326 = vector.broadcast %325 : vector<64x1xf32> to vector<64x32xf32>
    %327 = arith.mulf %323, %326 : vector<64x32xf32>
    %328 = vector.extract_strided_slice %291 {offsets = [1, 0, 0], sizes = [1, 1, 32], strides = [1, 1, 1]} : vector<3x3x32xf32> to vector<1x1x32xf32>
    %329 = vector.shape_cast %328 : vector<1x1x32xf32> to vector<1x32xf32>
    %330 = vector.broadcast %329 : vector<1x32xf32> to vector<64x32xf32>
    %331 = arith.mulf %327, %330 : vector<64x32xf32>
    %332 = arith.addf %322, %331 : vector<64x32xf32>
    %c8_117 = arith.constant 8 : index
    %c0_118 = arith.constant 0 : index
    %333 = vector.load %arg34[%c8_117, %c0_118] : memref<80x32xf32, #tpu.memory_space<vmem>>, vector<64x32xf32>
    %334 = vector.extract_strided_slice %4 {offsets = [4, 0, 0], sizes = [1, 64, 1], strides = [1, 1, 1]} : vector<9x64x1xf32> to vector<1x64x1xf32>
    %335 = vector.shape_cast %334 : vector<1x64x1xf32> to vector<64x1xf32>
    %336 = vector.broadcast %335 : vector<64x1xf32> to vector<64x32xf32>
    %337 = arith.mulf %333, %336 : vector<64x32xf32>
    %338 = vector.extract_strided_slice %291 {offsets = [1, 1, 0], sizes = [1, 1, 32], strides = [1, 1, 1]} : vector<3x3x32xf32> to vector<1x1x32xf32>
    %339 = vector.shape_cast %338 : vector<1x1x32xf32> to vector<1x32xf32>
    %340 = vector.broadcast %339 : vector<1x32xf32> to vector<64x32xf32>
    %341 = arith.mulf %337, %340 : vector<64x32xf32>
    %342 = arith.addf %332, %341 : vector<64x32xf32>
    %c9_119 = arith.constant 9 : index
    %c0_120 = arith.constant 0 : index
    %343 = vector.load %arg34[%c9_119, %c0_120] : memref<80x32xf32, #tpu.memory_space<vmem>>, vector<64x32xf32>
    %344 = vector.extract_strided_slice %4 {offsets = [5, 0, 0], sizes = [1, 64, 1], strides = [1, 1, 1]} : vector<9x64x1xf32> to vector<1x64x1xf32>
    %345 = vector.shape_cast %344 : vector<1x64x1xf32> to vector<64x1xf32>
    %346 = vector.broadcast %345 : vector<64x1xf32> to vector<64x32xf32>
    %347 = arith.mulf %343, %346 : vector<64x32xf32>
    %348 = vector.extract_strided_slice %291 {offsets = [1, 2, 0], sizes = [1, 1, 32], strides = [1, 1, 1]} : vector<3x3x32xf32> to vector<1x1x32xf32>
    %349 = vector.shape_cast %348 : vector<1x1x32xf32> to vector<1x32xf32>
    %350 = vector.broadcast %349 : vector<1x32xf32> to vector<64x32xf32>
    %351 = arith.mulf %347, %350 : vector<64x32xf32>
    %352 = arith.addf %342, %351 : vector<64x32xf32>
    %c11_121 = arith.constant 11 : index
    %c0_122 = arith.constant 0 : index
    %353 = vector.load %arg34[%c11_121, %c0_122] : memref<80x32xf32, #tpu.memory_space<vmem>>, vector<64x32xf32>
    %354 = vector.extract_strided_slice %4 {offsets = [6, 0, 0], sizes = [1, 64, 1], strides = [1, 1, 1]} : vector<9x64x1xf32> to vector<1x64x1xf32>
    %355 = vector.shape_cast %354 : vector<1x64x1xf32> to vector<64x1xf32>
    %356 = vector.broadcast %355 : vector<64x1xf32> to vector<64x32xf32>
    %357 = arith.mulf %353, %356 : vector<64x32xf32>
    %358 = vector.extract_strided_slice %291 {offsets = [2, 0, 0], sizes = [1, 1, 32], strides = [1, 1, 1]} : vector<3x3x32xf32> to vector<1x1x32xf32>
    %359 = vector.shape_cast %358 : vector<1x1x32xf32> to vector<1x32xf32>
    %360 = vector.broadcast %359 : vector<1x32xf32> to vector<64x32xf32>
    %361 = arith.mulf %357, %360 : vector<64x32xf32>
    %362 = arith.addf %352, %361 : vector<64x32xf32>
    %c12_123 = arith.constant 12 : index
    %c0_124 = arith.constant 0 : index
    %363 = vector.load %arg34[%c12_123, %c0_124] : memref<80x32xf32, #tpu.memory_space<vmem>>, vector<64x32xf32>
    %364 = vector.extract_strided_slice %4 {offsets = [7, 0, 0], sizes = [1, 64, 1], strides = [1, 1, 1]} : vector<9x64x1xf32> to vector<1x64x1xf32>
    %365 = vector.shape_cast %364 : vector<1x64x1xf32> to vector<64x1xf32>
    %366 = vector.broadcast %365 : vector<64x1xf32> to vector<64x32xf32>
    %367 = arith.mulf %363, %366 : vector<64x32xf32>
    %368 = vector.extract_strided_slice %291 {offsets = [2, 1, 0], sizes = [1, 1, 32], strides = [1, 1, 1]} : vector<3x3x32xf32> to vector<1x1x32xf32>
    %369 = vector.shape_cast %368 : vector<1x1x32xf32> to vector<1x32xf32>
    %370 = vector.broadcast %369 : vector<1x32xf32> to vector<64x32xf32>
    %371 = arith.mulf %367, %370 : vector<64x32xf32>
    %372 = arith.addf %362, %371 : vector<64x32xf32>
    %c13_125 = arith.constant 13 : index
    %c0_126 = arith.constant 0 : index
    %373 = vector.load %arg34[%c13_125, %c0_126] : memref<80x32xf32, #tpu.memory_space<vmem>>, vector<64x32xf32>
    %374 = vector.extract_strided_slice %4 {offsets = [8, 0, 0], sizes = [1, 64, 1], strides = [1, 1, 1]} : vector<9x64x1xf32> to vector<1x64x1xf32>
    %375 = vector.shape_cast %374 : vector<1x64x1xf32> to vector<64x1xf32>
    %376 = vector.broadcast %375 : vector<64x1xf32> to vector<64x32xf32>
    %377 = arith.mulf %373, %376 : vector<64x32xf32>
    %378 = vector.extract_strided_slice %291 {offsets = [2, 2, 0], sizes = [1, 1, 32], strides = [1, 1, 1]} : vector<3x3x32xf32> to vector<1x1x32xf32>
    %379 = vector.shape_cast %378 : vector<1x1x32xf32> to vector<1x32xf32>
    %380 = vector.broadcast %379 : vector<1x32xf32> to vector<64x32xf32>
    %381 = arith.mulf %377, %380 : vector<64x32xf32>
    %382 = arith.addf %372, %381 : vector<64x32xf32>
    %383 = arith.addf %289, %382 : vector<64x32xf32>
    %c0_127 = arith.constant 0 : index
    %c0_128 = arith.constant 0 : index
    %384 = vector.load %arg17[%c0_127, %c0_128] : memref<16x64xf32, #tpu.memory_space<vmem>>, vector<16x64xf32>
    %cst_129 = arith.constant dense<0.000000e+00> : vector<16x32xf32>
    %385 = tpu.matmul %384, %383, %cst_129 {dimension_numbers = #tpu.dot_dimension_numbers<[1], [0], [0], [1], [0, 0, 1, 1], [], []>} : vector<16x64xf32>, vector<64x32xf32>, vector<16x32xf32> -> vector<16x32xf32>
    %c0_130 = arith.constant 0 : index
    %c0_131 = arith.constant 0 : index
    %386 = vector.load %arg20[%c0_130, %c0_131] : memref<16x16xf32, #tpu.memory_space<vmem>>, vector<16x16xf32>
    %cst_132 = arith.constant 0.000000e+00 : f32
    %387 = vector.broadcast %cst_132 : f32 to vector<16x32xf32>
    %c0_133 = arith.constant 0 : index
    %c0_134 = arith.constant 0 : index
    %c0_135 = arith.constant 0 : index
    %388 = vector.load %arg18[%c0_133, %c0_134, %c0_135] : memref<2x32x32xf32, #tpu.memory_space<vmem>>, vector<1x32x32xf32>
    %389 = vector.shape_cast %388 : vector<1x32x32xf32> to vector<32x32xf32>
    %cst_136 = arith.constant dense<0.000000e+00> : vector<16x32xf32>
    %390 = tpu.matmul %385, %389, %cst_136 {dimension_numbers = #tpu.dot_dimension_numbers<[1], [0], [0], [1], [0, 0, 1, 1], [], []>} : vector<16x32xf32>, vector<32x32xf32>, vector<16x32xf32> -> vector<16x32xf32>
    %cst_137 = arith.constant dense<0.000000e+00> : vector<16x16xf32>
    %391 = tpu.matmul %390, %385, %cst_137 {dimension_numbers = #tpu.dot_dimension_numbers<[1], [1], [0], [0], [0, 0, 1, 0], [], []>} : vector<16x32xf32>, vector<16x32xf32>, vector<16x16xf32> -> vector<16x16xf32>
    %392 = arith.addf %391, %386 : vector<16x16xf32>
    %cst_138 = arith.constant dense<0xFF800000> : vector<16xf32>
    %393 = vector.multi_reduction <maximumf>, %392, %cst_138 [1] : vector<16x16xf32> to vector<16xf32>
    %394 = vector.shape_cast %393 : vector<16xf32> to vector<16x1xf32>
    %395 = vector.broadcast %394 : vector<16x1xf32> to vector<16x16xf32>
    %396 = arith.subf %392, %395 : vector<16x16xf32>
    %397 = math.exp %396 : vector<16x16xf32>
    %cst_139 = arith.constant dense<0.000000e+00> : vector<16xf32>
    %398 = vector.multi_reduction <add>, %397, %cst_139 [1] : vector<16x16xf32> to vector<16xf32>
    %399 = vector.shape_cast %398 : vector<16xf32> to vector<16x1xf32>
    %400 = vector.broadcast %399 : vector<16x1xf32> to vector<16x16xf32>
    %401 = arith.divf %397, %400 : vector<16x16xf32>
    %c0_140 = arith.constant 0 : index
    %c0_141 = arith.constant 0 : index
    %c0_142 = arith.constant 0 : index
    %402 = vector.load %arg19[%c0_140, %c0_141, %c0_142] : memref<2x32x32xf32, #tpu.memory_space<vmem>>, vector<1x32x32xf32>
    %403 = vector.shape_cast %402 : vector<1x32x32xf32> to vector<32x32xf32>
    %cst_143 = arith.constant dense<0.000000e+00> : vector<16x32xf32>
    %404 = tpu.matmul %385, %403, %cst_143 {dimension_numbers = #tpu.dot_dimension_numbers<[1], [0], [0], [1], [0, 0, 1, 1], [], []>} : vector<16x32xf32>, vector<32x32xf32>, vector<16x32xf32> -> vector<16x32xf32>
    %cst_144 = arith.constant dense<0.000000e+00> : vector<16x32xf32>
    %405 = tpu.matmul %401, %404, %cst_144 {dimension_numbers = #tpu.dot_dimension_numbers<[1], [0], [0], [1], [0, 0, 1, 1], [], []>} : vector<16x16xf32>, vector<16x32xf32>, vector<16x32xf32> -> vector<16x32xf32>
    %406 = arith.addf %387, %405 : vector<16x32xf32>
    %c1 = arith.constant 1 : index
    %c0_145 = arith.constant 0 : index
    %c0_146 = arith.constant 0 : index
    %407 = vector.load %arg18[%c1, %c0_145, %c0_146] : memref<2x32x32xf32, #tpu.memory_space<vmem>>, vector<1x32x32xf32>
    %408 = vector.shape_cast %407 : vector<1x32x32xf32> to vector<32x32xf32>
    %cst_147 = arith.constant dense<0.000000e+00> : vector<16x32xf32>
    %409 = tpu.matmul %385, %408, %cst_147 {dimension_numbers = #tpu.dot_dimension_numbers<[1], [0], [0], [1], [0, 0, 1, 1], [], []>} : vector<16x32xf32>, vector<32x32xf32>, vector<16x32xf32> -> vector<16x32xf32>
    %cst_148 = arith.constant dense<0.000000e+00> : vector<16x16xf32>
    %410 = tpu.matmul %409, %385, %cst_148 {dimension_numbers = #tpu.dot_dimension_numbers<[1], [1], [0], [0], [0, 0, 1, 0], [], []>} : vector<16x32xf32>, vector<16x32xf32>, vector<16x16xf32> -> vector<16x16xf32>
    %411 = arith.addf %410, %386 : vector<16x16xf32>
    %cst_149 = arith.constant dense<0xFF800000> : vector<16xf32>
    %412 = vector.multi_reduction <maximumf>, %411, %cst_149 [1] : vector<16x16xf32> to vector<16xf32>
    %413 = vector.shape_cast %412 : vector<16xf32> to vector<16x1xf32>
    %414 = vector.broadcast %413 : vector<16x1xf32> to vector<16x16xf32>
    %415 = arith.subf %411, %414 : vector<16x16xf32>
    %416 = math.exp %415 : vector<16x16xf32>
    %cst_150 = arith.constant dense<0.000000e+00> : vector<16xf32>
    %417 = vector.multi_reduction <add>, %416, %cst_150 [1] : vector<16x16xf32> to vector<16xf32>
    %418 = vector.shape_cast %417 : vector<16xf32> to vector<16x1xf32>
    %419 = vector.broadcast %418 : vector<16x1xf32> to vector<16x16xf32>
    %420 = arith.divf %416, %419 : vector<16x16xf32>
    %c1_151 = arith.constant 1 : index
    %c0_152 = arith.constant 0 : index
    %c0_153 = arith.constant 0 : index
    %421 = vector.load %arg19[%c1_151, %c0_152, %c0_153] : memref<2x32x32xf32, #tpu.memory_space<vmem>>, vector<1x32x32xf32>
    %422 = vector.shape_cast %421 : vector<1x32x32xf32> to vector<32x32xf32>
    %cst_154 = arith.constant dense<0.000000e+00> : vector<16x32xf32>
    %423 = tpu.matmul %385, %422, %cst_154 {dimension_numbers = #tpu.dot_dimension_numbers<[1], [0], [0], [1], [0, 0, 1, 1], [], []>} : vector<16x32xf32>, vector<32x32xf32>, vector<16x32xf32> -> vector<16x32xf32>
    %cst_155 = arith.constant dense<0.000000e+00> : vector<16x32xf32>
    %424 = tpu.matmul %420, %423, %cst_155 {dimension_numbers = #tpu.dot_dimension_numbers<[1], [0], [0], [1], [0, 0, 1, 1], [], []>} : vector<16x16xf32>, vector<16x32xf32>, vector<16x32xf32> -> vector<16x32xf32>
    %425 = arith.addf %406, %424 : vector<16x32xf32>
    %c0_156 = arith.constant 0 : index
    %c0_157 = arith.constant 0 : index
    %426 = vector.load %arg21[%c0_156, %c0_157] : memref<64x16xf32, #tpu.memory_space<vmem>>, vector<64x16xf32>
    %cst_158 = arith.constant dense<0.000000e+00> : vector<64x32xf32>
    %427 = tpu.matmul %426, %425, %cst_158 {dimension_numbers = #tpu.dot_dimension_numbers<[1], [0], [0], [1], [0, 0, 1, 1], [], []>} : vector<64x16xf32>, vector<16x32xf32>, vector<64x32xf32> -> vector<64x32xf32>
    %c0_159 = arith.constant 0 : index
    %c0_160 = arith.constant 0 : index
    %428 = vector.load %arg22[%c0_159, %c0_160] : memref<64x32xf32, #tpu.memory_space<vmem>>, vector<64x32xf32>
    %429 = arith.mulf %427, %428 : vector<64x32xf32>
    %c0_161 = arith.constant 0 : index
    %c0_162 = arith.constant 0 : index
    %430 = vector.load %arg23[%c0_161, %c0_162] : memref<1x32xf32, #tpu.memory_space<vmem>>, vector<1x32xf32>
    %431 = vector.broadcast %430 : vector<1x32xf32> to vector<64x32xf32>
    %432 = arith.addf %429, %431 : vector<64x32xf32>
    %cst_163 = arith.constant dense<0.000000e+00> : vector<4x32xf32>
    %433 = tpu.matmul %5, %432, %cst_163 {dimension_numbers = #tpu.dot_dimension_numbers<[1], [0], [0], [1], [0, 0, 1, 1], [], []>} : vector<4x64xf32>, vector<64x32xf32>, vector<4x32xf32> -> vector<4x32xf32>
    %cst_164 = arith.constant dense<0.000000e+00> : vector<4xf32>
    %434 = vector.multi_reduction <add>, %433, %cst_164 [1] : vector<4x32xf32> to vector<4xf32>
    %435 = vector.shape_cast %434 : vector<4xf32> to vector<4x1xf32>
    %cst_165 = arith.constant 0.001953125 : f32
    %436 = vector.broadcast %cst_165 : f32 to vector<4x1xf32>
    %437 = arith.mulf %435, %436 : vector<4x1xf32>
    %438 = vector.broadcast %437 : vector<4x1xf32> to vector<4x32xf32>
    %439 = vector.broadcast %7 : vector<1x32xf32> to vector<4x32xf32>
    %440 = arith.mulf %438, %439 : vector<4x32xf32>
    %cst_166 = arith.constant dense<0.000000e+00> : vector<64x32xf32>
    %441 = tpu.matmul %6, %440, %cst_166 {dimension_numbers = #tpu.dot_dimension_numbers<[1], [0], [0], [1], [0, 0, 1, 1], [], []>} : vector<64x4xf32>, vector<4x32xf32>, vector<64x32xf32> -> vector<64x32xf32>
    %442 = arith.subf %432, %441 : vector<64x32xf32>
    %443 = arith.mulf %442, %442 : vector<64x32xf32>
    %cst_167 = arith.constant dense<0.000000e+00> : vector<4x32xf32>
    %444 = tpu.matmul %5, %443, %cst_167 {dimension_numbers = #tpu.dot_dimension_numbers<[1], [0], [0], [1], [0, 0, 1, 1], [], []>} : vector<4x64xf32>, vector<64x32xf32>, vector<4x32xf32> -> vector<4x32xf32>
    %cst_168 = arith.constant dense<0.000000e+00> : vector<4xf32>
    %445 = vector.multi_reduction <add>, %444, %cst_168 [1] : vector<4x32xf32> to vector<4xf32>
    %446 = vector.shape_cast %445 : vector<4xf32> to vector<4x1xf32>
    %cst_169 = arith.constant 0.001953125 : f32
    %447 = vector.broadcast %cst_169 : f32 to vector<4x1xf32>
    %448 = arith.mulf %446, %447 : vector<4x1xf32>
    %449 = vector.broadcast %448 : vector<4x1xf32> to vector<4x32xf32>
    %450 = vector.broadcast %7 : vector<1x32xf32> to vector<4x32xf32>
    %451 = arith.mulf %449, %450 : vector<4x32xf32>
    %cst_170 = arith.constant dense<0.000000e+00> : vector<64x32xf32>
    %452 = tpu.matmul %6, %451, %cst_170 {dimension_numbers = #tpu.dot_dimension_numbers<[1], [0], [0], [1], [0, 0, 1, 1], [], []>} : vector<64x4xf32>, vector<4x32xf32>, vector<64x32xf32> -> vector<64x32xf32>
    %cst_171 = arith.constant 9.99999974E-6 : f32
    %453 = vector.broadcast %cst_171 : f32 to vector<64x32xf32>
    %454 = arith.addf %452, %453 : vector<64x32xf32>
    %455 = math.rsqrt %454 : vector<64x32xf32>
    %456 = arith.mulf %442, %455 : vector<64x32xf32>
    %c0_172 = arith.constant 0 : index
    %c0_173 = arith.constant 0 : index
    %457 = vector.load %arg24[%c0_172, %c0_173] : memref<1x32xf32, #tpu.memory_space<vmem>>, vector<1x32xf32>
    %458 = vector.broadcast %457 : vector<1x32xf32> to vector<64x32xf32>
    %459 = arith.mulf %456, %458 : vector<64x32xf32>
    %c0_174 = arith.constant 0 : index
    %c0_175 = arith.constant 0 : index
    %460 = vector.load %arg25[%c0_174, %c0_175] : memref<1x32xf32, #tpu.memory_space<vmem>>, vector<1x32xf32>
    %461 = vector.broadcast %460 : vector<1x32xf32> to vector<64x32xf32>
    %462 = arith.addf %459, %461 : vector<64x32xf32>
    %c0_176 = arith.constant 0 : index
    %c0_177 = arith.constant 0 : index
    %463 = vector.load %arg26[%c0_176, %c0_177] : memref<32x32xf32, #tpu.memory_space<vmem>>, vector<32x32xf32>
    %cst_178 = arith.constant dense<0.000000e+00> : vector<64x32xf32>
    %464 = tpu.matmul %462, %463, %cst_178 {dimension_numbers = #tpu.dot_dimension_numbers<[1], [0], [0], [1], [0, 0, 1, 1], [], []>} : vector<64x32xf32>, vector<32x32xf32>, vector<64x32xf32> -> vector<64x32xf32>
    %465 = arith.addf %383, %464 : vector<64x32xf32>
    %c0_179 = arith.constant 0 : index
    %c0_180 = arith.constant 0 : index
    %466 = vector.load %arg27[%c0_179, %c0_180] : memref<32x128xf32, #tpu.memory_space<vmem>>, vector<32x128xf32>
    %cst_181 = arith.constant dense<0.000000e+00> : vector<64x128xf32>
    %467 = tpu.matmul %465, %466, %cst_181 {dimension_numbers = #tpu.dot_dimension_numbers<[1], [0], [0], [1], [0, 0, 1, 1], [], []>} : vector<64x32xf32>, vector<32x128xf32>, vector<64x128xf32> -> vector<64x128xf32>
    %cst_182 = arith.constant 5.000000e-01 : f32
    %468 = vector.broadcast %cst_182 : f32 to vector<64x128xf32>
    %469 = arith.mulf %468, %467 : vector<64x128xf32>
    %cst_183 = arith.constant 0.707106769 : f32
    %470 = vector.broadcast %cst_183 : f32 to vector<64x128xf32>
    %471 = arith.mulf %467, %470 : vector<64x128xf32>
    %472 = math.absf %471 : vector<64x128xf32>
    %cst_184 = arith.constant 0.327591091 : f32
    %473 = vector.broadcast %cst_184 : f32 to vector<64x128xf32>
    %474 = arith.mulf %473, %472 : vector<64x128xf32>
    %cst_185 = arith.constant 1.000000e+00 : f32
    %475 = vector.broadcast %cst_185 : f32 to vector<64x128xf32>
    %476 = arith.addf %475, %474 : vector<64x128xf32>
    %cst_186 = arith.constant 1.000000e+00 : f32
    %477 = vector.broadcast %cst_186 : f32 to vector<64x128xf32>
    %478 = arith.divf %477, %476 : vector<64x128xf32>
    %cst_187 = arith.constant 1.06140542 : f32
    %479 = vector.broadcast %cst_187 : f32 to vector<64x128xf32>
    %480 = arith.mulf %479, %478 : vector<64x128xf32>
    %cst_188 = arith.constant 1.45315206 : f32
    %481 = vector.broadcast %cst_188 : f32 to vector<64x128xf32>
    %482 = arith.subf %480, %481 : vector<64x128xf32>
    %483 = arith.mulf %482, %478 : vector<64x128xf32>
    %cst_189 = arith.constant 1.42141378 : f32
    %484 = vector.broadcast %cst_189 : f32 to vector<64x128xf32>
    %485 = arith.addf %483, %484 : vector<64x128xf32>
    %486 = arith.mulf %485, %478 : vector<64x128xf32>
    %cst_190 = arith.constant 0.284496725 : f32
    %487 = vector.broadcast %cst_190 : f32 to vector<64x128xf32>
    %488 = arith.subf %486, %487 : vector<64x128xf32>
    %489 = arith.mulf %488, %478 : vector<64x128xf32>
    %cst_191 = arith.constant 0.254829586 : f32
    %490 = vector.broadcast %cst_191 : f32 to vector<64x128xf32>
    %491 = arith.addf %489, %490 : vector<64x128xf32>
    %492 = arith.mulf %491, %478 : vector<64x128xf32>
    %cst_192 = arith.constant 0.000000e+00 : f32
    %493 = vector.broadcast %cst_192 : f32 to vector<64x128xf32>
    %494 = arith.subf %493, %471 : vector<64x128xf32>
    %495 = arith.mulf %494, %471 : vector<64x128xf32>
    %496 = math.exp %495 : vector<64x128xf32>
    %497 = arith.mulf %492, %496 : vector<64x128xf32>
    %cst_193 = arith.constant 1.000000e+00 : f32
    %498 = vector.broadcast %cst_193 : f32 to vector<64x128xf32>
    %499 = arith.subf %498, %497 : vector<64x128xf32>
    %cst_194 = arith.constant 0.000000e+00 : f32
    %500 = vector.broadcast %cst_194 : f32 to vector<64x128xf32>
    %501 = arith.cmpf oge, %471, %500 : vector<64x128xf32>
    %cst_195 = arith.constant 0.000000e+00 : f32
    %502 = vector.broadcast %cst_195 : f32 to vector<64x128xf32>
    %503 = arith.subf %502, %499 : vector<64x128xf32>
    %504 = arith.select %501, %499, %503 : vector<64x128xi1>, vector<64x128xf32>
    %cst_196 = arith.constant 1.000000e+00 : f32
    %505 = vector.broadcast %cst_196 : f32 to vector<64x128xf32>
    %506 = arith.addf %505, %504 : vector<64x128xf32>
    %507 = arith.mulf %469, %506 : vector<64x128xf32>
    %c0_197 = arith.constant 0 : index
    %c0_198 = arith.constant 0 : index
    %508 = vector.load %arg28[%c0_197, %c0_198] : memref<128x32xf32, #tpu.memory_space<vmem>>, vector<128x32xf32>
    %cst_199 = arith.constant dense<0.000000e+00> : vector<64x32xf32>
    %509 = tpu.matmul %507, %508, %cst_199 {dimension_numbers = #tpu.dot_dimension_numbers<[1], [0], [0], [1], [0, 0, 1, 1], [], []>} : vector<64x128xf32>, vector<128x32xf32>, vector<64x32xf32> -> vector<64x32xf32>
    %510 = arith.addf %465, %509 : vector<64x32xf32>
    %cst_200 = arith.constant dense<0.000000e+00> : vector<4x32xf32>
    %511 = tpu.matmul %5, %510, %cst_200 {dimension_numbers = #tpu.dot_dimension_numbers<[1], [0], [0], [1], [0, 0, 1, 1], [], []>} : vector<4x64xf32>, vector<64x32xf32>, vector<4x32xf32> -> vector<4x32xf32>
    %cst_201 = arith.constant 6.250000e-02 : f32
    %512 = vector.broadcast %cst_201 : f32 to vector<4x32xf32>
    %513 = arith.mulf %511, %512 : vector<4x32xf32>
    %c0_202 = arith.constant 0 : index
    %c0_203 = arith.constant 0 : index
    %514 = vector.load %arg31[%c0_202, %c0_203] : memref<32x10xf32, #tpu.memory_space<vmem>>, vector<32x10xf32>
    %cst_204 = arith.constant dense<0.000000e+00> : vector<4x10xf32>
    %515 = tpu.matmul %513, %514, %cst_204 {dimension_numbers = #tpu.dot_dimension_numbers<[1], [0], [0], [1], [0, 0, 1, 1], [], []>} : vector<4x32xf32>, vector<32x10xf32>, vector<4x10xf32> -> vector<4x10xf32>
    %c0_205 = arith.constant 0 : index
    %c0_206 = arith.constant 0 : index
    %516 = vector.load %arg32[%c0_205, %c0_206] : memref<1x10xf32, #tpu.memory_space<vmem>>, vector<1x10xf32>
    %517 = vector.broadcast %516 : vector<1x10xf32> to vector<4x10xf32>
    %518 = arith.addf %515, %517 : vector<4x10xf32>
    %c0_207 = arith.constant 0 : index
    %c0_208 = arith.constant 0 : index
    %c0_209 = arith.constant 0 : index
    %519 = vector.load %arg33[%c0_207, %c0_208, %c0_209] : memref<1x4x10xf32, #tpu.memory_space<vmem>>, vector<1x4x10xf32>
    %520 = vector.shape_cast %519 : vector<1x4x10xf32> to vector<4x10xf32>
    %521 = vector.shape_cast %518 : vector<4x10xf32> to vector<1x4x10xf32>
    tpu.vector_store %arg33[%c0_207, %c0_208, %c0_209], %521 {strides = array<i32>} : memref<1x4x10xf32, #tpu.memory_space<vmem>>, vector<1x4x10xf32>,
    return
  }
  func.func @transform_0(%arg0: i32) -> (i32, i32) {
    %c0_i32 = arith.constant 0 : i32
    %c0_i32_0 = arith.constant 0 : i32
    return %arg0, %c0_i32 : i32, i32
  }
  func.func @transform_1(%arg0: i32) -> (i32, i32) {
    %c0_i32 = arith.constant 0 : i32
    %c0_i32_0 = arith.constant 0 : i32
    %c0_i32_1 = arith.constant 0 : i32
    return %c0_i32, %c0_i32_0 : i32, i32
  }
  func.func @transform_2(%arg0: i32) -> (i32, i32) {
    %c0_i32 = arith.constant 0 : i32
    %c0_i32_0 = arith.constant 0 : i32
    %c0_i32_1 = arith.constant 0 : i32
    return %c0_i32, %c0_i32_0 : i32, i32
  }
  func.func @transform_3(%arg0: i32) -> (i32, i32) {
    %c0_i32 = arith.constant 0 : i32
    %c0_i32_0 = arith.constant 0 : i32
    %c0_i32_1 = arith.constant 0 : i32
    return %c0_i32, %c0_i32_0 : i32, i32
  }
  func.func @transform_4(%arg0: i32) -> (i32, i32, i32) {
    %c0_i32 = arith.constant 0 : i32
    %c0_i32_0 = arith.constant 0 : i32
    %c0_i32_1 = arith.constant 0 : i32
    %c0_i32_2 = arith.constant 0 : i32
    return %c0_i32, %c0_i32_0, %c0_i32_1 : i32, i32, i32
  }
  func.func @transform_5(%arg0: i32) -> (i32, i32, i32) {
    %c0_i32 = arith.constant 0 : i32
    %c0_i32_0 = arith.constant 0 : i32
    %c0_i32_1 = arith.constant 0 : i32
    %c0_i32_2 = arith.constant 0 : i32
    return %c0_i32, %c0_i32_0, %c0_i32_1 : i32, i32, i32
  }
  func.func @transform_6(%arg0: i32) -> (i32, i32) {
    %c0_i32 = arith.constant 0 : i32
    %c0_i32_0 = arith.constant 0 : i32
    %c0_i32_1 = arith.constant 0 : i32
    return %c0_i32, %c0_i32_0 : i32, i32
  }
  func.func @transform_7(%arg0: i32) -> (i32, i32) {
    %c0_i32 = arith.constant 0 : i32
    %c0_i32_0 = arith.constant 0 : i32
    %c0_i32_1 = arith.constant 0 : i32
    return %c0_i32, %c0_i32_0 : i32, i32
  }
  func.func @transform_8(%arg0: i32) -> (i32, i32) {
    %c0_i32 = arith.constant 0 : i32
    %c0_i32_0 = arith.constant 0 : i32
    %c0_i32_1 = arith.constant 0 : i32
    return %c0_i32, %c0_i32_0 : i32, i32
  }
  func.func @transform_9(%arg0: i32) -> (i32, i32, i32) {
    %c0_i32 = arith.constant 0 : i32
    %c0_i32_0 = arith.constant 0 : i32
    %c0_i32_1 = arith.constant 0 : i32
    %c0_i32_2 = arith.constant 0 : i32
    return %c0_i32, %c0_i32_0, %c0_i32_1 : i32, i32, i32
  }
  func.func @transform_10(%arg0: i32) -> (i32, i32) {
    %c0_i32 = arith.constant 0 : i32
    %c0_i32_0 = arith.constant 0 : i32
    %c0_i32_1 = arith.constant 0 : i32
    return %c0_i32, %c0_i32_0 : i32, i32
  }
  func.func @transform_11(%arg0: i32) -> (i32, i32) {
    %c0_i32 = arith.constant 0 : i32
    %c0_i32_0 = arith.constant 0 : i32
    %c0_i32_1 = arith.constant 0 : i32
    return %c0_i32, %c0_i32_0 : i32, i32
  }
  func.func @transform_12(%arg0: i32) -> (i32, i32) {
    %c0_i32 = arith.constant 0 : i32
    %c0_i32_0 = arith.constant 0 : i32
    %c0_i32_1 = arith.constant 0 : i32
    return %c0_i32, %c0_i32_0 : i32, i32
  }
  func.func @transform_13(%arg0: i32) -> (i32, i32) {
    %c0_i32 = arith.constant 0 : i32
    %c0_i32_0 = arith.constant 0 : i32
    %c0_i32_1 = arith.constant 0 : i32
    return %c0_i32, %c0_i32_0 : i32, i32
  }
  func.func @transform_14(%arg0: i32) -> (i32, i32) {
    %c0_i32 = arith.constant 0 : i32
    %c0_i32_0 = arith.constant 0 : i32
    %c0_i32_1 = arith.constant 0 : i32
    return %c0_i32, %c0_i32_0 : i32, i32
  }
  func.func @transform_15(%arg0: i32) -> (i32, i32, i32) {
    %c0_i32 = arith.constant 0 : i32
    %c0_i32_0 = arith.constant 0 : i32
    %c0_i32_1 = arith.constant 0 : i32
    %c0_i32_2 = arith.constant 0 : i32
    return %c0_i32, %c0_i32_0, %c0_i32_1 : i32, i32, i32
  }
  func.func @transform_16(%arg0: i32) -> (i32, i32) {
    %c0_i32 = arith.constant 0 : i32
    %c0_i32_0 = arith.constant 0 : i32
    %c0_i32_1 = arith.constant 0 : i32
    return %c0_i32, %c0_i32_0 : i32, i32
  }
  func.func @transform_17(%arg0: i32) -> (i32, i32, i32) {
    %c0_i32 = arith.constant 0 : i32
    %c0_i32_0 = arith.constant 0 : i32
    %c0_i32_1 = arith.constant 0 : i32
    %c0_i32_2 = arith.constant 0 : i32
    return %c0_i32, %c0_i32_0, %c0_i32_1 : i32, i32, i32
  }
  func.func @transform_18(%arg0: i32) -> (i32, i32, i32) {
    %c0_i32 = arith.constant 0 : i32
    %c0_i32_0 = arith.constant 0 : i32
    %c0_i32_1 = arith.constant 0 : i32
    %c0_i32_2 = arith.constant 0 : i32
    return %c0_i32, %c0_i32_0, %c0_i32_1 : i32, i32, i32
  }
  func.func @transform_19(%arg0: i32) -> (i32, i32) {
    %c0_i32 = arith.constant 0 : i32
    %c0_i32_0 = arith.constant 0 : i32
    %c0_i32_1 = arith.constant 0 : i32
    return %c0_i32, %c0_i32_0 : i32, i32
  }
  func.func @transform_20(%arg0: i32) -> (i32, i32) {
    %c0_i32 = arith.constant 0 : i32
    %c0_i32_0 = arith.constant 0 : i32
    %c0_i32_1 = arith.constant 0 : i32
    return %c0_i32, %c0_i32_0 : i32, i32
  }
  func.func @transform_21(%arg0: i32) -> (i32, i32) {
    %c0_i32 = arith.constant 0 : i32
    %c0_i32_0 = arith.constant 0 : i32
    %c0_i32_1 = arith.constant 0 : i32
    return %c0_i32, %c0_i32_0 : i32, i32
  }
  func.func @transform_22(%arg0: i32) -> (i32, i32) {
    %c0_i32 = arith.constant 0 : i32
    %c0_i32_0 = arith.constant 0 : i32
    %c0_i32_1 = arith.constant 0 : i32
    return %c0_i32, %c0_i32_0 : i32, i32
  }
  func.func @transform_23(%arg0: i32) -> (i32, i32) {
    %c0_i32 = arith.constant 0 : i32
    %c0_i32_0 = arith.constant 0 : i32
    %c0_i32_1 = arith.constant 0 : i32
    return %c0_i32, %c0_i32_0 : i32, i32
  }
  func.func @transform_24(%arg0: i32) -> (i32, i32) {
    %c0_i32 = arith.constant 0 : i32
    %c0_i32_0 = arith.constant 0 : i32
    %c0_i32_1 = arith.constant 0 : i32
    return %c0_i32, %c0_i32_0 : i32, i32
  }
  func.func @transform_25(%arg0: i32) -> (i32, i32) {
    %c0_i32 = arith.constant 0 : i32
    %c0_i32_0 = arith.constant 0 : i32
    %c0_i32_1 = arith.constant 0 : i32
    return %c0_i32, %c0_i32_0 : i32, i32
  }
  func.func @transform_26(%arg0: i32) -> (i32, i32) {
    %c0_i32 = arith.constant 0 : i32
    %c0_i32_0 = arith.constant 0 : i32
    %c0_i32_1 = arith.constant 0 : i32
    return %c0_i32, %c0_i32_0 : i32, i32
  }
  func.func @transform_27(%arg0: i32) -> (i32, i32) {
    %c0_i32 = arith.constant 0 : i32
    %c0_i32_0 = arith.constant 0 : i32
    %c0_i32_1 = arith.constant 0 : i32
    return %c0_i32, %c0_i32_0 : i32, i32
  }
  func.func @transform_28(%arg0: i32) -> (i32, i32) {
    %c0_i32 = arith.constant 0 : i32
    %c0_i32_0 = arith.constant 0 : i32
    %c0_i32_1 = arith.constant 0 : i32
    return %c0_i32, %c0_i32_0 : i32, i32
  }
  func.func @transform_29(%arg0: i32) -> (i32, i32) {
    %c0_i32 = arith.constant 0 : i32
    %c0_i32_0 = arith.constant 0 : i32
    %c0_i32_1 = arith.constant 0 : i32
    return %c0_i32, %c0_i32_0 : i32, i32
  }
  func.func @transform_30(%arg0: i32) -> (i32, i32) {
    %c0_i32 = arith.constant 0 : i32
    %c0_i32_0 = arith.constant 0 : i32
    %c0_i32_1 = arith.constant 0 : i32
    return %c0_i32, %c0_i32_0 : i32, i32
  }
  func.func @transform_31(%arg0: i32) -> (i32, i32) {
    %c0_i32 = arith.constant 0 : i32
    %c0_i32_0 = arith.constant 0 : i32
    %c0_i32_1 = arith.constant 0 : i32
    return %c0_i32, %c0_i32_0 : i32, i32
  }
  func.func @transform_32(%arg0: i32) -> (i32, i32, i32) {
    %c0_i32 = arith.constant 0 : i32
    %c0_i32_0 = arith.constant 0 : i32
    %c0_i32_1 = arith.constant 0 : i32
    return %arg0, %c0_i32, %c0_i32_0 : i32, i32, i32
  }
}

</mosaic_0001>

<llo_original>
// kernel: edgevit_forward.1
$region0: #{edgevit_forward.1}
  #allocation0 [shape = 'u32[]', space=smem, size = 0x4, offset = 0x4, fixed_abs, tag = 'smem constant byte address 0x4 - core index']
  #allocation1 [shape = 'u32[72,128]{1,0:T(1,128)}', space=vmem, size = 0x9000, scoped, tag = 'internal scratch']
  #allocation2 [shape = 'f32[80,32]{1,0:T(8,128)}', space=vmem, size = 0xa000, scoped, tag = 'scratch operand']
  %s0 = inlined_call_operand.smem [shape: u32[33], index: -1, kind: input, shape index: {}]
  %s1 = sld [smem:[%s0]]
  %s2 = scalar_lea.smem %s0, 1
  %s3 = sld [smem:[%s2]]
  %s4 = scalar_lea.smem %s0, 2
  %s5 = sld [smem:[%s4]]
  %s6 = scalar_lea.smem %s0, 3
  %s7 = sld [smem:[%s6]]
  %s8 = scalar_lea.smem %s0, 4
  %s9 = sld [smem:[%s8]]
  %s10 = scalar_lea.smem %s0, 5
  %s11 = sld [smem:[%s10]]
  %s12 = scalar_lea.smem %s0, 6
  %s13 = sld [smem:[%s12]]
  %s14 = scalar_lea.smem %s0, 7
  %s15 = sld [smem:[%s14]]
  %s16 = scalar_lea.smem %s0, 8
  %s17 = sld [smem:[%s16]]
  %s18 = scalar_lea.smem %s0, 9
  %s19 = sld [smem:[%s18]]
  %s20 = scalar_lea.smem %s0, 10
  %s21 = sld [smem:[%s20]]
  %s22 = scalar_lea.smem %s0, 11
  %s23 = sld [smem:[%s22]]
  %s24 = scalar_lea.smem %s0, 12
  %s25 = sld [smem:[%s24]]
  %s26 = scalar_lea.smem %s0, 13
  %s27 = sld [smem:[%s26]]
  %s28 = scalar_lea.smem %s0, 14
  %s29 = sld [smem:[%s28]]
  %s30 = scalar_lea.smem %s0, 15
  %s31 = sld [smem:[%s30]]
  %s32 = scalar_lea.smem %s0, 16
  %s33 = sld [smem:[%s32]]
  %s34 = scalar_lea.smem %s0, 17
  %s35 = sld [smem:[%s34]]
  %s36 = scalar_lea.smem %s0, 18
  %s37 = sld [smem:[%s36]]
  %s38 = scalar_lea.smem %s0, 19
  %s39 = sld [smem:[%s38]]
  %s40 = scalar_lea.smem %s0, 20
  %s41 = sld [smem:[%s40]]
  %s42 = scalar_lea.smem %s0, 21
  %s43 = sld [smem:[%s42]]
  %s44 = scalar_lea.smem %s0, 22
  %s45 = sld [smem:[%s44]]
  %s46 = scalar_lea.smem %s0, 23
  %s47 = sld [smem:[%s46]]
  %s48 = scalar_lea.smem %s0, 24
  %s49 = sld [smem:[%s48]]
  %s50 = scalar_lea.smem %s0, 25
  %s51 = sld [smem:[%s50]]
  %s52 = scalar_lea.smem %s0, 26
  %s53 = sld [smem:[%s52]]
  %s54 = scalar_lea.smem %s0, 27
  %s55 = sld [smem:[%s54]]
  %s56 = scalar_lea.smem %s0, 28
  %s57 = sld [smem:[%s56]]
  %s58 = scalar_lea.smem %s0, 29
  %s59 = sld [smem:[%s58]]
  %s60 = scalar_lea.smem %s0, 30
  %s61 = sld [smem:[%s60]]
  %s62 = scalar_lea.smem %s0, 31
  %s63 = sld [smem:[%s62]]
  %s64 = scalar_lea.smem %s0, 32
  %s65 = sld [smem:[%s64]]
  %s66 = sld [smem:[#allocation0]]
  $region161: #{edgevit_forward.1} parent=0
    _
  %s68 = ssub.s32 1, %s66
  %s69 = scalar_select 0, %s68, %s66
  $region1: #{edgevit_forward.1} parent=0
    #allocation3 [shape = 'u8[4096]{0}', space=vmem, size = 0x1000, scoped, tag = 'output window, operand 0']
    #allocation4 [shape = 's32[2]{0}', space=sflag, size = 0x8, scoped, tag = 'scoped memory for edgevit_forward.1']
    %70 = vsyncpa [#allocation4], 0
    %s71 = scalar_lea.sflag [#allocation4], 1
    %72 = vsyncpa %s71, 0
    loop: start=0, step=1, limit=4
    $region2: #{edgevit_forward.1} parent=1 // loop_pre_header
      _
    $region3: #{edgevit_forward.1} parent=1 // loop_header
      %s74 = sphi 0, %s78
      %p75 = scmp.ge.s32.totalorder %s74, 4
      %s84 = sphi 0, %s86
      %s87 = sphi 0, %s84
      %s88 = sphi 0, %s87
      %s104 = sphi 0, %s88
      %s108 = sphi 0, %s108
      %s110 = sphi 0, %s108
      %s111 = sphi 0, %s110
      %s125 = sphi 0, %s111
      %s129 = sphi 0, %s129
      %s131 = sphi 0, %s129
      %s132 = sphi 0, %s131
      %s146 = sphi 0, %s132
      %s150 = sphi 0, %s150
      %s152 = sphi 0, %s150
      %s153 = sphi 0, %s152
      %s167 = sphi 0, %s153
      %s171 = sphi 0, %s171
      %s173 = sphi 0, %s171
      %s174 = sphi 0, %s173
      %s188 = sphi 0, %s174
      %s192 = sphi 0, %s192
      %s194 = sphi 0, %s192
      %s195 = sphi 0, %s194
      %s209 = sphi 0, %s195
      %s213 = sphi 0, %s213
      %s215 = sphi 0, %s213
      %s216 = sphi 0, %s215
      %s230 = sphi 0, %s216
      %s234 = sphi 0, %s234
      %s236 = sphi 0, %s234
      %s237 = sphi 0, %s236
      %s251 = sphi 0, %s237
      %s255 = sphi 0, %s255
      %s257 = sphi 0, %s255
      %s258 = sphi 0, %s257
      %s272 = sphi 0, %s258
      %s276 = sphi 0, %s276
      %s278 = sphi 0, %s276
      %s279 = sphi 0, %s278
      %s293 = sphi 0, %s279
      %s297 = sphi 0, %s297
      %s299 = sphi 0, %s297
      %s300 = sphi 0, %s299
      %s314 = sphi 0, %s300
      %s318 = sphi 0, %s318
      %s320 = sphi 0, %s318
      %s321 = sphi 0, %s320
      %s335 = sphi 0, %s321
      %s339 = sphi 0, %s339
      %s341 = sphi 0, %s339
      %s342 = sphi 0, %s341
      %s356 = sphi 0, %s342
      %s360 = sphi 0, %s360
      %s362 = sphi 0, %s360
      %s363 = sphi 0, %s362
      %s377 = sphi 0, %s363
      %s381 = sphi 0, %s381
      %s383 = sphi 0, %s381
      %s384 = sphi 0, %s383
      %s398 = sphi 0, %s384
      %s402 = sphi 0, %s402
      %s404 = sphi 0, %s402
      %s405 = sphi 0, %s404
      %s419 = sphi 0, %s405
      %s423 = sphi 0, %s423
      %s425 = sphi 0, %s423
      %s426 = sphi 0, %s425
      %s440 = sphi 0, %s426
      %s444 = sphi 0, %s444
      %s446 = sphi 0, %s444
      %s447 = sphi 0, %s446
      %s461 = sphi 0, %s447
      %s465 = sphi 0, %s465
      %s467 = sphi 0, %s465
      %s468 = sphi 0, %s467
      %s482 = sphi 0, %s468
      %s486 = sphi 0, %s486
      %s488 = sphi 0, %s486
      %s489 = sphi 0, %s488
      %s503 = sphi 0, %s489
      %s507 = sphi 0, %s507
      %s509 = sphi 0, %s507
      %s510 = sphi 0, %s509
      %s524 = sphi 0, %s510
      %s528 = sphi 0, %s528
      %s530 = sphi 0, %s528
      %s531 = sphi 0, %s530
      %s545 = sphi 0, %s531
      %s549 = sphi 0, %s549
      %s551 = sphi 0, %s549
      %s552 = sphi 0, %s551
      %s566 = sphi 0, %s552
      %s570 = sphi 0, %s570
      %s572 = sphi 0, %s570
      %s573 = sphi 0, %s572
      %s587 = sphi 0, %s573
      %s591 = sphi 0, %s591
      %s593 = sphi 0, %s591
      %s594 = sphi 0, %s593
      %s608 = sphi 0, %s594
      %s612 = sphi 0, %s612
      %s614 = sphi 0, %s612
      %s615 = sphi 0, %s614
      %s629 = sphi 0, %s615
      %s633 = sphi 0, %s633
      %s635 = sphi 0, %s633
      %s636 = sphi 0, %s635
      %s650 = sphi 0, %s636
      %s654 = sphi 0, %s654
      %s656 = sphi 0, %s654
      %s657 = sphi 0, %s656
      %s671 = sphi 0, %s657
      %s675 = sphi 0, %s675
      %s677 = sphi 0, %s675
      %s678 = sphi 0, %s677
      %s692 = sphi 0, %s678
      %s696 = sphi 0, %s696
      %s698 = sphi 0, %s696
      %s699 = sphi 0, %s698
      %s713 = sphi 0, %s699
      %s717 = sphi 0, %s717
      %s719 = sphi 0, %s717
      %s720 = sphi 0, %s719
      %s734 = sphi 0, %s720
      %s738 = sphi 0, %s738
      %s740 = sphi 0, %s738
      %s741 = sphi 0, %s740
      %s755 = sphi 0, %s741
      %s761 = sphi 0, %s763
      %s764 = sphi 0, %s761
      %s765 = sphi 0, %s764
      %s781 = sphi 0, %s765
    $region4: #{edgevit_forward.1} parent=1 // loop_header_branch
      %77 = sbr.rel (%p75) target = $region8
    $region5: #{edgevit_forward.1} parent=1 // loop_body
      %s79 = ssub.s32 %s74, 1
      %s80 = ssub.s32 %s74, 2
      %s81 = sadd.s32 %s74, 1
      %s82 = ssub.s32 %s74, %s81
      %p83 = scmp.eq.s32.totalorder %s82, 0
      %s85 = sadd.s32 %s84, 1
      %s86 = scalar_select %p83, %s84, %s85
      %p89 = pneg %p83
      %p90 = scmp.eq.s32.totalorder %s74, 1
      %p91 = por %p89, %p90
      %p92 = scmp.ne.s32.totalorder %s84, %s87
      %p93 = scmp.eq.s32.totalorder %s74, 0
      %p94 = por %p92, %p93
      %p95 = scmp.ne.s32.totalorder %s84, %s87
      %p96 = scmp.eq.s32.totalorder %s79, 1
      %p97 = por %p95, %p96
      %p98 = scmp.ne.s32.totalorder %s87, %s88
      %p99 = scmp.eq.s32.totalorder %s79, 0
      %p100 = por %p98, %p99
      %p101 = scmp.ne.s32.totalorder %s87, %s88
      %p102 = scmp.eq.s32.totalorder %s80, 1
      %p103 = por %p101, %p102
      %p105 = scmp.ne.s32.totalorder %s88, %s104
      %p106 = scmp.eq.s32.totalorder %s80, 0
      %p107 = por %p105, %p106
      %s109 = sadd.s32 %s108, 1
      %p112 = scmp.eq.s32.totalorder %s74, 1
      %p113 = scmp.ne.s32.totalorder %s108, %s110
      %p114 = scmp.eq.s32.totalorder %s74, 0
      %p115 = por %p113, %p114
      %p116 = scmp.ne.s32.totalorder %s108, %s110
      %p117 = scmp.eq.s32.totalorder %s79, 1
      %p118 = por %p116, %p117
      %p119 = scmp.ne.s32.totalorder %s110, %s111
      %p120 = scmp.eq.s32.totalorder %s79, 0
      %p121 = por %p119, %p120
      %p122 = scmp.ne.s32.totalorder %s110, %s111
      %p123 = scmp.eq.s32.totalorder %s80, 1
      %p124 = por %p122, %p123
      %p126 = scmp.ne.s32.totalorder %s111, %s125
      %p127 = scmp.eq.s32.totalorder %s80, 0
      %p128 = por %p126, %p127
      %s130 = sadd.s32 %s129, 1
      %p133 = scmp.eq.s32.totalorder %s74, 1
      %p134 = scmp.ne.s32.totalorder %s129, %s131
      %p135 = scmp.eq.s32.totalorder %s74, 0
      %p136 = por %p134, %p135
      %p137 = scmp.ne.s32.totalorder %s129, %s131
      %p138 = scmp.eq.s32.totalorder %s79, 1
      %p139 = por %p137, %p138
      %p140 = scmp.ne.s32.totalorder %s131, %s132
      %p141 = scmp.eq.s32.totalorder %s79, 0
      %p142 = por %p140, %p141
      %p143 = scmp.ne.s32.totalorder %s131, %s132
      %p144 = scmp.eq.s32.totalorder %s80, 1
      %p145 = por %p143, %p144
      %p147 = scmp.ne.s32.totalorder %s132, %s146
      %p148 = scmp.eq.s32.totalorder %s80, 0
      %p149 = por %p147, %p148
      %s151 = sadd.s32 %s150, 1
      %p154 = scmp.eq.s32.totalorder %s74, 1
      %p155 = scmp.ne.s32.totalorder %s150, %s152
      %p156 = scmp.eq.s32.totalorder %s74, 0
      %p157 = por %p155, %p156
      %p158 = scmp.ne.s32.totalorder %s150, %s152
      %p159 = scmp.eq.s32.totalorder %s79, 1
      %p160 = por %p158, %p159
      %p161 = scmp.ne.s32.totalorder %s152, %s153
      %p162 = scmp.eq.s32.totalorder %s79, 0
      %p163 = por %p161, %p162
      %p164 = scmp.ne.s32.totalorder %s152, %s153
      %p165 = scmp.eq.s32.totalorder %s80, 1
      %p166 = por %p164, %p165
      %p168 = scmp.ne.s32.totalorder %s153, %s167
      %p169 = scmp.eq.s32.totalorder %s80, 0
      %p170 = por %p168, %p169
      %s172 = sadd.s32 %s171, 1
      %p175 = scmp.eq.s32.totalorder %s74, 1
      %p176 = scmp.ne.s32.totalorder %s171, %s173
      %p177 = scmp.eq.s32.totalorder %s74, 0
      %p178 = por %p176, %p177
      %p179 = scmp.ne.s32.totalorder %s171, %s173
      %p180 = scmp.eq.s32.totalorder %s79, 1
      %p181 = por %p179, %p180
      %p182 = scmp.ne.s32.totalorder %s173, %s174
      %p183 = scmp.eq.s32.totalorder %s79, 0
      %p184 = por %p182, %p183
      %p185 = scmp.ne.s32.totalorder %s173, %s174
      %p186 = scmp.eq.s32.totalorder %s80, 1
      %p187 = por %p185, %p186
      %p189 = scmp.ne.s32.totalorder %s174, %s188
      %p190 = scmp.eq.s32.totalorder %s80, 0
      %p191 = por %p189, %p190
      %s193 = sadd.s32 %s192, 1
      %p196 = scmp.eq.s32.totalorder %s74, 1
      %p197 = scmp.ne.s32.totalorder %s192, %s194
      %p198 = scmp.eq.s32.totalorder %s74, 0
      %p199 = por %p197, %p198
      %p200 = scmp.ne.s32.totalorder %s192, %s194
      %p201 = scmp.eq.s32.totalorder %s79, 1
      %p202 = por %p200, %p201
      %p203 = scmp.ne.s32.totalorder %s194, %s195
      %p204 = scmp.eq.s32.totalorder %s79, 0
      %p205 = por %p203, %p204
      %p206 = scmp.ne.s32.totalorder %s194, %s195
      %p207 = scmp.eq.s32.totalorder %s80, 1
      %p208 = por %p206, %p207
      %p210 = scmp.ne.s32.totalorder %s195, %s209
      %p211 = scmp.eq.s32.totalorder %s80, 0
      %p212 = por %p210, %p211
      %s214 = sadd.s32 %s213, 1
      %p217 = scmp.eq.s32.totalorder %s74, 1
      %p218 = scmp.ne.s32.totalorder %s213, %s215
      %p219 = scmp.eq.s32.totalorder %s74, 0
      %p220 = por %p218, %p219
      %p221 = scmp.ne.s32.totalorder %s213, %s215
      %p222 = scmp.eq.s32.totalorder %s79, 1
      %p223 = por %p221, %p222
      %p224 = scmp.ne.s32.totalorder %s215, %s216
      %p225 = scmp.eq.s32.totalorder %s79, 0
      %p226 = por %p224, %p225
      %p227 = scmp.ne.s32.totalorder %s215, %s216
      %p228 = scmp.eq.s32.totalorder %s80, 1
      %p229 = por %p227, %p228
      %p231 = scmp.ne.s32.totalorder %s216, %s230
      %p232 = scmp.eq.s32.totalorder %s80, 0
      %p233 = por %p231, %p232
      %s235 = sadd.s32 %s234, 1
      %p238 = scmp.eq.s32.totalorder %s74, 1
      %p239 = scmp.ne.s32.totalorder %s234, %s236
      %p240 = scmp.eq.s32.totalorder %s74, 0
      %p241 = por %p239, %p240
      %p242 = scmp.ne.s32.totalorder %s234, %s236
      %p243 = scmp.eq.s32.totalorder %s79, 1
      %p244 = por %p242, %p243
      %p245 = scmp.ne.s32.totalorder %s236, %s237
      %p246 = scmp.eq.s32.totalorder %s79, 0
      %p247 = por %p245, %p246
      %p248 = scmp.ne.s32.totalorder %s236, %s237
      %p249 = scmp.eq.s32.totalorder %s80, 1
      %p250 = por %p248, %p249
      %p252 = scmp.ne.s32.totalorder %s237, %s251
      %p253 = scmp.eq.s32.totalorder %s80, 0
      %p254 = por %p252, %p253
      %s256 = sadd.s32 %s255, 1
      %p259 = scmp.eq.s32.totalorder %s74, 1
      %p260 = scmp.ne.s32.totalorder %s255, %s257
      %p261 = scmp.eq.s32.totalorder %s74, 0
      %p262 = por %p260, %p261
      %p263 = scmp.ne.s32.totalorder %s255, %s257
      %p264 = scmp.eq.s32.totalorder %s79, 1
      %p265 = por %p263, %p264
      %p266 = scmp.ne.s32.totalorder %s257, %s258
      %p267 = scmp.eq.s32.totalorder %s79, 0
      %p268 = por %p266, %p267
      %p269 = scmp.ne.s32.totalorder %s257, %s258
      %p270 = scmp.eq.s32.totalorder %s80, 1
      %p271 = por %p269, %p270
      %p273 = scmp.ne.s32.totalorder %s258, %s272
      %p274 = scmp.eq.s32.totalorder %s80, 0
      %p275 = por %p273, %p274
      %s277 = sadd.s32 %s276, 1
      %p280 = scmp.eq.s32.totalorder %s74, 1
      %p281 = scmp.ne.s32.totalorder %s276, %s278
      %p282 = scmp.eq.s32.totalorder %s74, 0
      %p283 = por %p281, %p282
      %p284 = scmp.ne.s32.totalorder %s276, %s278
      %p285 = scmp.eq.s32.totalorder %s79, 1
      %p286 = por %p284, %p285
      %p287 = scmp.ne.s32.totalorder %s278, %s279
      %p288 = scmp.eq.s32.totalorder %s79, 0
      %p289 = por %p287, %p288
      %p290 = scmp.ne.s32.totalorder %s278, %s279
      %p291 = scmp.eq.s32.totalorder %s80, 1
      %p292 = por %p290, %p291
      %p294 = scmp.ne.s32.totalorder %s279, %s293
      %p295 = scmp.eq.s32.totalorder %s80, 0
      %p296 = por %p294, %p295
      %s298 = sadd.s32 %s297, 1
      %p301 = scmp.eq.s32.totalorder %s74, 1
      %p302 = scmp.ne.s32.totalorder %s297, %s299
      %p303 = scmp.eq.s32.totalorder %s74, 0
      %p304 = por %p302, %p303
      %p305 = scmp.ne.s32.totalorder %s297, %s299
      %p306 = scmp.eq.s32.totalorder %s79, 1
      %p307 = por %p305, %p306
      %p308 = scmp.ne.s32.totalorder %s299, %s300
      %p309 = scmp.eq.s32.totalorder %s79, 0
      %p310 = por %p308, %p309
      %p311 = scmp.ne.s32.totalorder %s299, %s300
      %p312 = scmp.eq.s32.totalorder %s80, 1
      %p313 = por %p311, %p312
      %p315 = scmp.ne.s32.totalorder %s300, %s314
      %p316 = scmp.eq.s32.totalorder %s80, 0
      %p317 = por %p315, %p316
      %s319 = sadd.s32 %s318, 1
      %p322 = scmp.eq.s32.totalorder %s74, 1
      %p323 = scmp.ne.s32.totalorder %s318, %s320
      %p324 = scmp.eq.s32.totalorder %s74, 0
      %p325 = por %p323, %p324
      %p326 = scmp.ne.s32.totalorder %s318, %s320
      %p327 = scmp.eq.s32.totalorder %s79, 1
      %p328 = por %p326, %p327
      %p329 = scmp.ne.s32.totalorder %s320, %s321
      %p330 = scmp.eq.s32.totalorder %s79, 0
      %p331 = por %p329, %p330
      %p332 = scmp.ne.s32.totalorder %s320, %s321
      %p333 = scmp.eq.s32.totalorder %s80, 1
      %p334 = por %p332, %p333
      %p336 = scmp.ne.s32.totalorder %s321, %s335
      %p337 = scmp.eq.s32.totalorder %s80, 0
      %p338 = por %p336, %p337
      %s340 = sadd.s32 %s339, 1
      %p343 = scmp.eq.s32.totalorder %s74, 1
      %p344 = scmp.ne.s32.totalorder %s339, %s341
      %p345 = scmp.eq.s32.totalorder %s74, 0
      %p346 = por %p344, %p345
      %p347 = scmp.ne.s32.totalorder %s339, %s341
      %p348 = scmp.eq.s32.totalorder %s79, 1
      %p349 = por %p347, %p348
      %p350 = scmp.ne.s32.totalorder %s341, %s342
      %p351 = scmp.eq.s32.totalorder %s79, 0
      %p352 = por %p350, %p351
      %p353 = scmp.ne.s32.totalorder %s341, %s342
      %p354 = scmp.eq.s32.totalorder %s80, 1
      %p355 = por %p353, %p354
      %p357 = scmp.ne.s32.totalorder %s342, %s356
      %p358 = scmp.eq.s32.totalorder %s80, 0
      %p359 = por %p357, %p358
      %s361 = sadd.s32 %s360, 1
      %p364 = scmp.eq.s32.totalorder %s74, 1
      %p365 = scmp.ne.s32.totalorder %s360, %s362
      %p366 = scmp.eq.s32.totalorder %s74, 0
      %p367 = por %p365, %p366
      %p368 = scmp.ne.s32.totalorder %s360, %s362
      %p369 = scmp.eq.s32.totalorder %s79, 1
      %p370 = por %p368, %p369
      %p371 = scmp.ne.s32.totalorder %s362, %s363
      %p372 = scmp.eq.s32.totalorder %s79, 0
      %p373 = por %p371, %p372
      %p374 = scmp.ne.s32.totalorder %s362, %s363
      %p375 = scmp.eq.s32.totalorder %s80, 1
      %p376 = por %p374, %p375
      %p378 = scmp.ne.s32.totalorder %s363, %s377
      %p379 = scmp.eq.s32.totalorder %s80, 0
      %p380 = por %p378, %p379
      %s382 = sadd.s32 %s381, 1
      %p385 = scmp.eq.s32.totalorder %s74, 1
      %p386 = scmp.ne.s32.totalorder %s381, %s383
      %p387 = scmp.eq.s32.totalorder %s74, 0
      %p388 = por %p386, %p387
      %p389 = scmp.ne.s32.totalorder %s381, %s383
      %p390 = scmp.eq.s32.totalorder %s79, 1
      %p391 = por %p389, %p390
      %p392 = scmp.ne.s32.totalorder %s383, %s384
      %p393 = scmp.eq.s32.totalorder %s79, 0
      %p394 = por %p392, %p393
      %p395 = scmp.ne.s32.totalorder %s383, %s384
      %p396 = scmp.eq.s32.totalorder %s80, 1
      %p397 = por %p395, %p396
      %p399 = scmp.ne.s32.totalorder %s384, %s398
      %p400 = scmp.eq.s32.totalorder %s80, 0
      %p401 = por %p399, %p400
      %s403 = sadd.s32 %s402, 1
      %p406 = scmp.eq.s32.totalorder %s74, 1
      %p407 = scmp.ne.s32.totalorder %s402, %s404
      %p408 = scmp.eq.s32.totalorder %s74, 0
      %p409 = por %p407, %p408
      %p410 = scmp.ne.s32.totalorder %s402, %s404
      %p411 = scmp.eq.s32.totalorder %s79, 1
      %p412 = por %p410, %p411
      %p413 = scmp.ne.s32.totalorder %s404, %s405
      %p414 = scmp.eq.s32.totalorder %s79, 0
      %p415 = por %p413, %p414
      %p416 = scmp.ne.s32.totalorder %s404, %s405
      %p417 = scmp.eq.s32.totalorder %s80, 1
      %p418 = por %p416, %p417
      %p420 = scmp.ne.s32.totalorder %s405, %s419
      %p421 = scmp.eq.s32.totalorder %s80, 0
      %p422 = por %p420, %p421
      %s424 = sadd.s32 %s423, 1
      %p427 = scmp.eq.s32.totalorder %s74, 1
      %p428 = scmp.ne.s32.totalorder %s423, %s425
      %p429 = scmp.eq.s32.totalorder %s74, 0
      %p430 = por %p428, %p429
      %p431 = scmp.ne.s32.totalorder %s423, %s425
      %p432 = scmp.eq.s32.totalorder %s79, 1
      %p433 = por %p431, %p432
      %p434 = scmp.ne.s32.totalorder %s425, %s426
      %p435 = scmp.eq.s32.totalorder %s79, 0
      %p436 = por %p434, %p435
      %p437 = scmp.ne.s32.totalorder %s425, %s426
      %p438 = scmp.eq.s32.totalorder %s80, 1
      %p439 = por %p437, %p438
      %p441 = scmp.ne.s32.totalorder %s426, %s440
      %p442 = scmp.eq.s32.totalorder %s80, 0
      %p443 = por %p441, %p442
      %s445 = sadd.s32 %s444, 1
      %p448 = scmp.eq.s32.totalorder %s74, 1
      %p449 = scmp.ne.s32.totalorder %s444, %s446
      %p450 = scmp.eq.s32.totalorder %s74, 0
      %p451 = por %p449, %p450
      %p452 = scmp.ne.s32.totalorder %s444, %s446
      %p453 = scmp.eq.s32.totalorder %s79, 1
      %p454 = por %p452, %p453
      %p455 = scmp.ne.s32.totalorder %s446, %s447
      %p456 = scmp.eq.s32.totalorder %s79, 0
      %p457 = por %p455, %p456
      %p458 = scmp.ne.s32.totalorder %s446, %s447
      %p459 = scmp.eq.s32.totalorder %s80, 1
      %p460 = por %p458, %p459
      %p462 = scmp.ne.s32.totalorder %s447, %s461
      %p463 = scmp.eq.s32.totalorder %s80, 0
      %p464 = por %p462, %p463
      %s466 = sadd.s32 %s465, 1
      %p469 = scmp.eq.s32.totalorder %s74, 1
      %p470 = scmp.ne.s32.totalorder %s465, %s467
      %p471 = scmp.eq.s32.totalorder %s74, 0
      %p472 = por %p470, %p471
      %p473 = scmp.ne.s32.totalorder %s465, %s467
      %p474 = scmp.eq.s32.totalorder %s79, 1
      %p475 = por %p473, %p474
      %p476 = scmp.ne.s32.totalorder %s467, %s468
      %p477 = scmp.eq.s32.totalorder %s79, 0
      %p478 = por %p476, %p477
      %p479 = scmp.ne.s32.totalorder %s467, %s468
      %p480 = scmp.eq.s32.totalorder %s80, 1
      %p481 = por %p479, %p480
      %p483 = scmp.ne.s32.totalorder %s468, %s482
      %p484 = scmp.eq.s32.totalorder %s80, 0
      %p485 = por %p483, %p484
      %s487 = sadd.s32 %s486, 1
      %p490 = scmp.eq.s32.totalorder %s74, 1
      %p491 = scmp.ne.s32.totalorder %s486, %s488
      %p492 = scmp.eq.s32.totalorder %s74, 0
      %p493 = por %p491, %p492
      %p494 = scmp.ne.s32.totalorder %s486, %s488
      %p495 = scmp.eq.s32.totalorder %s79, 1
      %p496 = por %p494, %p495
      %p497 = scmp.ne.s32.totalorder %s488, %s489
      %p498 = scmp.eq.s32.totalorder %s79, 0
      %p499 = por %p497, %p498
      %p500 = scmp.ne.s32.totalorder %s488, %s489
      %p501 = scmp.eq.s32.totalorder %s80, 1
      %p502 = por %p500, %p501
      %p504 = scmp.ne.s32.totalorder %s489, %s503
      %p505 = scmp.eq.s32.totalorder %s80, 0
      %p506 = por %p504, %p505
      %s508 = sadd.s32 %s507, 1
      %p511 = scmp.eq.s32.totalorder %s74, 1
      %p512 = scmp.ne.s32.totalorder %s507, %s509
      %p513 = scmp.eq.s32.totalorder %s74, 0
      %p514 = por %p512, %p513
      %p515 = scmp.ne.s32.totalorder %s507, %s509
      %p516 = scmp.eq.s32.totalorder %s79, 1
      %p517 = por %p515, %p516
      %p518 = scmp.ne.s32.totalorder %s509, %s510
      %p519 = scmp.eq.s32.totalorder %s79, 0
      %p520 = por %p518, %p519
      %p521 = scmp.ne.s32.totalorder %s509, %s510
      %p522 = scmp.eq.s32.totalorder %s80, 1
      %p523 = por %p521, %p522
      %p525 = scmp.ne.s32.totalorder %s510, %s524
      %p526 = scmp.eq.s32.totalorder %s80, 0
      %p527 = por %p525, %p526
      %s529 = sadd.s32 %s528, 1
      %p532 = scmp.eq.s32.totalorder %s74, 1
      %p533 = scmp.ne.s32.totalorder %s528, %s530
      %p534 = scmp.eq.s32.totalorder %s74, 0
      %p535 = por %p533, %p534
      %p536 = scmp.ne.s32.totalorder %s528, %s530
      %p537 = scmp.eq.s32.totalorder %s79, 1
      %p538 = por %p536, %p537
      %p539 = scmp.ne.s32.totalorder %s530, %s531
      %p540 = scmp.eq.s32.totalorder %s79, 0
      %p541 = por %p539, %p540
      %p542 = scmp.ne.s32.totalorder %s530, %s531
      %p543 = scmp.eq.s32.totalorder %s80, 1
      %p544 = por %p542, %p543
      %p546 = scmp.ne.s32.totalorder %s531, %s545
      %p547 = scmp.eq.s32.totalorder %s80, 0
      %p548 = por %p546, %p547
      %s550 = sadd.s32 %s549, 1
      %p553 = scmp.eq.s32.totalorder %s74, 1
      %p554 = scmp.ne.s32.totalorder %s549, %s551
      %p555 = scmp.eq.s32.totalorder %s74, 0
      %p556 = por %p554, %p555
      %p557 = scmp.ne.s32.totalorder %s549, %s551
      %p558 = scmp.eq.s32.totalorder %s79, 1
      %p559 = por %p557, %p558
      %p560 = scmp.ne.s32.totalorder %s551, %s552
      %p561 = scmp.eq.s32.totalorder %s79, 0
      %p562 = por %p560, %p561
      %p563 = scmp.ne.s32.totalorder %s551, %s552
      %p564 = scmp.eq.s32.totalorder %s80, 1
      %p565 = por %p563, %p564
      %p567 = scmp.ne.s32.totalorder %s552, %s566
      %p568 = scmp.eq.s32.totalorder %s80, 0
      %p569 = por %p567, %p568
      %s571 = sadd.s32 %s570, 1
      %p574 = scmp.eq.s32.totalorder %s74, 1
      %p575 = scmp.ne.s32.totalorder %s570, %s572
      %p576 = scmp.eq.s32.totalorder %s74, 0
      %p577 = por %p575, %p576
      %p578 = scmp.ne.s32.totalorder %s570, %s572
      %p579 = scmp.eq.s32.totalorder %s79, 1
      %p580 = por %p578, %p579
      %p581 = scmp.ne.s32.totalorder %s572, %s573
      %p582 = scmp.eq.s32.totalorder %s79, 0
      %p583 = por %p581, %p582
      %p584 = scmp.ne.s32.totalorder %s572, %s573
      %p585 = scmp.eq.s32.totalorder %s80, 1
      %p586 = por %p584, %p585
      %p588 = scmp.ne.s32.totalorder %s573, %s587
      %p589 = scmp.eq.s32.totalorder %s80, 0
      %p590 = por %p588, %p589
      %s592 = sadd.s32 %s591, 1
      %p595 = scmp.eq.s32.totalorder %s74, 1
      %p596 = scmp.ne.s32.totalorder %s591, %s593
      %p597 = scmp.eq.s32.totalorder %s74, 0
      %p598 = por %p596, %p597
      %p599 = scmp.ne.s32.totalorder %s591, %s593
      %p600 = scmp.eq.s32.totalorder %s79, 1
      %p601 = por %p599, %p600
      %p602 = scmp.ne.s32.totalorder %s593, %s594
      %p603 = scmp.eq.s32.totalorder %s79, 0
      %p604 = por %p602, %p603
      %p605 = scmp.ne.s32.totalorder %s593, %s594
      %p606 = scmp.eq.s32.totalorder %s80, 1
      %p607 = por %p605, %p606
      %p609 = scmp.ne.s32.totalorder %s594, %s608
      %p610 = scmp.eq.s32.totalorder %s80, 0
      %p611 = por %p609, %p610
      %s613 = sadd.s32 %s612, 1
      %p616 = scmp.eq.s32.totalorder %s74, 1
      %p617 = scmp.ne.s32.totalorder %s612, %s614
      %p618 = scmp.eq.s32.totalorder %s74, 0
      %p619 = por %p617, %p618
      %p620 = scmp.ne.s32.totalorder %s612, %s614
      %p621 = scmp.eq.s32.totalorder %s79, 1
      %p622 = por %p620, %p621
      %p623 = scmp.ne.s32.totalorder %s614, %s615
      %p624 = scmp.eq.s32.totalorder %s79, 0
      %p625 = por %p623, %p624
      %p626 = scmp.ne.s32.totalorder %s614, %s615
      %p627 = scmp.eq.s32.totalorder %s80, 1
      %p628 = por %p626, %p627
      %p630 = scmp.ne.s32.totalorder %s615, %s629
      %p631 = scmp.eq.s32.totalorder %s80, 0
      %p632 = por %p630, %p631
      %s634 = sadd.s32 %s633, 1
      %p637 = scmp.eq.s32.totalorder %s74, 1
      %p638 = scmp.ne.s32.totalorder %s633, %s635
      %p639 = scmp.eq.s32.totalorder %s74, 0
      %p640 = por %p638, %p639
      %p641 = scmp.ne.s32.totalorder %s633, %s635
      %p642 = scmp.eq.s32.totalorder %s79, 1
      %p643 = por %p641, %p642
      %p644 = scmp.ne.s32.totalorder %s635, %s636
      %p645 = scmp.eq.s32.totalorder %s79, 0
      %p646 = por %p644, %p645
      %p647 = scmp.ne.s32.totalorder %s635, %s636
      %p648 = scmp.eq.s32.totalorder %s80, 1
      %p649 = por %p647, %p648
      %p651 = scmp.ne.s32.totalorder %s636, %s650
      %p652 = scmp.eq.s32.totalorder %s80, 0
      %p653 = por %p651, %p652
      %s655 = sadd.s32 %s654, 1
      %p658 = scmp.eq.s32.totalorder %s74, 1
      %p659 = scmp.ne.s32.totalorder %s654, %s656
      %p660 = scmp.eq.s32.totalorder %s74, 0
      %p661 = por %p659, %p660
      %p662 = scmp.ne.s32.totalorder %s654, %s656
      %p663 = scmp.eq.s32.totalorder %s79, 1
      %p664 = por %p662, %p663
      %p665 = scmp.ne.s32.totalorder %s656, %s657
      %p666 = scmp.eq.s32.totalorder %s79, 0
      %p667 = por %p665, %p666
      %p668 = scmp.ne.s32.totalorder %s656, %s657
      %p669 = scmp.eq.s32.totalorder %s80, 1
      %p670 = por %p668, %p669
      %p672 = scmp.ne.s32.totalorder %s657, %s671
      %p673 = scmp.eq.s32.totalorder %s80, 0
      %p674 = por %p672, %p673
      %s676 = sadd.s32 %s675, 1
      %p679 = scmp.eq.s32.totalorder %s74, 1
      %p680 = scmp.ne.s32.totalorder %s675, %s677
      %p681 = scmp.eq.s32.totalorder %s74, 0
      %p682 = por %p680, %p681
      %p683 = scmp.ne.s32.totalorder %s675, %s677
      %p684 = scmp.eq.s32.totalorder %s79, 1
      %p685 = por %p683, %p684
      %p686 = scmp.ne.s32.totalorder %s677, %s678
      %p687 = scmp.eq.s32.totalorder %s79, 0
      %p688 = por %p686, %p687
      %p689 = scmp.ne.s32.totalorder %s677, %s678
      %p690 = scmp.eq.s32.totalorder %s80, 1
      %p691 = por %p689, %p690
      %p693 = scmp.ne.s32.totalorder %s678, %s692
      %p694 = scmp.eq.s32.totalorder %s80, 0
      %p695 = por %p693, %p694
      %s697 = sadd.s32 %s696, 1
      %p700 = scmp.eq.s32.totalorder %s74, 1
      %p701 = scmp.ne.s32.totalorder %s696, %s698
      %p702 = scmp.eq.s32.totalorder %s74, 0
      %p703 = por %p701, %p702
      %p704 = scmp.ne.s32.totalorder %s696, %s698
      %p705 = scmp.eq.s32.totalorder %s79, 1
      %p706 = por %p704, %p705
      %p707 = scmp.ne.s32.totalorder %s698, %s699
      %p708 = scmp.eq.s32.totalorder %s79, 0
      %p709 = por %p707, %p708
      %p710 = scmp.ne.s32.totalorder %s698, %s699
      %p711 = scmp.eq.s32.totalorder %s80, 1
      %p712 = por %p710, %p711
      %p714 = scmp.ne.s32.totalorder %s699, %s713
      %p715 = scmp.eq.s32.totalorder %s80, 0
      %p716 = por %p714, %p715
      %s718 = sadd.s32 %s717, 1
      %p721 = scmp.eq.s32.totalorder %s74, 1
      %p722 = scmp.ne.s32.totalorder %s717, %s719
      %p723 = scmp.eq.s32.totalorder %s74, 0
      %p724 = por %p722, %p723
      %p725 = scmp.ne.s32.totalorder %s717, %s719
      %p726 = scmp.eq.s32.totalorder %s79, 1
      %p727 = por %p725, %p726
      %p728 = scmp.ne.s32.totalorder %s719, %s720
      %p729 = scmp.eq.s32.totalorder %s79, 0
      %p730 = por %p728, %p729
      %p731 = scmp.ne.s32.totalorder %s719, %s720
      %p732 = scmp.eq.s32.totalorder %s80, 1
      %p733 = por %p731, %p732
      %p735 = scmp.ne.s32.totalorder %s720, %s734
      %p736 = scmp.eq.s32.totalorder %s80, 0
      %p737 = por %p735, %p736
      %s739 = sadd.s32 %s738, 1
      %p742 = scmp.eq.s32.totalorder %s74, 1
      %p743 = scmp.ne.s32.totalorder %s738, %s740
      %p744 = scmp.eq.s32.totalorder %s74, 0
      %p745 = por %p743, %p744
      %p746 = scmp.ne.s32.totalorder %s738, %s740
      %p747 = scmp.eq.s32.totalorder %s79, 1
      %p748 = por %p746, %p747
      %p749 = scmp.ne.s32.totalorder %s740, %s741
      %p750 = scmp.eq.s32.totalorder %s79, 0
      %p751 = por %p749, %p750
      %p752 = scmp.ne.s32.totalorder %s740, %s741
      %p753 = scmp.eq.s32.totalorder %s80, 1
      %p754 = por %p752, %p753
      %p756 = scmp.ne.s32.totalorder %s741, %s755
      %p757 = scmp.eq.s32.totalorder %s80, 0
      %p758 = por %p756, %p757
      %s759 = ssub.s32 %s74, %s81
      %p760 = scmp.eq.s32.totalorder %s759, 0
      %s762 = sadd.s32 %s761, 1
      %s763 = scalar_select %p760, %s761, %s762
      %p766 = pneg %p760
      %p767 = scmp.eq.s32.totalorder %s74, 1
      %p768 = por %p766, %p767
      %p769 = scmp.ne.s32.totalorder %s761, %s764
      %p770 = scmp.eq.s32.totalorder %s74, 0
      %p771 = por %p769, %p770
      %p772 = scmp.ne.s32.totalorder %s761, %s764
      %p773 = scmp.eq.s32.totalorder %s79, 1
      %p774 = por %p772, %p773
      %p775 = scmp.ne.s32.totalorder %s764, %s765
      %p776 = scmp.eq.s32.totalorder %s79, 0
      %p777 = por %p775, %p776
      %p778 = scmp.ne.s32.totalorder %s764, %s765
      %p779 = scmp.eq.s32.totalorder %s80, 1
      %p780 = por %p778, %p779
      %p782 = scmp.ne.s32.totalorder %s765, %s781
      %p783 = scmp.eq.s32.totalorder %s80, 0
      %p784 = por %p782, %p783
      %p785 = scmp.le.s32.totalorder 1, %s74
      %p786 = scmp.lt.s32.totalorder %s74, 3
      %p787 = pnand %p785, %p786
      %p788 = pneg %p787
      // Predicated region
      $region9: #{edgevit_forward.1} parent=5 // pred_check
        _
      $region10: #{edgevit_forward.1} parent=5 // pred_check_branch
        %790 = sbr.rel (%p787) target = $region12
      $region11: #{edgevit_forward.1} parent=5 // pred_region
        %s791 = ssub.s32 %s74, 1
        // Predicated region
        $region13: #{edgevit_forward.1} parent=11 // pred_check
          %p792 = pneg %p121
        $region14: #{edgevit_forward.1} parent=11 // pred_check_branch
          %794 = sbr.rel (%p792) target = $region16
        $region15: #{edgevit_forward.1} parent=11 // pred_region
          _
        $region16: #{edgevit_forward.1} parent=11 // pred_fallthru
          _
        // Predicated region
        $region17: #{edgevit_forward.1} parent=11 // pred_check
          %p795 = pneg %p142
        $region18: #{edgevit_forward.1} parent=11 // pred_check_branch
          %797 = sbr.rel (%p795) target = $region20
        $region19: #{edgevit_forward.1} parent=11 // pred_region
          _
        $region20: #{edgevit_forward.1} parent=11 // pred_fallthru
          _
        // Predicated region
        $region21: #{edgevit_forward.1} parent=11 // pred_check
          %p798 = pneg %p163
        $region22: #{edgevit_forward.1} parent=11 // pred_check_branch
          %800 = sbr.rel (%p798) target = $region24
        $region23: #{edgevit_forward.1} parent=11 // pred_region
          _
        $region24: #{edgevit_forward.1} parent=11 // pred_fallthru
          _
        // Predicated region
        $region25: #{edgevit_forward.1} parent=11 // pred_check
          %p801 = pneg %p184
        $region26: #{edgevit_forward.1} parent=11 // pred_check_branch
          %803 = sbr.rel (%p801) target = $region28
        $region27: #{edgevit_forward.1} parent=11 // pred_region
          _
        $region28: #{edgevit_forward.1} parent=11 // pred_fallthru
          _
        // Predicated region
        $region29: #{edgevit_forward.1} parent=11 // pred_check
          %p804 = pneg %p205
        $region30: #{edgevit_forward.1} parent=11 // pred_check_branch
          %806 = sbr.rel (%p804) target = $region32
        $region31: #{edgevit_forward.1} parent=11 // pred_region
          _
        $region32: #{edgevit_forward.1} parent=11 // pred_fallthru
          _
        // Predicated region
        $region33: #{edgevit_forward.1} parent=11 // pred_check
          %p807 = pneg %p226
        $region34: #{edgevit_forward.1} parent=11 // pred_check_branch
          %809 = sbr.rel (%p807) target = $region36
        $region35: #{edgevit_forward.1} parent=11 // pred_region
          _
        $region36: #{edgevit_forward.1} parent=11 // pred_fallthru
          _
        // Predicated region
        $region37: #{edgevit_forward.1} parent=11 // pred_check
          %p810 = pneg %p247
        $region38: #{edgevit_forward.1} parent=11 // pred_check_branch
          %812 = sbr.rel (%p810) target = $region40
        $region39: #{edgevit_forward.1} parent=11 // pred_region
          _
        $region40: #{edgevit_forward.1} parent=11 // pred_fallthru
          _
        // Predicated region
        $region41: #{edgevit_forward.1} parent=11 // pred_check
          %p813 = pneg %p268
        $region42: #{edgevit_forward.1} parent=11 // pred_check_branch
          %815 = sbr.rel (%p813) target = $region44
        $region43: #{edgevit_forward.1} parent=11 // pred_region
          _
        $region44: #{edgevit_forward.1} parent=11 // pred_fallthru
          _
        // Predicated region
        $region45: #{edgevit_forward.1} parent=11 // pred_check
          %p816 = pneg %p289
        $region46: #{edgevit_forward.1} parent=11 // pred_check_branch
          %818 = sbr.rel (%p816) target = $region48
        $region47: #{edgevit_forward.1} parent=11 // pred_region
          _
        $region48: #{edgevit_forward.1} parent=11 // pred_fallthru
          _
        // Predicated region
        $region49: #{edgevit_forward.1} parent=11 // pred_check
          %p819 = pneg %p310
        $region50: #{edgevit_forward.1} parent=11 // pred_check_branch
          %821 = sbr.rel (%p819) target = $region52
        $region51: #{edgevit_forward.1} parent=11 // pred_region
          _
        $region52: #{edgevit_forward.1} parent=11 // pred_fallthru
          _
        // Predicated region
        $region53: #{edgevit_forward.1} parent=11 // pred_check
          %p822 = pneg %p331
        $region54: #{edgevit_forward.1} parent=11 // pred_check_branch
          %824 = sbr.rel (%p822) target = $region56
        $region55: #{edgevit_forward.1} parent=11 // pred_region
          _
        $region56: #{edgevit_forward.1} parent=11 // pred_fallthru
          _
        // Predicated region
        $region57: #{edgevit_forward.1} parent=11 // pred_check
          %p825 = pneg %p352
        $region58: #{edgevit_forward.1} parent=11 // pred_check_branch
          %827 = sbr.rel (%p825) target = $region60
        $region59: #{edgevit_forward.1} parent=11 // pred_region
          _
        $region60: #{edgevit_forward.1} parent=11 // pred_fallthru
          _
        // Predicated region
        $region61: #{edgevit_forward.1} parent=11 // pred_check
          %p828 = pneg %p373
        $region62: #{edgevit_forward.1} parent=11 // pred_check_branch
          %830 = sbr.rel (%p828) target = $region64
        $region63: #{edgevit_forward.1} parent=11 // pred_region
          _
        $region64: #{edgevit_forward.1} parent=11 // pred_fallthru
          _
        // Predicated region
        $region65: #{edgevit_forward.1} parent=11 // pred_check
          %p831 = pneg %p394
        $region66: #{edgevit_forward.1} parent=11 // pred_check_branch
          %833 = sbr.rel (%p831) target = $region68
        $region67: #{edgevit_forward.1} parent=11 // pred_region
          _
        $region68: #{edgevit_forward.1} parent=11 // pred_fallthru
          _
        // Predicated region
        $region69: #{edgevit_forward.1} parent=11 // pred_check
          %p834 = pneg %p415
        $region70: #{edgevit_forward.1} parent=11 // pred_check_branch
          %836 = sbr.rel (%p834) target = $region72
        $region71: #{edgevit_forward.1} parent=11 // pred_region
          _
        $region72: #{edgevit_forward.1} parent=11 // pred_fallthru
          _
        // Predicated region
        $region73: #{edgevit_forward.1} parent=11 // pred_check
          %p837 = pneg %p436
        $region74: #{edgevit_forward.1} parent=11 // pred_check_branch
          %839 = sbr.rel (%p837) target = $region76
        $region75: #{edgevit_forward.1} parent=11 // pred_region
          _
        $region76: #{edgevit_forward.1} parent=11 // pred_fallthru
          _
        // Predicated region
        $region77: #{edgevit_forward.1} parent=11 // pred_check
          %p840 = pneg %p457
        $region78: #{edgevit_forward.1} parent=11 // pred_check_branch
          %842 = sbr.rel (%p840) target = $region80
        $region79: #{edgevit_forward.1} parent=11 // pred_region
          _
        $region80: #{edgevit_forward.1} parent=11 // pred_fallthru
          _
        // Predicated region
        $region81: #{edgevit_forward.1} parent=11 // pred_check
          %p843 = pneg %p478
        $region82: #{edgevit_forward.1} parent=11 // pred_check_branch
          %845 = sbr.rel (%p843) target = $region84
        $region83: #{edgevit_forward.1} parent=11 // pred_region
          _
        $region84: #{edgevit_forward.1} parent=11 // pred_fallthru
          _
        // Predicated region
        $region85: #{edgevit_forward.1} parent=11 // pred_check
          %p846 = pneg %p499
        $region86: #{edgevit_forward.1} parent=11 // pred_check_branch
          %848 = sbr.rel (%p846) target = $region88
        $region87: #{edgevit_forward.1} parent=11 // pred_region
          _
        $region88: #{edgevit_forward.1} parent=11 // pred_fallthru
          _
        // Predicated region
        $region89: #{edgevit_forward.1} parent=11 // pred_check
          %p849 = pneg %p520
        $region90: #{edgevit_forward.1} parent=11 // pred_check_branch
          %851 = sbr.rel (%p849) target = $region92
        $region91: #{edgevit_forward.1} parent=11 // pred_region
          _
        $region92: #{edgevit_forward.1} parent=11 // pred_fallthru
          _
        // Predicated region
        $region93: #{edgevit_forward.1} parent=11 // pred_check
          %p852 = pneg %p541
        $region94: #{edgevit_forward.1} parent=11 // pred_check_branch
          %854 = sbr.rel (%p852) target = $region96
        $region95: #{edgevit_forward.1} parent=11 // pred_region
          _
        $region96: #{edgevit_forward.1} parent=11 // pred_fallthru
          _
        // Predicated region
        $region97: #{edgevit_forward.1} parent=11 // pred_check
          %p855 = pneg %p562
        $region98: #{edgevit_forward.1} parent=11 // pred_check_branch
          %857 = sbr.rel (%p855) target = $region100
        $region99: #{edgevit_forward.1} parent=11 // pred_region
          _
        $region100: #{edgevit_forward.1} parent=11 // pred_fallthru
          _
        // Predicated region
        $region101: #{edgevit_forward.1} parent=11 // pred_check
          %p858 = pneg %p583
        $region102: #{edgevit_forward.1} parent=11 // pred_check_branch
          %860 = sbr.rel (%p858) target = $region104
        $region103: #{edgevit_forward.1} parent=11 // pred_region
          _
        $region104: #{edgevit_forward.1} parent=11 // pred_fallthru
          _
        // Predicated region
        $region105: #{edgevit_forward.1} parent=11 // pred_check
          %p861 = pneg %p604
        $region106: #{edgevit_forward.1} parent=11 // pred_check_branch
          %863 = sbr.rel (%p861) target = $region108
        $region107: #{edgevit_forward.1} parent=11 // pred_region
          _
        $region108: #{edgevit_forward.1} parent=11 // pred_fallthru
          _
        // Predicated region
        $region109: #{edgevit_forward.1} parent=11 // pred_check
          %p864 = pneg %p625
        $region110: #{edgevit_forward.1} parent=11 // pred_check_branch
          %866 = sbr.rel (%p864) target = $region112
        $region111: #{edgevit_forward.1} parent=11 // pred_region
          _
        $region112: #{edgevit_forward.1} parent=11 // pred_fallthru
          _
        // Predicated region
        $region113: #{edgevit_forward.1} parent=11 // pred_check
          %p867 = pneg %p646
        $region114: #{edgevit_forward.1} parent=11 // pred_check_branch
          %869 = sbr.rel (%p867) target = $region116
        $region115: #{edgevit_forward.1} parent=11 // pred_region
          _
        $region116: #{edgevit_forward.1} parent=11 // pred_fallthru
          _
        // Predicated region
        $region117: #{edgevit_forward.1} parent=11 // pred_check
          %p870 = pneg %p667
        $region118: #{edgevit_forward.1} parent=11 // pred_check_branch
          %872 = sbr.rel (%p870) target = $region120
        $region119: #{edgevit_forward.1} parent=11 // pred_region
          _
        $region120: #{edgevit_forward.1} parent=11 // pred_fallthru
          _
        // Predicated region
        $region121: #{edgevit_forward.1} parent=11 // pred_check
          %p873 = pneg %p688
        $region122: #{edgevit_forward.1} parent=11 // pred_check_branch
          %875 = sbr.rel (%p873) target = $region124
        $region123: #{edgevit_forward.1} parent=11 // pred_region
          _
        $region124: #{edgevit_forward.1} parent=11 // pred_fallthru
          _
        // Predicated region
        $region125: #{edgevit_forward.1} parent=11 // pred_check
          %p876 = pneg %p709
        $region126: #{edgevit_forward.1} parent=11 // pred_check_branch
          %878 = sbr.rel (%p876) target = $region128
        $region127: #{edgevit_forward.1} parent=11 // pred_region
          _
        $region128: #{edgevit_forward.1} parent=11 // pred_fallthru
          _
        // Predicated region
        $region129: #{edgevit_forward.1} parent=11 // pred_check
          %p879 = pneg %p730
        $region130: #{edgevit_forward.1} parent=11 // pred_check_branch
          %881 = sbr.rel (%p879) target = $region132
        $region131: #{edgevit_forward.1} parent=11 // pred_region
          _
        $region132: #{edgevit_forward.1} parent=11 // pred_fallthru
          _
        // Predicated region
        $region133: #{edgevit_forward.1} parent=11 // pred_check
          %p882 = pneg %p751
        $region134: #{edgevit_forward.1} parent=11 // pred_check_branch
          %884 = sbr.rel (%p882) target = $region136
        $region135: #{edgevit_forward.1} parent=11 // pred_region
          _
        $region136: #{edgevit_forward.1} parent=11 // pred_fallthru
          _
      $region12: #{edgevit_forward.1} parent=5 // pred_fallthru
        _
      %p885 = scmp.lt.s32.totalorder %s74, 2
      // Predicated region
      $region137: #{edgevit_forward.1} parent=5 // pred_check
        %p886 = pneg %p885
      $region138: #{edgevit_forward.1} parent=5 // pred_check_branch
        %888 = sbr.rel (%p886) target = $region140
      $region139: #{edgevit_forward.1} parent=5 // pred_region
        // Predicated region
        $region141: #{edgevit_forward.1} parent=139 // pred_check
          %p889 = pneg %p94
        $region142: #{edgevit_forward.1} parent=139 // pred_check_branch
          %891 = sbr.rel (%p889) target = $region144
        $region143: #{edgevit_forward.1} parent=139 // pred_region
          %s892 = smul.u32 8, %s74
          %p893 = scmp.lt.s32.totalorder %s892, 15
          %s894 = scalar_select %p893, %s892, 15
          %s895 = smul.addr %s894, 32
          %s896 = smul.addr %s895, 4
          %s897 = scalar_lea.vmem %s1, %s896
          %s898 = smul.u32 8, %s74
        $region144: #{edgevit_forward.1} parent=139 // pred_fallthru
          _
      $region140: #{edgevit_forward.1} parent=5 // pred_fallthru
        _
      %p899 = scmp.le.s32.totalorder 1, %s74
      %p900 = scmp.lt.s32.totalorder %s74, 3
      %p901 = pnand %p899, %p900
      %p902 = pneg %p901
      // Predicated region
      $region145: #{edgevit_forward.1} parent=5 // pred_check
        _
      $region146: #{edgevit_forward.1} parent=5 // pred_check_branch
        %904 = sbr.rel (%p901) target = $region148
      $region147: #{edgevit_forward.1} parent=5 // pred_region
        %s905 = ssub.s32 %s74, 1
        %s906 = smul.u32 8, %s79
        %p907 = scmp.lt.s32.totalorder %s906, 15
        %s908 = scalar_select %p907, %s906, 15
        %s909 = smul.addr %s908, 32
        %s910 = smul.addr %s909, 4
        %s911 = scalar_lea.vmem %s1, %s910
        %p912 = pneg %p100
        %p913 = pneg %p97
        %p914 = pneg %p121
        %p915 = pneg %p118
        %p916 = pneg %p142
        %p917 = pneg %p139
        %p918 = pneg %p163
        %p919 = pneg %p160
        %p920 = pneg %p184
        %p921 = pneg %p181
        %p922 = pneg %p205
        %p923 = pneg %p202
        %p924 = pneg %p226
        %p925 = pneg %p223
        %p926 = pneg %p247
        %p927 = pneg %p244
        %p928 = pneg %p268
        %p929 = pneg %p265
        %p930 = pneg %p289
        %p931 = pneg %p286
        %p932 = pneg %p310
        %p933 = pneg %p307
        %p934 = pneg %p331
        %p935 = pneg %p328
        %p936 = pneg %p352
        %p937 = pneg %p349
        %p938 = pneg %p373
        %p939 = pneg %p370
        %p940 = pneg %p394
        %p941 = pneg %p391
        %p942 = pneg %p415
        %p943 = pneg %p412
        %p944 = pneg %p436
        %p945 = pneg %p433
        %p946 = pneg %p457
        %p947 = pneg %p454
        %p948 = pneg %p478
        %p949 = pneg %p475
        %p950 = pneg %p499
        %p951 = pneg %p496
        %p952 = pneg %p520
        %p953 = pneg %p517
        %p954 = pneg %p541
        %p955 = pneg %p538
        %p956 = pneg %p562
        %p957 = pneg %p559
        %p958 = pneg %p583
        %p959 = pneg %p580
        %p960 = pneg %p604
        %p961 = pneg %p601
        %p962 = pneg %p625
        %p963 = pneg %p622
        %p964 = pneg %p646
        %p965 = pneg %p643
        %p966 = pneg %p667
        %p967 = pneg %p664
        %p968 = pneg %p688
        %p969 = pneg %p685
        %p970 = pneg %p709
        %p971 = pneg %p706
        %p972 = pneg %p730
        %p973 = pneg %p727
        %p974 = pneg %p751
        %p975 = pneg %p748
        %p976 = pneg %p777
        %p977 = pneg %p774
        %s978 = sand.u32 %s764, 1
        %s979 = scalar_lea.sflag [#allocation4], %s978
        %s980 = sand.u32 %s764, 1
        %s981 = smul.addr %s980, 4
        %s982 = scalar_lea.vmem [#allocation3], %s981
        %s983 = smul.u32 8, %s79
        %p984 = scmp.lt.s32.totalorder %s983, 15
        %s985 = scalar_select %p984, %s983, 15
        %s986 = smul.addr %s985, 32
        %s987 = smul.addr %s986, 4
        %s988 = scalar_lea.vmem %s1, %s987
        %s989 = smul.u32 8, %s79
        %vm990 = vcmask 261120
        %991 = vst.msk [vmem:[#allocation2] sm:$0xff] %vm990, 0.0
        %992 = vst.msk [vmem:[#allocation2 + $0x48] sm:$0xff] %vm990, 0.0
        %v993 = vld [vmem:[%s9] sm:$0xff]
        %v994 = vld [vmem:[%s9 + $0x8] sm:$0xff]
        %v995 = vld [vmem:[%s9 + $0x10] sm:$0xff]
        %v996 = vld [vmem:[%s9 + $0x18] sm:$0xff]
        %v997 = vld [vmem:[%s9 + $0x20] sm:$0xff]
        %v998 = vld [vmem:[%s9 + $0x28] sm:$0xff]
        %v999 = vld [vmem:[%s9 + $0x30] sm:$0xff]
        %v1000 = vld [vmem:[%s9 + $0x38] sm:$0xff]
        %v1001 = vld [vmem:[%s9 + $0x40] sm:$0xff]
        %v1002 = vld [vmem:[%s9 + $0x48] sm:$0xff]
        %v1003 = vld [vmem:[%s9 + $0x50] sm:$0xff]
        %v1004 = vld [vmem:[%s9 + $0x58] sm:$0xff]
        %v1005 = vld [vmem:[%s9 + $0x60] sm:$0xff]
        %v1006 = vld [vmem:[%s9 + $0x68] sm:$0xff]
        %v1007 = vld [vmem:[%s9 + $0x70] sm:$0xff]
        %v1008 = vld [vmem:[%s9 + $0x78] sm:$0xff]
        %v1009 = vld [vmem:[%s9 + $0x80] sm:$0xff]
        %v1010 = vld [vmem:[%s9 + $0x88] sm:$0xff]
        %v1011 = vld [vmem:[%s9 + $0x90] sm:$0xff]
        %v1012 = vld [vmem:[%s9 + $0x98] sm:$0xff]
        %v1013 = vld [vmem:[%s9 + $0xa0] sm:$0xff]
        %v1014 = vld [vmem:[%s9 + $0xa8] sm:$0xff]
        %v1015 = vld [vmem:[%s9 + $0xb0] sm:$0xff]
        %v1016 = vld [vmem:[%s9 + $0xb8] sm:$0xff]
        %v1017 = vld [vmem:[%s9 + $0xc0] sm:$0xff]
        %v1018 = vld [vmem:[%s9 + $0xc8] sm:$0xff]
        %v1019 = vld [vmem:[%s9 + $0xd0] sm:$0xff]
        %v1020 = vld [vmem:[%s9 + $0xd8] sm:$0xff]
        %v1021 = vld [vmem:[%s9 + $0xe0] sm:$0xff]
        %v1022 = vld [vmem:[%s9 + $0xe8] sm:$0xff]
        %v1023 = vld [vmem:[%s9 + $0xf0] sm:$0xff]
        %v1024 = vld [vmem:[%s9 + $0xf8] sm:$0xff]
        %v1025 = vld [vmem:[%s9 + $0x100] sm:$0xff]
        %v1026 = vld [vmem:[%s9 + $0x108] sm:$0xff]
        %v1027 = vld [vmem:[%s9 + $0x110] sm:$0xff]
        %v1028 = vld [vmem:[%s9 + $0x118] sm:$0xff]
        %v1029 = vld [vmem:[%s9 + $0x120] sm:$0xff]
        %v1030 = vld [vmem:[%s9 + $0x128] sm:$0xff]
        %v1031 = vld [vmem:[%s9 + $0x130] sm:$0xff]
        %v1032 = vld [vmem:[%s9 + $0x138] sm:$0xff]
        %v1033 = vld [vmem:[%s9 + $0x140] sm:$0xff]
        %v1034 = vld [vmem:[%s9 + $0x148] sm:$0xff]
        %v1035 = vld [vmem:[%s9 + $0x150] sm:$0xff]
        %v1036 = vld [vmem:[%s9 + $0x158] sm:$0xff]
        %v1037 = vld [vmem:[%s9 + $0x160] sm:$0xff]
        %v1038 = vld [vmem:[%s9 + $0x168] sm:$0xff]
        %v1039 = vld [vmem:[%s9 + $0x170] sm:$0xff]
        %v1040 = vld [vmem:[%s9 + $0x178] sm:$0xff]
        %v1041 = vld [vmem:[%s9 + $0x180] sm:$0xff]
        %v1042 = vld [vmem:[%s9 + $0x188] sm:$0xff]
        %v1043 = vld [vmem:[%s9 + $0x190] sm:$0xff]
        %v1044 = vld [vmem:[%s9 + $0x198] sm:$0xff]
        %v1045 = vld [vmem:[%s9 + $0x1a0] sm:$0xff]
        %v1046 = vld [vmem:[%s9 + $0x1a8] sm:$0xff]
        %v1047 = vld [vmem:[%s9 + $0x1b0] sm:$0xff]
        %v1048 = vld [vmem:[%s9 + $0x1b8] sm:$0xff]
        %v1049 = vld [vmem:[%s9 + $0x1c0] sm:$0xff]
        %v1050 = vld [vmem:[%s9 + $0x1c8] sm:$0xff]
        %v1051 = vld [vmem:[%s9 + $0x1d0] sm:$0xff]
        %v1052 = vld [vmem:[%s9 + $0x1d8] sm:$0xff]
        %v1053 = vld [vmem:[%s9 + $0x1e0] sm:$0xff]
        %v1054 = vld [vmem:[%s9 + $0x1e8] sm:$0xff]
        %v1055 = vld [vmem:[%s9 + $0x1f0] sm:$0xff]
        %v1056 = vld [vmem:[%s9 + $0x1f8] sm:$0xff]
        %v1057 = vld [vmem:[%s9 + $0x200] sm:$0xff]
        %v1058 = vld [vmem:[%s9 + $0x208] sm:$0xff]
        %v1059 = vld [vmem:[%s9 + $0x210] sm:$0xff]
        %v1060 = vld [vmem:[%s9 + $0x218] sm:$0xff]
        %v1061 = vld [vmem:[%s9 + $0x220] sm:$0xff]
        %v1062 = vld [vmem:[%s9 + $0x228] sm:$0xff]
        %v1063 = vld [vmem:[%s9 + $0x230] sm:$0xff]
        %v1064 = vld [vmem:[%s9 + $0x238] sm:$0xff]
        %v1065 = vld [vmem:[%s57] sm:$0xf]
        %v1066 = vld [vmem:[%s59] sm:$0xff]
        %v1067 = vld [vmem:[%s59 + $0x8] sm:$0xff]
        %v1068 = vld [vmem:[%s59 + $0x10] sm:$0xff]
        %v1069 = vld [vmem:[%s59 + $0x18] sm:$0xff]
        %v1070 = vld [vmem:[%s59 + $0x20] sm:$0xff]
        %v1071 = vld [vmem:[%s59 + $0x28] sm:$0xff]
        %v1072 = vld [vmem:[%s59 + $0x30] sm:$0xff]
        %v1073 = vld [vmem:[%s59 + $0x38] sm:$0xff]
        %v1074 = vld [vmem:[%s988] sm:$0xff]
        %v1075 = vld [vmem:[%s988 + $0x8] sm:$0xff]
        %v1076 = vld [vmem:[%s988 + $0x10] sm:$0xff]
        %v1077 = vld [vmem:[%s988 + $0x18] sm:$0xff]
        %v1078 = vld [vmem:[%s988 + $0x20] sm:$0xff]
        %v1079 = vld [vmem:[%s988 + $0x28] sm:$0xff]
        %v1080 = vld [vmem:[%s988 + $0x30] sm:$0xff]
        %v1081 = vld [vmem:[%s988 + $0x38] sm:$0xff]
        %v1082 = vld [vmem:[%s988 + $0x40] sm:$0xff]
        %v1083 = vld [vmem:[%s988 + $0x48] sm:$0xff]
        %v1084 = vld [vmem:[%s988 + $0x50] sm:$0xff]
        %v1085 = vld [vmem:[%s988 + $0x58] sm:$0xff]
        %v1086 = vld [vmem:[%s988 + $0x60] sm:$0xff]
        %v1087 = vld [vmem:[%s988 + $0x68] sm:$0xff]
        %v1088 = vld [vmem:[%s988 + $0x70] sm:$0xff]
        %v1089 = vld [vmem:[%s988 + $0x78] sm:$0xff]
        %v1090 = vld [vmem:[%s988 + $0x80] sm:$0xff]
        %v1091 = vld [vmem:[%s988 + $0x88] sm:$0xff]
        %v1092 = vld [vmem:[%s988 + $0x90] sm:$0xff]
        %v1093 = vld [vmem:[%s988 + $0x98] sm:$0xff]
        %v1094 = vld [vmem:[%s988 + $0xa0] sm:$0xff]
        %v1095 = vld [vmem:[%s988 + $0xa8] sm:$0xff]
        %v1096 = vld [vmem:[%s988 + $0xb0] sm:$0xff]
        %v1097 = vld [vmem:[%s988 + $0xb8] sm:$0xff]
        %v1098 = vld [vmem:[%s988 + $0xc0] sm:$0xff]
        %v1099 = vld [vmem:[%s988 + $0xc8] sm:$0xff]
        %v1100 = vld [vmem:[%s988 + $0xd0] sm:$0xff]
        %v1101 = vld [vmem:[%s988 + $0xd8] sm:$0xff]
        %v1102 = vld [vmem:[%s988 + $0xe0] sm:$0xff]
        %v1103 = vld [vmem:[%s988 + $0xe8] sm:$0xff]
        %v1104 = vld [vmem:[%s988 + $0xf0] sm:$0xff]
        %v1105 = vld [vmem:[%s988 + $0xf8] sm:$0xff]
        %v1106 = vld [vmem:[%s988 + $0x100] sm:$0xff]
        %v1107 = vld [vmem:[%s988 + $0x108] sm:$0xff]
        %v1108 = vld [vmem:[%s988 + $0x110] sm:$0xff]
        %v1109 = vld [vmem:[%s988 + $0x118] sm:$0xff]
        %v1110 = vld [vmem:[%s988 + $0x120] sm:$0xff]
        %v1111 = vld [vmem:[%s988 + $0x128] sm:$0xff]
        %v1112 = vld [vmem:[%s988 + $0x130] sm:$0xff]
        %v1113 = vld [vmem:[%s988 + $0x138] sm:$0xff]
        %v1114 = vld [vmem:[%s988 + $0x140] sm:$0xff]
        %v1115 = vld [vmem:[%s988 + $0x148] sm:$0xff]
        %v1116 = vld [vmem:[%s988 + $0x150] sm:$0xff]
        %v1117 = vld [vmem:[%s988 + $0x158] sm:$0xff]
        %v1118 = vld [vmem:[%s988 + $0x160] sm:$0xff]
        %v1119 = vld [vmem:[%s988 + $0x168] sm:$0xff]
        %v1120 = vld [vmem:[%s988 + $0x170] sm:$0xff]
        %v1121 = vld [vmem:[%s988 + $0x178] sm:$0xff]
        %v1122 = vld [vmem:[%s988 + $0x180] sm:$0xff]
        %v1123 = vld [vmem:[%s988 + $0x188] sm:$0xff]
        %v1124 = vld [vmem:[%s988 + $0x190] sm:$0xff]
        %v1125 = vld [vmem:[%s988 + $0x198] sm:$0xff]
        %v1126 = vld [vmem:[%s988 + $0x1a0] sm:$0xff]
        %v1127 = vld [vmem:[%s988 + $0x1a8] sm:$0xff]
        %v1128 = vld [vmem:[%s988 + $0x1b0] sm:$0xff]
        %v1129 = vld [vmem:[%s988 + $0x1b8] sm:$0xff]
        %v1130 = vld [vmem:[%s988 + $0x1c0] sm:$0xff]
        %v1131 = vld [vmem:[%s988 + $0x1c8] sm:$0xff]
        %v1132 = vld [vmem:[%s988 + $0x1d0] sm:$0xff]
        %v1133 = vld [vmem:[%s988 + $0x1d8] sm:$0xff]
        %v1134 = vld [vmem:[%s988 + $0x1e0] sm:$0xff]
        %v1135 = vld [vmem:[%s988 + $0x1e8] sm:$0xff]
        %v1136 = vld [vmem:[%s988 + $0x1f0] sm:$0xff]
        %v1137 = vld [vmem:[%s988 + $0x1f8] sm:$0xff]
        %v1138 = vld [vmem:[%s988 + $0x200] sm:$0xff]
        %v1139 = vld [vmem:[%s988 + $0x208] sm:$0xff]
        %v1140 = vld [vmem:[%s988 + $0x210] sm:$0xff]
        %v1141 = vld [vmem:[%s988 + $0x218] sm:$0xff]
        %v1142 = vld [vmem:[%s988 + $0x220] sm:$0xff]
        %v1143 = vld [vmem:[%s988 + $0x228] sm:$0xff]
        %v1144 = vld [vmem:[%s988 + $0x230] sm:$0xff]
        %v1145 = vld [vmem:[%s988 + $0x238] sm:$0xff]
        %v1146 = vld [vmem:[%s988 + $0x240] sm:$0xff]
        %v1147 = vld [vmem:[%s988 + $0x248] sm:$0xff]
        %v1148 = vld [vmem:[%s988 + $0x250] sm:$0xff]
        %v1149 = vld [vmem:[%s988 + $0x258] sm:$0xff]
        %v1150 = vld [vmem:[%s988 + $0x260] sm:$0xff]
        %v1151 = vld [vmem:[%s988 + $0x268] sm:$0xff]
        %v1152 = vld [vmem:[%s988 + $0x270] sm:$0xff]
        %v1153 = vld [vmem:[%s988 + $0x278] sm:$0xff]
        %v1154 = vld [vmem:[%s988 + $0x280] sm:$0xff]
        %v1155 = vld [vmem:[%s988 + $0x288] sm:$0xff]
        %v1156 = vld [vmem:[%s988 + $0x290] sm:$0xff]
        %v1157 = vld [vmem:[%s988 + $0x298] sm:$0xff]
        %v1158 = vld [vmem:[%s988 + $0x2a0] sm:$0xff]
        %v1159 = vld [vmem:[%s988 + $0x2a8] sm:$0xff]
        %v1160 = vld [vmem:[%s988 + $0x2b0] sm:$0xff]
        %v1161 = vld [vmem:[%s988 + $0x2b8] sm:$0xff]
        %v1162 = vld [vmem:[%s988 + $0x2c0] sm:$0xff]
        %v1163 = vld [vmem:[%s988 + $0x2c8] sm:$0xff]
        %v1164 = vld [vmem:[%s988 + $0x2d0] sm:$0xff]
        %v1165 = vld [vmem:[%s988 + $0x2d8] sm:$0xff]
        %v1166 = vld [vmem:[%s988 + $0x2e0] sm:$0xff]
        %v1167 = vld [vmem:[%s988 + $0x2e8] sm:$0xff]
        %v1168 = vld [vmem:[%s988 + $0x2f0] sm:$0xff]
        %v1169 = vld [vmem:[%s988 + $0x2f8] sm:$0xff]
        %v1170 = vld [vmem:[%s988 + $0x300] sm:$0xff]
        %v1171 = vld [vmem:[%s988 + $0x308] sm:$0xff]
        %v1172 = vld [vmem:[%s988 + $0x310] sm:$0xff]
        %v1173 = vld [vmem:[%s988 + $0x318] sm:$0xff]
        %v1174 = vld [vmem:[%s988 + $0x320] sm:$0xff]
        %v1175 = vld [vmem:[%s988 + $0x328] sm:$0xff]
        %v1176 = vld [vmem:[%s988 + $0x330] sm:$0xff]
        %v1177 = vld [vmem:[%s988 + $0x338] sm:$0xff]
        %v1178 = vld [vmem:[%s988 + $0x340] sm:$0xff]
        %v1179 = vld [vmem:[%s988 + $0x348] sm:$0xff]
        %v1180 = vld [vmem:[%s988 + $0x350] sm:$0xff]
        %v1181 = vld [vmem:[%s988 + $0x358] sm:$0xff]
        %v1182 = vld [vmem:[%s988 + $0x360] sm:$0xff]
        %v1183 = vld [vmem:[%s988 + $0x368] sm:$0xff]
        %v1184 = vld [vmem:[%s988 + $0x370] sm:$0xff]
        %v1185 = vld [vmem:[%s988 + $0x378] sm:$0xff]
        %v1186 = vld [vmem:[%s988 + $0x380] sm:$0xff]
        %v1187 = vld [vmem:[%s988 + $0x388] sm:$0xff]
        %v1188 = vld [vmem:[%s988 + $0x390] sm:$0xff]
        %v1189 = vld [vmem:[%s988 + $0x398] sm:$0xff]
        %v1190 = vld [vmem:[%s988 + $0x3a0] sm:$0xff]
        %v1191 = vld [vmem:[%s988 + $0x3a8] sm:$0xff]
        %v1192 = vld [vmem:[%s988 + $0x3b0] sm:$0xff]
        %v1193 = vld [vmem:[%s988 + $0x3b8] sm:$0xff]
        %v1194 = vld [vmem:[%s988 + $0x3c0] sm:$0xff]
        %v1195 = vld [vmem:[%s988 + $0x3c8] sm:$0xff]
        %v1196 = vld [vmem:[%s988 + $0x3d0] sm:$0xff]
        %v1197 = vld [vmem:[%s988 + $0x3d8] sm:$0xff]
        %v1198 = vld [vmem:[%s988 + $0x3e0] sm:$0xff]
        %v1199 = vld [vmem:[%s988 + $0x3e8] sm:$0xff]
        %v1200 = vld [vmem:[%s988 + $0x3f0] sm:$0xff]
        %v1201 = vld [vmem:[%s988 + $0x3f8] sm:$0xff]
        %v1202 = vld [vmem:[%s3] sm:$0xf]
        %v1203 = vld [vmem:[%s3 + $0x4] sm:$0xf]
        %v1204 = vld [vmem:[%s3 + $0x8] sm:$0xf]
        %v1205 = vld [vmem:[%s3 + $0xc] sm:$0xf]
        %v1206 = vld [vmem:[%s3 + $0x10] sm:$0xf]
        %v1207 = vld [vmem:[%s3 + $0x14] sm:$0xf]
        %v1208 = vld [vmem:[%s3 + $0x18] sm:$0xf]
        %v1209 = vld [vmem:[%s3 + $0x1c] sm:$0xf]
        %v1210 = vld [vmem:[%s3 + $0x20] sm:$0xf]
        %v1211 = vld [vmem:[%s3 + $0x24] sm:$0xf]
        %v1212 = vld [vmem:[%s3 + $0x28] sm:$0xf]
        %v1213 = vld [vmem:[%s3 + $0x2c] sm:$0xf]
        %v1214 = vld [vmem:[%s3 + $0x30] sm:$0xf]
        %v1215 = vld [vmem:[%s3 + $0x34] sm:$0xf]
        %v1216 = vld [vmem:[%s3 + $0x38] sm:$0xf]
        %v1217 = vld [vmem:[%s3 + $0x3c] sm:$0xf]
        %v1218 = vld [vmem:[%s3 + $0x40] sm:$0xf]
        %v1219 = vld [vmem:[%s3 + $0x44] sm:$0xf]
        %v1220 = vld [vmem:[%s3 + $0x48] sm:$0xf]
        %v1221 = vld [vmem:[%s3 + $0x4c] sm:$0xf]
        %v1222 = vld [vmem:[%s3 + $0x50] sm:$0xf]
        %v1223 = vld [vmem:[%s3 + $0x54] sm:$0xf]
        %v1224 = vld [vmem:[%s3 + $0x58] sm:$0xf]
        %v1225 = vld [vmem:[%s3 + $0x5c] sm:$0xf]
        %v1226 = vld [vmem:[%s3 + $0x60] sm:$0xf]
        %v1227 = vld [vmem:[%s3 + $0x64] sm:$0xf]
        %v1228 = vld [vmem:[%s3 + $0x68] sm:$0xf]
        %v1229 = vld [vmem:[%s3 + $0x6c] sm:$0xf]
        %v1230 = vld [vmem:[%s3 + $0x70] sm:$0xf]
        %v1231 = vld [vmem:[%s3 + $0x74] sm:$0xf]
        %v1232 = vld [vmem:[%s3 + $0x78] sm:$0xf]
        %v1233 = vld [vmem:[%s3 + $0x7c] sm:$0xf]
        %v1234 = vld [vmem:[%s3 + $0x80] sm:$0xf]
        %v1235 = vld [vmem:[%s3 + $0x84] sm:$0xf]
        %v1236 = vld [vmem:[%s3 + $0x88] sm:$0xf]
        %v1237 = vld [vmem:[%s3 + $0x8c] sm:$0xf]
        %v1238 = vld [vmem:[%s3 + $0x90] sm:$0xf]
        %v1239 = vld [vmem:[%s3 + $0x94] sm:$0xf]
        %v1240 = vld [vmem:[%s3 + $0x98] sm:$0xf]
        %v1241 = vld [vmem:[%s3 + $0x9c] sm:$0xf]
        %v1242 = vld [vmem:[%s3 + $0xa0] sm:$0xf]
        %v1243 = vld [vmem:[%s3 + $0xa4] sm:$0xf]
        %v1244 = vld [vmem:[%s3 + $0xa8] sm:$0xf]
        %v1245 = vld [vmem:[%s3 + $0xac] sm:$0xf]
        %v1246 = vld [vmem:[%s3 + $0xb0] sm:$0xf]
        %v1247 = vld [vmem:[%s3 + $0xb4] sm:$0xf]
        %v1248 = vld [vmem:[%s3 + $0xb8] sm:$0xf]
        %v1249 = vld [vmem:[%s3 + $0xbc] sm:$0xf]
        %v1250 = vld [vmem:[%s3 + $0xc0] sm:$0xf]
        %v1251 = vld [vmem:[%s3 + $0xc4] sm:$0xf]
        %v1252 = vld [vmem:[%s3 + $0xc8] sm:$0xf]
        %v1253 = vld [vmem:[%s3 + $0xcc] sm:$0xf]
        %v1254 = vld [vmem:[%s3 + $0xd0] sm:$0xf]
        %v1255 = vld [vmem:[%s3 + $0xd4] sm:$0xf]
        %v1256 = vld [vmem:[%s3 + $0xd8] sm:$0xf]
        %v1257 = vld [vmem:[%s3 + $0xdc] sm:$0xf]
        %v1258 = vld [vmem:[%s3 + $0xe0] sm:$0xf]
        %v1259 = vld [vmem:[%s3 + $0xe4] sm:$0xf]
        %v1260 = vld [vmem:[%s3 + $0xe8] sm:$0xf]
        %v1261 = vld [vmem:[%s3 + $0xec] sm:$0xf]
        %v1262 = vld [vmem:[%s3 + $0xf0] sm:$0xf]
        %v1263 = vld [vmem:[%s3 + $0xf4] sm:$0xf]
        %v1264 = vld [vmem:[%s3 + $0xf8] sm:$0xf]
        %v1265 = vld [vmem:[%s3 + $0xfc] sm:$0xf]
        %v1266 = vld [vmem:[%s3 + $0x100] sm:$0xf]
        %v1267 = vld [vmem:[%s3 + $0x104] sm:$0xf]
        %v1268 = vld [vmem:[%s3 + $0x108] sm:$0xf]
        %v1269 = vld [vmem:[%s3 + $0x10c] sm:$0xf]
        %v1270 = vld [vmem:[%s3 + $0x110] sm:$0xf]
        %v1271 = vld [vmem:[%s3 + $0x114] sm:$0xf]
        %v1272 = vld [vmem:[%s3 + $0x118] sm:$0xf]
        %v1273 = vld [vmem:[%s3 + $0x11c] sm:$0xf]
        %v1274 = vld [vmem:[%s3 + $0x120] sm:$0xf]
        %v1275 = vld [vmem:[%s3 + $0x124] sm:$0xf]
        %v1276 = vld [vmem:[%s3 + $0x128] sm:$0xf]
        %v1277 = vld [vmem:[%s3 + $0x12c] sm:$0xf]
        %v1278 = vld [vmem:[%s3 + $0x130] sm:$0xf]
        %v1279 = vld [vmem:[%s3 + $0x134] sm:$0xf]
        %v1280 = vld [vmem:[%s3 + $0x138] sm:$0xf]
        %v1281 = vld [vmem:[%s3 + $0x13c] sm:$0xf]
        %v1282 = vld [vmem:[%s3 + $0x140] sm:$0xf]
        %v1283 = vld [vmem:[%s3 + $0x144] sm:$0xf]
        %v1284 = vld [vmem:[%s3 + $0x148] sm:$0xf]
        %v1285 = vld [vmem:[%s3 + $0x14c] sm:$0xf]
        %v1286 = vld [vmem:[%s3 + $0x150] sm:$0xf]
        %v1287 = vld [vmem:[%s3 + $0x154] sm:$0xf]
        %v1288 = vld [vmem:[%s3 + $0x158] sm:$0xf]
        %v1289 = vld [vmem:[%s3 + $0x15c] sm:$0xf]
        %v1290 = vld [vmem:[%s3 + $0x160] sm:$0xf]
        %v1291 = vld [vmem:[%s3 + $0x164] sm:$0xf]
        %v1292 = vld [vmem:[%s3 + $0x168] sm:$0xf]
        %v1293 = vld [vmem:[%s3 + $0x16c] sm:$0xf]
        %v1294 = vld [vmem:[%s3 + $0x170] sm:$0xf]
        %v1295 = vld [vmem:[%s3 + $0x174] sm:$0xf]
        %v1296 = vld [vmem:[%s3 + $0x178] sm:$0xf]
        %v1297 = vld [vmem:[%s3 + $0x17c] sm:$0xf]
        %v1298 = vld [vmem:[%s3 + $0x180] sm:$0xf]
        %v1299 = vld [vmem:[%s3 + $0x184] sm:$0xf]
        %v1300 = vld [vmem:[%s3 + $0x188] sm:$0xf]
        %v1301 = vld [vmem:[%s3 + $0x18c] sm:$0xf]
        %v1302 = vld [vmem:[%s3 + $0x190] sm:$0xf]
        %v1303 = vld [vmem:[%s3 + $0x194] sm:$0xf]
        %v1304 = vld [vmem:[%s3 + $0x198] sm:$0xf]
        %v1305 = vld [vmem:[%s3 + $0x19c] sm:$0xf]
        %v1306 = vld [vmem:[%s3 + $0x1a0] sm:$0xf]
        %v1307 = vld [vmem:[%s3 + $0x1a4] sm:$0xf]
        %v1308 = vld [vmem:[%s3 + $0x1a8] sm:$0xf]
        %v1309 = vld [vmem:[%s3 + $0x1ac] sm:$0xf]
        %v1310 = vld [vmem:[%s3 + $0x1b0] sm:$0xf]
        %v1311 = vld [vmem:[%s3 + $0x1b4] sm:$0xf]
        %v1312 = vld [vmem:[%s3 + $0x1b8] sm:$0xf]
        %v1313 = vld [vmem:[%s3 + $0x1bc] sm:$0xf]
        %v1314 = vld [vmem:[%s3 + $0x1c0] sm:$0xf]
        %v1315 = vld [vmem:[%s3 + $0x1c4] sm:$0xf]
        %v1316 = vld [vmem:[%s3 + $0x1c8] sm:$0xf]
        %v1317 = vld [vmem:[%s3 + $0x1cc] sm:$0xf]
        %v1318 = vld [vmem:[%s3 + $0x1d0] sm:$0xf]
        %v1319 = vld [vmem:[%s3 + $0x1d4] sm:$0xf]
        %v1320 = vld [vmem:[%s3 + $0x1d8] sm:$0xf]
        %v1321 = vld [vmem:[%s3 + $0x1dc] sm:$0xf]
        %v1322 = vld [vmem:[%s3 + $0x1e0] sm:$0xf]
        %v1323 = vld [vmem:[%s3 + $0x1e4] sm:$0xf]
        %v1324 = vld [vmem:[%s3 + $0x1e8] sm:$0xf]
        %v1325 = vld [vmem:[%s3 + $0x1ec] sm:$0xf]
        %v1326 = vld [vmem:[%s3 + $0x1f0] sm:$0xf]
        %v1327 = vld [vmem:[%s3 + $0x1f4] sm:$0xf]
        %v1328 = vld [vmem:[%s3 + $0x1f8] sm:$0xf]
        %v1329 = vld [vmem:[%s3 + $0x1fc] sm:$0xf]
        %v1330 = vld [vmem:[%s3 + $0x200] sm:$0xf]
        %v1331 = vld [vmem:[%s3 + $0x204] sm:$0xf]
        %v1332 = vld [vmem:[%s3 + $0x208] sm:$0xf]
        %v1333 = vld [vmem:[%s3 + $0x20c] sm:$0xf]
        %v1334 = vld [vmem:[%s3 + $0x210] sm:$0xf]
        %v1335 = vld [vmem:[%s3 + $0x214] sm:$0xf]
        %v1336 = vld [vmem:[%s3 + $0x218] sm:$0xf]
        %v1337 = vld [vmem:[%s3 + $0x21c] sm:$0xf]
        %v1338 = vld [vmem:[%s3 + $0x220] sm:$0xf]
        %v1339 = vld [vmem:[%s3 + $0x224] sm:$0xf]
        %v1340 = vld [vmem:[%s3 + $0x228] sm:$0xf]
        %v1341 = vld [vmem:[%s3 + $0x22c] sm:$0xf]
        %v1342 = vld [vmem:[%s3 + $0x230] sm:$0xf]
        %v1343 = vld [vmem:[%s3 + $0x234] sm:$0xf]
        %v1344 = vld [vmem:[%s3 + $0x238] sm:$0xf]
        %v1345 = vld [vmem:[%s3 + $0x23c] sm:$0xf]
        %v1346 = vld [vmem:[%s3 + $0x240] sm:$0xf]
        %v1347 = vld [vmem:[%s3 + $0x244] sm:$0xf]
        %v1348 = vld [vmem:[%s3 + $0x248] sm:$0xf]
        %v1349 = vld [vmem:[%s3 + $0x24c] sm:$0xf]
        %v1350 = vld [vmem:[%s3 + $0x250] sm:$0xf]
        %v1351 = vld [vmem:[%s3 + $0x254] sm:$0xf]
        %v1352 = vld [vmem:[%s3 + $0x258] sm:$0xf]
        %v1353 = vld [vmem:[%s3 + $0x25c] sm:$0xf]
        %v1354 = vld [vmem:[%s3 + $0x260] sm:$0xf]
        %v1355 = vld [vmem:[%s3 + $0x264] sm:$0xf]
        %v1356 = vld [vmem:[%s3 + $0x268] sm:$0xf]
        %v1357 = vld [vmem:[%s3 + $0x26c] sm:$0xf]
        %v1358 = vld [vmem:[%s3 + $0x270] sm:$0xf]
        %v1359 = vld [vmem:[%s3 + $0x274] sm:$0xf]
        %v1360 = vld [vmem:[%s3 + $0x278] sm:$0xf]
        %v1361 = vld [vmem:[%s3 + $0x27c] sm:$0xf]
        %v1362 = vld [vmem:[%s3 + $0x280] sm:$0xf]
        %v1363 = vld [vmem:[%s3 + $0x284] sm:$0xf]
        %v1364 = vld [vmem:[%s3 + $0x288] sm:$0xf]
        %v1365 = vld [vmem:[%s3 + $0x28c] sm:$0xf]
        %v1366 = vld [vmem:[%s3 + $0x290] sm:$0xf]
        %v1367 = vld [vmem:[%s3 + $0x294] sm:$0xf]
        %v1368 = vld [vmem:[%s3 + $0x298] sm:$0xf]
        %v1369 = vld [vmem:[%s3 + $0x29c] sm:$0xf]
        %v1370 = vld [vmem:[%s3 + $0x2a0] sm:$0xf]
        %v1371 = vld [vmem:[%s3 + $0x2a4] sm:$0xf]
        %v1372 = vld [vmem:[%s3 + $0x2a8] sm:$0xf]
        %v1373 = vld [vmem:[%s3 + $0x2ac] sm:$0xf]
        %v1374 = vld [vmem:[%s3 + $0x2b0] sm:$0xf]
        %v1375 = vld [vmem:[%s3 + $0x2b4] sm:$0xf]
        %v1376 = vld [vmem:[%s3 + $0x2b8] sm:$0xf]
        %v1377 = vld [vmem:[%s3 + $0x2bc] sm:$0xf]
        %v1378 = vld [vmem:[%s3 + $0x2c0] sm:$0xf]
        %v1379 = vld [vmem:[%s3 + $0x2c4] sm:$0xf]
        %v1380 = vld [vmem:[%s3 + $0x2c8] sm:$0xf]
        %v1381 = vld [vmem:[%s3 + $0x2cc] sm:$0xf]
        %v1382 = vld [vmem:[%s3 + $0x2d0] sm:$0xf]
        %v1383 = vld [vmem:[%s3 + $0x2d4] sm:$0xf]
        %v1384 = vld [vmem:[%s3 + $0x2d8] sm:$0xf]
        %v1385 = vld [vmem:[%s3 + $0x2dc] sm:$0xf]
        %v1386 = vld [vmem:[%s3 + $0x2e0] sm:$0xf]
        %v1387 = vld [vmem:[%s3 + $0x2e4] sm:$0xf]
        %v1388 = vld [vmem:[%s3 + $0x2e8] sm:$0xf]
        %v1389 = vld [vmem:[%s3 + $0x2ec] sm:$0xf]
        %v1390 = vld [vmem:[%s3 + $0x2f0] sm:$0xf]
        %v1391 = vld [vmem:[%s3 + $0x2f4] sm:$0xf]
        %v1392 = vld [vmem:[%s3 + $0x2f8] sm:$0xf]
        %v1393 = vld [vmem:[%s3 + $0x2fc] sm:$0xf]
        %v1394 = vld [vmem:[%s3 + $0x300] sm:$0xf]
        %v1395 = vld [vmem:[%s3 + $0x304] sm:$0xf]
        %v1396 = vld [vmem:[%s3 + $0x308] sm:$0xf]
        %v1397 = vld [vmem:[%s3 + $0x30c] sm:$0xf]
        %v1398 = vld [vmem:[%s3 + $0x310] sm:$0xf]
        %v1399 = vld [vmem:[%s3 + $0x314] sm:$0xf]
        %v1400 = vld [vmem:[%s3 + $0x318] sm:$0xf]
        %v1401 = vld [vmem:[%s3 + $0x31c] sm:$0xf]
        %v1402 = vld [vmem:[%s3 + $0x320] sm:$0xf]
        %v1403 = vld [vmem:[%s3 + $0x324] sm:$0xf]
        %v1404 = vld [vmem:[%s3 + $0x328] sm:$0xf]
        %v1405 = vld [vmem:[%s3 + $0x32c] sm:$0xf]
        %v1406 = vld [vmem:[%s3 + $0x330] sm:$0xf]
        %v1407 = vld [vmem:[%s3 + $0x334] sm:$0xf]
        %v1408 = vld [vmem:[%s3 + $0x338] sm:$0xf]
        %v1409 = vld [vmem:[%s3 + $0x33c] sm:$0xf]
        %v1410 = vld [vmem:[%s3 + $0x340] sm:$0xf]
        %v1411 = vld [vmem:[%s3 + $0x344] sm:$0xf]
        %v1412 = vld [vmem:[%s3 + $0x348] sm:$0xf]
        %v1413 = vld [vmem:[%s3 + $0x34c] sm:$0xf]
        %v1414 = vld [vmem:[%s3 + $0x350] sm:$0xf]
        %v1415 = vld [vmem:[%s3 + $0x354] sm:$0xf]
        %v1416 = vld [vmem:[%s3 + $0x358] sm:$0xf]
        %v1417 = vld [vmem:[%s3 + $0x35c] sm:$0xf]
        %v1418 = vld [vmem:[%s3 + $0x360] sm:$0xf]
        %v1419 = vld [vmem:[%s3 + $0x364] sm:$0xf]
        %v1420 = vld [vmem:[%s3 + $0x368] sm:$0xf]
        %v1421 = vld [vmem:[%s3 + $0x36c] sm:$0xf]
        %v1422 = vld [vmem:[%s3 + $0x370] sm:$0xf]
        %v1423 = vld [vmem:[%s3 + $0x374] sm:$0xf]
        %v1424 = vld [vmem:[%s3 + $0x378] sm:$0xf]
        %v1425 = vld [vmem:[%s3 + $0x37c] sm:$0xf]
        %v1426 = vld [vmem:[%s3 + $0x380] sm:$0xf]
        %v1427 = vld [vmem:[%s3 + $0x384] sm:$0xf]
        %v1428 = vld [vmem:[%s3 + $0x388] sm:$0xf]
        %v1429 = vld [vmem:[%s3 + $0x38c] sm:$0xf]
        %v1430 = vld [vmem:[%s3 + $0x390] sm:$0xf]
        %v1431 = vld [vmem:[%s3 + $0x394] sm:$0xf]
        %v1432 = vld [vmem:[%s3 + $0x398] sm:$0xf]
        %v1433 = vld [vmem:[%s3 + $0x39c] sm:$0xf]
        %v1434 = vld [vmem:[%s3 + $0x3a0] sm:$0xf]
        %v1435 = vld [vmem:[%s3 + $0x3a4] sm:$0xf]
        %v1436 = vld [vmem:[%s3 + $0x3a8] sm:$0xf]
        %v1437 = vld [vmem:[%s3 + $0x3ac] sm:$0xf]
        %v1438 = vld [vmem:[%s3 + $0x3b0] sm:$0xf]
        %v1439 = vld [vmem:[%s3 + $0x3b4] sm:$0xf]
        %v1440 = vld [vmem:[%s3 + $0x3b8] sm:$0xf]
        %v1441 = vld [vmem:[%s3 + $0x3bc] sm:$0xf]
        %v1442 = vld [vmem:[%s3 + $0x3c0] sm:$0xf]
        %v1443 = vld [vmem:[%s3 + $0x3c4] sm:$0xf]
        %v1444 = vld [vmem:[%s3 + $0x3c8] sm:$0xf]
        %v1445 = vld [vmem:[%s3 + $0x3cc] sm:$0xf]
        %v1446 = vld [vmem:[%s3 + $0x3d0] sm:$0xf]
        %v1447 = vld [vmem:[%s3 + $0x3d4] sm:$0xf]
        %v1448 = vld [vmem:[%s3 + $0x3d8] sm:$0xf]
        %v1449 = vld [vmem:[%s3 + $0x3dc] sm:$0xf]
        %v1450 = vld [vmem:[%s3 + $0x3e0] sm:$0xf]
        %v1451 = vld [vmem:[%s3 + $0x3e4] sm:$0xf]
        %v1452 = vld [vmem:[%s3 + $0x3e8] sm:$0xf]
        %v1453 = vld [vmem:[%s3 + $0x3ec] sm:$0xf]
        %v1454 = vld [vmem:[%s3 + $0x3f0] sm:$0xf]
        %v1455 = vld [vmem:[%s3 + $0x3f4] sm:$0xf]
        %v1456 = vld [vmem:[%s3 + $0x3f8] sm:$0xf]
        %v1457 = vld [vmem:[%s3 + $0x3fc] sm:$0xf]
        %v1458 = vld [vmem:[%s3 + $0x400] sm:$0xf]
        %v1459 = vld [vmem:[%s3 + $0x404] sm:$0xf]
        %v1460 = vld [vmem:[%s3 + $0x408] sm:$0xf]
        %v1461 = vld [vmem:[%s3 + $0x40c] sm:$0xf]
        %v1462 = vld [vmem:[%s3 + $0x410] sm:$0xf]
        %v1463 = vld [vmem:[%s3 + $0x414] sm:$0xf]
        %v1464 = vld [vmem:[%s3 + $0x418] sm:$0xf]
        %v1465 = vld [vmem:[%s3 + $0x41c] sm:$0xf]
        %v1466 = vld [vmem:[%s3 + $0x420] sm:$0xf]
        %v1467 = vld [vmem:[%s3 + $0x424] sm:$0xf]
        %v1468 = vld [vmem:[%s3 + $0x428] sm:$0xf]
        %v1469 = vld [vmem:[%s3 + $0x42c] sm:$0xf]
        %v1470 = vld [vmem:[%s3 + $0x430] sm:$0xf]
        %v1471 = vld [vmem:[%s3 + $0x434] sm:$0xf]
        %v1472 = vld [vmem:[%s3 + $0x438] sm:$0xf]
        %v1473 = vld [vmem:[%s3 + $0x43c] sm:$0xf]
        %v1474 = vld [vmem:[%s3 + $0x440] sm:$0xf]
        %v1475 = vld [vmem:[%s3 + $0x444] sm:$0xf]
        %v1476 = vld [vmem:[%s3 + $0x448] sm:$0xf]
        %v1477 = vld [vmem:[%s3 + $0x44c] sm:$0xf]
        %v1478 = vld [vmem:[%s3 + $0x450] sm:$0xf]
        %v1479 = vld [vmem:[%s3 + $0x454] sm:$0xf]
        %v1480 = vld [vmem:[%s3 + $0x458] sm:$0xf]
        %v1481 = vld [vmem:[%s3 + $0x45c] sm:$0xf]
        %v1482 = vld [vmem:[%s3 + $0x460] sm:$0xf]
        %v1483 = vld [vmem:[%s3 + $0x464] sm:$0xf]
        %v1484 = vld [vmem:[%s3 + $0x468] sm:$0xf]
        %v1485 = vld [vmem:[%s3 + $0x46c] sm:$0xf]
        %v1486 = vld [vmem:[%s3 + $0x470] sm:$0xf]
        %v1487 = vld [vmem:[%s3 + $0x474] sm:$0xf]
        %v1488 = vld [vmem:[%s3 + $0x478] sm:$0xf]
        %v1489 = vld [vmem:[%s3 + $0x47c] sm:$0xf]
        %v1490 = vld [vmem:[%s3 + $0x480] sm:$0xf]
        %v1491 = vld [vmem:[%s3 + $0x484] sm:$0xf]
        %v1492 = vld [vmem:[%s3 + $0x488] sm:$0xf]
        %v1493 = vld [vmem:[%s3 + $0x48c] sm:$0xf]
        %v1494 = vld [vmem:[%s3 + $0x490] sm:$0xf]
        %v1495 = vld [vmem:[%s3 + $0x494] sm:$0xf]
        %v1496 = vld [vmem:[%s3 + $0x498] sm:$0xf]
        %v1497 = vld [vmem:[%s3 + $0x49c] sm:$0xf]
        %v1498 = vld [vmem:[%s3 + $0x4a0] sm:$0xf]
        %v1499 = vld [vmem:[%s3 + $0x4a4] sm:$0xf]
        %v1500 = vld [vmem:[%s3 + $0x4a8] sm:$0xf]
        %v1501 = vld [vmem:[%s3 + $0x4ac] sm:$0xf]
        %v1502 = vld [vmem:[%s3 + $0x4b0] sm:$0xf]
        %v1503 = vld [vmem:[%s3 + $0x4b4] sm:$0xf]
        %v1504 = vld [vmem:[%s3 + $0x4b8] sm:$0xf]
        %v1505 = vld [vmem:[%s3 + $0x4bc] sm:$0xf]
        %v1506 = vld [vmem:[%s3 + $0x4c0] sm:$0xf]
        %v1507 = vld [vmem:[%s3 + $0x4c4] sm:$0xf]
        %v1508 = vld [vmem:[%s3 + $0x4c8] sm:$0xf]
        %v1509 = vld [vmem:[%s3 + $0x4cc] sm:$0xf]
        %v1510 = vld [vmem:[%s3 + $0x4d0] sm:$0xf]
        %v1511 = vld [vmem:[%s3 + $0x4d4] sm:$0xf]
        %v1512 = vld [vmem:[%s3 + $0x4d8] sm:$0xf]
        %v1513 = vld [vmem:[%s3 + $0x4dc] sm:$0xf]
        %v1514 = vld [vmem:[%s3 + $0x4e0] sm:$0xf]
        %v1515 = vld [vmem:[%s3 + $0x4e4] sm:$0xf]
        %v1516 = vld [vmem:[%s3 + $0x4e8] sm:$0xf]
        %v1517 = vld [vmem:[%s3 + $0x4ec] sm:$0xf]
        %v1518 = vld [vmem:[%s3 + $0x4f0] sm:$0xf]
        %v1519 = vld [vmem:[%s3 + $0x4f4] sm:$0xf]
        %v1520 = vld [vmem:[%s3 + $0x4f8] sm:$0xf]
        %v1521 = vld [vmem:[%s3 + $0x4fc] sm:$0xf]
        %v1522 = vld [vmem:[%s3 + $0x500] sm:$0xf]
        %v1523 = vld [vmem:[%s3 + $0x504] sm:$0xf]
        %v1524 = vld [vmem:[%s3 + $0x508] sm:$0xf]
        %v1525 = vld [vmem:[%s3 + $0x50c] sm:$0xf]
        %v1526 = vld [vmem:[%s3 + $0x510] sm:$0xf]
        %v1527 = vld [vmem:[%s3 + $0x514] sm:$0xf]
        %v1528 = vld [vmem:[%s3 + $0x518] sm:$0xf]
        %v1529 = vld [vmem:[%s3 + $0x51c] sm:$0xf]
        %v1530 = vld [vmem:[%s3 + $0x520] sm:$0xf]
        %v1531 = vld [vmem:[%s3 + $0x524] sm:$0xf]
        %v1532 = vld [vmem:[%s3 + $0x528] sm:$0xf]
        %v1533 = vld [vmem:[%s3 + $0x52c] sm:$0xf]
        %v1534 = vld [vmem:[%s3 + $0x530] sm:$0xf]
        %v1535 = vld [vmem:[%s3 + $0x534] sm:$0xf]
        %v1536 = vld [vmem:[%s3 + $0x538] sm:$0xf]
        %v1537 = vld [vmem:[%s3 + $0x53c] sm:$0xf]
        %v1538 = vld [vmem:[%s3 + $0x540] sm:$0xf]
        %v1539 = vld [vmem:[%s3 + $0x544] sm:$0xf]
        %v1540 = vld [vmem:[%s3 + $0x548] sm:$0xf]
        %v1541 = vld [vmem:[%s3 + $0x54c] sm:$0xf]
        %v1542 = vld [vmem:[%s3 + $0x550] sm:$0xf]
        %v1543 = vld [vmem:[%s3 + $0x554] sm:$0xf]
        %v1544 = vld [vmem:[%s3 + $0x558] sm:$0xf]
        %v1545 = vld [vmem:[%s3 + $0x55c] sm:$0xf]
        %v1546 = vld [vmem:[%s3 + $0x560] sm:$0xf]
        %v1547 = vld [vmem:[%s3 + $0x564] sm:$0xf]
        %v1548 = vld [vmem:[%s3 + $0x568] sm:$0xf]
        %v1549 = vld [vmem:[%s3 + $0x56c] sm:$0xf]
        %v1550 = vld [vmem:[%s3 + $0x570] sm:$0xf]
        %v1551 = vld [vmem:[%s3 + $0x574] sm:$0xf]
        %v1552 = vld [vmem:[%s3 + $0x578] sm:$0xf]
        %v1553 = vld [vmem:[%s3 + $0x57c] sm:$0xf]
        %v1554 = vld [vmem:[%s3 + $0x580] sm:$0xf]
        %v1555 = vld [vmem:[%s3 + $0x584] sm:$0xf]
        %v1556 = vld [vmem:[%s3 + $0x588] sm:$0xf]
        %v1557 = vld [vmem:[%s3 + $0x58c] sm:$0xf]
        %v1558 = vld [vmem:[%s3 + $0x590] sm:$0xf]
        %v1559 = vld [vmem:[%s3 + $0x594] sm:$0xf]
        %v1560 = vld [vmem:[%s3 + $0x598] sm:$0xf]
        %v1561 = vld [vmem:[%s3 + $0x59c] sm:$0xf]
        %v1562 = vld [vmem:[%s3 + $0x5a0] sm:$0xf]
        %v1563 = vld [vmem:[%s3 + $0x5a4] sm:$0xf]
        %v1564 = vld [vmem:[%s3 + $0x5a8] sm:$0xf]
        %v1565 = vld [vmem:[%s3 + $0x5ac] sm:$0xf]
        %v1566 = vld [vmem:[%s3 + $0x5b0] sm:$0xf]
        %v1567 = vld [vmem:[%s3 + $0x5b4] sm:$0xf]
        %v1568 = vld [vmem:[%s3 + $0x5b8] sm:$0xf]
        %v1569 = vld [vmem:[%s3 + $0x5bc] sm:$0xf]
        %v1570 = vld [vmem:[%s3 + $0x5c0] sm:$0xf]
        %v1571 = vld [vmem:[%s3 + $0x5c4] sm:$0xf]
        %v1572 = vld [vmem:[%s3 + $0x5c8] sm:$0xf]
        %v1573 = vld [vmem:[%s3 + $0x5cc] sm:$0xf]
        %v1574 = vld [vmem:[%s3 + $0x5d0] sm:$0xf]
        %v1575 = vld [vmem:[%s3 + $0x5d4] sm:$0xf]
        %v1576 = vld [vmem:[%s3 + $0x5d8] sm:$0xf]
        %v1577 = vld [vmem:[%s3 + $0x5dc] sm:$0xf]
        %v1578 = vld [vmem:[%s3 + $0x5e0] sm:$0xf]
        %v1579 = vld [vmem:[%s3 + $0x5e4] sm:$0xf]
        %v1580 = vld [vmem:[%s3 + $0x5e8] sm:$0xf]
        %v1581 = vld [vmem:[%s3 + $0x5ec] sm:$0xf]
        %v1582 = vld [vmem:[%s3 + $0x5f0] sm:$0xf]
        %v1583 = vld [vmem:[%s3 + $0x5f4] sm:$0xf]
        %v1584 = vld [vmem:[%s3 + $0x5f8] sm:$0xf]
        %v1585 = vld [vmem:[%s3 + $0x5fc] sm:$0xf]
        %v1586 = vld [vmem:[%s3 + $0x600] sm:$0xf]
        %v1587 = vld [vmem:[%s3 + $0x604] sm:$0xf]
        %v1588 = vld [vmem:[%s3 + $0x608] sm:$0xf]
        %v1589 = vld [vmem:[%s3 + $0x60c] sm:$0xf]
        %v1590 = vld [vmem:[%s3 + $0x610] sm:$0xf]
        %v1591 = vld [vmem:[%s3 + $0x614] sm:$0xf]
        %v1592 = vld [vmem:[%s3 + $0x618] sm:$0xf]
        %v1593 = vld [vmem:[%s3 + $0x61c] sm:$0xf]
        %v1594 = vld [vmem:[%s3 + $0x620] sm:$0xf]
        %v1595 = vld [vmem:[%s3 + $0x624] sm:$0xf]
        %v1596 = vld [vmem:[%s3 + $0x628] sm:$0xf]
        %v1597 = vld [vmem:[%s3 + $0x62c] sm:$0xf]
        %v1598 = vld [vmem:[%s3 + $0x630] sm:$0xf]
        %v1599 = vld [vmem:[%s3 + $0x634] sm:$0xf]
        %v1600 = vld [vmem:[%s3 + $0x638] sm:$0xf]
        %v1601 = vld [vmem:[%s3 + $0x63c] sm:$0xf]
        %v1602 = vld [vmem:[%s3 + $0x640] sm:$0xf]
        %v1603 = vld [vmem:[%s3 + $0x644] sm:$0xf]
        %v1604 = vld [vmem:[%s3 + $0x648] sm:$0xf]
        %v1605 = vld [vmem:[%s3 + $0x64c] sm:$0xf]
        %v1606 = vld [vmem:[%s3 + $0x650] sm:$0xf]
        %v1607 = vld [vmem:[%s3 + $0x654] sm:$0xf]
        %v1608 = vld [vmem:[%s3 + $0x658] sm:$0xf]
        %v1609 = vld [vmem:[%s3 + $0x65c] sm:$0xf]
        %v1610 = vld [vmem:[%s3 + $0x660] sm:$0xf]
        %v1611 = vld [vmem:[%s3 + $0x664] sm:$0xf]
        %v1612 = vld [vmem:[%s3 + $0x668] sm:$0xf]
        %v1613 = vld [vmem:[%s3 + $0x66c] sm:$0xf]
        %v1614 = vld [vmem:[%s3 + $0x670] sm:$0xf]
        %v1615 = vld [vmem:[%s3 + $0x674] sm:$0xf]
        %v1616 = vld [vmem:[%s3 + $0x678] sm:$0xf]
        %v1617 = vld [vmem:[%s3 + $0x67c] sm:$0xf]
        %v1618 = vld [vmem:[%s3 + $0x680] sm:$0xf]
        %v1619 = vld [vmem:[%s3 + $0x684] sm:$0xf]
        %v1620 = vld [vmem:[%s3 + $0x688] sm:$0xf]
        %v1621 = vld [vmem:[%s3 + $0x68c] sm:$0xf]
        %v1622 = vld [vmem:[%s3 + $0x690] sm:$0xf]
        %v1623 = vld [vmem:[%s3 + $0x694] sm:$0xf]
        %v1624 = vld [vmem:[%s3 + $0x698] sm:$0xf]
        %v1625 = vld [vmem:[%s3 + $0x69c] sm:$0xf]
        %v1626 = vld [vmem:[%s3 + $0x6a0] sm:$0xf]
        %v1627 = vld [vmem:[%s3 + $0x6a4] sm:$0xf]
        %v1628 = vld [vmem:[%s3 + $0x6a8] sm:$0xf]
        %v1629 = vld [vmem:[%s3 + $0x6ac] sm:$0xf]
        %v1630 = vld [vmem:[%s3 + $0x6b0] sm:$0xf]
        %v1631 = vld [vmem:[%s3 + $0x6b4] sm:$0xf]
        %v1632 = vld [vmem:[%s3 + $0x6b8] sm:$0xf]
        %v1633 = vld [vmem:[%s3 + $0x6bc] sm:$0xf]
        %v1634 = vld [vmem:[%s3 + $0x6c0] sm:$0xf]
        %v1635 = vld [vmem:[%s3 + $0x6c4] sm:$0xf]
        %v1636 = vld [vmem:[%s3 + $0x6c8] sm:$0xf]
        %v1637 = vld [vmem:[%s3 + $0x6cc] sm:$0xf]
        %v1638 = vld [vmem:[%s3 + $0x6d0] sm:$0xf]
        %v1639 = vld [vmem:[%s3 + $0x6d4] sm:$0xf]
        %v1640 = vld [vmem:[%s3 + $0x6d8] sm:$0xf]
        %v1641 = vld [vmem:[%s3 + $0x6dc] sm:$0xf]
        %v1642 = vld [vmem:[%s3 + $0x6e0] sm:$0xf]
        %v1643 = vld [vmem:[%s3 + $0x6e4] sm:$0xf]
        %v1644 = vld [vmem:[%s3 + $0x6e8] sm:$0xf]
        %v1645 = vld [vmem:[%s3 + $0x6ec] sm:$0xf]
        %v1646 = vld [vmem:[%s3 + $0x6f0] sm:$0xf]
        %v1647 = vld [vmem:[%s3 + $0x6f4] sm:$0xf]
        %v1648 = vld [vmem:[%s3 + $0x6f8] sm:$0xf]
        %v1649 = vld [vmem:[%s3 + $0x6fc] sm:$0xf]
        %v1650 = vld [vmem:[%s3 + $0x700] sm:$0xf]
        %v1651 = vld [vmem:[%s3 + $0x704] sm:$0xf]
        %v1652 = vld [vmem:[%s3 + $0x708] sm:$0xf]
        %v1653 = vld [vmem:[%s3 + $0x70c] sm:$0xf]
        %v1654 = vld [vmem:[%s3 + $0x710] sm:$0xf]
        %v1655 = vld [vmem:[%s3 + $0x714] sm:$0xf]
        %v1656 = vld [vmem:[%s3 + $0x718] sm:$0xf]
        %v1657 = vld [vmem:[%s3 + $0x71c] sm:$0xf]
        %v1658 = vld [vmem:[%s3 + $0x720] sm:$0xf]
        %v1659 = vld [vmem:[%s3 + $0x724] sm:$0xf]
        %v1660 = vld [vmem:[%s3 + $0x728] sm:$0xf]
        %v1661 = vld [vmem:[%s3 + $0x72c] sm:$0xf]
        %v1662 = vld [vmem:[%s3 + $0x730] sm:$0xf]
        %v1663 = vld [vmem:[%s3 + $0x734] sm:$0xf]
        %v1664 = vld [vmem:[%s3 + $0x738] sm:$0xf]
        %v1665 = vld [vmem:[%s3 + $0x73c] sm:$0xf]
        %v1666 = vld [vmem:[%s3 + $0x740] sm:$0xf]
        %v1667 = vld [vmem:[%s3 + $0x744] sm:$0xf]
        %v1668 = vld [vmem:[%s3 + $0x748] sm:$0xf]
        %v1669 = vld [vmem:[%s3 + $0x74c] sm:$0xf]
        %v1670 = vld [vmem:[%s3 + $0x750] sm:$0xf]
        %v1671 = vld [vmem:[%s3 + $0x754] sm:$0xf]
        %v1672 = vld [vmem:[%s3 + $0x758] sm:$0xf]
        %v1673 = vld [vmem:[%s3 + $0x75c] sm:$0xf]
        %v1674 = vld [vmem:[%s3 + $0x760] sm:$0xf]
        %v1675 = vld [vmem:[%s3 + $0x764] sm:$0xf]
        %v1676 = vld [vmem:[%s3 + $0x768] sm:$0xf]
        %v1677 = vld [vmem:[%s3 + $0x76c] sm:$0xf]
        %v1678 = vld [vmem:[%s3 + $0x770] sm:$0xf]
        %v1679 = vld [vmem:[%s3 + $0x774] sm:$0xf]
        %v1680 = vld [vmem:[%s3 + $0x778] sm:$0xf]
        %v1681 = vld [vmem:[%s3 + $0x77c] sm:$0xf]
        %v1682 = vld [vmem:[%s3 + $0x780] sm:$0xf]
        %v1683 = vld [vmem:[%s3 + $0x784] sm:$0xf]
        %v1684 = vld [vmem:[%s3 + $0x788] sm:$0xf]
        %v1685 = vld [vmem:[%s3 + $0x78c] sm:$0xf]
        %v1686 = vld [vmem:[%s3 + $0x790] sm:$0xf]
        %v1687 = vld [vmem:[%s3 + $0x794] sm:$0xf]
        %v1688 = vld [vmem:[%s3 + $0x798] sm:$0xf]
        %v1689 = vld [vmem:[%s3 + $0x79c] sm:$0xf]
        %v1690 = vld [vmem:[%s3 + $0x7a0] sm:$0xf]
        %v1691 = vld [vmem:[%s3 + $0x7a4] sm:$0xf]
        %v1692 = vld [vmem:[%s3 + $0x7a8] sm:$0xf]
        %v1693 = vld [vmem:[%s3 + $0x7ac] sm:$0xf]
        %v1694 = vld [vmem:[%s3 + $0x7b0] sm:$0xf]
        %v1695 = vld [vmem:[%s3 + $0x7b4] sm:$0xf]
        %v1696 = vld [vmem:[%s3 + $0x7b8] sm:$0xf]
        %v1697 = vld [vmem:[%s3 + $0x7bc] sm:$0xf]
        %v1698 = vld [vmem:[%s3 + $0x7c0] sm:$0xf]
        %v1699 = vld [vmem:[%s3 + $0x7c4] sm:$0xf]
        %v1700 = vld [vmem:[%s3 + $0x7c8] sm:$0xf]
        %v1701 = vld [vmem:[%s3 + $0x7cc] sm:$0xf]
        %v1702 = vld [vmem:[%s3 + $0x7d0] sm:$0xf]
        %v1703 = vld [vmem:[%s3 + $0x7d4] sm:$0xf]
        %v1704 = vld [vmem:[%s3 + $0x7d8] sm:$0xf]
        %v1705 = vld [vmem:[%s3 + $0x7dc] sm:$0xf]
        %v1706 = vld [vmem:[%s3 + $0x7e0] sm:$0xf]
        %v1707 = vld [vmem:[%s3 + $0x7e4] sm:$0xf]
        %v1708 = vld [vmem:[%s3 + $0x7e8] sm:$0xf]
        %v1709 = vld [vmem:[%s3 + $0x7ec] sm:$0xf]
        %v1710 = vld [vmem:[%s3 + $0x7f0] sm:$0xf]
        %v1711 = vld [vmem:[%s3 + $0x7f4] sm:$0xf]
        %v1712 = vld [vmem:[%s3 + $0x7f8] sm:$0xf]
        %v1713 = vld [vmem:[%s3 + $0x7fc] sm:$0xf]
        %v1842 = vunpack.c.l.b16 %v1074
        %v1843 = vunpack.c.h.b16 %v1074
        %v1844 = vunpack.c.l.b16 %v1075
        %v1845 = vunpack.c.h.b16 %v1075
        %v1846 = vunpack.c.l.b16 %v1076
        %v1847 = vunpack.c.h.b16 %v1076
        %v1848 = vunpack.c.l.b16 %v1077
        %v1849 = vunpack.c.h.b16 %v1077
        %v1850 = vunpack.c.l.b16 %v1078
        %v1851 = vunpack.c.h.b16 %v1078
        %v1852 = vunpack.c.l.b16 %v1079
        %v1853 = vunpack.c.h.b16 %v1079
        %v1854 = vunpack.c.l.b16 %v1080
        %v1855 = vunpack.c.h.b16 %v1080
        %v1856 = vunpack.c.l.b16 %v1081
        %v1857 = vunpack.c.h.b16 %v1081
        %v1858 = vunpack.c.l.b16 %v1082
        %v1859 = vunpack.c.h.b16 %v1082
        %v1860 = vunpack.c.l.b16 %v1083
        %v1861 = vunpack.c.h.b16 %v1083
        %v1862 = vunpack.c.l.b16 %v1084
        %v1863 = vunpack.c.h.b16 %v1084
        %v1864 = vunpack.c.l.b16 %v1085
        %v1865 = vunpack.c.h.b16 %v1085
        %v1866 = vunpack.c.l.b16 %v1086
        %v1867 = vunpack.c.h.b16 %v1086
        %v1868 = vunpack.c.l.b16 %v1087
        %v1869 = vunpack.c.h.b16 %v1087
        %v1870 = vunpack.c.l.b16 %v1088
        %v1871 = vunpack.c.h.b16 %v1088
        %v1872 = vunpack.c.l.b16 %v1089
        %v1873 = vunpack.c.h.b16 %v1089
        %v1874 = vunpack.c.l.b16 %v1090
        %v1875 = vunpack.c.h.b16 %v1090
        %v1876 = vunpack.c.l.b16 %v1091
        %v1877 = vunpack.c.h.b16 %v1091
        %v1878 = vunpack.c.l.b16 %v1092
        %v1879 = vunpack.c.h.b16 %v1092
        %v1880 = vunpack.c.l.b16 %v1093
        %v1881 = vunpack.c.h.b16 %v1093
        %v1882 = vunpack.c.l.b16 %v1094
        %v1883 = vunpack.c.h.b16 %v1094
        %v1884 = vunpack.c.l.b16 %v1095
        %v1885 = vunpack.c.h.b16 %v1095
        %v1886 = vunpack.c.l.b16 %v1096
        %v1887 = vunpack.c.h.b16 %v1096
        %v1888 = vunpack.c.l.b16 %v1097
        %v1889 = vunpack.c.h.b16 %v1097
        %v1890 = vunpack.c.l.b16 %v1098
        %v1891 = vunpack.c.h.b16 %v1098
        %v1892 = vunpack.c.l.b16 %v1099
        %v1893 = vunpack.c.h.b16 %v1099
        %v1894 = vunpack.c.l.b16 %v1100
        %v1895 = vunpack.c.h.b16 %v1100
        %v1896 = vunpack.c.l.b16 %v1101
        %v1897 = vunpack.c.h.b16 %v1101
        %v1898 = vunpack.c.l.b16 %v1102
        %v1899 = vunpack.c.h.b16 %v1102
        %v1900 = vunpack.c.l.b16 %v1103
        %v1901 = vunpack.c.h.b16 %v1103
        %v1902 = vunpack.c.l.b16 %v1104
        %v1903 = vunpack.c.h.b16 %v1104
        %v1904 = vunpack.c.l.b16 %v1105
        %v1905 = vunpack.c.h.b16 %v1105
        %v1906 = vunpack.c.l.b16 %v1106
        %v1907 = vunpack.c.h.b16 %v1106
        %v1908 = vunpack.c.l.b16 %v1107
        %v1909 = vunpack.c.h.b16 %v1107
        %v1910 = vunpack.c.l.b16 %v1108
        %v1911 = vunpack.c.h.b16 %v1108
        %v1912 = vunpack.c.l.b16 %v1109
        %v1913 = vunpack.c.h.b16 %v1109
        %v1914 = vunpack.c.l.b16 %v1110
        %v1915 = vunpack.c.h.b16 %v1110
        %v1916 = vunpack.c.l.b16 %v1111
        %v1917 = vunpack.c.h.b16 %v1111
        %v1918 = vunpack.c.l.b16 %v1112
        %v1919 = vunpack.c.h.b16 %v1112
        %v1920 = vunpack.c.l.b16 %v1113
        %v1921 = vunpack.c.h.b16 %v1113
        %v1922 = vunpack.c.l.b16 %v1114
        %v1923 = vunpack.c.h.b16 %v1114
        %v1924 = vunpack.c.l.b16 %v1115
        %v1925 = vunpack.c.h.b16 %v1115
        %v1926 = vunpack.c.l.b16 %v1116
        %v1927 = vunpack.c.h.b16 %v1116
        %v1928 = vunpack.c.l.b16 %v1117
        %v1929 = vunpack.c.h.b16 %v1117
        %v1930 = vunpack.c.l.b16 %v1118
        %v1931 = vunpack.c.h.b16 %v1118
        %v1932 = vunpack.c.l.b16 %v1119
        %v1933 = vunpack.c.h.b16 %v1119
        %v1934 = vunpack.c.l.b16 %v1120
        %v1935 = vunpack.c.h.b16 %v1120
        %v1936 = vunpack.c.l.b16 %v1121
        %v1937 = vunpack.c.h.b16 %v1121
        %v1938 = vunpack.c.l.b16 %v1122
        %v1939 = vunpack.c.h.b16 %v1122
        %v1940 = vunpack.c.l.b16 %v1123
        %v1941 = vunpack.c.h.b16 %v1123
        %v1942 = vunpack.c.l.b16 %v1124
        %v1943 = vunpack.c.h.b16 %v1124
        %v1944 = vunpack.c.l.b16 %v1125
        %v1945 = vunpack.c.h.b16 %v1125
        %v1946 = vunpack.c.l.b16 %v1126
        %v1947 = vunpack.c.h.b16 %v1126
        %v1948 = vunpack.c.l.b16 %v1127
        %v1949 = vunpack.c.h.b16 %v1127
        %v1950 = vunpack.c.l.b16 %v1128
        %v1951 = vunpack.c.h.b16 %v1128
        %v1952 = vunpack.c.l.b16 %v1129
        %v1953 = vunpack.c.h.b16 %v1129
        %v1954 = vunpack.c.l.b16 %v1130
        %v1955 = vunpack.c.h.b16 %v1130
        %v1956 = vunpack.c.l.b16 %v1131
        %v1957 = vunpack.c.h.b16 %v1131
        %v1958 = vunpack.c.l.b16 %v1132
        %v1959 = vunpack.c.h.b16 %v1132
        %v1960 = vunpack.c.l.b16 %v1133
        %v1961 = vunpack.c.h.b16 %v1133
        %v1962 = vunpack.c.l.b16 %v1134
        %v1963 = vunpack.c.h.b16 %v1134
        %v1964 = vunpack.c.l.b16 %v1135
        %v1965 = vunpack.c.h.b16 %v1135
        %v1966 = vunpack.c.l.b16 %v1136
        %v1967 = vunpack.c.h.b16 %v1136
        %v1968 = vunpack.c.l.b16 %v1137
        %v1969 = vunpack.c.h.b16 %v1137
        %v1970 = vunpack.c.l.b16 %v1138
        %v1971 = vunpack.c.h.b16 %v1138
        %v1972 = vunpack.c.l.b16 %v1139
        %v1973 = vunpack.c.h.b16 %v1139
        %v1974 = vunpack.c.l.b16 %v1140
        %v1975 = vunpack.c.h.b16 %v1140
        %v1976 = vunpack.c.l.b16 %v1141
        %v1977 = vunpack.c.h.b16 %v1141
        %v1978 = vunpack.c.l.b16 %v1142
        %v1979 = vunpack.c.h.b16 %v1142
        %v1980 = vunpack.c.l.b16 %v1143
        %v1981 = vunpack.c.h.b16 %v1143
        %v1982 = vunpack.c.l.b16 %v1144
        %v1983 = vunpack.c.h.b16 %v1144
        %v1984 = vunpack.c.l.b16 %v1145
        %v1985 = vunpack.c.h.b16 %v1145
        %v1986 = vunpack.c.l.b16 %v1146
        %v1987 = vunpack.c.h.b16 %v1146
        %v1988 = vunpack.c.l.b16 %v1147
        %v1989 = vunpack.c.h.b16 %v1147
        %v1990 = vunpack.c.l.b16 %v1148
        %v1991 = vunpack.c.h.b16 %v1148
        %v1992 = vunpack.c.l.b16 %v1149
        %v1993 = vunpack.c.h.b16 %v1149
        %v1994 = vunpack.c.l.b16 %v1150
        %v1995 = vunpack.c.h.b16 %v1150
        %v1996 = vunpack.c.l.b16 %v1151
        %v1997 = vunpack.c.h.b16 %v1151
        %v1998 = vunpack.c.l.b16 %v1152
        %v1999 = vunpack.c.h.b16 %v1152
        %v2000 = vunpack.c.l.b16 %v1153
        %v2001 = vunpack.c.h.b16 %v1153
        %v2002 = vunpack.c.l.b16 %v1154
        %v2003 = vunpack.c.h.b16 %v1154
        %v2004 = vunpack.c.l.b16 %v1155
        %v2005 = vunpack.c.h.b16 %v1155
        %v2006 = vunpack.c.l.b16 %v1156
        %v2007 = vunpack.c.h.b16 %v1156
        %v2008 = vunpack.c.l.b16 %v1157
        %v2009 = vunpack.c.h.b16 %v1157
        %v2010 = vunpack.c.l.b16 %v1158
        %v2011 = vunpack.c.h.b16 %v1158
        %v2012 = vunpack.c.l.b16 %v1159
        %v2013 = vunpack.c.h.b16 %v1159
        %v2014 = vunpack.c.l.b16 %v1160
        %v2015 = vunpack.c.h.b16 %v1160
        %v2016 = vunpack.c.l.b16 %v1161
        %v2017 = vunpack.c.h.b16 %v1161
        %v2018 = vunpack.c.l.b16 %v1162
        %v2019 = vunpack.c.h.b16 %v1162
        %v2020 = vunpack.c.l.b16 %v1163
        %v2021 = vunpack.c.h.b16 %v1163
        %v2022 = vunpack.c.l.b16 %v1164
        %v2023 = vunpack.c.h.b16 %v1164
        %v2024 = vunpack.c.l.b16 %v1165
        %v2025 = vunpack.c.h.b16 %v1165
        %v2026 = vunpack.c.l.b16 %v1166
        %v2027 = vunpack.c.h.b16 %v1166
        %v2028 = vunpack.c.l.b16 %v1167
        %v2029 = vunpack.c.h.b16 %v1167
        %v2030 = vunpack.c.l.b16 %v1168
        %v2031 = vunpack.c.h.b16 %v1168
        %v2032 = vunpack.c.l.b16 %v1169
        %v2033 = vunpack.c.h.b16 %v1169
        %v2034 = vunpack.c.l.b16 %v1170
        %v2035 = vunpack.c.h.b16 %v1170
        %v2036 = vunpack.c.l.b16 %v1171
        %v2037 = vunpack.c.h.b16 %v1171
        %v2038 = vunpack.c.l.b16 %v1172
        %v2039 = vunpack.c.h.b16 %v1172
        %v2040 = vunpack.c.l.b16 %v1173
        %v2041 = vunpack.c.h.b16 %v1173
        %v2042 = vunpack.c.l.b16 %v1174
        %v2043 = vunpack.c.h.b16 %v1174
        %v2044 = vunpack.c.l.b16 %v1175
        %v2045 = vunpack.c.h.b16 %v1175
        %v2046 = vunpack.c.l.b16 %v1176
        %v2047 = vunpack.c.h.b16 %v1176
        %v2048 = vunpack.c.l.b16 %v1177
        %v2049 = vunpack.c.h.b16 %v1177
        %v2050 = vunpack.c.l.b16 %v1178
        %v2051 = vunpack.c.h.b16 %v1178
        %v2052 = vunpack.c.l.b16 %v1179
        %v2053 = vunpack.c.h.b16 %v1179
        %v2054 = vunpack.c.l.b16 %v1180
        %v2055 = vunpack.c.h.b16 %v1180
        %v2056 = vunpack.c.l.b16 %v1181
        %v2057 = vunpack.c.h.b16 %v1181
        %v2058 = vunpack.c.l.b16 %v1182
        %v2059 = vunpack.c.h.b16 %v1182
        %v2060 = vunpack.c.l.b16 %v1183
        %v2061 = vunpack.c.h.b16 %v1183
        %v2062 = vunpack.c.l.b16 %v1184
        %v2063 = vunpack.c.h.b16 %v1184
        %v2064 = vunpack.c.l.b16 %v1185
        %v2065 = vunpack.c.h.b16 %v1185
        %v2066 = vunpack.c.l.b16 %v1186
        %v2067 = vunpack.c.h.b16 %v1186
        %v2068 = vunpack.c.l.b16 %v1187
        %v2069 = vunpack.c.h.b16 %v1187
        %v2070 = vunpack.c.l.b16 %v1188
        %v2071 = vunpack.c.h.b16 %v1188
        %v2072 = vunpack.c.l.b16 %v1189
        %v2073 = vunpack.c.h.b16 %v1189
        %v2074 = vunpack.c.l.b16 %v1190
        %v2075 = vunpack.c.h.b16 %v1190
        %v2076 = vunpack.c.l.b16 %v1191
        %v2077 = vunpack.c.h.b16 %v1191
        %v2078 = vunpack.c.l.b16 %v1192
        %v2079 = vunpack.c.h.b16 %v1192
        %v2080 = vunpack.c.l.b16 %v1193
        %v2081 = vunpack.c.h.b16 %v1193
        %v2082 = vunpack.c.l.b16 %v1194
        %v2083 = vunpack.c.h.b16 %v1194
        %v2084 = vunpack.c.l.b16 %v1195
        %v2085 = vunpack.c.h.b16 %v1195
        %v2086 = vunpack.c.l.b16 %v1196
        %v2087 = vunpack.c.h.b16 %v1196
        %v2088 = vunpack.c.l.b16 %v1197
        %v2089 = vunpack.c.h.b16 %v1197
        %v2090 = vunpack.c.l.b16 %v1198
        %v2091 = vunpack.c.h.b16 %v1198
        %v2092 = vunpack.c.l.b16 %v1199
        %v2093 = vunpack.c.h.b16 %v1199
        %v2094 = vunpack.c.l.b16 %v1200
        %v2095 = vunpack.c.h.b16 %v1200
        %v2096 = vunpack.c.l.b16 %v1201
        %v2097 = vunpack.c.h.b16 %v1201
        %v2098 = vpack.c.b16 %v1874, %v1842
        %v2099 = vpack.c.b16 %v1875, %v1843
        %v2100 = vpack.c.b16 %v1876, %v1844
        %v2101 = vpack.c.b16 %v1877, %v1845
        %v2102 = vpack.c.b16 %v1878, %v1846
        %v2103 = vpack.c.b16 %v1879, %v1847
        %v2104 = vpack.c.b16 %v1880, %v1848
        %v2105 = vpack.c.b16 %v1881, %v1849
        %v2106 = vpack.c.b16 %v1882, %v1850
        %v2107 = vpack.c.b16 %v1883, %v1851
        %v2108 = vpack.c.b16 %v1884, %v1852
        %v2109 = vpack.c.b16 %v1885, %v1853
        %v2110 = vpack.c.b16 %v1886, %v1854
        %v2111 = vpack.c.b16 %v1887, %v1855
        %v2112 = vpack.c.b16 %v1888, %v1856
        %v2113 = vpack.c.b16 %v1889, %v1857
        %v2114 = vpack.c.b16 %v1890, %v1858
        %v2115 = vpack.c.b16 %v1891, %v1859
        %v2116 = vpack.c.b16 %v1892, %v1860
        %v2117 = vpack.c.b16 %v1893, %v1861
        %v2118 = vpack.c.b16 %v1894, %v1862
        %v2119 = vpack.c.b16 %v1895, %v1863
        %v2120 = vpack.c.b16 %v1896, %v1864
        %v2121 = vpack.c.b16 %v1897, %v1865
        %v2122 = vpack.c.b16 %v1898, %v1866
        %v2123 = vpack.c.b16 %v1899, %v1867
        %v2124 = vpack.c.b16 %v1900, %v1868
        %v2125 = vpack.c.b16 %v1901, %v1869
        %v2126 = vpack.c.b16 %v1902, %v1870
        %v2127 = vpack.c.b16 %v1903, %v1871
        %v2128 = vpack.c.b16 %v1904, %v1872
        %v2129 = vpack.c.b16 %v1905, %v1873
        %v2130 = vpack.c.b16 %v1938, %v1906
        %v2131 = vpack.c.b16 %v1939, %v1907
        %v2132 = vpack.c.b16 %v1940, %v1908
        %v2133 = vpack.c.b16 %v1941, %v1909
        %v2134 = vpack.c.b16 %v1942, %v1910
        %v2135 = vpack.c.b16 %v1943, %v1911
        %v2136 = vpack.c.b16 %v1944, %v1912
        %v2137 = vpack.c.b16 %v1945, %v1913
        %v2138 = vpack.c.b16 %v1946, %v1914
        %v2139 = vpack.c.b16 %v1947, %v1915
        %v2140 = vpack.c.b16 %v1948, %v1916
        %v2141 = vpack.c.b16 %v1949, %v1917
        %v2142 = vpack.c.b16 %v1950, %v1918
        %v2143 = vpack.c.b16 %v1951, %v1919
        %v2144 = vpack.c.b16 %v1952, %v1920
        %v2145 = vpack.c.b16 %v1953, %v1921
        %v2146 = vpack.c.b16 %v1954, %v1922
        %v2147 = vpack.c.b16 %v1955, %v1923
        %v2148 = vpack.c.b16 %v1956, %v1924
        %v2149 = vpack.c.b16 %v1957, %v1925
        %v2150 = vpack.c.b16 %v1958, %v1926
        %v2151 = vpack.c.b16 %v1959, %v1927
        %v2152 = vpack.c.b16 %v1960, %v1928
        %v2153 = vpack.c.b16 %v1961, %v1929
        %v2154 = vpack.c.b16 %v1962, %v1930
        %v2155 = vpack.c.b16 %v1963, %v1931
        %v2156 = vpack.c.b16 %v1964, %v1932
        %v2157 = vpack.c.b16 %v1965, %v1933
        %v2158 = vpack.c.b16 %v1966, %v1934
        %v2159 = vpack.c.b16 %v1967, %v1935
        %v2160 = vpack.c.b16 %v1968, %v1936
        %v2161 = vpack.c.b16 %v1969, %v1937
        %v2162 = vpack.c.b16 %v2002, %v1970
        %v2163 = vpack.c.b16 %v2003, %v1971
        %v2164 = vpack.c.b16 %v2004, %v1972
        %v2165 = vpack.c.b16 %v2005, %v1973
        %v2166 = vpack.c.b16 %v2006, %v1974
        %v2167 = vpack.c.b16 %v2007, %v1975
        %v2168 = vpack.c.b16 %v2008, %v1976
        %v2169 = vpack.c.b16 %v2009, %v1977
        %v2170 = vpack.c.b16 %v2010, %v1978
        %v2171 = vpack.c.b16 %v2011, %v1979
        %v2172 = vpack.c.b16 %v2012, %v1980
        %v2173 = vpack.c.b16 %v2013, %v1981
        %v2174 = vpack.c.b16 %v2014, %v1982
        %v2175 = vpack.c.b16 %v2015, %v1983
        %v2176 = vpack.c.b16 %v2016, %v1984
        %v2177 = vpack.c.b16 %v2017, %v1985
        %v2178 = vpack.c.b16 %v2018, %v1986
        %v2179 = vpack.c.b16 %v2019, %v1987
        %v2180 = vpack.c.b16 %v2020, %v1988
        %v2181 = vpack.c.b16 %v2021, %v1989
        %v2182 = vpack.c.b16 %v2022, %v1990
        %v2183 = vpack.c.b16 %v2023, %v1991
        %v2184 = vpack.c.b16 %v2024, %v1992
        %v2185 = vpack.c.b16 %v2025, %v1993
        %v2186 = vpack.c.b16 %v2026, %v1994
        %v2187 = vpack.c.b16 %v2027, %v1995
        %v2188 = vpack.c.b16 %v2028, %v1996
        %v2189 = vpack.c.b16 %v2029, %v1997
        %v2190 = vpack.c.b16 %v2030, %v1998
        %v2191 = vpack.c.b16 %v2031, %v1999
        %v2192 = vpack.c.b16 %v2032, %v2000
        %v2193 = vpack.c.b16 %v2033, %v2001
        %v2194 = vpack.c.b16 %v2066, %v2034
        %v2195 = vpack.c.b16 %v2067, %v2035
        %v2196 = vpack.c.b16 %v2068, %v2036
        %v2197 = vpack.c.b16 %v2069, %v2037
        %v2198 = vpack.c.b16 %v2070, %v2038
        %v2199 = vpack.c.b16 %v2071, %v2039
        %v2200 = vpack.c.b16 %v2072, %v2040
        %v2201 = vpack.c.b16 %v2073, %v2041
        %v2202 = vpack.c.b16 %v2074, %v2042
        %v2203 = vpack.c.b16 %v2075, %v2043
        %v2204 = vpack.c.b16 %v2076, %v2044
        %v2205 = vpack.c.b16 %v2077, %v2045
        %v2206 = vpack.c.b16 %v2078, %v2046
        %v2207 = vpack.c.b16 %v2079, %v2047
        %v2208 = vpack.c.b16 %v2080, %v2048
        %v2209 = vpack.c.b16 %v2081, %v2049
        %v2210 = vpack.c.b16 %v2082, %v2050
        %v2211 = vpack.c.b16 %v2083, %v2051
        %v2212 = vpack.c.b16 %v2084, %v2052
        %v2213 = vpack.c.b16 %v2085, %v2053
        %v2214 = vpack.c.b16 %v2086, %v2054
        %v2215 = vpack.c.b16 %v2087, %v2055
        %v2216 = vpack.c.b16 %v2088, %v2056
        %v2217 = vpack.c.b16 %v2089, %v2057
        %v2218 = vpack.c.b16 %v2090, %v2058
        %v2219 = vpack.c.b16 %v2091, %v2059
        %v2220 = vpack.c.b16 %v2092, %v2060
        %v2221 = vpack.c.b16 %v2093, %v2061
        %v2222 = vpack.c.b16 %v2094, %v2062
        %v2223 = vpack.c.b16 %v2095, %v2063
        %v2224 = vpack.c.b16 %v2096, %v2064
        %v2225 = vpack.c.b16 %v2097, %v2065
        %v2866 = vunpack.c.l.b16 %v1202
        %v2867 = vunpack.c.l.b16 %v1203
        %v2868 = vunpack.c.l.b16 %v1204
        %v2869 = vunpack.c.l.b16 %v1205
        %v2870 = vunpack.c.l.b16 %v1206
        %v2871 = vunpack.c.l.b16 %v1207
        %v2872 = vunpack.c.l.b16 %v1208
        %v2873 = vunpack.c.l.b16 %v1209
        %v2874 = vunpack.c.l.b16 %v1210
        %v2875 = vunpack.c.l.b16 %v1211
        %v2876 = vunpack.c.l.b16 %v1212
        %v2877 = vunpack.c.l.b16 %v1213
        %v2878 = vunpack.c.l.b16 %v1214
        %v2879 = vunpack.c.l.b16 %v1215
        %v2880 = vunpack.c.l.b16 %v1216
        %v2881 = vunpack.c.l.b16 %v1217
        %v2882 = vunpack.c.l.b16 %v1218
        %v2883 = vunpack.c.l.b16 %v1219
        %v2884 = vunpack.c.l.b16 %v1220
        %v2885 = vunpack.c.l.b16 %v1221
        %v2886 = vunpack.c.l.b16 %v1222
        %v2887 = vunpack.c.l.b16 %v1223
        %v2888 = vunpack.c.l.b16 %v1224
        %v2889 = vunpack.c.l.b16 %v1225
        %v2890 = vunpack.c.l.b16 %v1226
        %v2891 = vunpack.c.l.b16 %v1227
        %v2892 = vunpack.c.l.b16 %v1228
        %v2893 = vunpack.c.l.b16 %v1229
        %v2894 = vunpack.c.l.b16 %v1230
        %v2895 = vunpack.c.l.b16 %v1231
        %v2896 = vunpack.c.l.b16 %v1232
        %v2897 = vunpack.c.l.b16 %v1233
        %v2898 = vunpack.c.l.b16 %v1234
        %v2899 = vunpack.c.l.b16 %v1235
        %v2900 = vunpack.c.l.b16 %v1236
        %v2901 = vunpack.c.l.b16 %v1237
        %v2902 = vunpack.c.l.b16 %v1238
        %v2903 = vunpack.c.l.b16 %v1239
        %v2904 = vunpack.c.l.b16 %v1240
        %v2905 = vunpack.c.l.b16 %v1241
        %v2906 = vunpack.c.l.b16 %v1242
        %v2907 = vunpack.c.l.b16 %v1243
        %v2908 = vunpack.c.l.b16 %v1244
        %v2909 = vunpack.c.l.b16 %v1245
        %v2910 = vunpack.c.l.b16 %v1246
        %v2911 = vunpack.c.l.b16 %v1247
        %v2912 = vunpack.c.l.b16 %v1248
        %v2913 = vunpack.c.l.b16 %v1249
        %v2914 = vunpack.c.l.b16 %v1250
        %v2915 = vunpack.c.l.b16 %v1251
        %v2916 = vunpack.c.l.b16 %v1252
        %v2917 = vunpack.c.l.b16 %v1253
        %v2918 = vunpack.c.l.b16 %v1254
        %v2919 = vunpack.c.l.b16 %v1255
        %v2920 = vunpack.c.l.b16 %v1256
        %v2921 = vunpack.c.l.b16 %v1257
        %v2922 = vunpack.c.l.b16 %v1258
        %v2923 = vunpack.c.l.b16 %v1259
        %v2924 = vunpack.c.l.b16 %v1260
        %v2925 = vunpack.c.l.b16 %v1261
        %v2926 = vunpack.c.l.b16 %v1262
        %v2927 = vunpack.c.l.b16 %v1263
        %v2928 = vunpack.c.l.b16 %v1264
        %v2929 = vunpack.c.l.b16 %v1265
        %v2930 = vunpack.c.l.b16 %v1266
        %v2931 = vunpack.c.l.b16 %v1267
        %v2932 = vunpack.c.l.b16 %v1268
        %v2933 = vunpack.c.l.b16 %v1269
        %v2934 = vunpack.c.l.b16 %v1270
        %v2935 = vunpack.c.l.b16 %v1271
        %v2936 = vunpack.c.l.b16 %v1272
        %v2937 = vunpack.c.l.b16 %v1273
        %v2938 = vunpack.c.l.b16 %v1274
        %v2939 = vunpack.c.l.b16 %v1275
        %v2940 = vunpack.c.l.b16 %v1276
        %v2941 = vunpack.c.l.b16 %v1277
        %v2942 = vunpack.c.l.b16 %v1278
        %v2943 = vunpack.c.l.b16 %v1279
        %v2944 = vunpack.c.l.b16 %v1280
        %v2945 = vunpack.c.l.b16 %v1281
        %v2946 = vunpack.c.l.b16 %v1282
        %v2947 = vunpack.c.l.b16 %v1283
        %v2948 = vunpack.c.l.b16 %v1284
        %v2949 = vunpack.c.l.b16 %v1285
        %v2950 = vunpack.c.l.b16 %v1286
        %v2951 = vunpack.c.l.b16 %v1287
        %v2952 = vunpack.c.l.b16 %v1288
        %v2953 = vunpack.c.l.b16 %v1289
        %v2954 = vunpack.c.l.b16 %v1290
        %v2955 = vunpack.c.l.b16 %v1291
        %v2956 = vunpack.c.l.b16 %v1292
        %v2957 = vunpack.c.l.b16 %v1293
        %v2958 = vunpack.c.l.b16 %v1294
        %v2959 = vunpack.c.l.b16 %v1295
        %v2960 = vunpack.c.l.b16 %v1296
        %v2961 = vunpack.c.l.b16 %v1297
        %v2962 = vunpack.c.l.b16 %v1298
        %v2963 = vunpack.c.l.b16 %v1299
        %v2964 = vunpack.c.l.b16 %v1300
        %v2965 = vunpack.c.l.b16 %v1301
        %v2966 = vunpack.c.l.b16 %v1302
        %v2967 = vunpack.c.l.b16 %v1303
        %v2968 = vunpack.c.l.b16 %v1304
        %v2969 = vunpack.c.l.b16 %v1305
        %v2970 = vunpack.c.l.b16 %v1306
        %v2971 = vunpack.c.l.b16 %v1307
        %v2972 = vunpack.c.l.b16 %v1308
        %v2973 = vunpack.c.l.b16 %v1309
        %v2974 = vunpack.c.l.b16 %v1310
        %v2975 = vunpack.c.l.b16 %v1311
        %v2976 = vunpack.c.l.b16 %v1312
        %v2977 = vunpack.c.l.b16 %v1313
        %v2978 = vunpack.c.l.b16 %v1314
        %v2979 = vunpack.c.l.b16 %v1315
        %v2980 = vunpack.c.l.b16 %v1316
        %v2981 = vunpack.c.l.b16 %v1317
        %v2982 = vunpack.c.l.b16 %v1318
        %v2983 = vunpack.c.l.b16 %v1319
        %v2984 = vunpack.c.l.b16 %v1320
        %v2985 = vunpack.c.l.b16 %v1321
        %v2986 = vunpack.c.l.b16 %v1322
        %v2987 = vunpack.c.l.b16 %v1323
        %v2988 = vunpack.c.l.b16 %v1324
        %v2989 = vunpack.c.l.b16 %v1325
        %v2990 = vunpack.c.l.b16 %v1326
        %v2991 = vunpack.c.l.b16 %v1327
        %v2992 = vunpack.c.l.b16 %v1328
        %v2993 = vunpack.c.l.b16 %v1329
        %v2994 = vunpack.c.l.b16 %v1330
        %v2995 = vunpack.c.l.b16 %v1331
        %v2996 = vunpack.c.l.b16 %v1332
        %v2997 = vunpack.c.l.b16 %v1333
        %v2998 = vunpack.c.l.b16 %v1334
        %v2999 = vunpack.c.l.b16 %v1335
        %v3000 = vunpack.c.l.b16 %v1336
        %v3001 = vunpack.c.l.b16 %v1337
        %v3002 = vunpack.c.l.b16 %v1338
        %v3003 = vunpack.c.l.b16 %v1339
        %v3004 = vunpack.c.l.b16 %v1340
        %v3005 = vunpack.c.l.b16 %v1341
        %v3006 = vunpack.c.l.b16 %v1342
        %v3007 = vunpack.c.l.b16 %v1343
        %v3008 = vunpack.c.l.b16 %v1344
        %v3009 = vunpack.c.l.b16 %v1345
        %v3010 = vunpack.c.l.b16 %v1346
        %v3011 = vunpack.c.l.b16 %v1347
        %v3012 = vunpack.c.l.b16 %v1348
        %v3013 = vunpack.c.l.b16 %v1349
        %v3014 = vunpack.c.l.b16 %v1350
        %v3015 = vunpack.c.l.b16 %v1351
        %v3016 = vunpack.c.l.b16 %v1352
        %v3017 = vunpack.c.l.b16 %v1353
        %v3018 = vunpack.c.l.b16 %v1354
        %v3019 = vunpack.c.l.b16 %v1355
        %v3020 = vunpack.c.l.b16 %v1356
        %v3021 = vunpack.c.l.b16 %v1357
        %v3022 = vunpack.c.l.b16 %v1358
        %v3023 = vunpack.c.l.b16 %v1359
        %v3024 = vunpack.c.l.b16 %v1360
        %v3025 = vunpack.c.l.b16 %v1361
        %v3026 = vunpack.c.l.b16 %v1362
        %v3027 = vunpack.c.l.b16 %v1363
        %v3028 = vunpack.c.l.b16 %v1364
        %v3029 = vunpack.c.l.b16 %v1365
        %v3030 = vunpack.c.l.b16 %v1366
        %v3031 = vunpack.c.l.b16 %v1367
        %v3032 = vunpack.c.l.b16 %v1368
        %v3033 = vunpack.c.l.b16 %v1369
        %v3034 = vunpack.c.l.b16 %v1370
        %v3035 = vunpack.c.l.b16 %v1371
        %v3036 = vunpack.c.l.b16 %v1372
        %v3037 = vunpack.c.l.b16 %v1373
        %v3038 = vunpack.c.l.b16 %v1374
        %v3039 = vunpack.c.l.b16 %v1375
        %v3040 = vunpack.c.l.b16 %v1376
        %v3041 = vunpack.c.l.b16 %v1377
        %v3042 = vunpack.c.l.b16 %v1378
        %v3043 = vunpack.c.l.b16 %v1379
        %v3044 = vunpack.c.l.b16 %v1380
        %v3045 = vunpack.c.l.b16 %v1381
        %v3046 = vunpack.c.l.b16 %v1382
        %v3047 = vunpack.c.l.b16 %v1383
        %v3048 = vunpack.c.l.b16 %v1384
        %v3049 = vunpack.c.l.b16 %v1385
        %v3050 = vunpack.c.l.b16 %v1386
        %v3051 = vunpack.c.l.b16 %v1387
        %v3052 = vunpack.c.l.b16 %v1388
        %v3053 = vunpack.c.l.b16 %v1389
        %v3054 = vunpack.c.l.b16 %v1390
        %v3055 = vunpack.c.l.b16 %v1391
        %v3056 = vunpack.c.l.b16 %v1392
        %v3057 = vunpack.c.l.b16 %v1393
        %v3058 = vunpack.c.l.b16 %v1394
        %v3059 = vunpack.c.l.b16 %v1395
        %v3060 = vunpack.c.l.b16 %v1396
        %v3061 = vunpack.c.l.b16 %v1397
        %v3062 = vunpack.c.l.b16 %v1398
        %v3063 = vunpack.c.l.b16 %v1399
        %v3064 = vunpack.c.l.b16 %v1400
        %v3065 = vunpack.c.l.b16 %v1401
        %v3066 = vunpack.c.l.b16 %v1402
        %v3067 = vunpack.c.l.b16 %v1403
        %v3068 = vunpack.c.l.b16 %v1404
        %v3069 = vunpack.c.l.b16 %v1405
        %v3070 = vunpack.c.l.b16 %v1406
        %v3071 = vunpack.c.l.b16 %v1407
        %v3072 = vunpack.c.l.b16 %v1408
        %v3073 = vunpack.c.l.b16 %v1409
        %v3074 = vunpack.c.l.b16 %v1410
        %v3075 = vunpack.c.l.b16 %v1411
        %v3076 = vunpack.c.l.b16 %v1412
        %v3077 = vunpack.c.l.b16 %v1413
        %v3078 = vunpack.c.l.b16 %v1414
        %v3079 = vunpack.c.l.b16 %v1415
        %v3080 = vunpack.c.l.b16 %v1416
        %v3081 = vunpack.c.l.b16 %v1417
        %v3082 = vunpack.c.l.b16 %v1418
        %v3083 = vunpack.c.l.b16 %v1419
        %v3084 = vunpack.c.l.b16 %v1420
        %v3085 = vunpack.c.l.b16 %v1421
        %v3086 = vunpack.c.l.b16 %v1422
        %v3087 = vunpack.c.l.b16 %v1423
        %v3088 = vunpack.c.l.b16 %v1424
        %v3089 = vunpack.c.l.b16 %v1425
        %v3090 = vunpack.c.l.b16 %v1426
        %v3091 = vunpack.c.l.b16 %v1427
        %v3092 = vunpack.c.l.b16 %v1428
        %v3093 = vunpack.c.l.b16 %v1429
        %v3094 = vunpack.c.l.b16 %v1430
        %v3095 = vunpack.c.l.b16 %v1431
        %v3096 = vunpack.c.l.b16 %v1432
        %v3097 = vunpack.c.l.b16 %v1433
        %v3098 = vunpack.c.l.b16 %v1434
        %v3099 = vunpack.c.l.b16 %v1435
        %v3100 = vunpack.c.l.b16 %v1436
        %v3101 = vunpack.c.l.b16 %v1437
        %v3102 = vunpack.c.l.b16 %v1438
        %v3103 = vunpack.c.l.b16 %v1439
        %v3104 = vunpack.c.l.b16 %v1440
        %v3105 = vunpack.c.l.b16 %v1441
        %v3106 = vunpack.c.l.b16 %v1442
        %v3107 = vunpack.c.l.b16 %v1443
        %v3108 = vunpack.c.l.b16 %v1444
        %v3109 = vunpack.c.l.b16 %v1445
        %v3110 = vunpack.c.l.b16 %v1446
        %v3111 = vunpack.c.l.b16 %v1447
        %v3112 = vunpack.c.l.b16 %v1448
        %v3113 = vunpack.c.l.b16 %v1449
        %v3114 = vunpack.c.l.b16 %v1450
        %v3115 = vunpack.c.l.b16 %v1451
        %v3116 = vunpack.c.l.b16 %v1452
        %v3117 = vunpack.c.l.b16 %v1453
        %v3118 = vunpack.c.l.b16 %v1454
        %v3119 = vunpack.c.l.b16 %v1455
        %v3120 = vunpack.c.l.b16 %v1456
        %v3121 = vunpack.c.l.b16 %v1457
        %v3122 = vunpack.c.l.b16 %v1458
        %v3123 = vunpack.c.l.b16 %v1459
        %v3124 = vunpack.c.l.b16 %v1460
        %v3125 = vunpack.c.l.b16 %v1461
        %v3126 = vunpack.c.l.b16 %v1462
        %v3127 = vunpack.c.l.b16 %v1463
        %v3128 = vunpack.c.l.b16 %v1464
        %v3129 = vunpack.c.l.b16 %v1465
        %v3130 = vunpack.c.l.b16 %v1466
        %v3131 = vunpack.c.l.b16 %v1467
        %v3132 = vunpack.c.l.b16 %v1468
        %v3133 = vunpack.c.l.b16 %v1469
        %v3134 = vunpack.c.l.b16 %v1470
        %v3135 = vunpack.c.l.b16 %v1471
        %v3136 = vunpack.c.l.b16 %v1472
        %v3137 = vunpack.c.l.b16 %v1473
        %v3138 = vunpack.c.l.b16 %v1474
        %v3139 = vunpack.c.l.b16 %v1475
        %v3140 = vunpack.c.l.b16 %v1476
        %v3141 = vunpack.c.l.b16 %v1477
        %v3142 = vunpack.c.l.b16 %v1478
        %v3143 = vunpack.c.l.b16 %v1479
        %v3144 = vunpack.c.l.b16 %v1480
        %v3145 = vunpack.c.l.b16 %v1481
        %v3146 = vunpack.c.l.b16 %v1482
        %v3147 = vunpack.c.l.b16 %v1483
        %v3148 = vunpack.c.l.b16 %v1484
        %v3149 = vunpack.c.l.b16 %v1485
        %v3150 = vunpack.c.l.b16 %v1486
        %v3151 = vunpack.c.l.b16 %v1487
        %v3152 = vunpack.c.l.b16 %v1488
        %v3153 = vunpack.c.l.b16 %v1489
        %v3154 = vunpack.c.l.b16 %v1490
        %v3155 = vunpack.c.l.b16 %v1491
        %v3156 = vunpack.c.l.b16 %v1492
        %v3157 = vunpack.c.l.b16 %v1493
        %v3158 = vunpack.c.l.b16 %v1494
        %v3159 = vunpack.c.l.b16 %v1495
        %v3160 = vunpack.c.l.b16 %v1496
        %v3161 = vunpack.c.l.b16 %v1497
        %v3162 = vunpack.c.l.b16 %v1498
        %v3163 = vunpack.c.l.b16 %v1499
        %v3164 = vunpack.c.l.b16 %v1500
        %v3165 = vunpack.c.l.b16 %v1501
        %v3166 = vunpack.c.l.b16 %v1502
        %v3167 = vunpack.c.l.b16 %v1503
        %v3168 = vunpack.c.l.b16 %v1504
        %v3169 = vunpack.c.l.b16 %v1505
        %v3170 = vunpack.c.l.b16 %v1506
        %v3171 = vunpack.c.l.b16 %v1507
        %v3172 = vunpack.c.l.b16 %v1508
        %v3173 = vunpack.c.l.b16 %v1509
        %v3174 = vunpack.c.l.b16 %v1510
        %v3175 = vunpack.c.l.b16 %v1511
        %v3176 = vunpack.c.l.b16 %v1512
        %v3177 = vunpack.c.l.b16 %v1513
        %v3178 = vunpack.c.l.b16 %v1514
        %v3179 = vunpack.c.l.b16 %v1515
        %v3180 = vunpack.c.l.b16 %v1516
        %v3181 = vunpack.c.l.b16 %v1517
        %v3182 = vunpack.c.l.b16 %v1518
        %v3183 = vunpack.c.l.b16 %v1519
        %v3184 = vunpack.c.l.b16 %v1520
        %v3185 = vunpack.c.l.b16 %v1521
        %v3186 = vunpack.c.l.b16 %v1522
        %v3187 = vunpack.c.l.b16 %v1523
        %v3188 = vunpack.c.l.b16 %v1524
        %v3189 = vunpack.c.l.b16 %v1525
        %v3190 = vunpack.c.l.b16 %v1526
        %v3191 = vunpack.c.l.b16 %v1527
        %v3192 = vunpack.c.l.b16 %v1528
        %v3193 = vunpack.c.l.b16 %v1529
        %v3194 = vunpack.c.l.b16 %v1530
        %v3195 = vunpack.c.l.b16 %v1531
        %v3196 = vunpack.c.l.b16 %v1532
        %v3197 = vunpack.c.l.b16 %v1533
        %v3198 = vunpack.c.l.b16 %v1534
        %v3199 = vunpack.c.l.b16 %v1535
        %v3200 = vunpack.c.l.b16 %v1536
        %v3201 = vunpack.c.l.b16 %v1537
        %v3202 = vunpack.c.l.b16 %v1538
        %v3203 = vunpack.c.l.b16 %v1539
        %v3204 = vunpack.c.l.b16 %v1540
        %v3205 = vunpack.c.l.b16 %v1541
        %v3206 = vunpack.c.l.b16 %v1542
        %v3207 = vunpack.c.l.b16 %v1543
        %v3208 = vunpack.c.l.b16 %v1544
        %v3209 = vunpack.c.l.b16 %v1545
        %v3210 = vunpack.c.l.b16 %v1546
        %v3211 = vunpack.c.l.b16 %v1547
        %v3212 = vunpack.c.l.b16 %v1548
        %v3213 = vunpack.c.l.b16 %v1549
        %v3214 = vunpack.c.l.b16 %v1550
        %v3215 = vunpack.c.l.b16 %v1551
        %v3216 = vunpack.c.l.b16 %v1552
        %v3217 = vunpack.c.l.b16 %v1553
        %v3218 = vunpack.c.l.b16 %v1554
        %v3219 = vunpack.c.l.b16 %v1555
        %v3220 = vunpack.c.l.b16 %v1556
        %v3221 = vunpack.c.l.b16 %v1557
        %v3222 = vunpack.c.l.b16 %v1558
        %v3223 = vunpack.c.l.b16 %v1559
        %v3224 = vunpack.c.l.b16 %v1560
        %v3225 = vunpack.c.l.b16 %v1561
        %v3226 = vunpack.c.l.b16 %v1562
        %v3227 = vunpack.c.l.b16 %v1563
        %v3228 = vunpack.c.l.b16 %v1564
        %v3229 = vunpack.c.l.b16 %v1565
        %v3230 = vunpack.c.l.b16 %v1566
        %v3231 = vunpack.c.l.b16 %v1567
        %v3232 = vunpack.c.l.b16 %v1568
        %v3233 = vunpack.c.l.b16 %v1569
        %v3234 = vunpack.c.l.b16 %v1570
        %v3235 = vunpack.c.l.b16 %v1571
        %v3236 = vunpack.c.l.b16 %v1572
        %v3237 = vunpack.c.l.b16 %v1573
        %v3238 = vunpack.c.l.b16 %v1574
        %v3239 = vunpack.c.l.b16 %v1575
        %v3240 = vunpack.c.l.b16 %v1576
        %v3241 = vunpack.c.l.b16 %v1577
        %v3242 = vunpack.c.l.b16 %v1578
        %v3243 = vunpack.c.l.b16 %v1579
        %v3244 = vunpack.c.l.b16 %v1580
        %v3245 = vunpack.c.l.b16 %v1581
        %v3246 = vunpack.c.l.b16 %v1582
        %v3247 = vunpack.c.l.b16 %v1583
        %v3248 = vunpack.c.l.b16 %v1584
        %v3249 = vunpack.c.l.b16 %v1585
        %v3250 = vunpack.c.l.b16 %v1586
        %v3251 = vunpack.c.l.b16 %v1587
        %v3252 = vunpack.c.l.b16 %v1588
        %v3253 = vunpack.c.l.b16 %v1589
        %v3254 = vunpack.c.l.b16 %v1590
        %v3255 = vunpack.c.l.b16 %v1591
        %v3256 = vunpack.c.l.b16 %v1592
        %v3257 = vunpack.c.l.b16 %v1593
        %v3258 = vunpack.c.l.b16 %v1594
        %v3259 = vunpack.c.l.b16 %v1595
        %v3260 = vunpack.c.l.b16 %v1596
        %v3261 = vunpack.c.l.b16 %v1597
        %v3262 = vunpack.c.l.b16 %v1598
        %v3263 = vunpack.c.l.b16 %v1599
        %v3264 = vunpack.c.l.b16 %v1600
        %v3265 = vunpack.c.l.b16 %v1601
        %v3266 = vunpack.c.l.b16 %v1602
        %v3267 = vunpack.c.l.b16 %v1603
        %v3268 = vunpack.c.l.b16 %v1604
        %v3269 = vunpack.c.l.b16 %v1605
        %v3270 = vunpack.c.l.b16 %v1606
        %v3271 = vunpack.c.l.b16 %v1607
        %v3272 = vunpack.c.l.b16 %v1608
        %v3273 = vunpack.c.l.b16 %v1609
        %v3274 = vunpack.c.l.b16 %v1610
        %v3275 = vunpack.c.l.b16 %v1611
        %v3276 = vunpack.c.l.b16 %v1612
        %v3277 = vunpack.c.l.b16 %v1613
        %v3278 = vunpack.c.l.b16 %v1614
        %v3279 = vunpack.c.l.b16 %v1615
        %v3280 = vunpack.c.l.b16 %v1616
        %v3281 = vunpack.c.l.b16 %v1617
        %v3282 = vunpack.c.l.b16 %v1618
        %v3283 = vunpack.c.l.b16 %v1619
        %v3284 = vunpack.c.l.b16 %v1620
        %v3285 = vunpack.c.l.b16 %v1621
        %v3286 = vunpack.c.l.b16 %v1622
        %v3287 = vunpack.c.l.b16 %v1623
        %v3288 = vunpack.c.l.b16 %v1624
        %v3289 = vunpack.c.l.b16 %v1625
        %v3290 = vunpack.c.l.b16 %v1626
        %v3291 = vunpack.c.l.b16 %v1627
        %v3292 = vunpack.c.l.b16 %v1628
        %v3293 = vunpack.c.l.b16 %v1629
        %v3294 = vunpack.c.l.b16 %v1630
        %v3295 = vunpack.c.l.b16 %v1631
        %v3296 = vunpack.c.l.b16 %v1632
        %v3297 = vunpack.c.l.b16 %v1633
        %v3298 = vunpack.c.l.b16 %v1634
        %v3299 = vunpack.c.l.b16 %v1635
        %v3300 = vunpack.c.l.b16 %v1636
        %v3301 = vunpack.c.l.b16 %v1637
        %v3302 = vunpack.c.l.b16 %v1638
        %v3303 = vunpack.c.l.b16 %v1639
        %v3304 = vunpack.c.l.b16 %v1640
        %v3305 = vunpack.c.l.b16 %v1641
        %v3306 = vunpack.c.l.b16 %v1642
        %v3307 = vunpack.c.l.b16 %v1643
        %v3308 = vunpack.c.l.b16 %v1644
        %v3309 = vunpack.c.l.b16 %v1645
        %v3310 = vunpack.c.l.b16 %v1646
        %v3311 = vunpack.c.l.b16 %v1647
        %v3312 = vunpack.c.l.b16 %v1648
        %v3313 = vunpack.c.l.b16 %v1649
        %v3314 = vunpack.c.l.b16 %v1650
        %v3315 = vunpack.c.l.b16 %v1651
        %v3316 = vunpack.c.l.b16 %v1652
        %v3317 = vunpack.c.l.b16 %v1653
        %v3318 = vunpack.c.l.b16 %v1654
        %v3319 = vunpack.c.l.b16 %v1655
        %v3320 = vunpack.c.l.b16 %v1656
        %v3321 = vunpack.c.l.b16 %v1657
        %v3322 = vunpack.c.l.b16 %v1658
        %v3323 = vunpack.c.l.b16 %v1659
        %v3324 = vunpack.c.l.b16 %v1660
        %v3325 = vunpack.c.l.b16 %v1661
        %v3326 = vunpack.c.l.b16 %v1662
        %v3327 = vunpack.c.l.b16 %v1663
        %v3328 = vunpack.c.l.b16 %v1664
        %v3329 = vunpack.c.l.b16 %v1665
        %v3330 = vunpack.c.l.b16 %v1666
        %v3331 = vunpack.c.l.b16 %v1667
        %v3332 = vunpack.c.l.b16 %v1668
        %v3333 = vunpack.c.l.b16 %v1669
        %v3334 = vunpack.c.l.b16 %v1670
        %v3335 = vunpack.c.l.b16 %v1671
        %v3336 = vunpack.c.l.b16 %v1672
        %v3337 = vunpack.c.l.b16 %v1673
        %v3338 = vunpack.c.l.b16 %v1674
        %v3339 = vunpack.c.l.b16 %v1675
        %v3340 = vunpack.c.l.b16 %v1676
        %v3341 = vunpack.c.l.b16 %v1677
        %v3342 = vunpack.c.l.b16 %v1678
        %v3343 = vunpack.c.l.b16 %v1679
        %v3344 = vunpack.c.l.b16 %v1680
        %v3345 = vunpack.c.l.b16 %v1681
        %v3346 = vunpack.c.l.b16 %v1682
        %v3347 = vunpack.c.l.b16 %v1683
        %v3348 = vunpack.c.l.b16 %v1684
        %v3349 = vunpack.c.l.b16 %v1685
        %v3350 = vunpack.c.l.b16 %v1686
        %v3351 = vunpack.c.l.b16 %v1687
        %v3352 = vunpack.c.l.b16 %v1688
        %v3353 = vunpack.c.l.b16 %v1689
        %v3354 = vunpack.c.l.b16 %v1690
        %v3355 = vunpack.c.l.b16 %v1691
        %v3356 = vunpack.c.l.b16 %v1692
        %v3357 = vunpack.c.l.b16 %v1693
        %v3358 = vunpack.c.l.b16 %v1694
        %v3359 = vunpack.c.l.b16 %v1695
        %v3360 = vunpack.c.l.b16 %v1696
        %v3361 = vunpack.c.l.b16 %v1697
        %v3362 = vunpack.c.l.b16 %v1698
        %v3363 = vunpack.c.l.b16 %v1699
        %v3364 = vunpack.c.l.b16 %v1700
        %v3365 = vunpack.c.l.b16 %v1701
        %v3366 = vunpack.c.l.b16 %v1702
        %v3367 = vunpack.c.l.b16 %v1703
        %v3368 = vunpack.c.l.b16 %v1704
        %v3369 = vunpack.c.l.b16 %v1705
        %v3370 = vunpack.c.l.b16 %v1706
        %v3371 = vunpack.c.l.b16 %v1707
        %v3372 = vunpack.c.l.b16 %v1708
        %v3373 = vunpack.c.l.b16 %v1709
        %v3374 = vunpack.c.l.b16 %v1710
        %v3375 = vunpack.c.l.b16 %v1711
        %v3376 = vunpack.c.l.b16 %v1712
        %v3377 = vunpack.c.l.b16 %v1713
        %v3378 = vpack.c.b16 %v2867, %v2866
        %v3379 = vpack.c.b16 %v2869, %v2868
        %v3380 = vpack.c.b16 %v2871, %v2870
        %v3381 = vpack.c.b16 %v2873, %v2872
        %v3382 = vpack.c.b16 %v2875, %v2874
        %v3383 = vpack.c.b16 %v2877, %v2876
        %v3384 = vpack.c.b16 %v2879, %v2878
        %v3385 = vpack.c.b16 %v2881, %v2880
        %v3386 = vpack.c.b16 %v2883, %v2882
        %v3387 = vpack.c.b16 %v2885, %v2884
        %v3388 = vpack.c.b16 %v2887, %v2886
        %v3389 = vpack.c.b16 %v2889, %v2888
        %v3390 = vpack.c.b16 %v2891, %v2890
        %v3391 = vpack.c.b16 %v2893, %v2892
        %v3392 = vpack.c.b16 %v2895, %v2894
        %v3393 = vpack.c.b16 %v2897, %v2896
        %v3394 = vpack.c.b16 %v2899, %v2898
        %v3395 = vpack.c.b16 %v2901, %v2900
        %v3396 = vpack.c.b16 %v2903, %v2902
        %v3397 = vpack.c.b16 %v2905, %v2904
        %v3398 = vpack.c.b16 %v2907, %v2906
        %v3399 = vpack.c.b16 %v2909, %v2908
        %v3400 = vpack.c.b16 %v2911, %v2910
        %v3401 = vpack.c.b16 %v2913, %v2912
        %v3402 = vpack.c.b16 %v2915, %v2914
        %v3403 = vpack.c.b16 %v2917, %v2916
        %v3404 = vpack.c.b16 %v2919, %v2918
        %v3405 = vpack.c.b16 %v2921, %v2920
        %v3406 = vpack.c.b16 %v2923, %v2922
        %v3407 = vpack.c.b16 %v2925, %v2924
        %v3408 = vpack.c.b16 %v2927, %v2926
        %v3409 = vpack.c.b16 %v2929, %v2928
        %v3410 = vpack.c.b16 %v2931, %v2930
        %v3411 = vpack.c.b16 %v2933, %v2932
        %v3412 = vpack.c.b16 %v2935, %v2934
        %v3413 = vpack.c.b16 %v2937, %v2936
        %v3414 = vpack.c.b16 %v2939, %v2938
        %v3415 = vpack.c.b16 %v2941, %v2940
        %v3416 = vpack.c.b16 %v2943, %v2942
        %v3417 = vpack.c.b16 %v2945, %v2944
        %v3418 = vpack.c.b16 %v2947, %v2946
        %v3419 = vpack.c.b16 %v2949, %v2948
        %v3420 = vpack.c.b16 %v2951, %v2950
        %v3421 = vpack.c.b16 %v2953, %v2952
        %v3422 = vpack.c.b16 %v2955, %v2954
        %v3423 = vpack.c.b16 %v2957, %v2956
        %v3424 = vpack.c.b16 %v2959, %v2958
        %v3425 = vpack.c.b16 %v2961, %v2960
        %v3426 = vpack.c.b16 %v2963, %v2962
        %v3427 = vpack.c.b16 %v2965, %v2964
        %v3428 = vpack.c.b16 %v2967, %v2966
        %v3429 = vpack.c.b16 %v2969, %v2968
        %v3430 = vpack.c.b16 %v2971, %v2970
        %v3431 = vpack.c.b16 %v2973, %v2972
        %v3432 = vpack.c.b16 %v2975, %v2974
        %v3433 = vpack.c.b16 %v2977, %v2976
        %v3434 = vpack.c.b16 %v2979, %v2978
        %v3435 = vpack.c.b16 %v2981, %v2980
        %v3436 = vpack.c.b16 %v2983, %v2982
        %v3437 = vpack.c.b16 %v2985, %v2984
        %v3438 = vpack.c.b16 %v2987, %v2986
        %v3439 = vpack.c.b16 %v2989, %v2988
        %v3440 = vpack.c.b16 %v2991, %v2990
        %v3441 = vpack.c.b16 %v2993, %v2992
        %v3442 = vpack.c.b16 %v2995, %v2994
        %v3443 = vpack.c.b16 %v2997, %v2996
        %v3444 = vpack.c.b16 %v2999, %v2998
        %v3445 = vpack.c.b16 %v3001, %v3000
        %v3446 = vpack.c.b16 %v3003, %v3002
        %v3447 = vpack.c.b16 %v3005, %v3004
        %v3448 = vpack.c.b16 %v3007, %v3006
        %v3449 = vpack.c.b16 %v3009, %v3008
        %v3450 = vpack.c.b16 %v3011, %v3010
        %v3451 = vpack.c.b16 %v3013, %v3012
        %v3452 = vpack.c.b16 %v3015, %v3014
        %v3453 = vpack.c.b16 %v3017, %v3016
        %v3454 = vpack.c.b16 %v3019, %v3018
        %v3455 = vpack.c.b16 %v3021, %v3020
        %v3456 = vpack.c.b16 %v3023, %v3022
        %v3457 = vpack.c.b16 %v3025, %v3024
        %v3458 = vpack.c.b16 %v3027, %v3026
        %v3459 = vpack.c.b16 %v3029, %v3028
        %v3460 = vpack.c.b16 %v3031, %v3030
        %v3461 = vpack.c.b16 %v3033, %v3032
        %v3462 = vpack.c.b16 %v3035, %v3034
        %v3463 = vpack.c.b16 %v3037, %v3036
        %v3464 = vpack.c.b16 %v3039, %v3038
        %v3465 = vpack.c.b16 %v3041, %v3040
        %v3466 = vpack.c.b16 %v3043, %v3042
        %v3467 = vpack.c.b16 %v3045, %v3044
        %v3468 = vpack.c.b16 %v3047, %v3046
        %v3469 = vpack.c.b16 %v3049, %v3048
        %v3470 = vpack.c.b16 %v3051, %v3050
        %v3471 = vpack.c.b16 %v3053, %v3052
        %v3472 = vpack.c.b16 %v3055, %v3054
        %v3473 = vpack.c.b16 %v3057, %v3056
        %v3474 = vpack.c.b16 %v3059, %v3058
        %v3475 = vpack.c.b16 %v3061, %v3060
        %v3476 = vpack.c.b16 %v3063, %v3062
        %v3477 = vpack.c.b16 %v3065, %v3064
        %v3478 = vpack.c.b16 %v3067, %v3066
        %v3479 = vpack.c.b16 %v3069, %v3068
        %v3480 = vpack.c.b16 %v3071, %v3070
        %v3481 = vpack.c.b16 %v3073, %v3072
        %v3482 = vpack.c.b16 %v3075, %v3074
        %v3483 = vpack.c.b16 %v3077, %v3076
        %v3484 = vpack.c.b16 %v3079, %v3078
        %v3485 = vpack.c.b16 %v3081, %v3080
        %v3486 = vpack.c.b16 %v3083, %v3082
        %v3487 = vpack.c.b16 %v3085, %v3084
        %v3488 = vpack.c.b16 %v3087, %v3086
        %v3489 = vpack.c.b16 %v3089, %v3088
        %v3490 = vpack.c.b16 %v3091, %v3090
        %v3491 = vpack.c.b16 %v3093, %v3092
        %v3492 = vpack.c.b16 %v3095, %v3094
        %v3493 = vpack.c.b16 %v3097, %v3096
        %v3494 = vpack.c.b16 %v3099, %v3098
        %v3495 = vpack.c.b16 %v3101, %v3100
        %v3496 = vpack.c.b16 %v3103, %v3102
        %v3497 = vpack.c.b16 %v3105, %v3104
        %v3498 = vpack.c.b16 %v3107, %v3106
        %v3499 = vpack.c.b16 %v3109, %v3108
        %v3500 = vpack.c.b16 %v3111, %v3110
        %v3501 = vpack.c.b16 %v3113, %v3112
        %v3502 = vpack.c.b16 %v3115, %v3114
        %v3503 = vpack.c.b16 %v3117, %v3116
        %v3504 = vpack.c.b16 %v3119, %v3118
        %v3505 = vpack.c.b16 %v3121, %v3120
        %v3506 = vpack.c.b16 %v3123, %v3122
        %v3507 = vpack.c.b16 %v3125, %v3124
        %v3508 = vpack.c.b16 %v3127, %v3126
        %v3509 = vpack.c.b16 %v3129, %v3128
        %v3510 = vpack.c.b16 %v3131, %v3130
        %v3511 = vpack.c.b16 %v3133, %v3132
        %v3512 = vpack.c.b16 %v3135, %v3134
        %v3513 = vpack.c.b16 %v3137, %v3136
        %v3514 = vpack.c.b16 %v3139, %v3138
        %v3515 = vpack.c.b16 %v3141, %v3140
        %v3516 = vpack.c.b16 %v3143, %v3142
        %v3517 = vpack.c.b16 %v3145, %v3144
        %v3518 = vpack.c.b16 %v3147, %v3146
        %v3519 = vpack.c.b16 %v3149, %v3148
        %v3520 = vpack.c.b16 %v3151, %v3150
        %v3521 = vpack.c.b16 %v3153, %v3152
        %v3522 = vpack.c.b16 %v3155, %v3154
        %v3523 = vpack.c.b16 %v3157, %v3156
        %v3524 = vpack.c.b16 %v3159, %v3158
        %v3525 = vpack.c.b16 %v3161, %v3160
        %v3526 = vpack.c.b16 %v3163, %v3162
        %v3527 = vpack.c.b16 %v3165, %v3164
        %v3528 = vpack.c.b16 %v3167, %v3166
        %v3529 = vpack.c.b16 %v3169, %v3168
        %v3530 = vpack.c.b16 %v3171, %v3170
        %v3531 = vpack.c.b16 %v3173, %v3172
        %v3532 = vpack.c.b16 %v3175, %v3174
        %v3533 = vpack.c.b16 %v3177, %v3176
        %v3534 = vpack.c.b16 %v3179, %v3178
        %v3535 = vpack.c.b16 %v3181, %v3180
        %v3536 = vpack.c.b16 %v3183, %v3182
        %v3537 = vpack.c.b16 %v3185, %v3184
        %v3538 = vpack.c.b16 %v3187, %v3186
        %v3539 = vpack.c.b16 %v3189, %v3188
        %v3540 = vpack.c.b16 %v3191, %v3190
        %v3541 = vpack.c.b16 %v3193, %v3192
        %v3542 = vpack.c.b16 %v3195, %v3194
        %v3543 = vpack.c.b16 %v3197, %v3196
        %v3544 = vpack.c.b16 %v3199, %v3198
        %v3545 = vpack.c.b16 %v3201, %v3200
        %v3546 = vpack.c.b16 %v3203, %v3202
        %v3547 = vpack.c.b16 %v3205, %v3204
        %v3548 = vpack.c.b16 %v3207, %v3206
        %v3549 = vpack.c.b16 %v3209, %v3208
        %v3550 = vpack.c.b16 %v3211, %v3210
        %v3551 = vpack.c.b16 %v3213, %v3212
        %v3552 = vpack.c.b16 %v3215, %v3214
        %v3553 = vpack.c.b16 %v3217, %v3216
        %v3554 = vpack.c.b16 %v3219, %v3218
        %v3555 = vpack.c.b16 %v3221, %v3220
        %v3556 = vpack.c.b16 %v3223, %v3222
        %v3557 = vpack.c.b16 %v3225, %v3224
        %v3558 = vpack.c.b16 %v3227, %v3226
        %v3559 = vpack.c.b16 %v3229, %v3228
        %v3560 = vpack.c.b16 %v3231, %v3230
        %v3561 = vpack.c.b16 %v3233, %v3232
        %v3562 = vpack.c.b16 %v3235, %v3234
        %v3563 = vpack.c.b16 %v3237, %v3236
        %v3564 = vpack.c.b16 %v3239, %v3238
        %v3565 = vpack.c.b16 %v3241, %v3240
        %v3566 = vpack.c.b16 %v3243, %v3242
        %v3567 = vpack.c.b16 %v3245, %v3244
        %v3568 = vpack.c.b16 %v3247, %v3246
        %v3569 = vpack.c.b16 %v3249, %v3248
        %v3570 = vpack.c.b16 %v3251, %v3250
        %v3571 = vpack.c.b16 %v3253, %v3252
        %v3572 = vpack.c.b16 %v3255, %v3254
        %v3573 = vpack.c.b16 %v3257, %v3256
        %v3574 = vpack.c.b16 %v3259, %v3258
        %v3575 = vpack.c.b16 %v3261, %v3260
        %v3576 = vpack.c.b16 %v3263, %v3262
        %v3577 = vpack.c.b16 %v3265, %v3264
        %v3578 = vpack.c.b16 %v3267, %v3266
        %v3579 = vpack.c.b16 %v3269, %v3268
        %v3580 = vpack.c.b16 %v3271, %v3270
        %v3581 = vpack.c.b16 %v3273, %v3272
        %v3582 = vpack.c.b16 %v3275, %v3274
        %v3583 = vpack.c.b16 %v3277, %v3276
        %v3584 = vpack.c.b16 %v3279, %v3278
        %v3585 = vpack.c.b16 %v3281, %v3280
        %v3586 = vpack.c.b16 %v3283, %v3282
        %v3587 = vpack.c.b16 %v3285, %v3284
        %v3588 = vpack.c.b16 %v3287, %v3286
        %v3589 = vpack.c.b16 %v3289, %v3288
        %v3590 = vpack.c.b16 %v3291, %v3290
        %v3591 = vpack.c.b16 %v3293, %v3292
        %v3592 = vpack.c.b16 %v3295, %v3294
        %v3593 = vpack.c.b16 %v3297, %v3296
        %v3594 = vpack.c.b16 %v3299, %v3298
        %v3595 = vpack.c.b16 %v3301, %v3300
        %v3596 = vpack.c.b16 %v3303, %v3302
        %v3597 = vpack.c.b16 %v3305, %v3304
        %v3598 = vpack.c.b16 %v3307, %v3306
        %v3599 = vpack.c.b16 %v3309, %v3308
        %v3600 = vpack.c.b16 %v3311, %v3310
        %v3601 = vpack.c.b16 %v3313, %v3312
        %v3602 = vpack.c.b16 %v3315, %v3314
        %v3603 = vpack.c.b16 %v3317, %v3316
        %v3604 = vpack.c.b16 %v3319, %v3318
        %v3605 = vpack.c.b16 %v3321, %v3320
        %v3606 = vpack.c.b16 %v3323, %v3322
        %v3607 = vpack.c.b16 %v3325, %v3324
        %v3608 = vpack.c.b16 %v3327, %v3326
        %v3609 = vpack.c.b16 %v3329, %v3328
        %v3610 = vpack.c.b16 %v3331, %v3330
        %v3611 = vpack.c.b16 %v3333, %v3332
        %v3612 = vpack.c.b16 %v3335, %v3334
        %v3613 = vpack.c.b16 %v3337, %v3336
        %v3614 = vpack.c.b16 %v3339, %v3338
        %v3615 = vpack.c.b16 %v3341, %v3340
        %v3616 = vpack.c.b16 %v3343, %v3342
        %v3617 = vpack.c.b16 %v3345, %v3344
        %v3618 = vpack.c.b16 %v3347, %v3346
        %v3619 = vpack.c.b16 %v3349, %v3348
        %v3620 = vpack.c.b16 %v3351, %v3350
        %v3621 = vpack.c.b16 %v3353, %v3352
        %v3622 = vpack.c.b16 %v3355, %v3354
        %v3623 = vpack.c.b16 %v3357, %v3356
        %v3624 = vpack.c.b16 %v3359, %v3358
        %v3625 = vpack.c.b16 %v3361, %v3360
        %v3626 = vpack.c.b16 %v3363, %v3362
        %v3627 = vpack.c.b16 %v3365, %v3364
        %v3628 = vpack.c.b16 %v3367, %v3366
        %v3629 = vpack.c.b16 %v3369, %v3368
        %v3630 = vpack.c.b16 %v3371, %v3370
        %v3631 = vpack.c.b16 %v3373, %v3372
        %v3632 = vpack.c.b16 %v3375, %v3374
        %v3633 = vpack.c.b16 %v3377, %v3376
        %3890 = vmatpush.bf16.msra.mxu0 %v3385
        %3891 = vmatpush.bf16.msra.mxu0 %v3384
        %3892 = vmatpush.bf16.msra.mxu0 %v3383
        %3893 = vmatpush.bf16.msra.mxu0 %v3382
        %3894 = vmatpush.bf16.msra.mxu0 %v3381
        %3895 = vmatpush.bf16.msra.mxu0 %v3380
        %3896 = vmatpush.bf16.msra.mxu0 %v3379
        %3897 = vmatpush.bf16.msra.mxu0 %v3378
        %3898 = vmatmul.bf16.gmra.mxu0 %v2098
        %v3899 = vpop.f32.mrf.mxu0
        %v3900 = vadd.f32 0.0, %v3899
        %v3901 = vpop.f32.mrf.mxu0
        %v3902 = vadd.f32 0.0, %v3901
        %3903 = vmatmul.bf16.gmra.mxu0 %v2130
        %v3904 = vpop.f32.mrf.mxu0
        %v3905 = vadd.f32 0.0, %v3904
        %v3906 = vpop.f32.mrf.mxu0
        %v3907 = vadd.f32 0.0, %v3906
        %3908 = vmatmul.bf16.gmra.mxu0 %v2162
        %v3909 = vpop.f32.mrf.mxu0
        %v3910 = vadd.f32 0.0, %v3909
        %v3911 = vpop.f32.mrf.mxu0
        %v3912 = vadd.f32 0.0, %v3911
        %3913 = vmatmul.bf16.gmra.mxu0 %v2194
        %v3914 = vpop.f32.mrf.mxu0
        %v3915 = vadd.f32 0.0, %v3914
        %v3916 = vpop.f32.mrf.mxu0
        %v3917 = vadd.f32 0.0, %v3916
        %3918 = vdwg.mxu0
        %3919 = vmatpush.bf16.msra.mxu0 %v3393
        %3920 = vmatpush.bf16.msra.mxu0 %v3392
        %3921 = vmatpush.bf16.msra.mxu0 %v3391
        %3922 = vmatpush.bf16.msra.mxu0 %v3390
        %3923 = vmatpush.bf16.msra.mxu0 %v3389
        %3924 = vmatpush.bf16.msra.mxu0 %v3388
        %3925 = vmatpush.bf16.msra.mxu0 %v3387
        %3926 = vmatpush.bf16.msra.mxu0 %v3386
        %3927 = vmatmul.bf16.gmra.mxu0 %v2099
        %v3928 = vpop.f32.mrf.mxu0
        %v3929 = vadd.f32 %v3900, %v3928
        %v3930 = vpop.f32.mrf.mxu0
        %v3931 = vadd.f32 %v3902, %v3930
        %3932 = vmatmul.bf16.gmra.mxu0 %v2131
        %v3933 = vpop.f32.mrf.mxu0
        %v3934 = vadd.f32 %v3905, %v3933
        %v3935 = vpop.f32.mrf.mxu0
        %v3936 = vadd.f32 %v3907, %v3935
        %3937 = vmatmul.bf16.gmra.mxu0 %v2163
        %v3938 = vpop.f32.mrf.mxu0
        %v3939 = vadd.f32 %v3910, %v3938
        %v3940 = vpop.f32.mrf.mxu0
        %v3941 = vadd.f32 %v3912, %v3940
        %3942 = vmatmul.bf16.gmra.mxu0 %v2195
        %v3943 = vpop.f32.mrf.mxu0
        %v3944 = vadd.f32 %v3915, %v3943
        %v3945 = vpop.f32.mrf.mxu0
        %v3946 = vadd.f32 %v3917, %v3945
        %3947 = vdwg.mxu0
        %3948 = vmatpush.bf16.msra.mxu0 %v3401
        %3949 = vmatpush.bf16.msra.mxu0 %v3400
        %3950 = vmatpush.bf16.msra.mxu0 %v3399
        %3951 = vmatpush.bf16.msra.mxu0 %v3398
        %3952 = vmatpush.bf16.msra.mxu0 %v3397
        %3953 = vmatpush.bf16.msra.mxu0 %v3396
        %3954 = vmatpush.bf16.msra.mxu0 %v3395
        %3955 = vmatpush.bf16.msra.mxu0 %v3394
        %3956 = vmatmul.bf16.gmra.mxu0 %v2100
        %v3957 = vpop.f32.mrf.mxu0
        %v3958 = vadd.f32 %v3929, %v3957
        %v3959 = vpop.f32.mrf.mxu0
        %v3960 = vadd.f32 %v3931, %v3959
        %3961 = vmatmul.bf16.gmra.mxu0 %v2132
        %v3962 = vpop.f32.mrf.mxu0
        %v3963 = vadd.f32 %v3934, %v3962
        %v3964 = vpop.f32.mrf.mxu0
        %v3965 = vadd.f32 %v3936, %v3964
        %3966 = vmatmul.bf16.gmra.mxu0 %v2164
        %v3967 = vpop.f32.mrf.mxu0
        %v3968 = vadd.f32 %v3939, %v3967
        %v3969 = vpop.f32.mrf.mxu0
        %v3970 = vadd.f32 %v3941, %v3969
        %3971 = vmatmul.bf16.gmra.mxu0 %v2196
        %v3972 = vpop.f32.mrf.mxu0
        %v3973 = vadd.f32 %v3944, %v3972
        %v3974 = vpop.f32.mrf.mxu0
        %v3975 = vadd.f32 %v3946, %v3974
        %3976 = vdwg.mxu0
        %3977 = vmatpush.bf16.msra.mxu0 %v3409
        %3978 = vmatpush.bf16.msra.mxu0 %v3408
        %3979 = vmatpush.bf16.msra.mxu0 %v3407
        %3980 = vmatpush.bf16.msra.mxu0 %v3406
        %3981 = vmatpush.bf16.msra.mxu0 %v3405
        %3982 = vmatpush.bf16.msra.mxu0 %v3404
        %3983 = vmatpush.bf16.msra.mxu0 %v3403
        %3984 = vmatpush.bf16.msra.mxu0 %v3402
        %3985 = vmatmul.bf16.gmra.mxu0 %v2101
        %v3986 = vpop.f32.mrf.mxu0
        %v3987 = vadd.f32 %v3958, %v3986
        %v3988 = vpop.f32.mrf.mxu0
        %v3989 = vadd.f32 %v3960, %v3988
        %3990 = vmatmul.bf16.gmra.mxu0 %v2133
        %v3991 = vpop.f32.mrf.mxu0
        %v3992 = vadd.f32 %v3963, %v3991
        %v3993 = vpop.f32.mrf.mxu0
        %v3994 = vadd.f32 %v3965, %v3993
        %3995 = vmatmul.bf16.gmra.mxu0 %v2165
        %v3996 = vpop.f32.mrf.mxu0
        %v3997 = vadd.f32 %v3968, %v3996
        %v3998 = vpop.f32.mrf.mxu0
        %v3999 = vadd.f32 %v3970, %v3998
        %4000 = vmatmul.bf16.gmra.mxu0 %v2197
        %v4001 = vpop.f32.mrf.mxu0
        %v4002 = vadd.f32 %v3973, %v4001
        %v4003 = vpop.f32.mrf.mxu0
        %v4004 = vadd.f32 %v3975, %v4003
        %4005 = vdwg.mxu0
        %4006 = vmatpush.bf16.msra.mxu0 %v3417
        %4007 = vmatpush.bf16.msra.mxu0 %v3416
        %4008 = vmatpush.bf16.msra.mxu0 %v3415
        %4009 = vmatpush.bf16.msra.mxu0 %v3414
        %4010 = vmatpush.bf16.msra.mxu0 %v3413
        %4011 = vmatpush.bf16.msra.mxu0 %v3412
        %4012 = vmatpush.bf16.msra.mxu0 %v3411
        %4013 = vmatpush.bf16.msra.mxu0 %v3410
        %4014 = vmatmul.bf16.gmra.mxu0 %v2102
        %v4015 = vpop.f32.mrf.mxu0
        %v4016 = vadd.f32 %v3987, %v4015
        %v4017 = vpop.f32.mrf.mxu0
        %v4018 = vadd.f32 %v3989, %v4017
        %4019 = vmatmul.bf16.gmra.mxu0 %v2134
        %v4020 = vpop.f32.mrf.mxu0
        %v4021 = vadd.f32 %v3992, %v4020
        %v4022 = vpop.f32.mrf.mxu0
        %v4023 = vadd.f32 %v3994, %v4022
        %4024 = vmatmul.bf16.gmra.mxu0 %v2166
        %v4025 = vpop.f32.mrf.mxu0
        %v4026 = vadd.f32 %v3997, %v4025
        %v4027 = vpop.f32.mrf.mxu0
        %v4028 = vadd.f32 %v3999, %v4027
        %4029 = vmatmul.bf16.gmra.mxu0 %v2198
        %v4030 = vpop.f32.mrf.mxu0
        %v4031 = vadd.f32 %v4002, %v4030
        %v4032 = vpop.f32.mrf.mxu0
        %v4033 = vadd.f32 %v4004, %v4032
        %4034 = vdwg.mxu0
        %4035 = vmatpush.bf16.msra.mxu0 %v3425
        %4036 = vmatpush.bf16.msra.mxu0 %v3424
        %4037 = vmatpush.bf16.msra.mxu0 %v3423
        %4038 = vmatpush.bf16.msra.mxu0 %v3422
        %4039 = vmatpush.bf16.msra.mxu0 %v3421
        %4040 = vmatpush.bf16.msra.mxu0 %v3420
        %4041 = vmatpush.bf16.msra.mxu0 %v3419
        %4042 = vmatpush.bf16.msra.mxu0 %v3418
        %4043 = vmatmul.bf16.gmra.mxu0 %v2103
        %v4044 = vpop.f32.mrf.mxu0
        %v4045 = vadd.f32 %v4016, %v4044
        %v4046 = vpop.f32.mrf.mxu0
        %v4047 = vadd.f32 %v4018, %v4046
        %4048 = vmatmul.bf16.gmra.mxu0 %v2135
        %v4049 = vpop.f32.mrf.mxu0
        %v4050 = vadd.f32 %v4021, %v4049
        %v4051 = vpop.f32.mrf.mxu0
        %v4052 = vadd.f32 %v4023, %v4051
        %4053 = vmatmul.bf16.gmra.mxu0 %v2167
        %v4054 = vpop.f32.mrf.mxu0
        %v4055 = vadd.f32 %v4026, %v4054
        %v4056 = vpop.f32.mrf.mxu0
        %v4057 = vadd.f32 %v4028, %v4056
        %4058 = vmatmul.bf16.gmra.mxu0 %v2199
        %v4059 = vpop.f32.mrf.mxu0
        %v4060 = vadd.f32 %v4031, %v4059
        %v4061 = vpop.f32.mrf.mxu0
        %v4062 = vadd.f32 %v4033, %v4061
        %4063 = vdwg.mxu0
        %4064 = vmatpush.bf16.msra.mxu0 %v3433
        %4065 = vmatpush.bf16.msra.mxu0 %v3432
        %4066 = vmatpush.bf16.msra.mxu0 %v3431
        %4067 = vmatpush.bf16.msra.mxu0 %v3430
        %4068 = vmatpush.bf16.msra.mxu0 %v3429
        %4069 = vmatpush.bf16.msra.mxu0 %v3428
        %4070 = vmatpush.bf16.msra.mxu0 %v3427
        %4071 = vmatpush.bf16.msra.mxu0 %v3426
        %4072 = vmatmul.bf16.gmra.mxu0 %v2104
        %v4073 = vpop.f32.mrf.mxu0
        %v4074 = vadd.f32 %v4045, %v4073
        %v4075 = vpop.f32.mrf.mxu0
        %v4076 = vadd.f32 %v4047, %v4075
        %4077 = vmatmul.bf16.gmra.mxu0 %v2136
        %v4078 = vpop.f32.mrf.mxu0
        %v4079 = vadd.f32 %v4050, %v4078
        %v4080 = vpop.f32.mrf.mxu0
        %v4081 = vadd.f32 %v4052, %v4080
        %4082 = vmatmul.bf16.gmra.mxu0 %v2168
        %v4083 = vpop.f32.mrf.mxu0
        %v4084 = vadd.f32 %v4055, %v4083
        %v4085 = vpop.f32.mrf.mxu0
        %v4086 = vadd.f32 %v4057, %v4085
        %4087 = vmatmul.bf16.gmra.mxu0 %v2200
        %v4088 = vpop.f32.mrf.mxu0
        %v4089 = vadd.f32 %v4060, %v4088
        %v4090 = vpop.f32.mrf.mxu0
        %v4091 = vadd.f32 %v4062, %v4090
        %4092 = vdwg.mxu0
        %4093 = vmatpush.bf16.msra.mxu0 %v3441
        %4094 = vmatpush.bf16.msra.mxu0 %v3440
        %4095 = vmatpush.bf16.msra.mxu0 %v3439
        %4096 = vmatpush.bf16.msra.mxu0 %v3438
        %4097 = vmatpush.bf16.msra.mxu0 %v3437
        %4098 = vmatpush.bf16.msra.mxu0 %v3436
        %4099 = vmatpush.bf16.msra.mxu0 %v3435
        %4100 = vmatpush.bf16.msra.mxu0 %v3434
        %4101 = vmatmul.bf16.gmra.mxu0 %v2105
        %v4102 = vpop.f32.mrf.mxu0
        %v4103 = vadd.f32 %v4074, %v4102
        %v4104 = vpop.f32.mrf.mxu0
        %v4105 = vadd.f32 %v4076, %v4104
        %4106 = vmatmul.bf16.gmra.mxu0 %v2137
        %v4107 = vpop.f32.mrf.mxu0
        %v4108 = vadd.f32 %v4079, %v4107
        %v4109 = vpop.f32.mrf.mxu0
        %v4110 = vadd.f32 %v4081, %v4109
        %4111 = vmatmul.bf16.gmra.mxu0 %v2169
        %v4112 = vpop.f32.mrf.mxu0
        %v4113 = vadd.f32 %v4084, %v4112
        %v4114 = vpop.f32.mrf.mxu0
        %v4115 = vadd.f32 %v4086, %v4114
        %4116 = vmatmul.bf16.gmra.mxu0 %v2201
        %v4117 = vpop.f32.mrf.mxu0
        %v4118 = vadd.f32 %v4089, %v4117
        %v4119 = vpop.f32.mrf.mxu0
        %v4120 = vadd.f32 %v4091, %v4119
        %4121 = vdwg.mxu0
        %4122 = vmatpush.bf16.msra.mxu0 %v3449
        %4123 = vmatpush.bf16.msra.mxu0 %v3448
        %4124 = vmatpush.bf16.msra.mxu0 %v3447
        %4125 = vmatpush.bf16.msra.mxu0 %v3446
        %4126 = vmatpush.bf16.msra.mxu0 %v3445
        %4127 = vmatpush.bf16.msra.mxu0 %v3444
        %4128 = vmatpush.bf16.msra.mxu0 %v3443
        %4129 = vmatpush.bf16.msra.mxu0 %v3442
        %4130 = vmatmul.bf16.gmra.mxu0 %v2106
        %v4131 = vpop.f32.mrf.mxu0
        %v4132 = vadd.f32 %v4103, %v4131
        %v4133 = vpop.f32.mrf.mxu0
        %v4134 = vadd.f32 %v4105, %v4133
        %4135 = vmatmul.bf16.gmra.mxu0 %v2138
        %v4136 = vpop.f32.mrf.mxu0
        %v4137 = vadd.f32 %v4108, %v4136
        %v4138 = vpop.f32.mrf.mxu0
        %v4139 = vadd.f32 %v4110, %v4138
        %4140 = vmatmul.bf16.gmra.mxu0 %v2170
        %v4141 = vpop.f32.mrf.mxu0
        %v4142 = vadd.f32 %v4113, %v4141
        %v4143 = vpop.f32.mrf.mxu0
        %v4144 = vadd.f32 %v4115, %v4143
        %4145 = vmatmul.bf16.gmra.mxu0 %v2202
        %v4146 = vpop.f32.mrf.mxu0
        %v4147 = vadd.f32 %v4118, %v4146
        %v4148 = vpop.f32.mrf.mxu0
        %v4149 = vadd.f32 %v4120, %v4148
        %4150 = vdwg.mxu0
        %4151 = vmatpush.bf16.msra.mxu0 %v3457
        %4152 = vmatpush.bf16.msra.mxu0 %v3456
        %4153 = vmatpush.bf16.msra.mxu0 %v3455
        %4154 = vmatpush.bf16.msra.mxu0 %v3454
        %4155 = vmatpush.bf16.msra.mxu0 %v3453
        %4156 = vmatpush.bf16.msra.mxu0 %v3452
        %4157 = vmatpush.bf16.msra.mxu0 %v3451
        %4158 = vmatpush.bf16.msra.mxu0 %v3450
        %4159 = vmatmul.bf16.gmra.mxu0 %v2107
        %v4160 = vpop.f32.mrf.mxu0
        %v4161 = vadd.f32 %v4132, %v4160
        %v4162 = vpop.f32.mrf.mxu0
        %v4163 = vadd.f32 %v4134, %v4162
        %4164 = vmatmul.bf16.gmra.mxu0 %v2139
        %v4165 = vpop.f32.mrf.mxu0
        %v4166 = vadd.f32 %v4137, %v4165
        %v4167 = vpop.f32.mrf.mxu0
        %v4168 = vadd.f32 %v4139, %v4167
        %4169 = vmatmul.bf16.gmra.mxu0 %v2171
        %v4170 = vpop.f32.mrf.mxu0
        %v4171 = vadd.f32 %v4142, %v4170
        %v4172 = vpop.f32.mrf.mxu0
        %v4173 = vadd.f32 %v4144, %v4172
        %4174 = vmatmul.bf16.gmra.mxu0 %v2203
        %v4175 = vpop.f32.mrf.mxu0
        %v4176 = vadd.f32 %v4147, %v4175
        %v4177 = vpop.f32.mrf.mxu0
        %v4178 = vadd.f32 %v4149, %v4177
        %4179 = vdwg.mxu0
        %4180 = vmatpush.bf16.msra.mxu0 %v3465
        %4181 = vmatpush.bf16.msra.mxu0 %v3464
        %4182 = vmatpush.bf16.msra.mxu0 %v3463
        %4183 = vmatpush.bf16.msra.mxu0 %v3462
        %4184 = vmatpush.bf16.msra.mxu0 %v3461
        %4185 = vmatpush.bf16.msra.mxu0 %v3460
        %4186 = vmatpush.bf16.msra.mxu0 %v3459
        %4187 = vmatpush.bf16.msra.mxu0 %v3458
        %4188 = vmatmul.bf16.gmra.mxu0 %v2108
        %v4189 = vpop.f32.mrf.mxu0
        %v4190 = vadd.f32 %v4161, %v4189
        %v4191 = vpop.f32.mrf.mxu0
        %v4192 = vadd.f32 %v4163, %v4191
        %4193 = vmatmul.bf16.gmra.mxu0 %v2140
        %v4194 = vpop.f32.mrf.mxu0
        %v4195 = vadd.f32 %v4166, %v4194
        %v4196 = vpop.f32.mrf.mxu0
        %v4197 = vadd.f32 %v4168, %v4196
        %4198 = vmatmul.bf16.gmra.mxu0 %v2172
        %v4199 = vpop.f32.mrf.mxu0
        %v4200 = vadd.f32 %v4171, %v4199
        %v4201 = vpop.f32.mrf.mxu0
        %v4202 = vadd.f32 %v4173, %v4201
        %4203 = vmatmul.bf16.gmra.mxu0 %v2204
        %v4204 = vpop.f32.mrf.mxu0
        %v4205 = vadd.f32 %v4176, %v4204
        %v4206 = vpop.f32.mrf.mxu0
        %v4207 = vadd.f32 %v4178, %v4206
        %4208 = vdwg.mxu0
        %4209 = vmatpush.bf16.msra.mxu0 %v3473
        %4210 = vmatpush.bf16.msra.mxu0 %v3472
        %4211 = vmatpush.bf16.msra.mxu0 %v3471
        %4212 = vmatpush.bf16.msra.mxu0 %v3470
        %4213 = vmatpush.bf16.msra.mxu0 %v3469
        %4214 = vmatpush.bf16.msra.mxu0 %v3468
        %4215 = vmatpush.bf16.msra.mxu0 %v3467
        %4216 = vmatpush.bf16.msra.mxu0 %v3466
        %4217 = vmatmul.bf16.gmra.mxu0 %v2109
        %v4218 = vpop.f32.mrf.mxu0
        %v4219 = vadd.f32 %v4190, %v4218
        %v4220 = vpop.f32.mrf.mxu0
        %v4221 = vadd.f32 %v4192, %v4220
        %4222 = vmatmul.bf16.gmra.mxu0 %v2141
        %v4223 = vpop.f32.mrf.mxu0
        %v4224 = vadd.f32 %v4195, %v4223
        %v4225 = vpop.f32.mrf.mxu0
        %v4226 = vadd.f32 %v4197, %v4225
        %4227 = vmatmul.bf16.gmra.mxu0 %v2173
        %v4228 = vpop.f32.mrf.mxu0
        %v4229 = vadd.f32 %v4200, %v4228
        %v4230 = vpop.f32.mrf.mxu0
        %v4231 = vadd.f32 %v4202, %v4230
        %4232 = vmatmul.bf16.gmra.mxu0 %v2205
        %v4233 = vpop.f32.mrf.mxu0
        %v4234 = vadd.f32 %v4205, %v4233
        %v4235 = vpop.f32.mrf.mxu0
        %v4236 = vadd.f32 %v4207, %v4235
        %4237 = vdwg.mxu0
        %4238 = vmatpush.bf16.msra.mxu0 %v3481
        %4239 = vmatpush.bf16.msra.mxu0 %v3480
        %4240 = vmatpush.bf16.msra.mxu0 %v3479
        %4241 = vmatpush.bf16.msra.mxu0 %v3478
        %4242 = vmatpush.bf16.msra.mxu0 %v3477
        %4243 = vmatpush.bf16.msra.mxu0 %v3476
        %4244 = vmatpush.bf16.msra.mxu0 %v3475
        %4245 = vmatpush.bf16.msra.mxu0 %v3474
        %4246 = vmatmul.bf16.gmra.mxu0 %v2110
        %v4247 = vpop.f32.mrf.mxu0
        %v4248 = vadd.f32 %v4219, %v4247
        %v4249 = vpop.f32.mrf.mxu0
        %v4250 = vadd.f32 %v4221, %v4249
        %4251 = vmatmul.bf16.gmra.mxu0 %v2142
        %v4252 = vpop.f32.mrf.mxu0
        %v4253 = vadd.f32 %v4224, %v4252
        %v4254 = vpop.f32.mrf.mxu0
        %v4255 = vadd.f32 %v4226, %v4254
        %4256 = vmatmul.bf16.gmra.mxu0 %v2174
        %v4257 = vpop.f32.mrf.mxu0
        %v4258 = vadd.f32 %v4229, %v4257
        %v4259 = vpop.f32.mrf.mxu0
        %v4260 = vadd.f32 %v4231, %v4259
        %4261 = vmatmul.bf16.gmra.mxu0 %v2206
        %v4262 = vpop.f32.mrf.mxu0
        %v4263 = vadd.f32 %v4234, %v4262
        %v4264 = vpop.f32.mrf.mxu0
        %v4265 = vadd.f32 %v4236, %v4264
        %4266 = vdwg.mxu0
        %4267 = vmatpush.bf16.msra.mxu0 %v3489
        %4268 = vmatpush.bf16.msra.mxu0 %v3488
        %4269 = vmatpush.bf16.msra.mxu0 %v3487
        %4270 = vmatpush.bf16.msra.mxu0 %v3486
        %4271 = vmatpush.bf16.msra.mxu0 %v3485
        %4272 = vmatpush.bf16.msra.mxu0 %v3484
        %4273 = vmatpush.bf16.msra.mxu0 %v3483
        %4274 = vmatpush.bf16.msra.mxu0 %v3482
        %4275 = vmatmul.bf16.gmra.mxu0 %v2111
        %v4276 = vpop.f32.mrf.mxu0
        %v4277 = vadd.f32 %v4248, %v4276
        %v4278 = vpop.f32.mrf.mxu0
        %v4279 = vadd.f32 %v4250, %v4278
        %4280 = vmatmul.bf16.gmra.mxu0 %v2143
        %v4281 = vpop.f32.mrf.mxu0
        %v4282 = vadd.f32 %v4253, %v4281
        %v4283 = vpop.f32.mrf.mxu0
        %v4284 = vadd.f32 %v4255, %v4283
        %4285 = vmatmul.bf16.gmra.mxu0 %v2175
        %v4286 = vpop.f32.mrf.mxu0
        %v4287 = vadd.f32 %v4258, %v4286
        %v4288 = vpop.f32.mrf.mxu0
        %v4289 = vadd.f32 %v4260, %v4288
        %4290 = vmatmul.bf16.gmra.mxu0 %v2207
        %v4291 = vpop.f32.mrf.mxu0
        %v4292 = vadd.f32 %v4263, %v4291
        %v4293 = vpop.f32.mrf.mxu0
        %v4294 = vadd.f32 %v4265, %v4293
        %4295 = vdwg.mxu0
        %4296 = vmatpush.bf16.msra.mxu0 %v3497
        %4297 = vmatpush.bf16.msra.mxu0 %v3496
        %4298 = vmatpush.bf16.msra.mxu0 %v3495
        %4299 = vmatpush.bf16.msra.mxu0 %v3494
        %4300 = vmatpush.bf16.msra.mxu0 %v3493
        %4301 = vmatpush.bf16.msra.mxu0 %v3492
        %4302 = vmatpush.bf16.msra.mxu0 %v3491
        %4303 = vmatpush.bf16.msra.mxu0 %v3490
        %4304 = vmatmul.bf16.gmra.mxu0 %v2112
        %v4305 = vpop.f32.mrf.mxu0
        %v4306 = vadd.f32 %v4277, %v4305
        %v4307 = vpop.f32.mrf.mxu0
        %v4308 = vadd.f32 %v4279, %v4307
        %4309 = vmatmul.bf16.gmra.mxu0 %v2144
        %v4310 = vpop.f32.mrf.mxu0
        %v4311 = vadd.f32 %v4282, %v4310
        %v4312 = vpop.f32.mrf.mxu0
        %v4313 = vadd.f32 %v4284, %v4312
        %4314 = vmatmul.bf16.gmra.mxu0 %v2176
        %v4315 = vpop.f32.mrf.mxu0
        %v4316 = vadd.f32 %v4287, %v4315
        %v4317 = vpop.f32.mrf.mxu0
        %v4318 = vadd.f32 %v4289, %v4317
        %4319 = vmatmul.bf16.gmra.mxu0 %v2208
        %v4320 = vpop.f32.mrf.mxu0
        %v4321 = vadd.f32 %v4292, %v4320
        %v4322 = vpop.f32.mrf.mxu0
        %v4323 = vadd.f32 %v4294, %v4322
        %4324 = vdwg.mxu0
        %4325 = vmatpush.bf16.msra.mxu0 %v3505
        %4326 = vmatpush.bf16.msra.mxu0 %v3504
        %4327 = vmatpush.bf16.msra.mxu0 %v3503
        %4328 = vmatpush.bf16.msra.mxu0 %v3502
        %4329 = vmatpush.bf16.msra.mxu0 %v3501
        %4330 = vmatpush.bf16.msra.mxu0 %v3500
        %4331 = vmatpush.bf16.msra.mxu0 %v3499
        %4332 = vmatpush.bf16.msra.mxu0 %v3498
        %4333 = vmatmul.bf16.gmra.mxu0 %v2113
        %v4334 = vpop.f32.mrf.mxu0
        %v4335 = vadd.f32 %v4306, %v4334
        %v4336 = vpop.f32.mrf.mxu0
        %v4337 = vadd.f32 %v4308, %v4336
        %4338 = vmatmul.bf16.gmra.mxu0 %v2145
        %v4339 = vpop.f32.mrf.mxu0
        %v4340 = vadd.f32 %v4311, %v4339
        %v4341 = vpop.f32.mrf.mxu0
        %v4342 = vadd.f32 %v4313, %v4341
        %4343 = vmatmul.bf16.gmra.mxu0 %v2177
        %v4344 = vpop.f32.mrf.mxu0
        %v4345 = vadd.f32 %v4316, %v4344
        %v4346 = vpop.f32.mrf.mxu0
        %v4347 = vadd.f32 %v4318, %v4346
        %4348 = vmatmul.bf16.gmra.mxu0 %v2209
        %v4349 = vpop.f32.mrf.mxu0
        %v4350 = vadd.f32 %v4321, %v4349
        %v4351 = vpop.f32.mrf.mxu0
        %v4352 = vadd.f32 %v4323, %v4351
        %4353 = vdwg.mxu0
        %4354 = vmatpush.bf16.msra.mxu0 %v3513
        %4355 = vmatpush.bf16.msra.mxu0 %v3512
        %4356 = vmatpush.bf16.msra.mxu0 %v3511
        %4357 = vmatpush.bf16.msra.mxu0 %v3510
        %4358 = vmatpush.bf16.msra.mxu0 %v3509
        %4359 = vmatpush.bf16.msra.mxu0 %v3508
        %4360 = vmatpush.bf16.msra.mxu0 %v3507
        %4361 = vmatpush.bf16.msra.mxu0 %v3506
        %4362 = vmatmul.bf16.gmra.mxu0 %v2114
        %v4363 = vpop.f32.mrf.mxu0
        %v4364 = vadd.f32 %v4335, %v4363
        %v4365 = vpop.f32.mrf.mxu0
        %v4366 = vadd.f32 %v4337, %v4365
        %4367 = vmatmul.bf16.gmra.mxu0 %v2146
        %v4368 = vpop.f32.mrf.mxu0
        %v4369 = vadd.f32 %v4340, %v4368
        %v4370 = vpop.f32.mrf.mxu0
        %v4371 = vadd.f32 %v4342, %v4370
        %4372 = vmatmul.bf16.gmra.mxu0 %v2178
        %v4373 = vpop.f32.mrf.mxu0
        %v4374 = vadd.f32 %v4345, %v4373
        %v4375 = vpop.f32.mrf.mxu0
        %v4376 = vadd.f32 %v4347, %v4375
        %4377 = vmatmul.bf16.gmra.mxu0 %v2210
        %v4378 = vpop.f32.mrf.mxu0
        %v4379 = vadd.f32 %v4350, %v4378
        %v4380 = vpop.f32.mrf.mxu0
        %v4381 = vadd.f32 %v4352, %v4380
        %4382 = vdwg.mxu0
        %4383 = vmatpush.bf16.msra.mxu0 %v3521
        %4384 = vmatpush.bf16.msra.mxu0 %v3520
        %4385 = vmatpush.bf16.msra.mxu0 %v3519
        %4386 = vmatpush.bf16.msra.mxu0 %v3518
        %4387 = vmatpush.bf16.msra.mxu0 %v3517
        %4388 = vmatpush.bf16.msra.mxu0 %v3516
        %4389 = vmatpush.bf16.msra.mxu0 %v3515
        %4390 = vmatpush.bf16.msra.mxu0 %v3514
        %4391 = vmatmul.bf16.gmra.mxu0 %v2115
        %v4392 = vpop.f32.mrf.mxu0
        %v4393 = vadd.f32 %v4364, %v4392
        %v4394 = vpop.f32.mrf.mxu0
        %v4395 = vadd.f32 %v4366, %v4394
        %4396 = vmatmul.bf16.gmra.mxu0 %v2147
        %v4397 = vpop.f32.mrf.mxu0
        %v4398 = vadd.f32 %v4369, %v4397
        %v4399 = vpop.f32.mrf.mxu0
        %v4400 = vadd.f32 %v4371, %v4399
        %4401 = vmatmul.bf16.gmra.mxu0 %v2179
        %v4402 = vpop.f32.mrf.mxu0
        %v4403 = vadd.f32 %v4374, %v4402
        %v4404 = vpop.f32.mrf.mxu0
        %v4405 = vadd.f32 %v4376, %v4404
        %4406 = vmatmul.bf16.gmra.mxu0 %v2211
        %v4407 = vpop.f32.mrf.mxu0
        %v4408 = vadd.f32 %v4379, %v4407
        %v4409 = vpop.f32.mrf.mxu0
        %v4410 = vadd.f32 %v4381, %v4409
        %4411 = vdwg.mxu0
        %4412 = vmatpush.bf16.msra.mxu0 %v3529
        %4413 = vmatpush.bf16.msra.mxu0 %v3528
        %4414 = vmatpush.bf16.msra.mxu0 %v3527
        %4415 = vmatpush.bf16.msra.mxu0 %v3526
        %4416 = vmatpush.bf16.msra.mxu0 %v3525
        %4417 = vmatpush.bf16.msra.mxu0 %v3524
        %4418 = vmatpush.bf16.msra.mxu0 %v3523
        %4419 = vmatpush.bf16.msra.mxu0 %v3522
        %4420 = vmatmul.bf16.gmra.mxu0 %v2116
        %v4421 = vpop.f32.mrf.mxu0
        %v4422 = vadd.f32 %v4393, %v4421
        %v4423 = vpop.f32.mrf.mxu0
        %v4424 = vadd.f32 %v4395, %v4423
        %4425 = vmatmul.bf16.gmra.mxu0 %v2148
        %v4426 = vpop.f32.mrf.mxu0
        %v4427 = vadd.f32 %v4398, %v4426
        %v4428 = vpop.f32.mrf.mxu0
        %v4429 = vadd.f32 %v4400, %v4428
        %4430 = vmatmul.bf16.gmra.mxu0 %v2180
        %v4431 = vpop.f32.mrf.mxu0
        %v4432 = vadd.f32 %v4403, %v4431
        %v4433 = vpop.f32.mrf.mxu0
        %v4434 = vadd.f32 %v4405, %v4433
        %4435 = vmatmul.bf16.gmra.mxu0 %v2212
        %v4436 = vpop.f32.mrf.mxu0
        %v4437 = vadd.f32 %v4408, %v4436
        %v4438 = vpop.f32.mrf.mxu0
        %v4439 = vadd.f32 %v4410, %v4438
        %4440 = vdwg.mxu0
        %4441 = vmatpush.bf16.msra.mxu0 %v3537
        %4442 = vmatpush.bf16.msra.mxu0 %v3536
        %4443 = vmatpush.bf16.msra.mxu0 %v3535
        %4444 = vmatpush.bf16.msra.mxu0 %v3534
        %4445 = vmatpush.bf16.msra.mxu0 %v3533
        %4446 = vmatpush.bf16.msra.mxu0 %v3532
        %4447 = vmatpush.bf16.msra.mxu0 %v3531
        %4448 = vmatpush.bf16.msra.mxu0 %v3530
        %4449 = vmatmul.bf16.gmra.mxu0 %v2117
        %v4450 = vpop.f32.mrf.mxu0
        %v4451 = vadd.f32 %v4422, %v4450
        %v4452 = vpop.f32.mrf.mxu0
        %v4453 = vadd.f32 %v4424, %v4452
        %4454 = vmatmul.bf16.gmra.mxu0 %v2149
        %v4455 = vpop.f32.mrf.mxu0
        %v4456 = vadd.f32 %v4427, %v4455
        %v4457 = vpop.f32.mrf.mxu0
        %v4458 = vadd.f32 %v4429, %v4457
        %4459 = vmatmul.bf16.gmra.mxu0 %v2181
        %v4460 = vpop.f32.mrf.mxu0
        %v4461 = vadd.f32 %v4432, %v4460
        %v4462 = vpop.f32.mrf.mxu0
        %v4463 = vadd.f32 %v4434, %v4462
        %4464 = vmatmul.bf16.gmra.mxu0 %v2213
        %v4465 = vpop.f32.mrf.mxu0
        %v4466 = vadd.f32 %v4437, %v4465
        %v4467 = vpop.f32.mrf.mxu0
        %v4468 = vadd.f32 %v4439, %v4467
        %4469 = vdwg.mxu0
        %4470 = vmatpush.bf16.msra.mxu0 %v3545
        %4471 = vmatpush.bf16.msra.mxu0 %v3544
        %4472 = vmatpush.bf16.msra.mxu0 %v3543
        %4473 = vmatpush.bf16.msra.mxu0 %v3542
        %4474 = vmatpush.bf16.msra.mxu0 %v3541
        %4475 = vmatpush.bf16.msra.mxu0 %v3540
        %4476 = vmatpush.bf16.msra.mxu0 %v3539
        %4477 = vmatpush.bf16.msra.mxu0 %v3538
        %4478 = vmatmul.bf16.gmra.mxu0 %v2118
        %v4479 = vpop.f32.mrf.mxu0
        %v4480 = vadd.f32 %v4451, %v4479
        %v4481 = vpop.f32.mrf.mxu0
        %v4482 = vadd.f32 %v4453, %v4481
        %4483 = vmatmul.bf16.gmra.mxu0 %v2150
        %v4484 = vpop.f32.mrf.mxu0
        %v4485 = vadd.f32 %v4456, %v4484
        %v4486 = vpop.f32.mrf.mxu0
        %v4487 = vadd.f32 %v4458, %v4486
        %4488 = vmatmul.bf16.gmra.mxu0 %v2182
        %v4489 = vpop.f32.mrf.mxu0
        %v4490 = vadd.f32 %v4461, %v4489
        %v4491 = vpop.f32.mrf.mxu0
        %v4492 = vadd.f32 %v4463, %v4491
        %4493 = vmatmul.bf16.gmra.mxu0 %v2214
        %v4494 = vpop.f32.mrf.mxu0
        %v4495 = vadd.f32 %v4466, %v4494
        %v4496 = vpop.f32.mrf.mxu0
        %v4497 = vadd.f32 %v4468, %v4496
        %4498 = vdwg.mxu0
        %4499 = vmatpush.bf16.msra.mxu0 %v3553
        %4500 = vmatpush.bf16.msra.mxu0 %v3552
        %4501 = vmatpush.bf16.msra.mxu0 %v3551
        %4502 = vmatpush.bf16.msra.mxu0 %v3550
        %4503 = vmatpush.bf16.msra.mxu0 %v3549
        %4504 = vmatpush.bf16.msra.mxu0 %v3548
        %4505 = vmatpush.bf16.msra.mxu0 %v3547
        %4506 = vmatpush.bf16.msra.mxu0 %v3546
        %4507 = vmatmul.bf16.gmra.mxu0 %v2119
        %v4508 = vpop.f32.mrf.mxu0
        %v4509 = vadd.f32 %v4480, %v4508
        %v4510 = vpop.f32.mrf.mxu0
        %v4511 = vadd.f32 %v4482, %v4510
        %4512 = vmatmul.bf16.gmra.mxu0 %v2151
        %v4513 = vpop.f32.mrf.mxu0
        %v4514 = vadd.f32 %v4485, %v4513
        %v4515 = vpop.f32.mrf.mxu0
        %v4516 = vadd.f32 %v4487, %v4515
        %4517 = vmatmul.bf16.gmra.mxu0 %v2183
        %v4518 = vpop.f32.mrf.mxu0
        %v4519 = vadd.f32 %v4490, %v4518
        %v4520 = vpop.f32.mrf.mxu0
        %v4521 = vadd.f32 %v4492, %v4520
        %4522 = vmatmul.bf16.gmra.mxu0 %v2215
        %v4523 = vpop.f32.mrf.mxu0
        %v4524 = vadd.f32 %v4495, %v4523
        %v4525 = vpop.f32.mrf.mxu0
        %v4526 = vadd.f32 %v4497, %v4525
        %4527 = vdwg.mxu0
        %4528 = vmatpush.bf16.msra.mxu0 %v3561
        %4529 = vmatpush.bf16.msra.mxu0 %v3560
        %4530 = vmatpush.bf16.msra.mxu0 %v3559
        %4531 = vmatpush.bf16.msra.mxu0 %v3558
        %4532 = vmatpush.bf16.msra.mxu0 %v3557
        %4533 = vmatpush.bf16.msra.mxu0 %v3556
        %4534 = vmatpush.bf16.msra.mxu0 %v3555
        %4535 = vmatpush.bf16.msra.mxu0 %v3554
        %4536 = vmatmul.bf16.gmra.mxu0 %v2120
        %v4537 = vpop.f32.mrf.mxu0
        %v4538 = vadd.f32 %v4509, %v4537
        %v4539 = vpop.f32.mrf.mxu0
        %v4540 = vadd.f32 %v4511, %v4539
        %4541 = vmatmul.bf16.gmra.mxu0 %v2152
        %v4542 = vpop.f32.mrf.mxu0
        %v4543 = vadd.f32 %v4514, %v4542
        %v4544 = vpop.f32.mrf.mxu0
        %v4545 = vadd.f32 %v4516, %v4544
        %4546 = vmatmul.bf16.gmra.mxu0 %v2184
        %v4547 = vpop.f32.mrf.mxu0
        %v4548 = vadd.f32 %v4519, %v4547
        %v4549 = vpop.f32.mrf.mxu0
        %v4550 = vadd.f32 %v4521, %v4549
        %4551 = vmatmul.bf16.gmra.mxu0 %v2216
        %v4552 = vpop.f32.mrf.mxu0
        %v4553 = vadd.f32 %v4524, %v4552
        %v4554 = vpop.f32.mrf.mxu0
        %v4555 = vadd.f32 %v4526, %v4554
        %4556 = vdwg.mxu0
        %4557 = vmatpush.bf16.msra.mxu0 %v3569
        %4558 = vmatpush.bf16.msra.mxu0 %v3568
        %4559 = vmatpush.bf16.msra.mxu0 %v3567
        %4560 = vmatpush.bf16.msra.mxu0 %v3566
        %4561 = vmatpush.bf16.msra.mxu0 %v3565
        %4562 = vmatpush.bf16.msra.mxu0 %v3564
        %4563 = vmatpush.bf16.msra.mxu0 %v3563
        %4564 = vmatpush.bf16.msra.mxu0 %v3562
        %4565 = vmatmul.bf16.gmra.mxu0 %v2121
        %v4566 = vpop.f32.mrf.mxu0
        %v4567 = vadd.f32 %v4538, %v4566
        %v4568 = vpop.f32.mrf.mxu0
        %v4569 = vadd.f32 %v4540, %v4568
        %4570 = vmatmul.bf16.gmra.mxu0 %v2153
        %v4571 = vpop.f32.mrf.mxu0
        %v4572 = vadd.f32 %v4543, %v4571
        %v4573 = vpop.f32.mrf.mxu0
        %v4574 = vadd.f32 %v4545, %v4573
        %4575 = vmatmul.bf16.gmra.mxu0 %v2185
        %v4576 = vpop.f32.mrf.mxu0
        %v4577 = vadd.f32 %v4548, %v4576
        %v4578 = vpop.f32.mrf.mxu0
        %v4579 = vadd.f32 %v4550, %v4578
        %4580 = vmatmul.bf16.gmra.mxu0 %v2217
        %v4581 = vpop.f32.mrf.mxu0
        %v4582 = vadd.f32 %v4553, %v4581
        %v4583 = vpop.f32.mrf.mxu0
        %v4584 = vadd.f32 %v4555, %v4583
        %4585 = vdwg.mxu0
        %4586 = vmatpush.bf16.msra.mxu0 %v3577
        %4587 = vmatpush.bf16.msra.mxu0 %v3576
        %4588 = vmatpush.bf16.msra.mxu0 %v3575
        %4589 = vmatpush.bf16.msra.mxu0 %v3574
        %4590 = vmatpush.bf16.msra.mxu0 %v3573
        %4591 = vmatpush.bf16.msra.mxu0 %v3572
        %4592 = vmatpush.bf16.msra.mxu0 %v3571
        %4593 = vmatpush.bf16.msra.mxu0 %v3570
        %4594 = vmatmul.bf16.gmra.mxu0 %v2122
        %v4595 = vpop.f32.mrf.mxu0
        %v4596 = vadd.f32 %v4567, %v4595
        %v4597 = vpop.f32.mrf.mxu0
        %v4598 = vadd.f32 %v4569, %v4597
        %4599 = vmatmul.bf16.gmra.mxu0 %v2154
        %v4600 = vpop.f32.mrf.mxu0
        %v4601 = vadd.f32 %v4572, %v4600
        %v4602 = vpop.f32.mrf.mxu0
        %v4603 = vadd.f32 %v4574, %v4602
        %4604 = vmatmul.bf16.gmra.mxu0 %v2186
        %v4605 = vpop.f32.mrf.mxu0
        %v4606 = vadd.f32 %v4577, %v4605
        %v4607 = vpop.f32.mrf.mxu0
        %v4608 = vadd.f32 %v4579, %v4607
        %4609 = vmatmul.bf16.gmra.mxu0 %v2218
        %v4610 = vpop.f32.mrf.mxu0
        %v4611 = vadd.f32 %v4582, %v4610
        %v4612 = vpop.f32.mrf.mxu0
        %v4613 = vadd.f32 %v4584, %v4612
        %4614 = vdwg.mxu0
        %4615 = vmatpush.bf16.msra.mxu0 %v3585
        %4616 = vmatpush.bf16.msra.mxu0 %v3584
        %4617 = vmatpush.bf16.msra.mxu0 %v3583
        %4618 = vmatpush.bf16.msra.mxu0 %v3582
        %4619 = vmatpush.bf16.msra.mxu0 %v3581
        %4620 = vmatpush.bf16.msra.mxu0 %v3580
        %4621 = vmatpush.bf16.msra.mxu0 %v3579
        %4622 = vmatpush.bf16.msra.mxu0 %v3578
        %4623 = vmatmul.bf16.gmra.mxu0 %v2123
        %v4624 = vpop.f32.mrf.mxu0
        %v4625 = vadd.f32 %v4596, %v4624
        %v4626 = vpop.f32.mrf.mxu0
        %v4627 = vadd.f32 %v4598, %v4626
        %4628 = vmatmul.bf16.gmra.mxu0 %v2155
        %v4629 = vpop.f32.mrf.mxu0
        %v4630 = vadd.f32 %v4601, %v4629
        %v4631 = vpop.f32.mrf.mxu0
        %v4632 = vadd.f32 %v4603, %v4631
        %4633 = vmatmul.bf16.gmra.mxu0 %v2187
        %v4634 = vpop.f32.mrf.mxu0
        %v4635 = vadd.f32 %v4606, %v4634
        %v4636 = vpop.f32.mrf.mxu0
        %v4637 = vadd.f32 %v4608, %v4636
        %4638 = vmatmul.bf16.gmra.mxu0 %v2219
        %v4639 = vpop.f32.mrf.mxu0
        %v4640 = vadd.f32 %v4611, %v4639
        %v4641 = vpop.f32.mrf.mxu0
        %v4642 = vadd.f32 %v4613, %v4641
        %4643 = vdwg.mxu0
        %4644 = vmatpush.bf16.msra.mxu0 %v3593
        %4645 = vmatpush.bf16.msra.mxu0 %v3592
        %4646 = vmatpush.bf16.msra.mxu0 %v3591
        %4647 = vmatpush.bf16.msra.mxu0 %v3590
        %4648 = vmatpush.bf16.msra.mxu0 %v3589
        %4649 = vmatpush.bf16.msra.mxu0 %v3588
        %4650 = vmatpush.bf16.msra.mxu0 %v3587
        %4651 = vmatpush.bf16.msra.mxu0 %v3586
        %4652 = vmatmul.bf16.gmra.mxu0 %v2124
        %v4653 = vpop.f32.mrf.mxu0
        %v4654 = vadd.f32 %v4625, %v4653
        %v4655 = vpop.f32.mrf.mxu0
        %v4656 = vadd.f32 %v4627, %v4655
        %4657 = vmatmul.bf16.gmra.mxu0 %v2156
        %v4658 = vpop.f32.mrf.mxu0
        %v4659 = vadd.f32 %v4630, %v4658
        %v4660 = vpop.f32.mrf.mxu0
        %v4661 = vadd.f32 %v4632, %v4660
        %4662 = vmatmul.bf16.gmra.mxu0 %v2188
        %v4663 = vpop.f32.mrf.mxu0
        %v4664 = vadd.f32 %v4635, %v4663
        %v4665 = vpop.f32.mrf.mxu0
        %v4666 = vadd.f32 %v4637, %v4665
        %4667 = vmatmul.bf16.gmra.mxu0 %v2220
        %v4668 = vpop.f32.mrf.mxu0
        %v4669 = vadd.f32 %v4640, %v4668
        %v4670 = vpop.f32.mrf.mxu0
        %v4671 = vadd.f32 %v4642, %v4670
        %4672 = vdwg.mxu0
        %4673 = vmatpush.bf16.msra.mxu0 %v3601
        %4674 = vmatpush.bf16.msra.mxu0 %v3600
        %4675 = vmatpush.bf16.msra.mxu0 %v3599
        %4676 = vmatpush.bf16.msra.mxu0 %v3598
        %4677 = vmatpush.bf16.msra.mxu0 %v3597
        %4678 = vmatpush.bf16.msra.mxu0 %v3596
        %4679 = vmatpush.bf16.msra.mxu0 %v3595
        %4680 = vmatpush.bf16.msra.mxu0 %v3594
        %4681 = vmatmul.bf16.gmra.mxu0 %v2125
        %v4682 = vpop.f32.mrf.mxu0
        %v4683 = vadd.f32 %v4654, %v4682
        %v4684 = vpop.f32.mrf.mxu0
        %v4685 = vadd.f32 %v4656, %v4684
        %4686 = vmatmul.bf16.gmra.mxu0 %v2157
        %v4687 = vpop.f32.mrf.mxu0
        %v4688 = vadd.f32 %v4659, %v4687
        %v4689 = vpop.f32.mrf.mxu0
        %v4690 = vadd.f32 %v4661, %v4689
        %4691 = vmatmul.bf16.gmra.mxu0 %v2189
        %v4692 = vpop.f32.mrf.mxu0
        %v4693 = vadd.f32 %v4664, %v4692
        %v4694 = vpop.f32.mrf.mxu0
        %v4695 = vadd.f32 %v4666, %v4694
        %4696 = vmatmul.bf16.gmra.mxu0 %v2221
        %v4697 = vpop.f32.mrf.mxu0
        %v4698 = vadd.f32 %v4669, %v4697
        %v4699 = vpop.f32.mrf.mxu0
        %v4700 = vadd.f32 %v4671, %v4699
        %4701 = vdwg.mxu0
        %4702 = vmatpush.bf16.msra.mxu0 %v3609
        %4703 = vmatpush.bf16.msra.mxu0 %v3608
        %4704 = vmatpush.bf16.msra.mxu0 %v3607
        %4705 = vmatpush.bf16.msra.mxu0 %v3606
        %4706 = vmatpush.bf16.msra.mxu0 %v3605
        %4707 = vmatpush.bf16.msra.mxu0 %v3604
        %4708 = vmatpush.bf16.msra.mxu0 %v3603
        %4709 = vmatpush.bf16.msra.mxu0 %v3602
        %4710 = vmatmul.bf16.gmra.mxu0 %v2126
        %v4711 = vpop.f32.mrf.mxu0
        %v4712 = vadd.f32 %v4683, %v4711
        %v4713 = vpop.f32.mrf.mxu0
        %v4714 = vadd.f32 %v4685, %v4713
        %4715 = vmatmul.bf16.gmra.mxu0 %v2158
        %v4716 = vpop.f32.mrf.mxu0
        %v4717 = vadd.f32 %v4688, %v4716
        %v4718 = vpop.f32.mrf.mxu0
        %v4719 = vadd.f32 %v4690, %v4718
        %4720 = vmatmul.bf16.gmra.mxu0 %v2190
        %v4721 = vpop.f32.mrf.mxu0
        %v4722 = vadd.f32 %v4693, %v4721
        %v4723 = vpop.f32.mrf.mxu0
        %v4724 = vadd.f32 %v4695, %v4723
        %4725 = vmatmul.bf16.gmra.mxu0 %v2222
        %v4726 = vpop.f32.mrf.mxu0
        %v4727 = vadd.f32 %v4698, %v4726
        %v4728 = vpop.f32.mrf.mxu0
        %v4729 = vadd.f32 %v4700, %v4728
        %4730 = vdwg.mxu0
        %4731 = vmatpush.bf16.msra.mxu0 %v3617
        %4732 = vmatpush.bf16.msra.mxu0 %v3616
        %4733 = vmatpush.bf16.msra.mxu0 %v3615
        %4734 = vmatpush.bf16.msra.mxu0 %v3614
        %4735 = vmatpush.bf16.msra.mxu0 %v3613
        %4736 = vmatpush.bf16.msra.mxu0 %v3612
        %4737 = vmatpush.bf16.msra.mxu0 %v3611
        %4738 = vmatpush.bf16.msra.mxu0 %v3610
        %4739 = vmatmul.bf16.gmra.mxu0 %v2127
        %v4740 = vpop.f32.mrf.mxu0
        %v4741 = vadd.f32 %v4712, %v4740
        %v4742 = vpop.f32.mrf.mxu0
        %v4743 = vadd.f32 %v4714, %v4742
        %4744 = vmatmul.bf16.gmra.mxu0 %v2159
        %v4745 = vpop.f32.mrf.mxu0
        %v4746 = vadd.f32 %v4717, %v4745
        %v4747 = vpop.f32.mrf.mxu0
        %v4748 = vadd.f32 %v4719, %v4747
        %4749 = vmatmul.bf16.gmra.mxu0 %v2191
        %v4750 = vpop.f32.mrf.mxu0
        %v4751 = vadd.f32 %v4722, %v4750
        %v4752 = vpop.f32.mrf.mxu0
        %v4753 = vadd.f32 %v4724, %v4752
        %4754 = vmatmul.bf16.gmra.mxu0 %v2223
        %v4755 = vpop.f32.mrf.mxu0
        %v4756 = vadd.f32 %v4727, %v4755
        %v4757 = vpop.f32.mrf.mxu0
        %v4758 = vadd.f32 %v4729, %v4757
        %4759 = vdwg.mxu0
        %4760 = vmatpush.bf16.msra.mxu0 %v3625
        %4761 = vmatpush.bf16.msra.mxu0 %v3624
        %4762 = vmatpush.bf16.msra.mxu0 %v3623
        %4763 = vmatpush.bf16.msra.mxu0 %v3622
        %4764 = vmatpush.bf16.msra.mxu0 %v3621
        %4765 = vmatpush.bf16.msra.mxu0 %v3620
        %4766 = vmatpush.bf16.msra.mxu0 %v3619
        %4767 = vmatpush.bf16.msra.mxu0 %v3618
        %4768 = vmatmul.bf16.gmra.mxu0 %v2128
        %v4769 = vpop.f32.mrf.mxu0
        %v4770 = vadd.f32 %v4741, %v4769
        %v4771 = vpop.f32.mrf.mxu0
        %v4772 = vadd.f32 %v4743, %v4771
        %4773 = vmatmul.bf16.gmra.mxu0 %v2160
        %v4774 = vpop.f32.mrf.mxu0
        %v4775 = vadd.f32 %v4746, %v4774
        %v4776 = vpop.f32.mrf.mxu0
        %v4777 = vadd.f32 %v4748, %v4776
        %4778 = vmatmul.bf16.gmra.mxu0 %v2192
        %v4779 = vpop.f32.mrf.mxu0
        %v4780 = vadd.f32 %v4751, %v4779
        %v4781 = vpop.f32.mrf.mxu0
        %v4782 = vadd.f32 %v4753, %v4781
        %4783 = vmatmul.bf16.gmra.mxu0 %v2224
        %v4784 = vpop.f32.mrf.mxu0
        %v4785 = vadd.f32 %v4756, %v4784
        %v4786 = vpop.f32.mrf.mxu0
        %v4787 = vadd.f32 %v4758, %v4786
        %4788 = vdwg.mxu0
        %4789 = vmatpush.bf16.msra.mxu0 %v3633
        %4790 = vmatpush.bf16.msra.mxu0 %v3632
        %4791 = vmatpush.bf16.msra.mxu0 %v3631
        %4792 = vmatpush.bf16.msra.mxu0 %v3630
        %4793 = vmatpush.bf16.msra.mxu0 %v3629
        %4794 = vmatpush.bf16.msra.mxu0 %v3628
        %4795 = vmatpush.bf16.msra.mxu0 %v3627
        %4796 = vmatpush.bf16.msra.mxu0 %v3626
        %4797 = vmatmul.bf16.gmra.mxu0 %v2129
        %v4798 = vpop.f32.mrf.mxu0
        %v4799 = vadd.f32 %v4770, %v4798
        %v4800 = vpop.f32.mrf.mxu0
        %v4801 = vadd.f32 %v4772, %v4800
        %4802 = vmatmul.bf16.gmra.mxu0 %v2161
        %v4803 = vpop.f32.mrf.mxu0
        %v4804 = vadd.f32 %v4775, %v4803
        %v4805 = vpop.f32.mrf.mxu0
        %v4806 = vadd.f32 %v4777, %v4805
        %4807 = vmatmul.bf16.gmra.mxu0 %v2193
        %v4808 = vpop.f32.mrf.mxu0
        %v4809 = vadd.f32 %v4780, %v4808
        %v4810 = vpop.f32.mrf.mxu0
        %v4811 = vadd.f32 %v4782, %v4810
        %4812 = vmatmul.bf16.gmra.mxu0 %v2225
        %v4813 = vpop.f32.mrf.mxu0
        %v4814 = vadd.f32 %v4785, %v4813
        %v4815 = vpop.f32.mrf.mxu0
        %v4816 = vadd.f32 %v4787, %v4815
        %4817 = vdwg.mxu0
        %vm4818 = vcmask 523264
        %v4820 = vsel %vm4818, %v1065, 0
        %4822 = vmatpush.msra.mxu0 0.0
        %4823 = vmatpush.msra.mxu0 0.0
        %4824 = vmatpush.msra.mxu0 0.0
        %4825 = vmatpush.msra.mxu0 0.0
        %4826 = vmatpush.msra.mxu0 0.0
        %4827 = vmatpush.msra.mxu0 0.0
        %4828 = vmatpush.msra.mxu0 0.0
        %4829 = vmatpush.msra.mxu0 0.0
        %4830 = vmatpush.msra.mxu0 %v4816
        %4831 = vmatpush.msra.mxu0 %v4814
        %4832 = vmatpush.msra.mxu0 %v4811
        %4833 = vmatpush.msra.mxu0 %v4809
        %4834 = vmatpush.msra.mxu0 %v4806
        %4835 = vmatpush.msra.mxu0 %v4804
        %4836 = vmatpush.msra.mxu0 %v4801
        %4837 = vmatpush.msra.mxu0 %v4799
        %4838 = vmatmul.f32.gmra.mxu0 %v4820
        %v4839 = vpop.f32.mrf.mxu0
        %v4840 = vadd.f32 0.0, %v4839
        %4841 = vdwg.mxu0
        %vm4842 = vcmask 257024
        %v4843 = vsel %vm4842, %v4840, 0.0
        %4844 = vadd.xlane.f32.xlu0 %v4843
        %v4845 = vpop.xlane.xlu0 %4844
        %v4846 = vmul.f32 %v4845, 0.001953125
        %vm4847 = vcmask 31744
        %v4849 = vsel %vm4847, %v1066, 0
        %v4852 = vsel %vm4847, %v1067, 0
        %v4855 = vsel %vm4847, %v1068, 0
        %v4858 = vsel %vm4847, %v1069, 0
        %v4861 = vsel %vm4847, %v1070, 0
        %v4864 = vsel %vm4847, %v1071, 0
        %v4867 = vsel %vm4847, %v1072, 0
        %v4870 = vsel %vm4847, %v1073, 0
        %vm4872 = vcmask 1043456
        %v4874 = vsel %vm4872, %v4846, 0
        %4876 = vmatpush.msra.mxu0 0.0
        %4877 = vmatpush.msra.mxu0 0.0
        %4878 = vmatpush.msra.mxu0 0.0
        %4879 = vmatpush.msra.mxu0 0.0
        %4880 = vmatpush.msra.mxu0 0.0
        %4881 = vmatpush.msra.mxu0 0.0
        %4882 = vmatpush.msra.mxu0 0.0
        %4883 = vmatpush.msra.mxu0 0.0
        %4884 = vmatpush.msra.mxu0 0.0
        %4885 = vmatpush.msra.mxu0 0.0
        %4886 = vmatpush.msra.mxu0 0.0
        %4887 = vmatpush.msra.mxu0 0.0
        %4888 = vmatpush.msra.mxu0 0.0
        %4889 = vmatpush.msra.mxu0 0.0
        %4890 = vmatpush.msra.mxu0 0.0
        %4891 = vmatpush.msra.mxu0 %v4874
        %4892 = vmatmul.f32.gmra.mxu0 %v4849
        %v4893 = vpop.f32.mrf.mxu0
        %v4894 = vadd.f32 0.0, %v4893
        %4895 = vmatmul.f32.gmra.mxu0 %v4852
        %v4896 = vpop.f32.mrf.mxu0
        %v4897 = vadd.f32 0.0, %v4896
        %4898 = vmatmul.f32.gmra.mxu0 %v4855
        %v4899 = vpop.f32.mrf.mxu0
        %v4900 = vadd.f32 0.0, %v4899
        %4901 = vmatmul.f32.gmra.mxu0 %v4858
        %v4902 = vpop.f32.mrf.mxu0
        %v4903 = vadd.f32 0.0, %v4902
        %4904 = vmatmul.f32.gmra.mxu0 %v4861
        %v4905 = vpop.f32.mrf.mxu0
        %v4906 = vadd.f32 0.0, %v4905
        %4907 = vmatmul.f32.gmra.mxu0 %v4864
        %v4908 = vpop.f32.mrf.mxu0
        %v4909 = vadd.f32 0.0, %v4908
        %4910 = vmatmul.f32.gmra.mxu0 %v4867
        %v4911 = vpop.f32.mrf.mxu0
        %v4912 = vadd.f32 0.0, %v4911
        %4913 = vmatmul.f32.gmra.mxu0 %v4870
        %v4914 = vpop.f32.mrf.mxu0
        %v4915 = vadd.f32 0.0, %v4914
        %4916 = vdwg.mxu0
        %v4917 = vsub.f32 %v4799, %v4894
        %v4918 = vsub.f32 %v4801, %v4897
        %v4919 = vsub.f32 %v4804, %v4900
        %v4920 = vsub.f32 %v4806, %v4903
        %v4921 = vsub.f32 %v4809, %v4906
        %v4922 = vsub.f32 %v4811, %v4909
        %v4923 = vsub.f32 %v4814, %v4912
        %v4924 = vsub.f32 %v4816, %v4915
        %v4925 = vmul.f32 %v4917, %v4917
        %v4926 = vmul.f32 %v4918, %v4918
        %v4927 = vmul.f32 %v4919, %v4919
        %v4928 = vmul.f32 %v4920, %v4920
        %v4929 = vmul.f32 %v4921, %v4921
        %v4930 = vmul.f32 %v4922, %v4922
        %v4931 = vmul.f32 %v4923, %v4923
        %v4932 = vmul.f32 %v4924, %v4924
        %4933 = vmatpush.msra.mxu0 0.0
        %4934 = vmatpush.msra.mxu0 0.0
        %4935 = vmatpush.msra.mxu0 0.0
        %4936 = vmatpush.msra.mxu0 0.0
        %4937 = vmatpush.msra.mxu0 0.0
        %4938 = vmatpush.msra.mxu0 0.0
        %4939 = vmatpush.msra.mxu0 0.0
        %4940 = vmatpush.msra.mxu0 0.0
        %4941 = vmatpush.msra.mxu0 %v4932
        %4942 = vmatpush.msra.mxu0 %v4931
        %4943 = vmatpush.msra.mxu0 %v4930
        %4944 = vmatpush.msra.mxu0 %v4929
        %4945 = vmatpush.msra.mxu0 %v4928
        %4946 = vmatpush.msra.mxu0 %v4927
        %4947 = vmatpush.msra.mxu0 %v4926
        %4948 = vmatpush.msra.mxu0 %v4925
        %4949 = vmatmul.f32.gmra.mxu0 %v4820
        %v4950 = vpop.f32.mrf.mxu0
        %v4951 = vadd.f32 0.0, %v4950
        %4952 = vdwg.mxu0
        %v4953 = vsel %vm4842, %v4951, 0.0
        %4954 = vadd.xlane.f32.xlu0 %v4953
        %v4955 = vpop.xlane.xlu0 %4954
        %v4956 = vmul.f32 %v4955, 0.001953125
        %v4958 = vsel %vm4872, %v4956, 0
        %4960 = vmatpush.msra.mxu0 0.0
        %4961 = vmatpush.msra.mxu0 0.0
        %4962 = vmatpush.msra.mxu0 0.0
        %4963 = vmatpush.msra.mxu0 0.0
        %4964 = vmatpush.msra.mxu0 0.0
        %4965 = vmatpush.msra.mxu0 0.0
        %4966 = vmatpush.msra.mxu0 0.0
        %4967 = vmatpush.msra.mxu0 0.0
        %4968 = vmatpush.msra.mxu0 0.0
        %4969 = vmatpush.msra.mxu0 0.0
        %4970 = vmatpush.msra.mxu0 0.0
        %4971 = vmatpush.msra.mxu0 0.0
        %4972 = vmatpush.msra.mxu0 0.0
        %4973 = vmatpush.msra.mxu0 0.0
        %4974 = vmatpush.msra.mxu0 0.0
        %4975 = vmatpush.msra.mxu0 %v4958
        %4976 = vmatmul.f32.gmra.mxu0 %v4849
        %v4977 = vpop.f32.mrf.mxu0
        %v4978 = vadd.f32 1e-05, %v4977
        %4979 = vmatmul.f32.gmra.mxu0 %v4852
        %v4980 = vpop.f32.mrf.mxu0
        %v4981 = vadd.f32 1e-05, %v4980
        %4982 = vmatmul.f32.gmra.mxu0 %v4855
        %v4983 = vpop.f32.mrf.mxu0
        %v4984 = vadd.f32 1e-05, %v4983
        %4985 = vmatmul.f32.gmra.mxu0 %v4858
        %v4986 = vpop.f32.mrf.mxu0
        %v4987 = vadd.f32 1e-05, %v4986
        %4988 = vmatmul.f32.gmra.mxu0 %v4861
        %v4989 = vpop.f32.mrf.mxu0
        %v4990 = vadd.f32 1e-05, %v4989
        %4991 = vmatmul.f32.gmra.mxu0 %v4864
        %v4992 = vpop.f32.mrf.mxu0
        %v4993 = vadd.f32 1e-05, %v4992
        %4994 = vmatmul.f32.gmra.mxu0 %v4867
        %v4995 = vpop.f32.mrf.mxu0
        %v4996 = vadd.f32 1e-05, %v4995
        %4997 = vmatmul.f32.gmra.mxu0 %v4870
        %v4998 = vpop.f32.mrf.mxu0
        %v4999 = vadd.f32 1e-05, %v4998
        %5000 = vdwg.mxu0
        %v5001 = vrsqrt.pop %v4978
        %v5002 = vmul.f32 %v5001, %v4978
        %v5003 = vmul.f32 %v5002, %v5001
        %v5004 = vmul.f32 0.5, %v5003
        %v5005 = vsub.f32 1.5, %v5004
        %v5006 = vmul.f32 %v5001, %v5005
        %vm5007 = vweird.f32 %v4978
        %vm5008 = vweird.f32 %v5001
        %vm5009 = vmor %vm5007, %vm5008
        %v5010 = vsel %vm5009, %v5001, %v5006
        %v5011 = vrsqrt.pop %v4981
        %v5012 = vmul.f32 %v5011, %v4981
        %v5013 = vmul.f32 %v5012, %v5011
        %v5014 = vmul.f32 0.5, %v5013
        %v5015 = vsub.f32 1.5, %v5014
        %v5016 = vmul.f32 %v5011, %v5015
        %vm5017 = vweird.f32 %v4981
        %vm5018 = vweird.f32 %v5011
        %vm5019 = vmor %vm5017, %vm5018
        %v5020 = vsel %vm5019, %v5011, %v5016
        %v5021 = vrsqrt.pop %v4984
        %v5022 = vmul.f32 %v5021, %v4984
        %v5023 = vmul.f32 %v5022, %v5021
        %v5024 = vmul.f32 0.5, %v5023
        %v5025 = vsub.f32 1.5, %v5024
        %v5026 = vmul.f32 %v5021, %v5025
        %vm5027 = vweird.f32 %v4984
        %vm5028 = vweird.f32 %v5021
        %vm5029 = vmor %vm5027, %vm5028
        %v5030 = vsel %vm5029, %v5021, %v5026
        %v5031 = vrsqrt.pop %v4987
        %v5032 = vmul.f32 %v5031, %v4987
        %v5033 = vmul.f32 %v5032, %v5031
        %v5034 = vmul.f32 0.5, %v5033
        %v5035 = vsub.f32 1.5, %v5034
        %v5036 = vmul.f32 %v5031, %v5035
        %vm5037 = vweird.f32 %v4987
        %vm5038 = vweird.f32 %v5031
        %vm5039 = vmor %vm5037, %vm5038
        %v5040 = vsel %vm5039, %v5031, %v5036
        %v5041 = vrsqrt.pop %v4990
        %v5042 = vmul.f32 %v5041, %v4990
        %v5043 = vmul.f32 %v5042, %v5041
        %v5044 = vmul.f32 0.5, %v5043
        %v5045 = vsub.f32 1.5, %v5044
        %v5046 = vmul.f32 %v5041, %v5045
        %vm5047 = vweird.f32 %v4990
        %vm5048 = vweird.f32 %v5041
        %vm5049 = vmor %vm5047, %vm5048
        %v5050 = vsel %vm5049, %v5041, %v5046
        %v5051 = vrsqrt.pop %v4993
        %v5052 = vmul.f32 %v5051, %v4993
        %v5053 = vmul.f32 %v5052, %v5051
        %v5054 = vmul.f32 0.5, %v5053
        %v5055 = vsub.f32 1.5, %v5054
        %v5056 = vmul.f32 %v5051, %v5055
        %vm5057 = vweird.f32 %v4993
        %vm5058 = vweird.f32 %v5051
        %vm5059 = vmor %vm5057, %vm5058
        %v5060 = vsel %vm5059, %v5051, %v5056
        %v5061 = vrsqrt.pop %v4996
        %v5062 = vmul.f32 %v5061, %v4996
        %v5063 = vmul.f32 %v5062, %v5061
        %v5064 = vmul.f32 0.5, %v5063
        %v5065 = vsub.f32 1.5, %v5064
        %v5066 = vmul.f32 %v5061, %v5065
        %vm5067 = vweird.f32 %v4996
        %vm5068 = vweird.f32 %v5061
        %vm5069 = vmor %vm5067, %vm5068
        %v5070 = vsel %vm5069, %v5061, %v5066
        %v5071 = vrsqrt.pop %v4999
        %v5072 = vmul.f32 %v5071, %v4999
        %v5073 = vmul.f32 %v5072, %v5071
        %v5074 = vmul.f32 0.5, %v5073
        %v5075 = vsub.f32 1.5, %v5074
        %v5076 = vmul.f32 %v5071, %v5075
        %vm5077 = vweird.f32 %v4999
        %vm5078 = vweird.f32 %v5071
        %vm5079 = vmor %vm5077, %vm5078
        %v5080 = vsel %vm5079, %v5071, %v5076
        %v5081 = vmul.f32 %v4917, %v5010
        %v5082 = vmul.f32 %v4918, %v5020
        %v5083 = vmul.f32 %v4919, %v5030
        %v5084 = vmul.f32 %v4920, %v5040
        %v5085 = vmul.f32 %v4921, %v5050
        %v5086 = vmul.f32 %v4922, %v5060
        %v5087 = vmul.f32 %v4923, %v5070
        %v5088 = vmul.f32 %v4924, %v5080
        %v5089 = vld [vmem:[%s5] sm:$0x1]
        %v5091 = vperm.slane %v5089, 0
        %v5093 = vmul.f32 %v5081, %v5091
        %v5094 = vmul.f32 %v5082, %v5091
        %v5095 = vmul.f32 %v5083, %v5091
        %v5096 = vmul.f32 %v5084, %v5091
        %v5097 = vmul.f32 %v5085, %v5091
        %v5098 = vmul.f32 %v5086, %v5091
        %v5099 = vmul.f32 %v5087, %v5091
        %v5100 = vmul.f32 %v5088, %v5091
        %v5101 = vld [vmem:[%s7] sm:$0x1]
        %v5103 = vperm.slane %v5101, 0
        %v5105 = vadd.f32 %v5093, %v5103
        %v5106 = vadd.f32 %v5094, %v5103
        %v5107 = vadd.f32 %v5095, %v5103
        %v5108 = vadd.f32 %v5096, %v5103
        %v5109 = vadd.f32 %v5097, %v5103
        %v5110 = vadd.f32 %v5098, %v5103
        %v5111 = vadd.f32 %v5099, %v5103
        %v5112 = vadd.f32 %v5100, %v5103
        %5113 = vst.msk [vmem:[#allocation2 + $0x8] sm:$0xff] %vm990, %v5105
        %5114 = vst.msk [vmem:[#allocation2 + $0x10] sm:$0xff] %vm990, %v5106
        %5115 = vst.msk [vmem:[#allocation2 + $0x18] sm:$0xff] %vm990, %v5107
        %5116 = vst.msk [vmem:[#allocation2 + $0x20] sm:$0xff] %vm990, %v5108
        %5117 = vst.msk [vmem:[#allocation2 + $0x28] sm:$0xff] %vm990, %v5109
        %5118 = vst.msk [vmem:[#allocation2 + $0x30] sm:$0xff] %vm990, %v5110
        %5119 = vst.msk [vmem:[#allocation2 + $0x38] sm:$0xff] %vm990, %v5111
        %5120 = vst.msk [vmem:[#allocation2 + $0x40] sm:$0xff] %vm990, %v5112
        %v5121 = vld [vmem:[%s11] sm:$0x7]
        %v5122 = vld [vmem:[%s11 + $0x4] sm:$0x7]
        %v5123 = vld [vmem:[%s11 + $0x8] sm:$0x7]
        %v5124 = vld [vmem:[#allocation2 + $0x3] sm:$0xff]
        %v5125 = vld [vmem:[#allocation2 + $0xb] sm:$0xff]
        %v5126 = vld [vmem:[#allocation2 + $0x13] sm:$0xff]
        %v5127 = vld [vmem:[#allocation2 + $0x1b] sm:$0xff]
        %v5128 = vld [vmem:[#allocation2 + $0x23] sm:$0xff]
        %v5129 = vld [vmem:[#allocation2 + $0x2b] sm:$0xff]
        %v5130 = vld [vmem:[#allocation2 + $0x33] sm:$0xff]
        %v5131 = vld [vmem:[#allocation2 + $0x3b] sm:$0xff]
        %5133 = vset.pattern.permute.xlu0 0
        %5134 = vperm.xlu0 %5133, %v993
        %v5135 = vpop.permute.xlu0 %5134
        %5138 = vset.pattern.permute.xlu0 0
        %5139 = vperm.xlu0 %5138, %v994
        %v5140 = vpop.permute.xlu0 %5139
        %5143 = vset.pattern.permute.xlu0 0
        %5144 = vperm.xlu0 %5143, %v995
        %v5145 = vpop.permute.xlu0 %5144
        %5148 = vset.pattern.permute.xlu0 0
        %5149 = vperm.xlu0 %5148, %v996
        %v5150 = vpop.permute.xlu0 %5149
        %5153 = vset.pattern.permute.xlu0 0
        %5154 = vperm.xlu0 %5153, %v997
        %v5155 = vpop.permute.xlu0 %5154
        %5158 = vset.pattern.permute.xlu0 0
        %5159 = vperm.xlu0 %5158, %v998
        %v5160 = vpop.permute.xlu0 %5159
        %5163 = vset.pattern.permute.xlu0 0
        %5164 = vperm.xlu0 %5163, %v999
        %v5165 = vpop.permute.xlu0 %5164
        %5168 = vset.pattern.permute.xlu0 0
        %5169 = vperm.xlu0 %5168, %v1000
        %v5170 = vpop.permute.xlu0 %5169
        %v5172 = vmul.f32 %v5124, %v5135
        %v5173 = vmul.f32 %v5125, %v5140
        %v5174 = vmul.f32 %v5126, %v5145
        %v5175 = vmul.f32 %v5127, %v5150
        %v5176 = vmul.f32 %v5128, %v5155
        %v5177 = vmul.f32 %v5129, %v5160
        %v5178 = vmul.f32 %v5130, %v5165
        %v5179 = vmul.f32 %v5131, %v5170
        %v5180 = vperm.slane %v5121, 0
        %v5181 = vmul.f32 %v5172, %v5180
        %v5182 = vmul.f32 %v5173, %v5180
        %v5183 = vmul.f32 %v5174, %v5180
        %v5184 = vmul.f32 %v5175, %v5180
        %v5185 = vmul.f32 %v5176, %v5180
        %v5186 = vmul.f32 %v5177, %v5180
        %v5187 = vmul.f32 %v5178, %v5180
        %v5188 = vmul.f32 %v5179, %v5180
        %v5189 = vadd.f32 %v5181, 0.0
        %v5190 = vadd.f32 %v5182, 0.0
        %v5191 = vadd.f32 %v5183, 0.0
        %v5192 = vadd.f32 %v5184, 0.0
        %v5193 = vadd.f32 %v5185, 0.0
        %v5194 = vadd.f32 %v5186, 0.0
        %v5195 = vadd.f32 %v5187, 0.0
        %v5196 = vadd.f32 %v5188, 0.0
        %v5197 = vld [vmem:[#allocation2 + $0x4] sm:$0xff]
        %v5198 = vld [vmem:[#allocation2 + $0xc] sm:$0xff]
        %v5199 = vld [vmem:[#allocation2 + $0x14] sm:$0xff]
        %v5200 = vld [vmem:[#allocation2 + $0x1c] sm:$0xff]
        %v5201 = vld [vmem:[#allocation2 + $0x24] sm:$0xff]
        %v5202 = vld [vmem:[#allocation2 + $0x2c] sm:$0xff]
        %v5203 = vld [vmem:[#allocation2 + $0x34] sm:$0xff]
        %v5204 = vld [vmem:[#allocation2 + $0x3c] sm:$0xff]
        %5206 = vset.pattern.permute.xlu0 0
        %5207 = vperm.xlu0 %5206, %v1001
        %v5208 = vpop.permute.xlu0 %5207
        %5211 = vset.pattern.permute.xlu0 0
        %5212 = vperm.xlu0 %5211, %v1002
        %v5213 = vpop.permute.xlu0 %5212
        %5216 = vset.pattern.permute.xlu0 0
        %5217 = vperm.xlu0 %5216, %v1003
        %v5218 = vpop.permute.xlu0 %5217
        %5221 = vset.pattern.permute.xlu0 0
        %5222 = vperm.xlu0 %5221, %v1004
        %v5223 = vpop.permute.xlu0 %5222
        %5226 = vset.pattern.permute.xlu0 0
        %5227 = vperm.xlu0 %5226, %v1005
        %v5228 = vpop.permute.xlu0 %5227
        %5231 = vset.pattern.permute.xlu0 0
        %5232 = vperm.xlu0 %5231, %v1006
        %v5233 = vpop.permute.xlu0 %5232
        %5236 = vset.pattern.permute.xlu0 0
        %5237 = vperm.xlu0 %5236, %v1007
        %v5238 = vpop.permute.xlu0 %5237
        %5241 = vset.pattern.permute.xlu0 0
        %5242 = vperm.xlu0 %5241, %v1008
        %v5243 = vpop.permute.xlu0 %5242
        %v5245 = vmul.f32 %v5197, %v5208
        %v5246 = vmul.f32 %v5198, %v5213
        %v5247 = vmul.f32 %v5199, %v5218
        %v5248 = vmul.f32 %v5200, %v5223
        %v5249 = vmul.f32 %v5201, %v5228
        %v5250 = vmul.f32 %v5202, %v5233
        %v5251 = vmul.f32 %v5203, %v5238
        %v5252 = vmul.f32 %v5204, %v5243
        %v5253 = vperm.slane %v5121, 1
        %v5254 = vmul.f32 %v5245, %v5253
        %v5255 = vmul.f32 %v5246, %v5253
        %v5256 = vmul.f32 %v5247, %v5253
        %v5257 = vmul.f32 %v5248, %v5253
        %v5258 = vmul.f32 %v5249, %v5253
        %v5259 = vmul.f32 %v5250, %v5253
        %v5260 = vmul.f32 %v5251, %v5253
        %v5261 = vmul.f32 %v5252, %v5253
        %v5262 = vadd.f32 %v5189, %v5254
        %v5263 = vadd.f32 %v5190, %v5255
        %v5264 = vadd.f32 %v5191, %v5256
        %v5265 = vadd.f32 %v5192, %v5257
        %v5266 = vadd.f32 %v5193, %v5258
        %v5267 = vadd.f32 %v5194, %v5259
        %v5268 = vadd.f32 %v5195, %v5260
        %v5269 = vadd.f32 %v5196, %v5261
        %v5270 = vld [vmem:[#allocation2 + $0x5] sm:$0xff]
        %v5271 = vld [vmem:[#allocation2 + $0xd] sm:$0xff]
        %v5272 = vld [vmem:[#allocation2 + $0x15] sm:$0xff]
        %v5273 = vld [vmem:[#allocation2 + $0x1d] sm:$0xff]
        %v5274 = vld [vmem:[#allocation2 + $0x25] sm:$0xff]
        %v5275 = vld [vmem:[#allocation2 + $0x2d] sm:$0xff]
        %v5276 = vld [vmem:[#allocation2 + $0x35] sm:$0xff]
        %v5277 = vld [vmem:[#allocation2 + $0x3d] sm:$0xff]
        %5279 = vset.pattern.permute.xlu0 0
        %5280 = vperm.xlu0 %5279, %v1009
        %v5281 = vpop.permute.xlu0 %5280
        %5284 = vset.pattern.permute.xlu0 0
        %5285 = vperm.xlu0 %5284, %v1010
        %v5286 = vpop.permute.xlu0 %5285
        %5289 = vset.pattern.permute.xlu0 0
        %5290 = vperm.xlu0 %5289, %v1011
        %v5291 = vpop.permute.xlu0 %5290
        %5294 = vset.pattern.permute.xlu0 0
        %5295 = vperm.xlu0 %5294, %v1012
        %v5296 = vpop.permute.xlu0 %5295
        %5299 = vset.pattern.permute.xlu0 0
        %5300 = vperm.xlu0 %5299, %v1013
        %v5301 = vpop.permute.xlu0 %5300
        %5304 = vset.pattern.permute.xlu0 0
        %5305 = vperm.xlu0 %5304, %v1014
        %v5306 = vpop.permute.xlu0 %5305
        %5309 = vset.pattern.permute.xlu0 0
        %5310 = vperm.xlu0 %5309, %v1015
        %v5311 = vpop.permute.xlu0 %5310
        %5314 = vset.pattern.permute.xlu0 0
        %5315 = vperm.xlu0 %5314, %v1016
        %v5316 = vpop.permute.xlu0 %5315
        %v5318 = vmul.f32 %v5270, %v5281
        %v5319 = vmul.f32 %v5271, %v5286
        %v5320 = vmul.f32 %v5272, %v5291
        %v5321 = vmul.f32 %v5273, %v5296
        %v5322 = vmul.f32 %v5274, %v5301
        %v5323 = vmul.f32 %v5275, %v5306
        %v5324 = vmul.f32 %v5276, %v5311
        %v5325 = vmul.f32 %v5277, %v5316
        %v5326 = vperm.slane %v5121, 2
        %v5327 = vmul.f32 %v5318, %v5326
        %v5328 = vmul.f32 %v5319, %v5326
        %v5329 = vmul.f32 %v5320, %v5326
        %v5330 = vmul.f32 %v5321, %v5326
        %v5331 = vmul.f32 %v5322, %v5326
        %v5332 = vmul.f32 %v5323, %v5326
        %v5333 = vmul.f32 %v5324, %v5326
        %v5334 = vmul.f32 %v5325, %v5326
        %v5335 = vadd.f32 %v5262, %v5327
        %v5336 = vadd.f32 %v5263, %v5328
        %v5337 = vadd.f32 %v5264, %v5329
        %v5338 = vadd.f32 %v5265, %v5330
        %v5339 = vadd.f32 %v5266, %v5331
        %v5340 = vadd.f32 %v5267, %v5332
        %v5341 = vadd.f32 %v5268, %v5333
        %v5342 = vadd.f32 %v5269, %v5334
        %v5343 = vld [vmem:[#allocation2 + $0x7] sm:$0xff]
        %v5344 = vld [vmem:[#allocation2 + $0xf] sm:$0xff]
        %v5345 = vld [vmem:[#allocation2 + $0x17] sm:$0xff]
        %v5346 = vld [vmem:[#allocation2 + $0x1f] sm:$0xff]
        %v5347 = vld [vmem:[#allocation2 + $0x27] sm:$0xff]
        %v5348 = vld [vmem:[#allocation2 + $0x2f] sm:$0xff]
        %v5349 = vld [vmem:[#allocation2 + $0x37] sm:$0xff]
        %v5350 = vld [vmem:[#allocation2 + $0x3f] sm:$0xff]
        %5352 = vset.pattern.permute.xlu0 0
        %5353 = vperm.xlu0 %5352, %v1017
        %v5354 = vpop.permute.xlu0 %5353
        %5357 = vset.pattern.permute.xlu0 0
        %5358 = vperm.xlu0 %5357, %v1018
        %v5359 = vpop.permute.xlu0 %5358
        %5362 = vset.pattern.permute.xlu0 0
        %5363 = vperm.xlu0 %5362, %v1019
        %v5364 = vpop.permute.xlu0 %5363
        %5367 = vset.pattern.permute.xlu0 0
        %5368 = vperm.xlu0 %5367, %v1020
        %v5369 = vpop.permute.xlu0 %5368
        %5372 = vset.pattern.permute.xlu0 0
        %5373 = vperm.xlu0 %5372, %v1021
        %v5374 = vpop.permute.xlu0 %5373
        %5377 = vset.pattern.permute.xlu0 0
        %5378 = vperm.xlu0 %5377, %v1022
        %v5379 = vpop.permute.xlu0 %5378
        %5382 = vset.pattern.permute.xlu0 0
        %5383 = vperm.xlu0 %5382, %v1023
        %v5384 = vpop.permute.xlu0 %5383
        %5387 = vset.pattern.permute.xlu0 0
        %5388 = vperm.xlu0 %5387, %v1024
        %v5389 = vpop.permute.xlu0 %5388
        %v5391 = vmul.f32 %v5343, %v5354
        %v5392 = vmul.f32 %v5344, %v5359
        %v5393 = vmul.f32 %v5345, %v5364
        %v5394 = vmul.f32 %v5346, %v5369
        %v5395 = vmul.f32 %v5347, %v5374
        %v5396 = vmul.f32 %v5348, %v5379
        %v5397 = vmul.f32 %v5349, %v5384
        %v5398 = vmul.f32 %v5350, %v5389
        %v5399 = vperm.slane %v5122, 0
        %v5400 = vmul.f32 %v5391, %v5399
        %v5401 = vmul.f32 %v5392, %v5399
        %v5402 = vmul.f32 %v5393, %v5399
        %v5403 = vmul.f32 %v5394, %v5399
        %v5404 = vmul.f32 %v5395, %v5399
        %v5405 = vmul.f32 %v5396, %v5399
        %v5406 = vmul.f32 %v5397, %v5399
        %v5407 = vmul.f32 %v5398, %v5399
        %v5408 = vadd.f32 %v5335, %v5400
        %v5409 = vadd.f32 %v5336, %v5401
        %v5410 = vadd.f32 %v5337, %v5402
        %v5411 = vadd.f32 %v5338, %v5403
        %v5412 = vadd.f32 %v5339, %v5404
        %v5413 = vadd.f32 %v5340, %v5405
        %v5414 = vadd.f32 %v5341, %v5406
        %v5415 = vadd.f32 %v5342, %v5407
        %v5416 = vld [vmem:[#allocation2 + $0x8] sm:$0xff]
        %v5417 = vld [vmem:[#allocation2 + $0x10] sm:$0xff]
        %v5418 = vld [vmem:[#allocation2 + $0x18] sm:$0xff]
        %v5419 = vld [vmem:[#allocation2 + $0x20] sm:$0xff]
        %v5420 = vld [vmem:[#allocation2 + $0x28] sm:$0xff]
        %v5421 = vld [vmem:[#allocation2 + $0x30] sm:$0xff]
        %v5422 = vld [vmem:[#allocation2 + $0x38] sm:$0xff]
        %v5423 = vld [vmem:[#allocation2 + $0x40] sm:$0xff]
        %5425 = vset.pattern.permute.xlu0 0
        %5426 = vperm.xlu0 %5425, %v1025
        %v5427 = vpop.permute.xlu0 %5426
        %5430 = vset.pattern.permute.xlu0 0
        %5431 = vperm.xlu0 %5430, %v1026
        %v5432 = vpop.permute.xlu0 %5431
        %5435 = vset.pattern.permute.xlu0 0
        %5436 = vperm.xlu0 %5435, %v1027
        %v5437 = vpop.permute.xlu0 %5436
        %5440 = vset.pattern.permute.xlu0 0
        %5441 = vperm.xlu0 %5440, %v1028
        %v5442 = vpop.permute.xlu0 %5441
        %5445 = vset.pattern.permute.xlu0 0
        %5446 = vperm.xlu0 %5445, %v1029
        %v5447 = vpop.permute.xlu0 %5446
        %5450 = vset.pattern.permute.xlu0 0
        %5451 = vperm.xlu0 %5450, %v1030
        %v5452 = vpop.permute.xlu0 %5451
        %5455 = vset.pattern.permute.xlu0 0
        %5456 = vperm.xlu0 %5455, %v1031
        %v5457 = vpop.permute.xlu0 %5456
        %5460 = vset.pattern.permute.xlu0 0
        %5461 = vperm.xlu0 %5460, %v1032
        %v5462 = vpop.permute.xlu0 %5461
        %v5464 = vmul.f32 %v5416, %v5427
        %v5465 = vmul.f32 %v5417, %v5432
        %v5466 = vmul.f32 %v5418, %v5437
        %v5467 = vmul.f32 %v5419, %v5442
        %v5468 = vmul.f32 %v5420, %v5447
        %v5469 = vmul.f32 %v5421, %v5452
        %v5470 = vmul.f32 %v5422, %v5457
        %v5471 = vmul.f32 %v5423, %v5462
        %v5472 = vperm.slane %v5122, 1
        %v5473 = vmul.f32 %v5464, %v5472
        %v5474 = vmul.f32 %v5465, %v5472
        %v5475 = vmul.f32 %v5466, %v5472
        %v5476 = vmul.f32 %v5467, %v5472
        %v5477 = vmul.f32 %v5468, %v5472
        %v5478 = vmul.f32 %v5469, %v5472
        %v5479 = vmul.f32 %v5470, %v5472
        %v5480 = vmul.f32 %v5471, %v5472
        %v5481 = vadd.f32 %v5408, %v5473
        %v5482 = vadd.f32 %v5409, %v5474
        %v5483 = vadd.f32 %v5410, %v5475
        %v5484 = vadd.f32 %v5411, %v5476
        %v5485 = vadd.f32 %v5412, %v5477
        %v5486 = vadd.f32 %v5413, %v5478
        %v5487 = vadd.f32 %v5414, %v5479
        %v5488 = vadd.f32 %v5415, %v5480
        %v5489 = vld [vmem:[#allocation2 + $0x9] sm:$0xff]
        %v5490 = vld [vmem:[#allocation2 + $0x11] sm:$0xff]
        %v5491 = vld [vmem:[#allocation2 + $0x19] sm:$0xff]
        %v5492 = vld [vmem:[#allocation2 + $0x21] sm:$0xff]
        %v5493 = vld [vmem:[#allocation2 + $0x29] sm:$0xff]
        %v5494 = vld [vmem:[#allocation2 + $0x31] sm:$0xff]
        %v5495 = vld [vmem:[#allocation2 + $0x39] sm:$0xff]
        %v5496 = vld [vmem:[#allocation2 + $0x41] sm:$0xff]
        %5498 = vset.pattern.permute.xlu0 0
        %5499 = vperm.xlu0 %5498, %v1033
        %v5500 = vpop.permute.xlu0 %5499
        %5503 = vset.pattern.permute.xlu0 0
        %5504 = vperm.xlu0 %5503, %v1034
        %v5505 = vpop.permute.xlu0 %5504
        %5508 = vset.pattern.permute.xlu0 0
        %5509 = vperm.xlu0 %5508, %v1035
        %v5510 = vpop.permute.xlu0 %5509
        %5513 = vset.pattern.permute.xlu0 0
        %5514 = vperm.xlu0 %5513, %v1036
        %v5515 = vpop.permute.xlu0 %5514
        %5518 = vset.pattern.permute.xlu0 0
        %5519 = vperm.xlu0 %5518, %v1037
        %v5520 = vpop.permute.xlu0 %5519
        %5523 = vset.pattern.permute.xlu0 0
        %5524 = vperm.xlu0 %5523, %v1038
        %v5525 = vpop.permute.xlu0 %5524
        %5528 = vset.pattern.permute.xlu0 0
        %5529 = vperm.xlu0 %5528, %v1039
        %v5530 = vpop.permute.xlu0 %5529
        %5533 = vset.pattern.permute.xlu0 0
        %5534 = vperm.xlu0 %5533, %v1040
        %v5535 = vpop.permute.xlu0 %5534
        %v5537 = vmul.f32 %v5489, %v5500
        %v5538 = vmul.f32 %v5490, %v5505
        %v5539 = vmul.f32 %v5491, %v5510
        %v5540 = vmul.f32 %v5492, %v5515
        %v5541 = vmul.f32 %v5493, %v5520
        %v5542 = vmul.f32 %v5494, %v5525
        %v5543 = vmul.f32 %v5495, %v5530
        %v5544 = vmul.f32 %v5496, %v5535
        %v5545 = vperm.slane %v5122, 2
        %v5546 = vmul.f32 %v5537, %v5545
        %v5547 = vmul.f32 %v5538, %v5545
        %v5548 = vmul.f32 %v5539, %v5545
        %v5549 = vmul.f32 %v5540, %v5545
        %v5550 = vmul.f32 %v5541, %v5545
        %v5551 = vmul.f32 %v5542, %v5545
        %v5552 = vmul.f32 %v5543, %v5545
        %v5553 = vmul.f32 %v5544, %v5545
        %v5554 = vadd.f32 %v5481, %v5546
        %v5555 = vadd.f32 %v5482, %v5547
        %v5556 = vadd.f32 %v5483, %v5548
        %v5557 = vadd.f32 %v5484, %v5549
        %v5558 = vadd.f32 %v5485, %v5550
        %v5559 = vadd.f32 %v5486, %v5551
        %v5560 = vadd.f32 %v5487, %v5552
        %v5561 = vadd.f32 %v5488, %v5553
        %v5562 = vld [vmem:[#allocation2 + $0xb] sm:$0xff]
        %v5563 = vld [vmem:[#allocation2 + $0x13] sm:$0xff]
        %v5564 = vld [vmem:[#allocation2 + $0x1b] sm:$0xff]
        %v5565 = vld [vmem:[#allocation2 + $0x23] sm:$0xff]
        %v5566 = vld [vmem:[#allocation2 + $0x2b] sm:$0xff]
        %v5567 = vld [vmem:[#allocation2 + $0x33] sm:$0xff]
        %v5568 = vld [vmem:[#allocation2 + $0x3b] sm:$0xff]
        %v5569 = vld [vmem:[#allocation2 + $0x43] sm:$0xff]
        %5571 = vset.pattern.permute.xlu0 0
        %5572 = vperm.xlu0 %5571, %v1041
        %v5573 = vpop.permute.xlu0 %5572
        %5576 = vset.pattern.permute.xlu0 0
        %5577 = vperm.xlu0 %5576, %v1042
        %v5578 = vpop.permute.xlu0 %5577
        %5581 = vset.pattern.permute.xlu0 0
        %5582 = vperm.xlu0 %5581, %v1043
        %v5583 = vpop.permute.xlu0 %5582
        %5586 = vset.pattern.permute.xlu0 0
        %5587 = vperm.xlu0 %5586, %v1044
        %v5588 = vpop.permute.xlu0 %5587
        %5591 = vset.pattern.permute.xlu0 0
        %5592 = vperm.xlu0 %5591, %v1045
        %v5593 = vpop.permute.xlu0 %5592
        %5596 = vset.pattern.permute.xlu0 0
        %5597 = vperm.xlu0 %5596, %v1046
        %v5598 = vpop.permute.xlu0 %5597
        %5601 = vset.pattern.permute.xlu0 0
        %5602 = vperm.xlu0 %5601, %v1047
        %v5603 = vpop.permute.xlu0 %5602
        %5606 = vset.pattern.permute.xlu0 0
        %5607 = vperm.xlu0 %5606, %v1048
        %v5608 = vpop.permute.xlu0 %5607
        %v5610 = vmul.f32 %v5562, %v5573
        %v5611 = vmul.f32 %v5563, %v5578
        %v5612 = vmul.f32 %v5564, %v5583
        %v5613 = vmul.f32 %v5565, %v5588
        %v5614 = vmul.f32 %v5566, %v5593
        %v5615 = vmul.f32 %v5567, %v5598
        %v5616 = vmul.f32 %v5568, %v5603
        %v5617 = vmul.f32 %v5569, %v5608
        %v5618 = vperm.slane %v5123, 0
        %v5619 = vmul.f32 %v5610, %v5618
        %v5620 = vmul.f32 %v5611, %v5618
        %v5621 = vmul.f32 %v5612, %v5618
        %v5622 = vmul.f32 %v5613, %v5618
        %v5623 = vmul.f32 %v5614, %v5618
        %v5624 = vmul.f32 %v5615, %v5618
        %v5625 = vmul.f32 %v5616, %v5618
        %v5626 = vmul.f32 %v5617, %v5618
        %v5627 = vadd.f32 %v5554, %v5619
        %v5628 = vadd.f32 %v5555, %v5620
        %v5629 = vadd.f32 %v5556, %v5621
        %v5630 = vadd.f32 %v5557, %v5622
        %v5631 = vadd.f32 %v5558, %v5623
        %v5632 = vadd.f32 %v5559, %v5624
        %v5633 = vadd.f32 %v5560, %v5625
        %v5634 = vadd.f32 %v5561, %v5626
        %v5635 = vld [vmem:[#allocation2 + $0xc] sm:$0xff]
        %v5636 = vld [vmem:[#allocation2 + $0x14] sm:$0xff]
        %v5637 = vld [vmem:[#allocation2 + $0x1c] sm:$0xff]
        %v5638 = vld [vmem:[#allocation2 + $0x24] sm:$0xff]
        %v5639 = vld [vmem:[#allocation2 + $0x2c] sm:$0xff]
        %v5640 = vld [vmem:[#allocation2 + $0x34] sm:$0xff]
        %v5641 = vld [vmem:[#allocation2 + $0x3c] sm:$0xff]
        %v5642 = vld [vmem:[#allocation2 + $0x44] sm:$0xff]
        %5644 = vset.pattern.permute.xlu0 0
        %5645 = vperm.xlu0 %5644, %v1049
        %v5646 = vpop.permute.xlu0 %5645
        %5649 = vset.pattern.permute.xlu0 0
        %5650 = vperm.xlu0 %5649, %v1050
        %v5651 = vpop.permute.xlu0 %5650
        %5654 = vset.pattern.permute.xlu0 0
        %5655 = vperm.xlu0 %5654, %v1051
        %v5656 = vpop.permute.xlu0 %5655
        %5659 = vset.pattern.permute.xlu0 0
        %5660 = vperm.xlu0 %5659, %v1052
        %v5661 = vpop.permute.xlu0 %5660
        %5664 = vset.pattern.permute.xlu0 0
        %5665 = vperm.xlu0 %5664, %v1053
        %v5666 = vpop.permute.xlu0 %5665
        %5669 = vset.pattern.permute.xlu0 0
        %5670 = vperm.xlu0 %5669, %v1054
        %v5671 = vpop.permute.xlu0 %5670
        %5674 = vset.pattern.permute.xlu0 0
        %5675 = vperm.xlu0 %5674, %v1055
        %v5676 = vpop.permute.xlu0 %5675
        %5679 = vset.pattern.permute.xlu0 0
        %5680 = vperm.xlu0 %5679, %v1056
        %v5681 = vpop.permute.xlu0 %5680
        %v5683 = vmul.f32 %v5635, %v5646
        %v5684 = vmul.f32 %v5636, %v5651
        %v5685 = vmul.f32 %v5637, %v5656
        %v5686 = vmul.f32 %v5638, %v5661
        %v5687 = vmul.f32 %v5639, %v5666
        %v5688 = vmul.f32 %v5640, %v5671
        %v5689 = vmul.f32 %v5641, %v5676
        %v5690 = vmul.f32 %v5642, %v5681
        %v5691 = vperm.slane %v5123, 1
        %v5692 = vmul.f32 %v5683, %v5691
        %v5693 = vmul.f32 %v5684, %v5691
        %v5694 = vmul.f32 %v5685, %v5691
        %v5695 = vmul.f32 %v5686, %v5691
        %v5696 = vmul.f32 %v5687, %v5691
        %v5697 = vmul.f32 %v5688, %v5691
        %v5698 = vmul.f32 %v5689, %v5691
        %v5699 = vmul.f32 %v5690, %v5691
        %v5700 = vadd.f32 %v5627, %v5692
        %v5701 = vadd.f32 %v5628, %v5693
        %v5702 = vadd.f32 %v5629, %v5694
        %v5703 = vadd.f32 %v5630, %v5695
        %v5704 = vadd.f32 %v5631, %v5696
        %v5705 = vadd.f32 %v5632, %v5697
        %v5706 = vadd.f32 %v5633, %v5698
        %v5707 = vadd.f32 %v5634, %v5699
        %v5708 = vld [vmem:[#allocation2 + $0xd] sm:$0xff]
        %v5709 = vld [vmem:[#allocation2 + $0x15] sm:$0xff]
        %v5710 = vld [vmem:[#allocation2 + $0x1d] sm:$0xff]
        %v5711 = vld [vmem:[#allocation2 + $0x25] sm:$0xff]
        %v5712 = vld [vmem:[#allocation2 + $0x2d] sm:$0xff]
        %v5713 = vld [vmem:[#allocation2 + $0x35] sm:$0xff]
        %v5714 = vld [vmem:[#allocation2 + $0x3d] sm:$0xff]
        %v5715 = vld [vmem:[#allocation2 + $0x45] sm:$0xff]
        %5717 = vset.pattern.permute.xlu0 0
        %5718 = vperm.xlu0 %5717, %v1057
        %v5719 = vpop.permute.xlu0 %5718
        %5722 = vset.pattern.permute.xlu0 0
        %5723 = vperm.xlu0 %5722, %v1058
        %v5724 = vpop.permute.xlu0 %5723
        %5727 = vset.pattern.permute.xlu0 0
        %5728 = vperm.xlu0 %5727, %v1059
        %v5729 = vpop.permute.xlu0 %5728
        %5732 = vset.pattern.permute.xlu0 0
        %5733 = vperm.xlu0 %5732, %v1060
        %v5734 = vpop.permute.xlu0 %5733
        %5737 = vset.pattern.permute.xlu0 0
        %5738 = vperm.xlu0 %5737, %v1061
        %v5739 = vpop.permute.xlu0 %5738
        %5742 = vset.pattern.permute.xlu0 0
        %5743 = vperm.xlu0 %5742, %v1062
        %v5744 = vpop.permute.xlu0 %5743
        %5747 = vset.pattern.permute.xlu0 0
        %5748 = vperm.xlu0 %5747, %v1063
        %v5749 = vpop.permute.xlu0 %5748
        %5752 = vset.pattern.permute.xlu0 0
        %5753 = vperm.xlu0 %5752, %v1064
        %v5754 = vpop.permute.xlu0 %5753
        %v5756 = vmul.f32 %v5708, %v5719
        %v5757 = vmul.f32 %v5709, %v5724
        %v5758 = vmul.f32 %v5710, %v5729
        %v5759 = vmul.f32 %v5711, %v5734
        %v5760 = vmul.f32 %v5712, %v5739
        %v5761 = vmul.f32 %v5713, %v5744
        %v5762 = vmul.f32 %v5714, %v5749
        %v5763 = vmul.f32 %v5715, %v5754
        %v5764 = vperm.slane %v5123, 2
        %v5765 = vmul.f32 %v5756, %v5764
        %v5766 = vmul.f32 %v5757, %v5764
        %v5767 = vmul.f32 %v5758, %v5764
        %v5768 = vmul.f32 %v5759, %v5764
        %v5769 = vmul.f32 %v5760, %v5764
        %v5770 = vmul.f32 %v5761, %v5764
        %v5771 = vmul.f32 %v5762, %v5764
        %v5772 = vmul.f32 %v5763, %v5764
        %v5773 = vadd.f32 %v5700, %v5765
        %v5774 = vadd.f32 %v5701, %v5766
        %v5775 = vadd.f32 %v5702, %v5767
        %v5776 = vadd.f32 %v5703, %v5768
        %v5777 = vadd.f32 %v5704, %v5769
        %v5778 = vadd.f32 %v5705, %v5770
        %v5779 = vadd.f32 %v5706, %v5771
        %v5780 = vadd.f32 %v5707, %v5772
        %v5781 = vadd.f32 %v5105, %v5773
        %v5782 = vadd.f32 %v5106, %v5774
        %v5783 = vadd.f32 %v5107, %v5775
        %v5784 = vadd.f32 %v5108, %v5776
        %v5785 = vadd.f32 %v5109, %v5777
        %v5786 = vadd.f32 %v5110, %v5778
        %v5787 = vadd.f32 %v5111, %v5779
        %v5788 = vadd.f32 %v5112, %v5780
        %v5789 = vld [vmem:[%s13] sm:$0x1]
        %v5791 = vperm.slane %v5789, 0
        %v5793 = vmul.f32 %v5781, %v5791
        %v5794 = vmul.f32 %v5782, %v5791
        %v5795 = vmul.f32 %v5783, %v5791
        %v5796 = vmul.f32 %v5784, %v5791
        %v5797 = vmul.f32 %v5785, %v5791
        %v5798 = vmul.f32 %v5786, %v5791
        %v5799 = vmul.f32 %v5787, %v5791
        %v5800 = vmul.f32 %v5788, %v5791
        %v5801 = vld [vmem:[%s15] sm:$0x1]
        %v5803 = vperm.slane %v5801, 0
        %v5805 = vadd.f32 %v5793, %v5803
        %v5806 = vadd.f32 %v5794, %v5803
        %v5807 = vadd.f32 %v5795, %v5803
        %v5808 = vadd.f32 %v5796, %v5803
        %v5809 = vadd.f32 %v5797, %v5803
        %v5810 = vadd.f32 %v5798, %v5803
        %v5811 = vadd.f32 %v5799, %v5803
        %v5812 = vadd.f32 %v5800, %v5803
        %v5813 = vld [vmem:[%s17] sm:$0xff]
        %v5814 = vld [vmem:[%s17 + $0x8] sm:$0xff]
        %v5815 = vld [vmem:[%s17 + $0x10] sm:$0xff]
        %v5816 = vld [vmem:[%s17 + $0x18] sm:$0xff]
        %v5818 = vsel %vm990, %v5805, 0
        %v5821 = vsel %vm990, %v5806, 0
        %v5824 = vsel %vm990, %v5807, 0
        %v5827 = vsel %vm990, %v5808, 0
        %v5830 = vsel %vm990, %v5809, 0
        %v5833 = vsel %vm990, %v5810, 0
        %v5836 = vsel %vm990, %v5811, 0
        %v5839 = vsel %vm990, %v5812, 0
        %5841 = vmatpush.msra.mxu0 0.0
        %5842 = vmatpush.msra.mxu0 0.0
        %5843 = vmatpush.msra.mxu0 0.0
        %5844 = vmatpush.msra.mxu0 0.0
        %5845 = vmatpush.msra.mxu0 0.0
        %5846 = vmatpush.msra.mxu0 0.0
        %5847 = vmatpush.msra.mxu0 0.0
        %5848 = vmatpush.msra.mxu0 0.0
        %5849 = vmatpush.msra.mxu0 0.0
        %5850 = vmatpush.msra.mxu0 0.0
        %5851 = vmatpush.msra.mxu0 0.0
        %5852 = vmatpush.msra.mxu0 0.0
        %5853 = vmatpush.msra.mxu0 %v5816
        %5854 = vmatpush.msra.mxu0 %v5815
        %5855 = vmatpush.msra.mxu0 %v5814
        %5856 = vmatpush.msra.mxu0 %v5813
        %5857 = vmatmul.f32.gmra.mxu0 %v5818
        %v5858 = vpop.f32.mrf.mxu0
        %v5859 = vadd.f32 0.0, %v5858
        %5860 = vmatmul.f32.gmra.mxu0 %v5821
        %v5861 = vpop.f32.mrf.mxu0
        %v5862 = vadd.f32 0.0, %v5861
        %5863 = vmatmul.f32.gmra.mxu0 %v5824
        %v5864 = vpop.f32.mrf.mxu0
        %v5865 = vadd.f32 0.0, %v5864
        %5866 = vmatmul.f32.gmra.mxu0 %v5827
        %v5867 = vpop.f32.mrf.mxu0
        %v5868 = vadd.f32 0.0, %v5867
        %5869 = vmatmul.f32.gmra.mxu0 %v5830
        %v5870 = vpop.f32.mrf.mxu0
        %v5871 = vadd.f32 0.0, %v5870
        %5872 = vmatmul.f32.gmra.mxu0 %v5833
        %v5873 = vpop.f32.mrf.mxu0
        %v5874 = vadd.f32 0.0, %v5873
        %5875 = vmatmul.f32.gmra.mxu0 %v5836
        %v5876 = vpop.f32.mrf.mxu0
        %v5877 = vadd.f32 0.0, %v5876
        %5878 = vmatmul.f32.gmra.mxu0 %v5839
        %v5879 = vpop.f32.mrf.mxu0
        %v5880 = vadd.f32 0.0, %v5879
        %5881 = vdwg.mxu0
        %5882 = vst.msk [vmem:[#allocation2 + $0x8] sm:$0xff] %vm990, %v5859
        %5883 = vst.msk [vmem:[#allocation2 + $0x10] sm:$0xff] %vm990, %v5862
        %5884 = vst.msk [vmem:[#allocation2 + $0x18] sm:$0xff] %vm990, %v5865
        %5885 = vst.msk [vmem:[#allocation2 + $0x20] sm:$0xff] %vm990, %v5868
        %5886 = vst.msk [vmem:[#allocation2 + $0x28] sm:$0xff] %vm990, %v5871
        %5887 = vst.msk [vmem:[#allocation2 + $0x30] sm:$0xff] %vm990, %v5874
        %5888 = vst.msk [vmem:[#allocation2 + $0x38] sm:$0xff] %vm990, %v5877
        %5889 = vst.msk [vmem:[#allocation2 + $0x40] sm:$0xff] %vm990, %v5880
        %v5890 = vld [vmem:[%s19] sm:$0x7]
        %v5891 = vld [vmem:[%s19 + $0x4] sm:$0x7]
        %v5892 = vld [vmem:[%s19 + $0x8] sm:$0x7]
        %v5893 = vld [vmem:[#allocation2 + $0x3] sm:$0xff]
        %v5894 = vld [vmem:[#allocation2 + $0xb] sm:$0xff]
        %v5895 = vld [vmem:[#allocation2 + $0x13] sm:$0xff]
        %v5896 = vld [vmem:[#allocation2 + $0x1b] sm:$0xff]
        %v5897 = vld [vmem:[#allocation2 + $0x23] sm:$0xff]
        %v5898 = vld [vmem:[#allocation2 + $0x2b] sm:$0xff]
        %v5899 = vld [vmem:[#allocation2 + $0x33] sm:$0xff]
        %v5900 = vld [vmem:[#allocation2 + $0x3b] sm:$0xff]
        %v5901 = vmul.f32 %v5893, %v5135
        %v5902 = vmul.f32 %v5894, %v5140
        %v5903 = vmul.f32 %v5895, %v5145
        %v5904 = vmul.f32 %v5896, %v5150
        %v5905 = vmul.f32 %v5897, %v5155
        %v5906 = vmul.f32 %v5898, %v5160
        %v5907 = vmul.f32 %v5899, %v5165
        %v5908 = vmul.f32 %v5900, %v5170
        %v5909 = vperm.slane %v5890, 0
        %v5910 = vmul.f32 %v5901, %v5909
        %v5911 = vmul.f32 %v5902, %v5909
        %v5912 = vmul.f32 %v5903, %v5909
        %v5913 = vmul.f32 %v5904, %v5909
        %v5914 = vmul.f32 %v5905, %v5909
        %v5915 = vmul.f32 %v5906, %v5909
        %v5916 = vmul.f32 %v5907, %v5909
        %v5917 = vmul.f32 %v5908, %v5909
        %v5918 = vadd.f32 %v5910, 0.0
        %v5919 = vadd.f32 %v5911, 0.0
        %v5920 = vadd.f32 %v5912, 0.0
        %v5921 = vadd.f32 %v5913, 0.0
        %v5922 = vadd.f32 %v5914, 0.0
        %v5923 = vadd.f32 %v5915, 0.0
        %v5924 = vadd.f32 %v5916, 0.0
        %v5925 = vadd.f32 %v5917, 0.0
        %v5926 = vld [vmem:[#allocation2 + $0x4] sm:$0xff]
        %v5927 = vld [vmem:[#allocation2 + $0xc] sm:$0xff]
        %v5928 = vld [vmem:[#allocation2 + $0x14] sm:$0xff]
        %v5929 = vld [vmem:[#allocation2 + $0x1c] sm:$0xff]
        %v5930 = vld [vmem:[#allocation2 + $0x24] sm:$0xff]
        %v5931 = vld [vmem:[#allocation2 + $0x2c] sm:$0xff]
        %v5932 = vld [vmem:[#allocation2 + $0x34] sm:$0xff]
        %v5933 = vld [vmem:[#allocation2 + $0x3c] sm:$0xff]
        %v5934 = vmul.f32 %v5926, %v5208
        %v5935 = vmul.f32 %v5927, %v5213
        %v5936 = vmul.f32 %v5928, %v5218
        %v5937 = vmul.f32 %v5929, %v5223
        %v5938 = vmul.f32 %v5930, %v5228
        %v5939 = vmul.f32 %v5931, %v5233
        %v5940 = vmul.f32 %v5932, %v5238
        %v5941 = vmul.f32 %v5933, %v5243
        %v5942 = vperm.slane %v5890, 1
        %v5943 = vmul.f32 %v5934, %v5942
        %v5944 = vmul.f32 %v5935, %v5942
        %v5945 = vmul.f32 %v5936, %v5942
        %v5946 = vmul.f32 %v5937, %v5942
        %v5947 = vmul.f32 %v5938, %v5942
        %v5948 = vmul.f32 %v5939, %v5942
        %v5949 = vmul.f32 %v5940, %v5942
        %v5950 = vmul.f32 %v5941, %v5942
        %v5951 = vadd.f32 %v5918, %v5943
        %v5952 = vadd.f32 %v5919, %v5944
        %v5953 = vadd.f32 %v5920, %v5945
        %v5954 = vadd.f32 %v5921, %v5946
        %v5955 = vadd.f32 %v5922, %v5947
        %v5956 = vadd.f32 %v5923, %v5948
        %v5957 = vadd.f32 %v5924, %v5949
        %v5958 = vadd.f32 %v5925, %v5950
        %v5959 = vld [vmem:[#allocation2 + $0x5] sm:$0xff]
        %v5960 = vld [vmem:[#allocation2 + $0xd] sm:$0xff]
        %v5961 = vld [vmem:[#allocation2 + $0x15] sm:$0xff]
        %v5962 = vld [vmem:[#allocation2 + $0x1d] sm:$0xff]
        %v5963 = vld [vmem:[#allocation2 + $0x25] sm:$0xff]
        %v5964 = vld [vmem:[#allocation2 + $0x2d] sm:$0xff]
        %v5965 = vld [vmem:[#allocation2 + $0x35] sm:$0xff]
        %v5966 = vld [vmem:[#allocation2 + $0x3d] sm:$0xff]
        %v5967 = vmul.f32 %v5959, %v5281
        %v5968 = vmul.f32 %v5960, %v5286
        %v5969 = vmul.f32 %v5961, %v5291
        %v5970 = vmul.f32 %v5962, %v5296
        %v5971 = vmul.f32 %v5963, %v5301
        %v5972 = vmul.f32 %v5964, %v5306
        %v5973 = vmul.f32 %v5965, %v5311
        %v5974 = vmul.f32 %v5966, %v5316
        %v5975 = vperm.slane %v5890, 2
        %v5976 = vmul.f32 %v5967, %v5975
        %v5977 = vmul.f32 %v5968, %v5975
        %v5978 = vmul.f32 %v5969, %v5975
        %v5979 = vmul.f32 %v5970, %v5975
        %v5980 = vmul.f32 %v5971, %v5975
        %v5981 = vmul.f32 %v5972, %v5975
        %v5982 = vmul.f32 %v5973, %v5975
        %v5983 = vmul.f32 %v5974, %v5975
        %v5984 = vadd.f32 %v5951, %v5976
        %v5985 = vadd.f32 %v5952, %v5977
        %v5986 = vadd.f32 %v5953, %v5978
        %v5987 = vadd.f32 %v5954, %v5979
        %v5988 = vadd.f32 %v5955, %v5980
        %v5989 = vadd.f32 %v5956, %v5981
        %v5990 = vadd.f32 %v5957, %v5982
        %v5991 = vadd.f32 %v5958, %v5983
        %v5992 = vld [vmem:[#allocation2 + $0x7] sm:$0xff]
        %v5993 = vld [vmem:[#allocation2 + $0xf] sm:$0xff]
        %v5994 = vld [vmem:[#allocation2 + $0x17] sm:$0xff]
        %v5995 = vld [vmem:[#allocation2 + $0x1f] sm:$0xff]
        %v5996 = vld [vmem:[#allocation2 + $0x27] sm:$0xff]
        %v5997 = vld [vmem:[#allocation2 + $0x2f] sm:$0xff]
        %v5998 = vld [vmem:[#allocation2 + $0x37] sm:$0xff]
        %v5999 = vld [vmem:[#allocation2 + $0x3f] sm:$0xff]
        %v6000 = vmul.f32 %v5992, %v5354
        %v6001 = vmul.f32 %v5993, %v5359
        %v6002 = vmul.f32 %v5994, %v5364
        %v6003 = vmul.f32 %v5995, %v5369
        %v6004 = vmul.f32 %v5996, %v5374
        %v6005 = vmul.f32 %v5997, %v5379
        %v6006 = vmul.f32 %v5998, %v5384
        %v6007 = vmul.f32 %v5999, %v5389
        %v6008 = vperm.slane %v5891, 0
        %v6009 = vmul.f32 %v6000, %v6008
        %v6010 = vmul.f32 %v6001, %v6008
        %v6011 = vmul.f32 %v6002, %v6008
        %v6012 = vmul.f32 %v6003, %v6008
        %v6013 = vmul.f32 %v6004, %v6008
        %v6014 = vmul.f32 %v6005, %v6008
        %v6015 = vmul.f32 %v6006, %v6008
        %v6016 = vmul.f32 %v6007, %v6008
        %v6017 = vadd.f32 %v5984, %v6009
        %v6018 = vadd.f32 %v5985, %v6010
        %v6019 = vadd.f32 %v5986, %v6011
        %v6020 = vadd.f32 %v5987, %v6012
        %v6021 = vadd.f32 %v5988, %v6013
        %v6022 = vadd.f32 %v5989, %v6014
        %v6023 = vadd.f32 %v5990, %v6015
        %v6024 = vadd.f32 %v5991, %v6016
        %v6025 = vld [vmem:[#allocation2 + $0x8] sm:$0xff]
        %v6026 = vld [vmem:[#allocation2 + $0x10] sm:$0xff]
        %v6027 = vld [vmem:[#allocation2 + $0x18] sm:$0xff]
        %v6028 = vld [vmem:[#allocation2 + $0x20] sm:$0xff]
        %v6029 = vld [vmem:[#allocation2 + $0x28] sm:$0xff]
        %v6030 = vld [vmem:[#allocation2 + $0x30] sm:$0xff]
        %v6031 = vld [vmem:[#allocation2 + $0x38] sm:$0xff]
        %v6032 = vld [vmem:[#allocation2 + $0x40] sm:$0xff]
        %v6033 = vmul.f32 %v6025, %v5427
        %v6034 = vmul.f32 %v6026, %v5432
        %v6035 = vmul.f32 %v6027, %v5437
        %v6036 = vmul.f32 %v6028, %v5442
        %v6037 = vmul.f32 %v6029, %v5447
        %v6038 = vmul.f32 %v6030, %v5452
        %v6039 = vmul.f32 %v6031, %v5457
        %v6040 = vmul.f32 %v6032, %v5462
        %v6041 = vperm.slane %v5891, 1
        %v6042 = vmul.f32 %v6033, %v6041
        %v6043 = vmul.f32 %v6034, %v6041
        %v6044 = vmul.f32 %v6035, %v6041
        %v6045 = vmul.f32 %v6036, %v6041
        %v6046 = vmul.f32 %v6037, %v6041
        %v6047 = vmul.f32 %v6038, %v6041
        %v6048 = vmul.f32 %v6039, %v6041
        %v6049 = vmul.f32 %v6040, %v6041
        %v6050 = vadd.f32 %v6017, %v6042
        %v6051 = vadd.f32 %v6018, %v6043
        %v6052 = vadd.f32 %v6019, %v6044
        %v6053 = vadd.f32 %v6020, %v6045
        %v6054 = vadd.f32 %v6021, %v6046
        %v6055 = vadd.f32 %v6022, %v6047
        %v6056 = vadd.f32 %v6023, %v6048
        %v6057 = vadd.f32 %v6024, %v6049
        %v6058 = vld [vmem:[#allocation2 + $0x9] sm:$0xff]
        %v6059 = vld [vmem:[#allocation2 + $0x11] sm:$0xff]
        %v6060 = vld [vmem:[#allocation2 + $0x19] sm:$0xff]
        %v6061 = vld [vmem:[#allocation2 + $0x21] sm:$0xff]
        %v6062 = vld [vmem:[#allocation2 + $0x29] sm:$0xff]
        %v6063 = vld [vmem:[#allocation2 + $0x31] sm:$0xff]
        %v6064 = vld [vmem:[#allocation2 + $0x39] sm:$0xff]
        %v6065 = vld [vmem:[#allocation2 + $0x41] sm:$0xff]
        %v6066 = vmul.f32 %v6058, %v5500
        %v6067 = vmul.f32 %v6059, %v5505
        %v6068 = vmul.f32 %v6060, %v5510
        %v6069 = vmul.f32 %v6061, %v5515
        %v6070 = vmul.f32 %v6062, %v5520
        %v6071 = vmul.f32 %v6063, %v5525
        %v6072 = vmul.f32 %v6064, %v5530
        %v6073 = vmul.f32 %v6065, %v5535
        %v6074 = vperm.slane %v5891, 2
        %v6075 = vmul.f32 %v6066, %v6074
        %v6076 = vmul.f32 %v6067, %v6074
        %v6077 = vmul.f32 %v6068, %v6074
        %v6078 = vmul.f32 %v6069, %v6074
        %v6079 = vmul.f32 %v6070, %v6074
        %v6080 = vmul.f32 %v6071, %v6074
        %v6081 = vmul.f32 %v6072, %v6074
        %v6082 = vmul.f32 %v6073, %v6074
        %v6083 = vadd.f32 %v6050, %v6075
        %v6084 = vadd.f32 %v6051, %v6076
        %v6085 = vadd.f32 %v6052, %v6077
        %v6086 = vadd.f32 %v6053, %v6078
        %v6087 = vadd.f32 %v6054, %v6079
        %v6088 = vadd.f32 %v6055, %v6080
        %v6089 = vadd.f32 %v6056, %v6081
        %v6090 = vadd.f32 %v6057, %v6082
        %v6091 = vld [vmem:[#allocation2 + $0x43] sm:$0xff]
        %v6092 = vmul.f32 %v5894, %v5573
        %v6093 = vmul.f32 %v5895, %v5578
        %v6094 = vmul.f32 %v5896, %v5583
        %v6095 = vmul.f32 %v5897, %v5588
        %v6096 = vmul.f32 %v5898, %v5593
        %v6097 = vmul.f32 %v5899, %v5598
        %v6098 = vmul.f32 %v5900, %v5603
        %v6099 = vmul.f32 %v6091, %v5608
        %v6100 = vperm.slane %v5892, 0
        %v6101 = vmul.f32 %v6092, %v6100
        %v6102 = vmul.f32 %v6093, %v6100
        %v6103 = vmul.f32 %v6094, %v6100
        %v6104 = vmul.f32 %v6095, %v6100
        %v6105 = vmul.f32 %v6096, %v6100
        %v6106 = vmul.f32 %v6097, %v6100
        %v6107 = vmul.f32 %v6098, %v6100
        %v6108 = vmul.f32 %v6099, %v6100
        %v6109 = vadd.f32 %v6083, %v6101
        %v6110 = vadd.f32 %v6084, %v6102
        %v6111 = vadd.f32 %v6085, %v6103
        %v6112 = vadd.f32 %v6086, %v6104
        %v6113 = vadd.f32 %v6087, %v6105
        %v6114 = vadd.f32 %v6088, %v6106
        %v6115 = vadd.f32 %v6089, %v6107
        %v6116 = vadd.f32 %v6090, %v6108
        %v6117 = vld [vmem:[#allocation2 + $0x44] sm:$0xff]
        %v6118 = vmul.f32 %v5927, %v5646
        %v6119 = vmul.f32 %v5928, %v5651
        %v6120 = vmul.f32 %v5929, %v5656
        %v6121 = vmul.f32 %v5930, %v5661
        %v6122 = vmul.f32 %v5931, %v5666
        %v6123 = vmul.f32 %v5932, %v5671
        %v6124 = vmul.f32 %v5933, %v5676
        %v6125 = vmul.f32 %v6117, %v5681
        %v6126 = vperm.slane %v5892, 1
        %v6127 = vmul.f32 %v6118, %v6126
        %v6128 = vmul.f32 %v6119, %v6126
        %v6129 = vmul.f32 %v6120, %v6126
        %v6130 = vmul.f32 %v6121, %v6126
        %v6131 = vmul.f32 %v6122, %v6126
        %v6132 = vmul.f32 %v6123, %v6126
        %v6133 = vmul.f32 %v6124, %v6126
        %v6134 = vmul.f32 %v6125, %v6126
        %v6135 = vadd.f32 %v6109, %v6127
        %v6136 = vadd.f32 %v6110, %v6128
        %v6137 = vadd.f32 %v6111, %v6129
        %v6138 = vadd.f32 %v6112, %v6130
        %v6139 = vadd.f32 %v6113, %v6131
        %v6140 = vadd.f32 %v6114, %v6132
        %v6141 = vadd.f32 %v6115, %v6133
        %v6142 = vadd.f32 %v6116, %v6134
        %v6143 = vld [vmem:[#allocation2 + $0x45] sm:$0xff]
        %v6144 = vmul.f32 %v5960, %v5719
        %v6145 = vmul.f32 %v5961, %v5724
        %v6146 = vmul.f32 %v5962, %v5729
        %v6147 = vmul.f32 %v5963, %v5734
        %v6148 = vmul.f32 %v5964, %v5739
        %v6149 = vmul.f32 %v5965, %v5744
        %v6150 = vmul.f32 %v5966, %v5749
        %v6151 = vmul.f32 %v6143, %v5754
        %v6152 = vperm.slane %v5892, 2
        %v6153 = vmul.f32 %v6144, %v6152
        %v6154 = vmul.f32 %v6145, %v6152
        %v6155 = vmul.f32 %v6146, %v6152
        %v6156 = vmul.f32 %v6147, %v6152
        %v6157 = vmul.f32 %v6148, %v6152
        %v6158 = vmul.f32 %v6149, %v6152
        %v6159 = vmul.f32 %v6150, %v6152
        %v6160 = vmul.f32 %v6151, %v6152
        %v6161 = vadd.f32 %v6135, %v6153
        %v6162 = vadd.f32 %v6136, %v6154
        %v6163 = vadd.f32 %v6137, %v6155
        %v6164 = vadd.f32 %v6138, %v6156
        %v6165 = vadd.f32 %v6139, %v6157
        %v6166 = vadd.f32 %v6140, %v6158
        %v6167 = vadd.f32 %v6141, %v6159
        %v6168 = vadd.f32 %v6142, %v6160
        %v6169 = vld [vmem:[%s21] sm:$0x1]
        %v6171 = vperm.slane %v6169, 0
        %v6173 = vmul.f32 %v6161, %v6171
        %v6174 = vmul.f32 %v6162, %v6171
        %v6175 = vmul.f32 %v6163, %v6171
        %v6176 = vmul.f32 %v6164, %v6171
        %v6177 = vmul.f32 %v6165, %v6171
        %v6178 = vmul.f32 %v6166, %v6171
        %v6179 = vmul.f32 %v6167, %v6171
        %v6180 = vmul.f32 %v6168, %v6171
        %v6181 = vld [vmem:[%s23] sm:$0x1]
        %v6183 = vperm.slane %v6181, 0
        %v6185 = vadd.f32 %v6173, %v6183
        %v6186 = vadd.f32 %v6174, %v6183
        %v6187 = vadd.f32 %v6175, %v6183
        %v6188 = vadd.f32 %v6176, %v6183
        %v6189 = vadd.f32 %v6177, %v6183
        %v6190 = vadd.f32 %v6178, %v6183
        %v6191 = vadd.f32 %v6179, %v6183
        %v6192 = vadd.f32 %v6180, %v6183
        %v6193 = vld [vmem:[%s25] sm:$0xff]
        %v6194 = vld [vmem:[%s25 + $0x8] sm:$0xff]
        %v6195 = vld [vmem:[%s25 + $0x10] sm:$0xff]
        %v6196 = vld [vmem:[%s25 + $0x18] sm:$0xff]
        %v6198 = vsel %vm990, %v6185, 0
        %v6201 = vsel %vm990, %v6186, 0
        %v6204 = vsel %vm990, %v6187, 0
        %v6207 = vsel %vm990, %v6188, 0
        %v6210 = vsel %vm990, %v6189, 0
        %v6213 = vsel %vm990, %v6190, 0
        %v6216 = vsel %vm990, %v6191, 0
        %v6219 = vsel %vm990, %v6192, 0
        %6221 = vmatpush.msra.mxu0 0.0
        %6222 = vmatpush.msra.mxu0 0.0
        %6223 = vmatpush.msra.mxu0 0.0
        %6224 = vmatpush.msra.mxu0 0.0
        %6225 = vmatpush.msra.mxu0 0.0
        %6226 = vmatpush.msra.mxu0 0.0
        %6227 = vmatpush.msra.mxu0 0.0
        %6228 = vmatpush.msra.mxu0 0.0
        %6229 = vmatpush.msra.mxu0 0.0
        %6230 = vmatpush.msra.mxu0 0.0
        %6231 = vmatpush.msra.mxu0 0.0
        %6232 = vmatpush.msra.mxu0 0.0
        %6233 = vmatpush.msra.mxu0 %v6196
        %6234 = vmatpush.msra.mxu0 %v6195
        %6235 = vmatpush.msra.mxu0 %v6194
        %6236 = vmatpush.msra.mxu0 %v6193
        %6237 = vmatmul.f32.gmra.mxu0 %v6198
        %v6238 = vpop.f32.mrf.mxu0
        %v6239 = vadd.f32 0.0, %v6238
        %6240 = vmatmul.f32.gmra.mxu0 %v6201
        %v6241 = vpop.f32.mrf.mxu0
        %v6242 = vadd.f32 0.0, %v6241
        %6243 = vmatmul.f32.gmra.mxu0 %v6204
        %v6244 = vpop.f32.mrf.mxu0
        %v6245 = vadd.f32 0.0, %v6244
        %6246 = vmatmul.f32.gmra.mxu0 %v6207
        %v6247 = vpop.f32.mrf.mxu0
        %v6248 = vadd.f32 0.0, %v6247
        %6249 = vmatmul.f32.gmra.mxu0 %v6210
        %v6250 = vpop.f32.mrf.mxu0
        %v6251 = vadd.f32 0.0, %v6250
        %6252 = vmatmul.f32.gmra.mxu0 %v6213
        %v6253 = vpop.f32.mrf.mxu0
        %v6254 = vadd.f32 0.0, %v6253
        %6255 = vmatmul.f32.gmra.mxu0 %v6216
        %v6256 = vpop.f32.mrf.mxu0
        %v6257 = vadd.f32 0.0, %v6256
        %6258 = vmatmul.f32.gmra.mxu0 %v6219
        %v6259 = vpop.f32.mrf.mxu0
        %v6260 = vadd.f32 0.0, %v6259
        %6261 = vdwg.mxu0
        %v6262 = vadd.f32 %v5781, %v6239
        %v6263 = vadd.f32 %v5782, %v6242
        %v6264 = vadd.f32 %v5783, %v6245
        %v6265 = vadd.f32 %v5784, %v6248
        %v6266 = vadd.f32 %v5785, %v6251
        %v6267 = vadd.f32 %v5786, %v6254
        %v6268 = vadd.f32 %v5787, %v6257
        %v6269 = vadd.f32 %v5788, %v6260
        %v6270 = vld [vmem:[%s27] sm:$0xff]
        %v6271 = vld [vmem:[%s27 + $0x8] sm:$0xff]
        %v6272 = vld [vmem:[%s27 + $0x10] sm:$0xff]
        %v6273 = vld [vmem:[%s27 + $0x18] sm:$0xff]
        %v6275 = vsel %vm990, %v6262, 0
        %v6278 = vsel %vm990, %v6263, 0
        %v6281 = vsel %vm990, %v6264, 0
        %v6284 = vsel %vm990, %v6265, 0
        %v6287 = vsel %vm990, %v6266, 0
        %v6290 = vsel %vm990, %v6267, 0
        %v6293 = vsel %vm990, %v6268, 0
        %v6296 = vsel %vm990, %v6269, 0
        %6298 = vmatpush.msra.mxu0 0.0
        %6299 = vmatpush.msra.mxu0 0.0
        %6300 = vmatpush.msra.mxu0 0.0
        %6301 = vmatpush.msra.mxu0 0.0
        %6302 = vmatpush.msra.mxu0 0.0
        %6303 = vmatpush.msra.mxu0 0.0
        %6304 = vmatpush.msra.mxu0 0.0
        %6305 = vmatpush.msra.mxu0 0.0
        %6306 = vmatpush.msra.mxu0 0.0
        %6307 = vmatpush.msra.mxu0 0.0
        %6308 = vmatpush.msra.mxu0 0.0
        %6309 = vmatpush.msra.mxu0 0.0
        %6310 = vmatpush.msra.mxu0 %v6273
        %6311 = vmatpush.msra.mxu0 %v6272
        %6312 = vmatpush.msra.mxu0 %v6271
        %6313 = vmatpush.msra.mxu0 %v6270
        %6314 = vmatmul.f32.gmra.mxu0 %v6275
        %v6315 = vpop.f32.mrf.mxu0
        %v6316 = vadd.f32 0.0, %v6315
        %6317 = vmatmul.f32.gmra.mxu0 %v6278
        %v6318 = vpop.f32.mrf.mxu0
        %v6319 = vadd.f32 0.0, %v6318
        %6320 = vmatmul.f32.gmra.mxu0 %v6281
        %v6321 = vpop.f32.mrf.mxu0
        %v6322 = vadd.f32 0.0, %v6321
        %6323 = vmatmul.f32.gmra.mxu0 %v6284
        %v6324 = vpop.f32.mrf.mxu0
        %v6325 = vadd.f32 0.0, %v6324
        %6326 = vmatmul.f32.gmra.mxu0 %v6287
        %v6327 = vpop.f32.mrf.mxu0
        %v6328 = vadd.f32 0.0, %v6327
        %6329 = vmatmul.f32.gmra.mxu0 %v6290
        %v6330 = vpop.f32.mrf.mxu0
        %v6331 = vadd.f32 0.0, %v6330
        %6332 = vmatmul.f32.gmra.mxu0 %v6293
        %v6333 = vpop.f32.mrf.mxu0
        %v6334 = vadd.f32 0.0, %v6333
        %6335 = vmatmul.f32.gmra.mxu0 %v6296
        %v6336 = vpop.f32.mrf.mxu0
        %v6337 = vadd.f32 0.0, %v6336
        %6338 = vdwg.mxu0
        %v6339 = vmul.f32 %v6316, 0.5
        %v6340 = vmul.f32 %v6319, 0.5
        %v6341 = vmul.f32 %v6322, 0.5
        %v6342 = vmul.f32 %v6325, 0.5
        %v6343 = vmul.f32 %v6328, 0.5
        %v6344 = vmul.f32 %v6331, 0.5
        %v6345 = vmul.f32 %v6334, 0.5
        %v6346 = vmul.f32 %v6337, 0.5
        %v6347 = vmul.f32 %v6316, 0.70710677
        %v6348 = vmul.f32 %v6319, 0.70710677
        %v6349 = vmul.f32 %v6322, 0.70710677
        %v6350 = vmul.f32 %v6325, 0.70710677
        %v6351 = vmul.f32 %v6328, 0.70710677
        %v6352 = vmul.f32 %v6331, 0.70710677
        %v6353 = vmul.f32 %v6334, 0.70710677
        %v6354 = vmul.f32 %v6337, 0.70710677
        %v6355 = vand.u32 2147483647, %v6347
        %v6356 = vand.u32 2147483647, %v6348
        %v6357 = vand.u32 2147483647, %v6349
        %v6358 = vand.u32 2147483647, %v6350
        %v6359 = vand.u32 2147483647, %v6351
        %v6360 = vand.u32 2147483647, %v6352
        %v6361 = vand.u32 2147483647, %v6353
        %v6362 = vand.u32 2147483647, %v6354
        %v6363 = vmul.f32 %v6355, 0.3275911
        %v6364 = vmul.f32 %v6356, 0.3275911
        %v6365 = vmul.f32 %v6357, 0.3275911
        %v6366 = vmul.f32 %v6358, 0.3275911
        %v6367 = vmul.f32 %v6359, 0.3275911
        %v6368 = vmul.f32 %v6360, 0.3275911
        %v6369 = vmul.f32 %v6361, 0.3275911
        %v6370 = vmul.f32 %v6362, 0.3275911
        %v6371 = vadd.f32 %v6363, 1.0
        %v6372 = vadd.f32 %v6364, 1.0
        %v6373 = vadd.f32 %v6365, 1.0
        %v6374 = vadd.f32 %v6366, 1.0
        %v6375 = vadd.f32 %v6367, 1.0
        %v6376 = vadd.f32 %v6368, 1.0
        %v6377 = vadd.f32 %v6369, 1.0
        %v6378 = vadd.f32 %v6370, 1.0
        %v6379 = vrcp.pop %v6371
        %v6380 = vmul.f32 %v6371, %v6379
        %v6381 = vsub.f32 1.0, %v6380
        %v6382 = vmul.f32 %v6379, %v6381
        %v6383 = vadd.f32 %v6379, %v6382
        %vm6384 = vweird.f32 %v6371
        %vm6385 = vweird.f32 %v6379
        %vm6386 = vmor %vm6384, %vm6385
        %v6387 = vsel %vm6386, %v6379, %v6383
        %v6388 = vand.u32 2147483647, %v6371
        %vm6389 = vcmp.eq.f32.partialorder %v6388, 8.507059e+37
        %v6390 = vand.u32 %v6371, 2147483648
        %v6391 = vor.u32 1.1754944e-38, %v6390
        %v6392 = vsel %vm6389, %v6391, %v6387
        %v6393 = vmul.f32 1.0, %v6392
        %v6394 = vrcp.pop %v6372
        %v6395 = vmul.f32 %v6372, %v6394
        %v6396 = vsub.f32 1.0, %v6395
        %v6397 = vmul.f32 %v6394, %v6396
        %v6398 = vadd.f32 %v6394, %v6397
        %vm6399 = vweird.f32 %v6372
        %vm6400 = vweird.f32 %v6394
        %vm6401 = vmor %vm6399, %vm6400
        %v6402 = vsel %vm6401, %v6394, %v6398
        %v6403 = vand.u32 2147483647, %v6372
        %vm6404 = vcmp.eq.f32.partialorder %v6403, 8.507059e+37
        %v6405 = vand.u32 %v6372, 2147483648
        %v6406 = vor.u32 1.1754944e-38, %v6405
        %v6407 = vsel %vm6404, %v6406, %v6402
        %v6408 = vmul.f32 1.0, %v6407
        %v6409 = vrcp.pop %v6373
        %v6410 = vmul.f32 %v6373, %v6409
        %v6411 = vsub.f32 1.0, %v6410
        %v6412 = vmul.f32 %v6409, %v6411
        %v6413 = vadd.f32 %v6409, %v6412
        %vm6414 = vweird.f32 %v6373
        %vm6415 = vweird.f32 %v6409
        %vm6416 = vmor %vm6414, %vm6415
        %v6417 = vsel %vm6416, %v6409, %v6413
        %v6418 = vand.u32 2147483647, %v6373
        %vm6419 = vcmp.eq.f32.partialorder %v6418, 8.507059e+37
        %v6420 = vand.u32 %v6373, 2147483648
        %v6421 = vor.u32 1.1754944e-38, %v6420
        %v6422 = vsel %vm6419, %v6421, %v6417
        %v6423 = vmul.f32 1.0, %v6422
        %v6424 = vrcp.pop %v6374
        %v6425 = vmul.f32 %v6374, %v6424
        %v6426 = vsub.f32 1.0, %v6425
        %v6427 = vmul.f32 %v6424, %v6426
        %v6428 = vadd.f32 %v6424, %v6427
        %vm6429 = vweird.f32 %v6374
        %vm6430 = vweird.f32 %v6424
        %vm6431 = vmor %vm6429, %vm6430
        %v6432 = vsel %vm6431, %v6424, %v6428
        %v6433 = vand.u32 2147483647, %v6374
        %vm6434 = vcmp.eq.f32.partialorder %v6433, 8.507059e+37
        %v6435 = vand.u32 %v6374, 2147483648
        %v6436 = vor.u32 1.1754944e-38, %v6435
        %v6437 = vsel %vm6434, %v6436, %v6432
        %v6438 = vmul.f32 1.0, %v6437
        %v6439 = vrcp.pop %v6375
        %v6440 = vmul.f32 %v6375, %v6439
        %v6441 = vsub.f32 1.0, %v6440
        %v6442 = vmul.f32 %v6439, %v6441
        %v6443 = vadd.f32 %v6439, %v6442
        %vm6444 = vweird.f32 %v6375
        %vm6445 = vweird.f32 %v6439
        %vm6446 = vmor %vm6444, %vm6445
        %v6447 = vsel %vm6446, %v6439, %v6443
        %v6448 = vand.u32 2147483647, %v6375
        %vm6449 = vcmp.eq.f32.partialorder %v6448, 8.507059e+37
        %v6450 = vand.u32 %v6375, 2147483648
        %v6451 = vor.u32 1.1754944e-38, %v6450
        %v6452 = vsel %vm6449, %v6451, %v6447
        %v6453 = vmul.f32 1.0, %v6452
        %v6454 = vrcp.pop %v6376
        %v6455 = vmul.f32 %v6376, %v6454
        %v6456 = vsub.f32 1.0, %v6455
        %v6457 = vmul.f32 %v6454, %v6456
        %v6458 = vadd.f32 %v6454, %v6457
        %vm6459 = vweird.f32 %v6376
        %vm6460 = vweird.f32 %v6454
        %vm6461 = vmor %vm6459, %vm6460
        %v6462 = vsel %vm6461, %v6454, %v6458
        %v6463 = vand.u32 2147483647, %v6376
        %vm6464 = vcmp.eq.f32.partialorder %v6463, 8.507059e+37
        %v6465 = vand.u32 %v6376, 2147483648
        %v6466 = vor.u32 1.1754944e-38, %v6465
        %v6467 = vsel %vm6464, %v6466, %v6462
        %v6468 = vmul.f32 1.0, %v6467
        %v6469 = vrcp.pop %v6377
        %v6470 = vmul.f32 %v6377, %v6469
        %v6471 = vsub.f32 1.0, %v6470
        %v6472 = vmul.f32 %v6469, %v6471
        %v6473 = vadd.f32 %v6469, %v6472
        %vm6474 = vweird.f32 %v6377
        %vm6475 = vweird.f32 %v6469
        %vm6476 = vmor %vm6474, %vm6475
        %v6477 = vsel %vm6476, %v6469, %v6473
        %v6478 = vand.u32 2147483647, %v6377
        %vm6479 = vcmp.eq.f32.partialorder %v6478, 8.507059e+37
        %v6480 = vand.u32 %v6377, 2147483648
        %v6481 = vor.u32 1.1754944e-38, %v6480
        %v6482 = vsel %vm6479, %v6481, %v6477
        %v6483 = vmul.f32 1.0, %v6482
        %v6484 = vrcp.pop %v6378
        %v6485 = vmul.f32 %v6378, %v6484
        %v6486 = vsub.f32 1.0, %v6485
        %v6487 = vmul.f32 %v6484, %v6486
        %v6488 = vadd.f32 %v6484, %v6487
        %vm6489 = vweird.f32 %v6378
        %vm6490 = vweird.f32 %v6484
        %vm6491 = vmor %vm6489, %vm6490
        %v6492 = vsel %vm6491, %v6484, %v6488
        %v6493 = vand.u32 2147483647, %v6378
        %vm6494 = vcmp.eq.f32.partialorder %v6493, 8.507059e+37
        %v6495 = vand.u32 %v6378, 2147483648
        %v6496 = vor.u32 1.1754944e-38, %v6495
        %v6497 = vsel %vm6494, %v6496, %v6492
        %v6498 = vmul.f32 1.0, %v6497
        %v6499 = vmul.f32 %v6393, 1.0614054
        %v6500 = vmul.f32 %v6408, 1.0614054
        %v6501 = vmul.f32 %v6423, 1.0614054
        %v6502 = vmul.f32 %v6438, 1.0614054
        %v6503 = vmul.f32 %v6453, 1.0614054
        %v6504 = vmul.f32 %v6468, 1.0614054
        %v6505 = vmul.f32 %v6483, 1.0614054
        %v6506 = vmul.f32 %v6498, 1.0614054
        %v6507 = vsub.f32 %v6499, 1.4531521
        %v6508 = vsub.f32 %v6500, 1.4531521
        %v6509 = vsub.f32 %v6501, 1.4531521
        %v6510 = vsub.f32 %v6502, 1.4531521
        %v6511 = vsub.f32 %v6503, 1.4531521
        %v6512 = vsub.f32 %v6504, 1.4531521
        %v6513 = vsub.f32 %v6505, 1.4531521
        %v6514 = vsub.f32 %v6506, 1.4531521
        %v6515 = vmul.f32 %v6507, %v6393
        %v6516 = vmul.f32 %v6508, %v6408
        %v6517 = vmul.f32 %v6509, %v6423
        %v6518 = vmul.f32 %v6510, %v6438
        %v6519 = vmul.f32 %v6511, %v6453
        %v6520 = vmul.f32 %v6512, %v6468
        %v6521 = vmul.f32 %v6513, %v6483
        %v6522 = vmul.f32 %v6514, %v6498
        %v6523 = vadd.f32 %v6515, 1.4214138
        %v6524 = vadd.f32 %v6516, 1.4214138
        %v6525 = vadd.f32 %v6517, 1.4214138
        %v6526 = vadd.f32 %v6518, 1.4214138
        %v6527 = vadd.f32 %v6519, 1.4214138
        %v6528 = vadd.f32 %v6520, 1.4214138
        %v6529 = vadd.f32 %v6521, 1.4214138
        %v6530 = vadd.f32 %v6522, 1.4214138
        %v6531 = vmul.f32 %v6523, %v6393
        %v6532 = vmul.f32 %v6524, %v6408
        %v6533 = vmul.f32 %v6525, %v6423
        %v6534 = vmul.f32 %v6526, %v6438
        %v6535 = vmul.f32 %v6527, %v6453
        %v6536 = vmul.f32 %v6528, %v6468
        %v6537 = vmul.f32 %v6529, %v6483
        %v6538 = vmul.f32 %v6530, %v6498
        %v6539 = vsub.f32 %v6531, 0.28449672
        %v6540 = vsub.f32 %v6532, 0.28449672
        %v6541 = vsub.f32 %v6533, 0.28449672
        %v6542 = vsub.f32 %v6534, 0.28449672
        %v6543 = vsub.f32 %v6535, 0.28449672
        %v6544 = vsub.f32 %v6536, 0.28449672
        %v6545 = vsub.f32 %v6537, 0.28449672
        %v6546 = vsub.f32 %v6538, 0.28449672
        %v6547 = vmul.f32 %v6539, %v6393
        %v6548 = vmul.f32 %v6540, %v6408
        %v6549 = vmul.f32 %v6541, %v6423
        %v6550 = vmul.f32 %v6542, %v6438
        %v6551 = vmul.f32 %v6543, %v6453
        %v6552 = vmul.f32 %v6544, %v6468
        %v6553 = vmul.f32 %v6545, %v6483
        %v6554 = vmul.f32 %v6546, %v6498
        %v6555 = vadd.f32 %v6547, 0.2548296
        %v6556 = vadd.f32 %v6548, 0.2548296
        %v6557 = vadd.f32 %v6549, 0.2548296
        %v6558 = vadd.f32 %v6550, 0.2548296
        %v6559 = vadd.f32 %v6551, 0.2548296
        %v6560 = vadd.f32 %v6552, 0.2548296
        %v6561 = vadd.f32 %v6553, 0.2548296
        %v6562 = vadd.f32 %v6554, 0.2548296
        %v6563 = vmul.f32 %v6555, %v6393
        %v6564 = vmul.f32 %v6556, %v6408
        %v6565 = vmul.f32 %v6557, %v6423
        %v6566 = vmul.f32 %v6558, %v6438
        %v6567 = vmul.f32 %v6559, %v6453
        %v6568 = vmul.f32 %v6560, %v6468
        %v6569 = vmul.f32 %v6561, %v6483
        %v6570 = vmul.f32 %v6562, %v6498
        %v6571 = vsub.f32 0.0, %v6347
        %v6572 = vsub.f32 0.0, %v6348
        %v6573 = vsub.f32 0.0, %v6349
        %v6574 = vsub.f32 0.0, %v6350
        %v6575 = vsub.f32 0.0, %v6351
        %v6576 = vsub.f32 0.0, %v6352
        %v6577 = vsub.f32 0.0, %v6353
        %v6578 = vsub.f32 0.0, %v6354
        %v6579 = vmul.f32 %v6571, %v6347
        %v6580 = vmul.f32 %v6572, %v6348
        %v6581 = vmul.f32 %v6573, %v6349
        %v6582 = vmul.f32 %v6574, %v6350
        %v6583 = vmul.f32 %v6575, %v6351
        %v6584 = vmul.f32 %v6576, %v6352
        %v6585 = vmul.f32 %v6577, %v6353
        %v6586 = vmul.f32 %v6578, %v6354
        %v6587 = vmul.f32 %v6579, 1.442695
        %v6588 = vpow.pop %v6587
        %v6589 = vmul.f32 %v6580, 1.442695
        %v6590 = vpow.pop %v6589
        %v6591 = vmul.f32 %v6581, 1.442695
        %v6592 = vpow.pop %v6591
        %v6593 = vmul.f32 %v6582, 1.442695
        %v6594 = vpow.pop %v6593
        %v6595 = vmul.f32 %v6583, 1.442695
        %v6596 = vpow.pop %v6595
        %v6597 = vmul.f32 %v6584, 1.442695
        %v6598 = vpow.pop %v6597
        %v6599 = vmul.f32 %v6585, 1.442695
        %v6600 = vpow.pop %v6599
        %v6601 = vmul.f32 %v6586, 1.442695
        %v6602 = vpow.pop %v6601
        %v6603 = vmul.f32 %v6563, %v6588
        %v6604 = vmul.f32 %v6564, %v6590
        %v6605 = vmul.f32 %v6565, %v6592
        %v6606 = vmul.f32 %v6566, %v6594
        %v6607 = vmul.f32 %v6567, %v6596
        %v6608 = vmul.f32 %v6568, %v6598
        %v6609 = vmul.f32 %v6569, %v6600
        %v6610 = vmul.f32 %v6570, %v6602
        %v6611 = vsub.f32 1.0, %v6603
        %v6612 = vsub.f32 1.0, %v6604
        %v6613 = vsub.f32 1.0, %v6605
        %v6614 = vsub.f32 1.0, %v6606
        %v6615 = vsub.f32 1.0, %v6607
        %v6616 = vsub.f32 1.0, %v6608
        %v6617 = vsub.f32 1.0, %v6609
        %v6618 = vsub.f32 1.0, %v6610
        %vm6619 = vcmp.ge.f32.partialorder %v6347, 0.0
        %vm6620 = vcmp.ge.f32.partialorder %v6348, 0.0
        %vm6621 = vcmp.ge.f32.partialorder %v6349, 0.0
        %vm6622 = vcmp.ge.f32.partialorder %v6350, 0.0
        %vm6623 = vcmp.ge.f32.partialorder %v6351, 0.0
        %vm6624 = vcmp.ge.f32.partialorder %v6352, 0.0
        %vm6625 = vcmp.ge.f32.partialorder %v6353, 0.0
        %vm6626 = vcmp.ge.f32.partialorder %v6354, 0.0
        %v6627 = vsub.f32 0.0, %v6611
        %v6628 = vsub.f32 0.0, %v6612
        %v6629 = vsub.f32 0.0, %v6613
        %v6630 = vsub.f32 0.0, %v6614
        %v6631 = vsub.f32 0.0, %v6615
        %v6632 = vsub.f32 0.0, %v6616
        %v6633 = vsub.f32 0.0, %v6617
        %v6634 = vsub.f32 0.0, %v6618
        %v6635 = vsel %vm6619, %v6611, %v6627
        %v6636 = vsel %vm6620, %v6612, %v6628
        %v6637 = vsel %vm6621, %v6613, %v6629
        %v6638 = vsel %vm6622, %v6614, %v6630
        %v6639 = vsel %vm6623, %v6615, %v6631
        %v6640 = vsel %vm6624, %v6616, %v6632
        %v6641 = vsel %vm6625, %v6617, %v6633
        %v6642 = vsel %vm6626, %v6618, %v6634
        %v6643 = vadd.f32 %v6635, 1.0
        %v6644 = vadd.f32 %v6636, 1.0
        %v6645 = vadd.f32 %v6637, 1.0
        %v6646 = vadd.f32 %v6638, 1.0
        %v6647 = vadd.f32 %v6639, 1.0
        %v6648 = vadd.f32 %v6640, 1.0
        %v6649 = vadd.f32 %v6641, 1.0
        %v6650 = vadd.f32 %v6642, 1.0
        %v6651 = vmul.f32 %v6339, %v6643
        %v6652 = vmul.f32 %v6340, %v6644
        %v6653 = vmul.f32 %v6341, %v6645
        %v6654 = vmul.f32 %v6342, %v6646
        %v6655 = vmul.f32 %v6343, %v6647
        %v6656 = vmul.f32 %v6344, %v6648
        %v6657 = vmul.f32 %v6345, %v6649
        %v6658 = vmul.f32 %v6346, %v6650
        %v6659 = vld [vmem:[%s29] sm:$0xff]
        %v6660 = vld [vmem:[%s29 + $0x8] sm:$0xff]
        %v6661 = vld [vmem:[%s29 + $0x10] sm:$0xff]
        %v6662 = vld [vmem:[%s29 + $0x18] sm:$0xff]
        %v6663 = vld [vmem:[%s29 + $0x20] sm:$0xff]
        %v6664 = vld [vmem:[%s29 + $0x28] sm:$0xff]
        %v6665 = vld [vmem:[%s29 + $0x30] sm:$0xff]
        %v6666 = vld [vmem:[%s29 + $0x38] sm:$0xff]
        %v6667 = vld [vmem:[%s29 + $0x40] sm:$0xff]
        %v6668 = vld [vmem:[%s29 + $0x48] sm:$0xff]
        %v6669 = vld [vmem:[%s29 + $0x50] sm:$0xff]
        %v6670 = vld [vmem:[%s29 + $0x58] sm:$0xff]
        %v6671 = vld [vmem:[%s29 + $0x60] sm:$0xff]
        %v6672 = vld [vmem:[%s29 + $0x68] sm:$0xff]
        %v6673 = vld [vmem:[%s29 + $0x70] sm:$0xff]
        %v6674 = vld [vmem:[%s29 + $0x78] sm:$0xff]
        %6675 = vmatpush.msra.mxu0 %v6674
        %6676 = vmatpush.msra.mxu0 %v6673
        %6677 = vmatpush.msra.mxu0 %v6672
        %6678 = vmatpush.msra.mxu0 %v6671
        %6679 = vmatpush.msra.mxu0 %v6670
        %6680 = vmatpush.msra.mxu0 %v6669
        %6681 = vmatpush.msra.mxu0 %v6668
        %6682 = vmatpush.msra.mxu0 %v6667
        %6683 = vmatpush.msra.mxu0 %v6666
        %6684 = vmatpush.msra.mxu0 %v6665
        %6685 = vmatpush.msra.mxu0 %v6664
        %6686 = vmatpush.msra.mxu0 %v6663
        %6687 = vmatpush.msra.mxu0 %v6662
        %6688 = vmatpush.msra.mxu0 %v6661
        %6689 = vmatpush.msra.mxu0 %v6660
        %6690 = vmatpush.msra.mxu0 %v6659
        %6691 = vmatmul.f32.gmra.mxu0 %v6651
        %v6692 = vpop.f32.mrf.mxu0
        %v6693 = vadd.f32 0.0, %v6692
        %6694 = vmatmul.f32.gmra.mxu0 %v6652
        %v6695 = vpop.f32.mrf.mxu0
        %v6696 = vadd.f32 0.0, %v6695
        %6697 = vmatmul.f32.gmra.mxu0 %v6653
        %v6698 = vpop.f32.mrf.mxu0
        %v6699 = vadd.f32 0.0, %v6698
        %6700 = vmatmul.f32.gmra.mxu0 %v6654
        %v6701 = vpop.f32.mrf.mxu0
        %v6702 = vadd.f32 0.0, %v6701
        %6703 = vmatmul.f32.gmra.mxu0 %v6655
        %v6704 = vpop.f32.mrf.mxu0
        %v6705 = vadd.f32 0.0, %v6704
        %6706 = vmatmul.f32.gmra.mxu0 %v6656
        %v6707 = vpop.f32.mrf.mxu0
        %v6708 = vadd.f32 0.0, %v6707
        %6709 = vmatmul.f32.gmra.mxu0 %v6657
        %v6710 = vpop.f32.mrf.mxu0
        %v6711 = vadd.f32 0.0, %v6710
        %6712 = vmatmul.f32.gmra.mxu0 %v6658
        %v6713 = vpop.f32.mrf.mxu0
        %v6714 = vadd.f32 0.0, %v6713
        %6715 = vdwg.mxu0
        %v6716 = vadd.f32 %v6262, %v6693
        %v6717 = vadd.f32 %v6263, %v6696
        %v6718 = vadd.f32 %v6264, %v6699
        %v6719 = vadd.f32 %v6265, %v6702
        %v6720 = vadd.f32 %v6266, %v6705
        %v6721 = vadd.f32 %v6267, %v6708
        %v6722 = vadd.f32 %v6268, %v6711
        %v6723 = vadd.f32 %v6269, %v6714
        %6724 = vst.msk [vmem:[#allocation2 + $0x8] sm:$0xff] %vm990, %v6716
        %6725 = vst.msk [vmem:[#allocation2 + $0x10] sm:$0xff] %vm990, %v6717
        %6726 = vst.msk [vmem:[#allocation2 + $0x18] sm:$0xff] %vm990, %v6718
        %6727 = vst.msk [vmem:[#allocation2 + $0x20] sm:$0xff] %vm990, %v6719
        %6728 = vst.msk [vmem:[#allocation2 + $0x28] sm:$0xff] %vm990, %v6720
        %6729 = vst.msk [vmem:[#allocation2 + $0x30] sm:$0xff] %vm990, %v6721
        %6730 = vst.msk [vmem:[#allocation2 + $0x38] sm:$0xff] %vm990, %v6722
        %6731 = vst.msk [vmem:[#allocation2 + $0x40] sm:$0xff] %vm990, %v6723
        %v6732 = vld [vmem:[%s31] sm:$0x7]
        %v6733 = vld [vmem:[%s31 + $0x4] sm:$0x7]
        %v6734 = vld [vmem:[%s31 + $0x8] sm:$0x7]
        %v6735 = vld [vmem:[#allocation2 + $0x3] sm:$0xff]
        %v6736 = vld [vmem:[#allocation2 + $0xb] sm:$0xff]
        %v6737 = vld [vmem:[#allocation2 + $0x13] sm:$0xff]
        %v6738 = vld [vmem:[#allocation2 + $0x1b] sm:$0xff]
        %v6739 = vld [vmem:[#allocation2 + $0x23] sm:$0xff]
        %v6740 = vld [vmem:[#allocation2 + $0x2b] sm:$0xff]
        %v6741 = vld [vmem:[#allocation2 + $0x33] sm:$0xff]
        %v6742 = vld [vmem:[#allocation2 + $0x3b] sm:$0xff]
        %v6743 = vmul.f32 %v6735, %v5135
        %v6744 = vmul.f32 %v6736, %v5140
        %v6745 = vmul.f32 %v6737, %v5145
        %v6746 = vmul.f32 %v6738, %v5150
        %v6747 = vmul.f32 %v6739, %v5155
        %v6748 = vmul.f32 %v6740, %v5160
        %v6749 = vmul.f32 %v6741, %v5165
        %v6750 = vmul.f32 %v6742, %v5170
        %v6751 = vperm.slane %v6732, 0
        %v6752 = vmul.f32 %v6743, %v6751
        %v6753 = vmul.f32 %v6744, %v6751
        %v6754 = vmul.f32 %v6745, %v6751
        %v6755 = vmul.f32 %v6746, %v6751
        %v6756 = vmul.f32 %v6747, %v6751
        %v6757 = vmul.f32 %v6748, %v6751
        %v6758 = vmul.f32 %v6749, %v6751
        %v6759 = vmul.f32 %v6750, %v6751
        %v6760 = vadd.f32 %v6752, 0.0
        %v6761 = vadd.f32 %v6753, 0.0
        %v6762 = vadd.f32 %v6754, 0.0
        %v6763 = vadd.f32 %v6755, 0.0
        %v6764 = vadd.f32 %v6756, 0.0
        %v6765 = vadd.f32 %v6757, 0.0
        %v6766 = vadd.f32 %v6758, 0.0
        %v6767 = vadd.f32 %v6759, 0.0
        %v6768 = vld [vmem:[#allocation2 + $0x4] sm:$0xff]
        %v6769 = vld [vmem:[#allocation2 + $0xc] sm:$0xff]
        %v6770 = vld [vmem:[#allocation2 + $0x14] sm:$0xff]
        %v6771 = vld [vmem:[#allocation2 + $0x1c] sm:$0xff]
        %v6772 = vld [vmem:[#allocation2 + $0x24] sm:$0xff]
        %v6773 = vld [vmem:[#allocation2 + $0x2c] sm:$0xff]
        %v6774 = vld [vmem:[#allocation2 + $0x34] sm:$0xff]
        %v6775 = vld [vmem:[#allocation2 + $0x3c] sm:$0xff]
        %v6776 = vmul.f32 %v6768, %v5208
        %v6777 = vmul.f32 %v6769, %v5213
        %v6778 = vmul.f32 %v6770, %v5218
        %v6779 = vmul.f32 %v6771, %v5223
        %v6780 = vmul.f32 %v6772, %v5228
        %v6781 = vmul.f32 %v6773, %v5233
        %v6782 = vmul.f32 %v6774, %v5238
        %v6783 = vmul.f32 %v6775, %v5243
        %v6784 = vperm.slane %v6732, 1
        %v6785 = vmul.f32 %v6776, %v6784
        %v6786 = vmul.f32 %v6777, %v6784
        %v6787 = vmul.f32 %v6778, %v6784
        %v6788 = vmul.f32 %v6779, %v6784
        %v6789 = vmul.f32 %v6780, %v6784
        %v6790 = vmul.f32 %v6781, %v6784
        %v6791 = vmul.f32 %v6782, %v6784
        %v6792 = vmul.f32 %v6783, %v6784
        %v6793 = vadd.f32 %v6760, %v6785
        %v6794 = vadd.f32 %v6761, %v6786
        %v6795 = vadd.f32 %v6762, %v6787
        %v6796 = vadd.f32 %v6763, %v6788
        %v6797 = vadd.f32 %v6764, %v6789
        %v6798 = vadd.f32 %v6765, %v6790
        %v6799 = vadd.f32 %v6766, %v6791
        %v6800 = vadd.f32 %v6767, %v6792
        %v6801 = vld [vmem:[#allocation2 + $0x5] sm:$0xff]
        %v6802 = vld [vmem:[#allocation2 + $0xd] sm:$0xff]
        %v6803 = vld [vmem:[#allocation2 + $0x15] sm:$0xff]
        %v6804 = vld [vmem:[#allocation2 + $0x1d] sm:$0xff]
        %v6805 = vld [vmem:[#allocation2 + $0x25] sm:$0xff]
        %v6806 = vld [vmem:[#allocation2 + $0x2d] sm:$0xff]
        %v6807 = vld [vmem:[#allocation2 + $0x35] sm:$0xff]
        %v6808 = vld [vmem:[#allocation2 + $0x3d] sm:$0xff]
        %v6809 = vmul.f32 %v6801, %v5281
        %v6810 = vmul.f32 %v6802, %v5286
        %v6811 = vmul.f32 %v6803, %v5291
        %v6812 = vmul.f32 %v6804, %v5296
        %v6813 = vmul.f32 %v6805, %v5301
        %v6814 = vmul.f32 %v6806, %v5306
        %v6815 = vmul.f32 %v6807, %v5311
        %v6816 = vmul.f32 %v6808, %v5316
        %v6817 = vperm.slane %v6732, 2
        %v6818 = vmul.f32 %v6809, %v6817
        %v6819 = vmul.f32 %v6810, %v6817
        %v6820 = vmul.f32 %v6811, %v6817
        %v6821 = vmul.f32 %v6812, %v6817
        %v6822 = vmul.f32 %v6813, %v6817
        %v6823 = vmul.f32 %v6814, %v6817
        %v6824 = vmul.f32 %v6815, %v6817
        %v6825 = vmul.f32 %v6816, %v6817
        %v6826 = vadd.f32 %v6793, %v6818
        %v6827 = vadd.f32 %v6794, %v6819
        %v6828 = vadd.f32 %v6795, %v6820
        %v6829 = vadd.f32 %v6796, %v6821
        %v6830 = vadd.f32 %v6797, %v6822
        %v6831 = vadd.f32 %v6798, %v6823
        %v6832 = vadd.f32 %v6799, %v6824
        %v6833 = vadd.f32 %v6800, %v6825
        %v6834 = vld [vmem:[#allocation2 + $0x7] sm:$0xff]
        %v6835 = vld [vmem:[#allocation2 + $0xf] sm:$0xff]
        %v6836 = vld [vmem:[#allocation2 + $0x17] sm:$0xff]
        %v6837 = vld [vmem:[#allocation2 + $0x1f] sm:$0xff]
        %v6838 = vld [vmem:[#allocation2 + $0x27] sm:$0xff]
        %v6839 = vld [vmem:[#allocation2 + $0x2f] sm:$0xff]
        %v6840 = vld [vmem:[#allocation2 + $0x37] sm:$0xff]
        %v6841 = vld [vmem:[#allocation2 + $0x3f] sm:$0xff]
        %v6842 = vmul.f32 %v6834, %v5354
        %v6843 = vmul.f32 %v6835, %v5359
        %v6844 = vmul.f32 %v6836, %v5364
        %v6845 = vmul.f32 %v6837, %v5369
        %v6846 = vmul.f32 %v6838, %v5374
        %v6847 = vmul.f32 %v6839, %v5379
        %v6848 = vmul.f32 %v6840, %v5384
        %v6849 = vmul.f32 %v6841, %v5389
        %v6850 = vperm.slane %v6733, 0
        %v6851 = vmul.f32 %v6842, %v6850
        %v6852 = vmul.f32 %v6843, %v6850
        %v6853 = vmul.f32 %v6844, %v6850
        %v6854 = vmul.f32 %v6845, %v6850
        %v6855 = vmul.f32 %v6846, %v6850
        %v6856 = vmul.f32 %v6847, %v6850
        %v6857 = vmul.f32 %v6848, %v6850
        %v6858 = vmul.f32 %v6849, %v6850
        %v6859 = vadd.f32 %v6826, %v6851
        %v6860 = vadd.f32 %v6827, %v6852
        %v6861 = vadd.f32 %v6828, %v6853
        %v6862 = vadd.f32 %v6829, %v6854
        %v6863 = vadd.f32 %v6830, %v6855
        %v6864 = vadd.f32 %v6831, %v6856
        %v6865 = vadd.f32 %v6832, %v6857
        %v6866 = vadd.f32 %v6833, %v6858
        %v6867 = vld [vmem:[#allocation2 + $0x8] sm:$0xff]
        %v6868 = vld [vmem:[#allocation2 + $0x10] sm:$0xff]
        %v6869 = vld [vmem:[#allocation2 + $0x18] sm:$0xff]
        %v6870 = vld [vmem:[#allocation2 + $0x20] sm:$0xff]
        %v6871 = vld [vmem:[#allocation2 + $0x28] sm:$0xff]
        %v6872 = vld [vmem:[#allocation2 + $0x30] sm:$0xff]
        %v6873 = vld [vmem:[#allocation2 + $0x38] sm:$0xff]
        %v6874 = vld [vmem:[#allocation2 + $0x40] sm:$0xff]
        %v6875 = vmul.f32 %v6867, %v5427
        %v6876 = vmul.f32 %v6868, %v5432
        %v6877 = vmul.f32 %v6869, %v5437
        %v6878 = vmul.f32 %v6870, %v5442
        %v6879 = vmul.f32 %v6871, %v5447
        %v6880 = vmul.f32 %v6872, %v5452
        %v6881 = vmul.f32 %v6873, %v5457
        %v6882 = vmul.f32 %v6874, %v5462
        %v6883 = vperm.slane %v6733, 1
        %v6884 = vmul.f32 %v6875, %v6883
        %v6885 = vmul.f32 %v6876, %v6883
        %v6886 = vmul.f32 %v6877, %v6883
        %v6887 = vmul.f32 %v6878, %v6883
        %v6888 = vmul.f32 %v6879, %v6883
        %v6889 = vmul.f32 %v6880, %v6883
        %v6890 = vmul.f32 %v6881, %v6883
        %v6891 = vmul.f32 %v6882, %v6883
        %v6892 = vadd.f32 %v6859, %v6884
        %v6893 = vadd.f32 %v6860, %v6885
        %v6894 = vadd.f32 %v6861, %v6886
        %v6895 = vadd.f32 %v6862, %v6887
        %v6896 = vadd.f32 %v6863, %v6888
        %v6897 = vadd.f32 %v6864, %v6889
        %v6898 = vadd.f32 %v6865, %v6890
        %v6899 = vadd.f32 %v6866, %v6891
        %v6900 = vld [vmem:[#allocation2 + $0x9] sm:$0xff]
        %v6901 = vld [vmem:[#allocation2 + $0x11] sm:$0xff]
        %v6902 = vld [vmem:[#allocation2 + $0x19] sm:$0xff]
        %v6903 = vld [vmem:[#allocation2 + $0x21] sm:$0xff]
        %v6904 = vld [vmem:[#allocation2 + $0x29] sm:$0xff]
        %v6905 = vld [vmem:[#allocation2 + $0x31] sm:$0xff]
        %v6906 = vld [vmem:[#allocation2 + $0x39] sm:$0xff]
        %v6907 = vld [vmem:[#allocation2 + $0x41] sm:$0xff]
        %v6908 = vmul.f32 %v6900, %v5500
        %v6909 = vmul.f32 %v6901, %v5505
        %v6910 = vmul.f32 %v6902, %v5510
        %v6911 = vmul.f32 %v6903, %v5515
        %v6912 = vmul.f32 %v6904, %v5520
        %v6913 = vmul.f32 %v6905, %v5525
        %v6914 = vmul.f32 %v6906, %v5530
        %v6915 = vmul.f32 %v6907, %v5535
        %v6916 = vperm.slane %v6733, 2
        %v6917 = vmul.f32 %v6908, %v6916
        %v6918 = vmul.f32 %v6909, %v6916
        %v6919 = vmul.f32 %v6910, %v6916
        %v6920 = vmul.f32 %v6911, %v6916
        %v6921 = vmul.f32 %v6912, %v6916
        %v6922 = vmul.f32 %v6913, %v6916
        %v6923 = vmul.f32 %v6914, %v6916
        %v6924 = vmul.f32 %v6915, %v6916
        %v6925 = vadd.f32 %v6892, %v6917
        %v6926 = vadd.f32 %v6893, %v6918
        %v6927 = vadd.f32 %v6894, %v6919
        %v6928 = vadd.f32 %v6895, %v6920
        %v6929 = vadd.f32 %v6896, %v6921
        %v6930 = vadd.f32 %v6897, %v6922
        %v6931 = vadd.f32 %v6898, %v6923
        %v6932 = vadd.f32 %v6899, %v6924
        %v6933 = vld [vmem:[#allocation2 + $0x43] sm:$0xff]
        %v6934 = vmul.f32 %v6736, %v5573
        %v6935 = vmul.f32 %v6737, %v5578
        %v6936 = vmul.f32 %v6738, %v5583
        %v6937 = vmul.f32 %v6739, %v5588
        %v6938 = vmul.f32 %v6740, %v5593
        %v6939 = vmul.f32 %v6741, %v5598
        %v6940 = vmul.f32 %v6742, %v5603
        %v6941 = vmul.f32 %v6933, %v5608
        %v6942 = vperm.slane %v6734, 0
        %v6943 = vmul.f32 %v6934, %v6942
        %v6944 = vmul.f32 %v6935, %v6942
        %v6945 = vmul.f32 %v6936, %v6942
        %v6946 = vmul.f32 %v6937, %v6942
        %v6947 = vmul.f32 %v6938, %v6942
        %v6948 = vmul.f32 %v6939, %v6942
        %v6949 = vmul.f32 %v6940, %v6942
        %v6950 = vmul.f32 %v6941, %v6942
        %v6951 = vadd.f32 %v6925, %v6943
        %v6952 = vadd.f32 %v6926, %v6944
        %v6953 = vadd.f32 %v6927, %v6945
        %v6954 = vadd.f32 %v6928, %v6946
        %v6955 = vadd.f32 %v6929, %v6947
        %v6956 = vadd.f32 %v6930, %v6948
        %v6957 = vadd.f32 %v6931, %v6949
        %v6958 = vadd.f32 %v6932, %v6950
        %v6959 = vld [vmem:[#allocation2 + $0x44] sm:$0xff]
        %v6960 = vmul.f32 %v6769, %v5646
        %v6961 = vmul.f32 %v6770, %v5651
        %v6962 = vmul.f32 %v6771, %v5656
        %v6963 = vmul.f32 %v6772, %v5661
        %v6964 = vmul.f32 %v6773, %v5666
        %v6965 = vmul.f32 %v6774, %v5671
        %v6966 = vmul.f32 %v6775, %v5676
        %v6967 = vmul.f32 %v6959, %v5681
        %v6968 = vperm.slane %v6734, 1
        %v6969 = vmul.f32 %v6960, %v6968
        %v6970 = vmul.f32 %v6961, %v6968
        %v6971 = vmul.f32 %v6962, %v6968
        %v6972 = vmul.f32 %v6963, %v6968
        %v6973 = vmul.f32 %v6964, %v6968
        %v6974 = vmul.f32 %v6965, %v6968
        %v6975 = vmul.f32 %v6966, %v6968
        %v6976 = vmul.f32 %v6967, %v6968
        %v6977 = vadd.f32 %v6951, %v6969
        %v6978 = vadd.f32 %v6952, %v6970
        %v6979 = vadd.f32 %v6953, %v6971
        %v6980 = vadd.f32 %v6954, %v6972
        %v6981 = vadd.f32 %v6955, %v6973
        %v6982 = vadd.f32 %v6956, %v6974
        %v6983 = vadd.f32 %v6957, %v6975
        %v6984 = vadd.f32 %v6958, %v6976
        %v6985 = vld [vmem:[#allocation2 + $0x45] sm:$0xff]
        %v6986 = vmul.f32 %v6802, %v5719
        %v6987 = vmul.f32 %v6803, %v5724
        %v6988 = vmul.f32 %v6804, %v5729
        %v6989 = vmul.f32 %v6805, %v5734
        %v6990 = vmul.f32 %v6806, %v5739
        %v6991 = vmul.f32 %v6807, %v5744
        %v6992 = vmul.f32 %v6808, %v5749
        %v6993 = vmul.f32 %v6985, %v5754
        %v6994 = vperm.slane %v6734, 2
        %v6995 = vmul.f32 %v6986, %v6994
        %v6996 = vmul.f32 %v6987, %v6994
        %v6997 = vmul.f32 %v6988, %v6994
        %v6998 = vmul.f32 %v6989, %v6994
        %v6999 = vmul.f32 %v6990, %v6994
        %v7000 = vmul.f32 %v6991, %v6994
        %v7001 = vmul.f32 %v6992, %v6994
        %v7002 = vmul.f32 %v6993, %v6994
        %v7003 = vadd.f32 %v6977, %v6995
        %v7004 = vadd.f32 %v6978, %v6996
        %v7005 = vadd.f32 %v6979, %v6997
        %v7006 = vadd.f32 %v6980, %v6998
        %v7007 = vadd.f32 %v6981, %v6999
        %v7008 = vadd.f32 %v6982, %v7000
        %v7009 = vadd.f32 %v6983, %v7001
        %v7010 = vadd.f32 %v6984, %v7002
        %v7011 = vadd.f32 %v6716, %v7003
        %v7012 = vadd.f32 %v6717, %v7004
        %v7013 = vadd.f32 %v6718, %v7005
        %v7014 = vadd.f32 %v6719, %v7006
        %v7015 = vadd.f32 %v6720, %v7007
        %v7016 = vadd.f32 %v6721, %v7008
        %v7017 = vadd.f32 %v6722, %v7009
        %v7018 = vadd.f32 %v6723, %v7010
        %v7019 = vld [vmem:[%s33] sm:$0xff]
        %v7020 = vld [vmem:[%s33 + $0x8] sm:$0xff]
        %v7022 = vsel %vm4818, %v7019, 0
        %v7025 = vsel %vm4818, %v7020, 0
        %7027 = vmatpush.msra.mxu0 0.0
        %7028 = vmatpush.msra.mxu0 0.0
        %7029 = vmatpush.msra.mxu0 0.0
        %7030 = vmatpush.msra.mxu0 0.0
        %7031 = vmatpush.msra.mxu0 0.0
        %7032 = vmatpush.msra.mxu0 0.0
        %7033 = vmatpush.msra.mxu0 0.0
        %7034 = vmatpush.msra.mxu0 0.0
        %7035 = vmatpush.msra.mxu0 %v7018
        %7036 = vmatpush.msra.mxu0 %v7017
        %7037 = vmatpush.msra.mxu0 %v7016
        %7038 = vmatpush.msra.mxu0 %v7015
        %7039 = vmatpush.msra.mxu0 %v7014
        %7040 = vmatpush.msra.mxu0 %v7013
        %7041 = vmatpush.msra.mxu0 %v7012
        %7042 = vmatpush.msra.mxu0 %v7011
        %7043 = vmatmul.f32.gmra.mxu0 %v7022
        %v7044 = vpop.f32.mrf.mxu0
        %v7045 = vadd.f32 0.0, %v7044
        %7046 = vmatmul.f32.gmra.mxu0 %v7025
        %v7047 = vpop.f32.mrf.mxu0
        %v7048 = vadd.f32 0.0, %v7047
        %7049 = vdwg.mxu0
        %v7050 = vld [vmem:[%s39] sm:$0xff]
        %v7051 = vld [vmem:[%s39 + $0x8] sm:$0xff]
        %v7052 = vld [vmem:[%s35] sm:$0xff]
        %v7053 = vld [vmem:[%s35 + $0x8] sm:$0xff]
        %v7054 = vld [vmem:[%s35 + $0x10] sm:$0xff]
        %v7055 = vld [vmem:[%s35 + $0x18] sm:$0xff]
        %v7057 = vsel %vm990, %v7045, 0
        %v7060 = vsel %vm990, %v7048, 0
        %7062 = vmatpush.msra.mxu0 0.0
        %7063 = vmatpush.msra.mxu0 0.0
        %7064 = vmatpush.msra.mxu0 0.0
        %7065 = vmatpush.msra.mxu0 0.0
        %7066 = vmatpush.msra.mxu0 0.0
        %7067 = vmatpush.msra.mxu0 0.0
        %7068 = vmatpush.msra.mxu0 0.0
        %7069 = vmatpush.msra.mxu0 0.0
        %7070 = vmatpush.msra.mxu0 0.0
        %7071 = vmatpush.msra.mxu0 0.0
        %7072 = vmatpush.msra.mxu0 0.0
        %7073 = vmatpush.msra.mxu0 0.0
        %7074 = vmatpush.msra.mxu0 %v7055
        %7075 = vmatpush.msra.mxu0 %v7054
        %7076 = vmatpush.msra.mxu0 %v7053
        %7077 = vmatpush.msra.mxu0 %v7052
        %7078 = vmatmul.f32.gmra.mxu0 %v7057
        %v7079 = vpop.f32.mrf.mxu0
        %v7080 = vadd.f32 0.0, %v7079
        %7081 = vmatmul.f32.gmra.mxu0 %v7060
        %v7082 = vpop.f32.mrf.mxu0
        %v7083 = vadd.f32 0.0, %v7082
        %7084 = vdwg.mxu0
        %v7086 = vsel %vm990, %v7080, 0
        %v7089 = vsel %vm990, %v7083, 0
        %7091 = vmatpush.xpose.msra.mxu0 0.0
        %7092 = vmatpush.xpose.msra.mxu0 0.0
        %7093 = vmatpush.xpose.msra.mxu0 0.0
        %7094 = vmatpush.xpose.msra.mxu0 0.0
        %7095 = vmatpush.xpose.msra.mxu0 0.0
        %7096 = vmatpush.xpose.msra.mxu0 0.0
        %7097 = vmatpush.xpose.msra.mxu0 0.0
        %7098 = vmatpush.xpose.msra.mxu0 0.0
        %7099 = vmatpush.xpose.msra.mxu0 0.0
        %7100 = vmatpush.xpose.msra.mxu0 0.0
        %7101 = vmatpush.xpose.msra.mxu0 0.0
        %7102 = vmatpush.xpose.msra.mxu0 0.0
        %7103 = vmatpush.xpose.msra.mxu0 0.0
        %7104 = vmatpush.xpose.msra.mxu0 0.0
        %7105 = vmatpush.xpose.msra.mxu0 %v7060
        %7106 = vmatpush.xpose.msra.mxu0 %v7057
        %7107 = vmatmul.f32.gmra.mxu0 %v7086
        %v7108 = vpop.f32.mrf.mxu0
        %v7109 = vadd.f32 %v7050, %v7108
        %7110 = vmatmul.f32.gmra.mxu0 %v7089
        %v7111 = vpop.f32.mrf.mxu0
        %v7112 = vadd.f32 %v7051, %v7111
        %7113 = vdwg.mxu0
        %vm7114 = vcmask 130048
        %v7115 = vsel %vm7114, %v7109, -inf
        %7116 = vmax.xlane.f32.xlu0 %v7115
        %v7117 = vpop.xlane.xlu0 %7116
        %v7118 = vsel %vm7114, %v7112, -inf
        %7119 = vmax.xlane.f32.xlu0 %v7118
        %v7120 = vpop.xlane.xlu0 %7119
        %v7121 = vsub.f32 %v7109, %v7117
        %v7122 = vsub.f32 %v7112, %v7120
        %v7123 = vmul.f32 %v7121, 1.442695
        %v7124 = vpow.pop %v7123
        %v7125 = vmul.f32 %v7122, 1.442695
        %v7126 = vpow.pop %v7125
        %v7127 = vsel %vm7114, %v7124, 0.0
        %7128 = vadd.xlane.f32.xlu0 %v7127
        %v7129 = vpop.xlane.xlu0 %7128
        %v7130 = vsel %vm7114, %v7126, 0.0
        %7131 = vadd.xlane.f32.xlu0 %v7130
        %v7132 = vpop.xlane.xlu0 %7131
        %v7133 = vrcp.pop %v7129
        %v7134 = vmul.f32 %v7129, %v7133
        %v7135 = vsub.f32 1.0, %v7134
        %v7136 = vmul.f32 %v7133, %v7135
        %v7137 = vadd.f32 %v7133, %v7136
        %vm7138 = vweird.f32 %v7129
        %vm7139 = vweird.f32 %v7133
        %vm7140 = vmor %vm7138, %vm7139
        %v7141 = vsel %vm7140, %v7133, %v7137
        %v7142 = vand.u32 2147483647, %v7129
        %vm7143 = vcmp.eq.f32.partialorder %v7142, 8.507059e+37
        %v7144 = vand.u32 %v7129, 2147483648
        %v7145 = vor.u32 1.1754944e-38, %v7144
        %v7146 = vsel %vm7143, %v7145, %v7141
        %v7147 = vmul.f32 %v7124, %v7146
        %v7148 = vrcp.pop %v7132
        %v7149 = vmul.f32 %v7132, %v7148
        %v7150 = vsub.f32 1.0, %v7149
        %v7151 = vmul.f32 %v7148, %v7150
        %v7152 = vadd.f32 %v7148, %v7151
        %vm7153 = vweird.f32 %v7132
        %vm7154 = vweird.f32 %v7148
        %vm7155 = vmor %vm7153, %vm7154
        %v7156 = vsel %vm7155, %v7148, %v7152
        %v7157 = vand.u32 2147483647, %v7132
        %vm7158 = vcmp.eq.f32.partialorder %v7157, 8.507059e+37
        %v7159 = vand.u32 %v7132, 2147483648
        %v7160 = vor.u32 1.1754944e-38, %v7159
        %v7161 = vsel %vm7158, %v7160, %v7156
        %v7162 = vmul.f32 %v7126, %v7161
        %v7163 = vld [vmem:[%s37] sm:$0xff]
        %v7164 = vld [vmem:[%s37 + $0x8] sm:$0xff]
        %v7165 = vld [vmem:[%s37 + $0x10] sm:$0xff]
        %v7166 = vld [vmem:[%s37 + $0x18] sm:$0xff]
        %7167 = vmatpush.msra.mxu0 0.0
        %7168 = vmatpush.msra.mxu0 0.0
        %7169 = vmatpush.msra.mxu0 0.0
        %7170 = vmatpush.msra.mxu0 0.0
        %7171 = vmatpush.msra.mxu0 0.0
        %7172 = vmatpush.msra.mxu0 0.0
        %7173 = vmatpush.msra.mxu0 0.0
        %7174 = vmatpush.msra.mxu0 0.0
        %7175 = vmatpush.msra.mxu0 0.0
        %7176 = vmatpush.msra.mxu0 0.0
        %7177 = vmatpush.msra.mxu0 0.0
        %7178 = vmatpush.msra.mxu0 0.0
        %7179 = vmatpush.msra.mxu0 %v7166
        %7180 = vmatpush.msra.mxu0 %v7165
        %7181 = vmatpush.msra.mxu0 %v7164
        %7182 = vmatpush.msra.mxu0 %v7163
        %7183 = vmatmul.f32.gmra.mxu0 %v7057
        %v7184 = vpop.f32.mrf.mxu0
        %v7185 = vadd.f32 0.0, %v7184
        %7186 = vmatmul.f32.gmra.mxu0 %v7060
        %v7187 = vpop.f32.mrf.mxu0
        %v7188 = vadd.f32 0.0, %v7187
        %7189 = vdwg.mxu0
        %s7190 = scalar_lea.vmem %s35, 32
        %v7191 = vld [vmem:[%s7190] sm:$0xff]
        %v7192 = vld [vmem:[%s7190 + $0x8] sm:$0xff]
        %v7193 = vld [vmem:[%s7190 + $0x10] sm:$0xff]
        %v7194 = vld [vmem:[%s7190 + $0x18] sm:$0xff]
        %7195 = vmatpush.msra.mxu0 0.0
        %7196 = vmatpush.msra.mxu0 0.0
        %7197 = vmatpush.msra.mxu0 0.0
        %7198 = vmatpush.msra.mxu0 0.0
        %7199 = vmatpush.msra.mxu0 0.0
        %7200 = vmatpush.msra.mxu0 0.0
        %7201 = vmatpush.msra.mxu0 0.0
        %7202 = vmatpush.msra.mxu0 0.0
        %7203 = vmatpush.msra.mxu0 0.0
        %7204 = vmatpush.msra.mxu0 0.0
        %7205 = vmatpush.msra.mxu0 0.0
        %7206 = vmatpush.msra.mxu0 0.0
        %7207 = vmatpush.msra.mxu0 %v7194
        %7208 = vmatpush.msra.mxu0 %v7193
        %7209 = vmatpush.msra.mxu0 %v7192
        %7210 = vmatpush.msra.mxu0 %v7191
        %7211 = vmatmul.f32.gmra.mxu0 %v7057
        %v7212 = vpop.f32.mrf.mxu0
        %v7213 = vadd.f32 0.0, %v7212
        %7214 = vmatmul.f32.gmra.mxu0 %v7060
        %v7215 = vpop.f32.mrf.mxu0
        %v7216 = vadd.f32 0.0, %v7215
        %7217 = vdwg.mxu0
        %v7219 = vsel %vm990, %v7213, 0
        %v7222 = vsel %vm990, %v7216, 0
        %7224 = vmatpush.xpose.msra.mxu0 0.0
        %7225 = vmatpush.xpose.msra.mxu0 0.0
        %7226 = vmatpush.xpose.msra.mxu0 0.0
        %7227 = vmatpush.xpose.msra.mxu0 0.0
        %7228 = vmatpush.xpose.msra.mxu0 0.0
        %7229 = vmatpush.xpose.msra.mxu0 0.0
        %7230 = vmatpush.xpose.msra.mxu0 0.0
        %7231 = vmatpush.xpose.msra.mxu0 0.0
        %7232 = vmatpush.xpose.msra.mxu0 0.0
        %7233 = vmatpush.xpose.msra.mxu0 0.0
        %7234 = vmatpush.xpose.msra.mxu0 0.0
        %7235 = vmatpush.xpose.msra.mxu0 0.0
        %7236 = vmatpush.xpose.msra.mxu0 0.0
        %7237 = vmatpush.xpose.msra.mxu0 0.0
        %7238 = vmatpush.xpose.msra.mxu0 %v7060
        %7239 = vmatpush.xpose.msra.mxu0 %v7057
        %7240 = vmatmul.f32.gmra.mxu0 %v7219
        %v7241 = vpop.f32.mrf.mxu0
        %v7242 = vadd.f32 %v7050, %v7241
        %7243 = vmatmul.f32.gmra.mxu0 %v7222
        %v7244 = vpop.f32.mrf.mxu0
        %v7245 = vadd.f32 %v7051, %v7244
        %7246 = vdwg.mxu0
        %v7247 = vsel %vm7114, %v7242, -inf
        %7248 = vmax.xlane.f32.xlu0 %v7247
        %v7249 = vpop.xlane.xlu0 %7248
        %v7250 = vsel %vm7114, %v7245, -inf
        %7251 = vmax.xlane.f32.xlu0 %v7250
        %v7252 = vpop.xlane.xlu0 %7251
        %v7253 = vsub.f32 %v7242, %v7249
        %v7254 = vsub.f32 %v7245, %v7252
        %v7255 = vmul.f32 %v7253, 1.442695
        %v7256 = vpow.pop %v7255
        %v7257 = vmul.f32 %v7254, 1.442695
        %v7258 = vpow.pop %v7257
        %v7259 = vsel %vm7114, %v7256, 0.0
        %7260 = vadd.xlane.f32.xlu0 %v7259
        %v7261 = vpop.xlane.xlu0 %7260
        %v7262 = vsel %vm7114, %v7258, 0.0
        %7263 = vadd.xlane.f32.xlu0 %v7262
        %v7264 = vpop.xlane.xlu0 %7263
        %v7265 = vrcp.pop %v7261
        %v7266 = vmul.f32 %v7261, %v7265
        %v7267 = vsub.f32 1.0, %v7266
        %v7268 = vmul.f32 %v7265, %v7267
        %v7269 = vadd.f32 %v7265, %v7268
        %vm7270 = vweird.f32 %v7261
        %vm7271 = vweird.f32 %v7265
        %vm7272 = vmor %vm7270, %vm7271
        %v7273 = vsel %vm7272, %v7265, %v7269
        %v7274 = vand.u32 2147483647, %v7261
        %vm7275 = vcmp.eq.f32.partialorder %v7274, 8.507059e+37
        %v7276 = vand.u32 %v7261, 2147483648
        %v7277 = vor.u32 1.1754944e-38, %v7276
        %v7278 = vsel %vm7275, %v7277, %v7273
        %v7279 = vmul.f32 %v7256, %v7278
        %v7280 = vrcp.pop %v7264
        %v7281 = vmul.f32 %v7264, %v7280
        %v7282 = vsub.f32 1.0, %v7281
        %v7283 = vmul.f32 %v7280, %v7282
        %v7284 = vadd.f32 %v7280, %v7283
        %vm7285 = vweird.f32 %v7264
        %vm7286 = vweird.f32 %v7280
        %vm7287 = vmor %vm7285, %vm7286
        %v7288 = vsel %vm7287, %v7280, %v7284
        %v7289 = vand.u32 2147483647, %v7264
        %vm7290 = vcmp.eq.f32.partialorder %v7289, 8.507059e+37
        %v7291 = vand.u32 %v7264, 2147483648
        %v7292 = vor.u32 1.1754944e-38, %v7291
        %v7293 = vsel %vm7290, %v7292, %v7288
        %v7294 = vmul.f32 %v7258, %v7293
        %s7295 = scalar_lea.vmem %s37, 32
        %v7296 = vld [vmem:[%s7295] sm:$0xff]
        %v7297 = vld [vmem:[%s7295 + $0x8] sm:$0xff]
        %v7298 = vld [vmem:[%s7295 + $0x10] sm:$0xff]
        %v7299 = vld [vmem:[%s7295 + $0x18] sm:$0xff]
        %7300 = vmatpush.msra.mxu0 0.0
        %7301 = vmatpush.msra.mxu0 0.0
        %7302 = vmatpush.msra.mxu0 0.0
        %7303 = vmatpush.msra.mxu0 0.0
        %7304 = vmatpush.msra.mxu0 0.0
        %7305 = vmatpush.msra.mxu0 0.0
        %7306 = vmatpush.msra.mxu0 0.0
        %7307 = vmatpush.msra.mxu0 0.0
        %7308 = vmatpush.msra.mxu0 0.0
        %7309 = vmatpush.msra.mxu0 0.0
        %7310 = vmatpush.msra.mxu0 0.0
        %7311 = vmatpush.msra.mxu0 0.0
        %7312 = vmatpush.msra.mxu0 %v7299
        %7313 = vmatpush.msra.mxu0 %v7298
        %7314 = vmatpush.msra.mxu0 %v7297
        %7315 = vmatpush.msra.mxu0 %v7296
        %7316 = vmatmul.f32.gmra.mxu0 %v7057
        %v7317 = vpop.f32.mrf.mxu0
        %v7318 = vadd.f32 0.0, %v7317
        %7319 = vmatmul.f32.gmra.mxu0 %v7060
        %v7320 = vpop.f32.mrf.mxu0
        %v7321 = vadd.f32 0.0, %v7320
        %7322 = vdwg.mxu0
        %v7324 = vsel %vm7114, %v7279, 0
        %v7327 = vsel %vm7114, %v7294, 0
        %7329 = vmatpush.msra.mxu0 0.0
        %7330 = vmatpush.msra.mxu0 0.0
        %7331 = vmatpush.msra.mxu0 0.0
        %7332 = vmatpush.msra.mxu0 0.0
        %7333 = vmatpush.msra.mxu0 0.0
        %7334 = vmatpush.msra.mxu0 0.0
        %7335 = vmatpush.msra.mxu0 0.0
        %7336 = vmatpush.msra.mxu0 0.0
        %7337 = vmatpush.msra.mxu0 0.0
        %7338 = vmatpush.msra.mxu0 0.0
        %7339 = vmatpush.msra.mxu0 0.0
        %7340 = vmatpush.msra.mxu0 0.0
        %7341 = vmatpush.msra.mxu0 0.0
        %7342 = vmatpush.msra.mxu0 0.0
        %7343 = vmatpush.msra.mxu0 %v7321
        %7344 = vmatpush.msra.mxu0 %v7318
        %7345 = vmatmul.f32.gmra.mxu0 %v7324
        %v7346 = vpop.f32.mrf.mxu0
        %v7347 = vadd.f32 0.0, %v7346
        %7348 = vmatmul.f32.gmra.mxu0 %v7327
        %v7349 = vpop.f32.mrf.mxu0
        %v7350 = vadd.f32 0.0, %v7349
        %7351 = vdwg.mxu0
        %v7353 = vsel %vm7114, %v7147, 0
        %v7356 = vsel %vm7114, %v7162, 0
        %7358 = vmatpush.msra.mxu0 0.0
        %7359 = vmatpush.msra.mxu0 0.0
        %7360 = vmatpush.msra.mxu0 0.0
        %7361 = vmatpush.msra.mxu0 0.0
        %7362 = vmatpush.msra.mxu0 0.0
        %7363 = vmatpush.msra.mxu0 0.0
        %7364 = vmatpush.msra.mxu0 0.0
        %7365 = vmatpush.msra.mxu0 0.0
        %7366 = vmatpush.msra.mxu0 0.0
        %7367 = vmatpush.msra.mxu0 0.0
        %7368 = vmatpush.msra.mxu0 0.0
        %7369 = vmatpush.msra.mxu0 0.0
        %7370 = vmatpush.msra.mxu0 0.0
        %7371 = vmatpush.msra.mxu0 0.0
        %7372 = vmatpush.msra.mxu0 %v7188
        %7373 = vmatpush.msra.mxu0 %v7185
        %7374 = vmatmul.f32.gmra.mxu0 %v7353
        %v7375 = vpop.f32.mrf.mxu0
        %v7376 = vadd.f32 %v7347, %v7375
        %7377 = vmatmul.f32.gmra.mxu0 %v7356
        %v7378 = vpop.f32.mrf.mxu0
        %v7379 = vadd.f32 %v7350, %v7378
        %7380 = vdwg.mxu0
        %v7381 = vld [vmem:[%s41] sm:$0xff]
        %v7382 = vld [vmem:[%s41 + $0x8] sm:$0xff]
        %v7383 = vld [vmem:[%s41 + $0x10] sm:$0xff]
        %v7384 = vld [vmem:[%s41 + $0x18] sm:$0xff]
        %v7385 = vld [vmem:[%s41 + $0x20] sm:$0xff]
        %v7386 = vld [vmem:[%s41 + $0x28] sm:$0xff]
        %v7387 = vld [vmem:[%s41 + $0x30] sm:$0xff]
        %v7388 = vld [vmem:[%s41 + $0x38] sm:$0xff]
        %v7390 = vsel %vm7114, %v7381, 0
        %v7393 = vsel %vm7114, %v7382, 0
        %v7396 = vsel %vm7114, %v7383, 0
        %v7399 = vsel %vm7114, %v7384, 0
        %v7402 = vsel %vm7114, %v7385, 0
        %v7405 = vsel %vm7114, %v7386, 0
        %v7408 = vsel %vm7114, %v7387, 0
        %v7411 = vsel %vm7114, %v7388, 0
        %7413 = vmatpush.msra.mxu0 0.0
        %7414 = vmatpush.msra.mxu0 0.0
        %7415 = vmatpush.msra.mxu0 0.0
        %7416 = vmatpush.msra.mxu0 0.0
        %7417 = vmatpush.msra.mxu0 0.0
        %7418 = vmatpush.msra.mxu0 0.0
        %7419 = vmatpush.msra.mxu0 0.0
        %7420 = vmatpush.msra.mxu0 0.0
        %7421 = vmatpush.msra.mxu0 0.0
        %7422 = vmatpush.msra.mxu0 0.0
        %7423 = vmatpush.msra.mxu0 0.0
        %7424 = vmatpush.msra.mxu0 0.0
        %7425 = vmatpush.msra.mxu0 0.0
        %7426 = vmatpush.msra.mxu0 0.0
        %7427 = vmatpush.msra.mxu0 %v7379
        %7428 = vmatpush.msra.mxu0 %v7376
        %7429 = vmatmul.f32.gmra.mxu0 %v7390
        %v7430 = vpop.f32.mrf.mxu0
        %v7431 = vadd.f32 0.0, %v7430
        %7432 = vmatmul.f32.gmra.mxu0 %v7393
        %v7433 = vpop.f32.mrf.mxu0
        %v7434 = vadd.f32 0.0, %v7433
        %7435 = vmatmul.f32.gmra.mxu0 %v7396
        %v7436 = vpop.f32.mrf.mxu0
        %v7437 = vadd.f32 0.0, %v7436
        %7438 = vmatmul.f32.gmra.mxu0 %v7399
        %v7439 = vpop.f32.mrf.mxu0
        %v7440 = vadd.f32 0.0, %v7439
        %7441 = vmatmul.f32.gmra.mxu0 %v7402
        %v7442 = vpop.f32.mrf.mxu0
        %v7443 = vadd.f32 0.0, %v7442
        %7444 = vmatmul.f32.gmra.mxu0 %v7405
        %v7445 = vpop.f32.mrf.mxu0
        %v7446 = vadd.f32 0.0, %v7445
        %7447 = vmatmul.f32.gmra.mxu0 %v7408
        %v7448 = vpop.f32.mrf.mxu0
        %v7449 = vadd.f32 0.0, %v7448
        %7450 = vmatmul.f32.gmra.mxu0 %v7411
        %v7451 = vpop.f32.mrf.mxu0
        %v7452 = vadd.f32 0.0, %v7451
        %7453 = vdwg.mxu0
        %v7454 = vld [vmem:[%s43] sm:$0xff]
        %v7455 = vld [vmem:[%s43 + $0x8] sm:$0xff]
        %v7456 = vld [vmem:[%s43 + $0x10] sm:$0xff]
        %v7457 = vld [vmem:[%s43 + $0x18] sm:$0xff]
        %v7458 = vld [vmem:[%s43 + $0x20] sm:$0xff]
        %v7459 = vld [vmem:[%s43 + $0x28] sm:$0xff]
        %v7460 = vld [vmem:[%s43 + $0x30] sm:$0xff]
        %v7461 = vld [vmem:[%s43 + $0x38] sm:$0xff]
        %v7462 = vmul.f32 %v7431, %v7454
        %v7463 = vmul.f32 %v7434, %v7455
        %v7464 = vmul.f32 %v7437, %v7456
        %v7465 = vmul.f32 %v7440, %v7457
        %v7466 = vmul.f32 %v7443, %v7458
        %v7467 = vmul.f32 %v7446, %v7459
        %v7468 = vmul.f32 %v7449, %v7460
        %v7469 = vmul.f32 %v7452, %v7461
        %v7470 = vld [vmem:[%s45] sm:$0x1]
        %v7472 = vperm.slane %v7470, 0
        %v7474 = vadd.f32 %v7462, %v7472
        %v7475 = vadd.f32 %v7463, %v7472
        %v7476 = vadd.f32 %v7464, %v7472
        %v7477 = vadd.f32 %v7465, %v7472
        %v7478 = vadd.f32 %v7466, %v7472
        %v7479 = vadd.f32 %v7467, %v7472
        %v7480 = vadd.f32 %v7468, %v7472
        %v7481 = vadd.f32 %v7469, %v7472
        %7482 = vmatpush.msra.mxu0 0.0
        %7483 = vmatpush.msra.mxu0 0.0
        %7484 = vmatpush.msra.mxu0 0.0
        %7485 = vmatpush.msra.mxu0 0.0
        %7486 = vmatpush.msra.mxu0 0.0
        %7487 = vmatpush.msra.mxu0 0.0
        %7488 = vmatpush.msra.mxu0 0.0
        %7489 = vmatpush.msra.mxu0 0.0
        %7490 = vmatpush.msra.mxu0 %v7481
        %7491 = vmatpush.msra.mxu0 %v7480
        %7492 = vmatpush.msra.mxu0 %v7479
        %7493 = vmatpush.msra.mxu0 %v7478
        %7494 = vmatpush.msra.mxu0 %v7477
        %7495 = vmatpush.msra.mxu0 %v7476
        %7496 = vmatpush.msra.mxu0 %v7475
        %7497 = vmatpush.msra.mxu0 %v7474
        %7498 = vmatmul.f32.gmra.mxu0 %v4820
        %v7499 = vpop.f32.mrf.mxu0
        %v7500 = vadd.f32 0.0, %v7499
        %7501 = vdwg.mxu0
        %v7502 = vsel %vm4842, %v7500, 0.0
        %7503 = vadd.xlane.f32.xlu0 %v7502
        %v7504 = vpop.xlane.xlu0 %7503
        %v7505 = vmul.f32 %v7504, 0.001953125
        %v7507 = vsel %vm4872, %v7505, 0
        %7509 = vmatpush.msra.mxu0 0.0
        %7510 = vmatpush.msra.mxu0 0.0
        %7511 = vmatpush.msra.mxu0 0.0
        %7512 = vmatpush.msra.mxu0 0.0
        %7513 = vmatpush.msra.mxu0 0.0
        %7514 = vmatpush.msra.mxu0 0.0
        %7515 = vmatpush.msra.mxu0 0.0
        %7516 = vmatpush.msra.mxu0 0.0
        %7517 = vmatpush.msra.mxu0 0.0
        %7518 = vmatpush.msra.mxu0 0.0
        %7519 = vmatpush.msra.mxu0 0.0
        %7520 = vmatpush.msra.mxu0 0.0
        %7521 = vmatpush.msra.mxu0 0.0
        %7522 = vmatpush.msra.mxu0 0.0
        %7523 = vmatpush.msra.mxu0 0.0
        %7524 = vmatpush.msra.mxu0 %v7507
        %7525 = vmatmul.f32.gmra.mxu0 %v4849
        %v7526 = vpop.f32.mrf.mxu0
        %v7527 = vadd.f32 0.0, %v7526
        %7528 = vmatmul.f32.gmra.mxu0 %v4852
        %v7529 = vpop.f32.mrf.mxu0
        %v7530 = vadd.f32 0.0, %v7529
        %7531 = vmatmul.f32.gmra.mxu0 %v4855
        %v7532 = vpop.f32.mrf.mxu0
        %v7533 = vadd.f32 0.0, %v7532
        %7534 = vmatmul.f32.gmra.mxu0 %v4858
        %v7535 = vpop.f32.mrf.mxu0
        %v7536 = vadd.f32 0.0, %v7535
        %7537 = vmatmul.f32.gmra.mxu0 %v4861
        %v7538 = vpop.f32.mrf.mxu0
        %v7539 = vadd.f32 0.0, %v7538
        %7540 = vmatmul.f32.gmra.mxu0 %v4864
        %v7541 = vpop.f32.mrf.mxu0
        %v7542 = vadd.f32 0.0, %v7541
        %7543 = vmatmul.f32.gmra.mxu0 %v4867
        %v7544 = vpop.f32.mrf.mxu0
        %v7545 = vadd.f32 0.0, %v7544
        %7546 = vmatmul.f32.gmra.mxu0 %v4870
        %v7547 = vpop.f32.mrf.mxu0
        %v7548 = vadd.f32 0.0, %v7547
        %7549 = vdwg.mxu0
        %v7550 = vsub.f32 %v7474, %v7527
        %v7551 = vsub.f32 %v7475, %v7530
        %v7552 = vsub.f32 %v7476, %v7533
        %v7553 = vsub.f32 %v7477, %v7536
        %v7554 = vsub.f32 %v7478, %v7539
        %v7555 = vsub.f32 %v7479, %v7542
        %v7556 = vsub.f32 %v7480, %v7545
        %v7557 = vsub.f32 %v7481, %v7548
        %v7558 = vmul.f32 %v7550, %v7550
        %v7559 = vmul.f32 %v7551, %v7551
        %v7560 = vmul.f32 %v7552, %v7552
        %v7561 = vmul.f32 %v7553, %v7553
        %v7562 = vmul.f32 %v7554, %v7554
        %v7563 = vmul.f32 %v7555, %v7555
        %v7564 = vmul.f32 %v7556, %v7556
        %v7565 = vmul.f32 %v7557, %v7557
        %7566 = vmatpush.msra.mxu0 0.0
        %7567 = vmatpush.msra.mxu0 0.0
        %7568 = vmatpush.msra.mxu0 0.0
        %7569 = vmatpush.msra.mxu0 0.0
        %7570 = vmatpush.msra.mxu0 0.0
        %7571 = vmatpush.msra.mxu0 0.0
        %7572 = vmatpush.msra.mxu0 0.0
        %7573 = vmatpush.msra.mxu0 0.0
        %7574 = vmatpush.msra.mxu0 %v7565
        %7575 = vmatpush.msra.mxu0 %v7564
        %7576 = vmatpush.msra.mxu0 %v7563
        %7577 = vmatpush.msra.mxu0 %v7562
        %7578 = vmatpush.msra.mxu0 %v7561
        %7579 = vmatpush.msra.mxu0 %v7560
        %7580 = vmatpush.msra.mxu0 %v7559
        %7581 = vmatpush.msra.mxu0 %v7558
        %7582 = vmatmul.f32.gmra.mxu0 %v4820
        %v7583 = vpop.f32.mrf.mxu0
        %v7584 = vadd.f32 0.0, %v7583
        %7585 = vdwg.mxu0
        %v7586 = vsel %vm4842, %v7584, 0.0
        %7587 = vadd.xlane.f32.xlu0 %v7586
        %v7588 = vpop.xlane.xlu0 %7587
        %v7589 = vmul.f32 %v7588, 0.001953125
        %v7591 = vsel %vm4872, %v7589, 0
        %7593 = vmatpush.msra.mxu0 0.0
        %7594 = vmatpush.msra.mxu0 0.0
        %7595 = vmatpush.msra.mxu0 0.0
        %7596 = vmatpush.msra.mxu0 0.0
        %7597 = vmatpush.msra.mxu0 0.0
        %7598 = vmatpush.msra.mxu0 0.0
        %7599 = vmatpush.msra.mxu0 0.0
        %7600 = vmatpush.msra.mxu0 0.0
        %7601 = vmatpush.msra.mxu0 0.0
        %7602 = vmatpush.msra.mxu0 0.0
        %7603 = vmatpush.msra.mxu0 0.0
        %7604 = vmatpush.msra.mxu0 0.0
        %7605 = vmatpush.msra.mxu0 0.0
        %7606 = vmatpush.msra.mxu0 0.0
        %7607 = vmatpush.msra.mxu0 0.0
        %7608 = vmatpush.msra.mxu0 %v7591
        %7609 = vmatmul.f32.gmra.mxu0 %v4849
        %v7610 = vpop.f32.mrf.mxu0
        %v7611 = vadd.f32 1e-05, %v7610
        %7612 = vmatmul.f32.gmra.mxu0 %v4852
        %v7613 = vpop.f32.mrf.mxu0
        %v7614 = vadd.f32 1e-05, %v7613
        %7615 = vmatmul.f32.gmra.mxu0 %v4855
        %v7616 = vpop.f32.mrf.mxu0
        %v7617 = vadd.f32 1e-05, %v7616
        %7618 = vmatmul.f32.gmra.mxu0 %v4858
        %v7619 = vpop.f32.mrf.mxu0
        %v7620 = vadd.f32 1e-05, %v7619
        %7621 = vmatmul.f32.gmra.mxu0 %v4861
        %v7622 = vpop.f32.mrf.mxu0
        %v7623 = vadd.f32 1e-05, %v7622
        %7624 = vmatmul.f32.gmra.mxu0 %v4864
        %v7625 = vpop.f32.mrf.mxu0
        %v7626 = vadd.f32 1e-05, %v7625
        %7627 = vmatmul.f32.gmra.mxu0 %v4867
        %v7628 = vpop.f32.mrf.mxu0
        %v7629 = vadd.f32 1e-05, %v7628
        %7630 = vmatmul.f32.gmra.mxu0 %v4870
        %v7631 = vpop.f32.mrf.mxu0
        %v7632 = vadd.f32 1e-05, %v7631
        %7633 = vdwg.mxu0
        %v7634 = vrsqrt.pop %v7611
        %v7635 = vmul.f32 %v7634, %v7611
        %v7636 = vmul.f32 %v7635, %v7634
        %v7637 = vmul.f32 0.5, %v7636
        %v7638 = vsub.f32 1.5, %v7637
        %v7639 = vmul.f32 %v7634, %v7638
        %vm7640 = vweird.f32 %v7611
        %vm7641 = vweird.f32 %v7634
        %vm7642 = vmor %vm7640, %vm7641
        %v7643 = vsel %vm7642, %v7634, %v7639
        %v7644 = vrsqrt.pop %v7614
        %v7645 = vmul.f32 %v7644, %v7614
        %v7646 = vmul.f32 %v7645, %v7644
        %v7647 = vmul.f32 0.5, %v7646
        %v7648 = vsub.f32 1.5, %v7647
        %v7649 = vmul.f32 %v7644, %v7648
        %vm7650 = vweird.f32 %v7614
        %vm7651 = vweird.f32 %v7644
        %vm7652 = vmor %vm7650, %vm7651
        %v7653 = vsel %vm7652, %v7644, %v7649
        %v7654 = vrsqrt.pop %v7617
        %v7655 = vmul.f32 %v7654, %v7617
        %v7656 = vmul.f32 %v7655, %v7654
        %v7657 = vmul.f32 0.5, %v7656
        %v7658 = vsub.f32 1.5, %v7657
        %v7659 = vmul.f32 %v7654, %v7658
        %vm7660 = vweird.f32 %v7617
        %vm7661 = vweird.f32 %v7654
        %vm7662 = vmor %vm7660, %vm7661
        %v7663 = vsel %vm7662, %v7654, %v7659
        %v7664 = vrsqrt.pop %v7620
        %v7665 = vmul.f32 %v7664, %v7620
        %v7666 = vmul.f32 %v7665, %v7664
        %v7667 = vmul.f32 0.5, %v7666
        %v7668 = vsub.f32 1.5, %v7667
        %v7669 = vmul.f32 %v7664, %v7668
        %vm7670 = vweird.f32 %v7620
        %vm7671 = vweird.f32 %v7664
        %vm7672 = vmor %vm7670, %vm7671
        %v7673 = vsel %vm7672, %v7664, %v7669
        %v7674 = vrsqrt.pop %v7623
        %v7675 = vmul.f32 %v7674, %v7623
        %v7676 = vmul.f32 %v7675, %v7674
        %v7677 = vmul.f32 0.5, %v7676
        %v7678 = vsub.f32 1.5, %v7677
        %v7679 = vmul.f32 %v7674, %v7678
        %vm7680 = vweird.f32 %v7623
        %vm7681 = vweird.f32 %v7674
        %vm7682 = vmor %vm7680, %vm7681
        %v7683 = vsel %vm7682, %v7674, %v7679
        %v7684 = vrsqrt.pop %v7626
        %v7685 = vmul.f32 %v7684, %v7626
        %v7686 = vmul.f32 %v7685, %v7684
        %v7687 = vmul.f32 0.5, %v7686
        %v7688 = vsub.f32 1.5, %v7687
        %v7689 = vmul.f32 %v7684, %v7688
        %vm7690 = vweird.f32 %v7626
        %vm7691 = vweird.f32 %v7684
        %vm7692 = vmor %vm7690, %vm7691
        %v7693 = vsel %vm7692, %v7684, %v7689
        %v7694 = vrsqrt.pop %v7629
        %v7695 = vmul.f32 %v7694, %v7629
        %v7696 = vmul.f32 %v7695, %v7694
        %v7697 = vmul.f32 0.5, %v7696
        %v7698 = vsub.f32 1.5, %v7697
        %v7699 = vmul.f32 %v7694, %v7698
        %vm7700 = vweird.f32 %v7629
        %vm7701 = vweird.f32 %v7694
        %vm7702 = vmor %vm7700, %vm7701
        %v7703 = vsel %vm7702, %v7694, %v7699
        %v7704 = vrsqrt.pop %v7632
        %v7705 = vmul.f32 %v7704, %v7632
        %v7706 = vmul.f32 %v7705, %v7704
        %v7707 = vmul.f32 0.5, %v7706
        %v7708 = vsub.f32 1.5, %v7707
        %v7709 = vmul.f32 %v7704, %v7708
        %vm7710 = vweird.f32 %v7632
        %vm7711 = vweird.f32 %v7704
        %vm7712 = vmor %vm7710, %vm7711
        %v7713 = vsel %vm7712, %v7704, %v7709
        %v7714 = vmul.f32 %v7550, %v7643
        %v7715 = vmul.f32 %v7551, %v7653
        %v7716 = vmul.f32 %v7552, %v7663
        %v7717 = vmul.f32 %v7553, %v7673
        %v7718 = vmul.f32 %v7554, %v7683
        %v7719 = vmul.f32 %v7555, %v7693
        %v7720 = vmul.f32 %v7556, %v7703
        %v7721 = vmul.f32 %v7557, %v7713
        %v7722 = vld [vmem:[%s47] sm:$0x1]
        %v7724 = vperm.slane %v7722, 0
        %v7726 = vmul.f32 %v7714, %v7724
        %v7727 = vmul.f32 %v7715, %v7724
        %v7728 = vmul.f32 %v7716, %v7724
        %v7729 = vmul.f32 %v7717, %v7724
        %v7730 = vmul.f32 %v7718, %v7724
        %v7731 = vmul.f32 %v7719, %v7724
        %v7732 = vmul.f32 %v7720, %v7724
        %v7733 = vmul.f32 %v7721, %v7724
        %v7734 = vld [vmem:[%s49] sm:$0x1]
        %v7736 = vperm.slane %v7734, 0
        %v7738 = vadd.f32 %v7726, %v7736
        %v7739 = vadd.f32 %v7727, %v7736
        %v7740 = vadd.f32 %v7728, %v7736
        %v7741 = vadd.f32 %v7729, %v7736
        %v7742 = vadd.f32 %v7730, %v7736
        %v7743 = vadd.f32 %v7731, %v7736
        %v7744 = vadd.f32 %v7732, %v7736
        %v7745 = vadd.f32 %v7733, %v7736
        %v7746 = vld [vmem:[%s51] sm:$0xff]
        %v7747 = vld [vmem:[%s51 + $0x8] sm:$0xff]
        %v7748 = vld [vmem:[%s51 + $0x10] sm:$0xff]
        %v7749 = vld [vmem:[%s51 + $0x18] sm:$0xff]
        %v7751 = vsel %vm990, %v7738, 0
        %v7754 = vsel %vm990, %v7739, 0
        %v7757 = vsel %vm990, %v7740, 0
        %v7760 = vsel %vm990, %v7741, 0
        %v7763 = vsel %vm990, %v7742, 0
        %v7766 = vsel %vm990, %v7743, 0
        %v7769 = vsel %vm990, %v7744, 0
        %v7772 = vsel %vm990, %v7745, 0
        %7774 = vmatpush.msra.mxu0 0.0
        %7775 = vmatpush.msra.mxu0 0.0
        %7776 = vmatpush.msra.mxu0 0.0
        %7777 = vmatpush.msra.mxu0 0.0
        %7778 = vmatpush.msra.mxu0 0.0
        %7779 = vmatpush.msra.mxu0 0.0
        %7780 = vmatpush.msra.mxu0 0.0
        %7781 = vmatpush.msra.mxu0 0.0
        %7782 = vmatpush.msra.mxu0 0.0
        %7783 = vmatpush.msra.mxu0 0.0
        %7784 = vmatpush.msra.mxu0 0.0
        %7785 = vmatpush.msra.mxu0 0.0
        %7786 = vmatpush.msra.mxu0 %v7749
        %7787 = vmatpush.msra.mxu0 %v7748
        %7788 = vmatpush.msra.mxu0 %v7747
        %7789 = vmatpush.msra.mxu0 %v7746
        %7790 = vmatmul.f32.gmra.mxu0 %v7751
        %v7791 = vpop.f32.mrf.mxu0
        %v7792 = vadd.f32 0.0, %v7791
        %7793 = vmatmul.f32.gmra.mxu0 %v7754
        %v7794 = vpop.f32.mrf.mxu0
        %v7795 = vadd.f32 0.0, %v7794
        %7796 = vmatmul.f32.gmra.mxu0 %v7757
        %v7797 = vpop.f32.mrf.mxu0
        %v7798 = vadd.f32 0.0, %v7797
        %7799 = vmatmul.f32.gmra.mxu0 %v7760
        %v7800 = vpop.f32.mrf.mxu0
        %v7801 = vadd.f32 0.0, %v7800
        %7802 = vmatmul.f32.gmra.mxu0 %v7763
        %v7803 = vpop.f32.mrf.mxu0
        %v7804 = vadd.f32 0.0, %v7803
        %7805 = vmatmul.f32.gmra.mxu0 %v7766
        %v7806 = vpop.f32.mrf.mxu0
        %v7807 = vadd.f32 0.0, %v7806
        %7808 = vmatmul.f32.gmra.mxu0 %v7769
        %v7809 = vpop.f32.mrf.mxu0
        %v7810 = vadd.f32 0.0, %v7809
        %7811 = vmatmul.f32.gmra.mxu0 %v7772
        %v7812 = vpop.f32.mrf.mxu0
        %v7813 = vadd.f32 0.0, %v7812
        %7814 = vdwg.mxu0
        %v7815 = vadd.f32 %v7011, %v7792
        %v7816 = vadd.f32 %v7012, %v7795
        %v7817 = vadd.f32 %v7013, %v7798
        %v7818 = vadd.f32 %v7014, %v7801
        %v7819 = vadd.f32 %v7015, %v7804
        %v7820 = vadd.f32 %v7016, %v7807
        %v7821 = vadd.f32 %v7017, %v7810
        %v7822 = vadd.f32 %v7018, %v7813
        %v7823 = vld [vmem:[%s53] sm:$0xff]
        %v7824 = vld [vmem:[%s53 + $0x8] sm:$0xff]
        %v7825 = vld [vmem:[%s53 + $0x10] sm:$0xff]
        %v7826 = vld [vmem:[%s53 + $0x18] sm:$0xff]
        %v7828 = vsel %vm990, %v7815, 0
        %v7831 = vsel %vm990, %v7816, 0
        %v7834 = vsel %vm990, %v7817, 0
        %v7837 = vsel %vm990, %v7818, 0
        %v7840 = vsel %vm990, %v7819, 0
        %v7843 = vsel %vm990, %v7820, 0
        %v7846 = vsel %vm990, %v7821, 0
        %v7849 = vsel %vm990, %v7822, 0
        %7851 = vmatpush.msra.mxu0 0.0
        %7852 = vmatpush.msra.mxu0 0.0
        %7853 = vmatpush.msra.mxu0 0.0
        %7854 = vmatpush.msra.mxu0 0.0
        %7855 = vmatpush.msra.mxu0 0.0
        %7856 = vmatpush.msra.mxu0 0.0
        %7857 = vmatpush.msra.mxu0 0.0
        %7858 = vmatpush.msra.mxu0 0.0
        %7859 = vmatpush.msra.mxu0 0.0
        %7860 = vmatpush.msra.mxu0 0.0
        %7861 = vmatpush.msra.mxu0 0.0
        %7862 = vmatpush.msra.mxu0 0.0
        %7863 = vmatpush.msra.mxu0 %v7826
        %7864 = vmatpush.msra.mxu0 %v7825
        %7865 = vmatpush.msra.mxu0 %v7824
        %7866 = vmatpush.msra.mxu0 %v7823
        %7867 = vmatmul.f32.gmra.mxu0 %v7828
        %v7868 = vpop.f32.mrf.mxu0
        %v7869 = vadd.f32 0.0, %v7868
        %7870 = vmatmul.f32.gmra.mxu0 %v7831
        %v7871 = vpop.f32.mrf.mxu0
        %v7872 = vadd.f32 0.0, %v7871
        %7873 = vmatmul.f32.gmra.mxu0 %v7834
        %v7874 = vpop.f32.mrf.mxu0
        %v7875 = vadd.f32 0.0, %v7874
        %7876 = vmatmul.f32.gmra.mxu0 %v7837
        %v7877 = vpop.f32.mrf.mxu0
        %v7878 = vadd.f32 0.0, %v7877
        %7879 = vmatmul.f32.gmra.mxu0 %v7840
        %v7880 = vpop.f32.mrf.mxu0
        %v7881 = vadd.f32 0.0, %v7880
        %7882 = vmatmul.f32.gmra.mxu0 %v7843
        %v7883 = vpop.f32.mrf.mxu0
        %v7884 = vadd.f32 0.0, %v7883
        %7885 = vmatmul.f32.gmra.mxu0 %v7846
        %v7886 = vpop.f32.mrf.mxu0
        %v7887 = vadd.f32 0.0, %v7886
        %7888 = vmatmul.f32.gmra.mxu0 %v7849
        %v7889 = vpop.f32.mrf.mxu0
        %v7890 = vadd.f32 0.0, %v7889
        %7891 = vdwg.mxu0
        %v7892 = vmul.f32 %v7869, 0.5
        %v7893 = vmul.f32 %v7872, 0.5
        %v7894 = vmul.f32 %v7875, 0.5
        %v7895 = vmul.f32 %v7878, 0.5
        %v7896 = vmul.f32 %v7881, 0.5
        %v7897 = vmul.f32 %v7884, 0.5
        %v7898 = vmul.f32 %v7887, 0.5
        %v7899 = vmul.f32 %v7890, 0.5
        %v7900 = vmul.f32 %v7869, 0.70710677
        %v7901 = vmul.f32 %v7872, 0.70710677
        %v7902 = vmul.f32 %v7875, 0.70710677
        %v7903 = vmul.f32 %v7878, 0.70710677
        %v7904 = vmul.f32 %v7881, 0.70710677
        %v7905 = vmul.f32 %v7884, 0.70710677
        %v7906 = vmul.f32 %v7887, 0.70710677
        %v7907 = vmul.f32 %v7890, 0.70710677
        %v7908 = vand.u32 2147483647, %v7900
        %v7909 = vand.u32 2147483647, %v7901
        %v7910 = vand.u32 2147483647, %v7902
        %v7911 = vand.u32 2147483647, %v7903
        %v7912 = vand.u32 2147483647, %v7904
        %v7913 = vand.u32 2147483647, %v7905
        %v7914 = vand.u32 2147483647, %v7906
        %v7915 = vand.u32 2147483647, %v7907
        %v7916 = vmul.f32 %v7908, 0.3275911
        %v7917 = vmul.f32 %v7909, 0.3275911
        %v7918 = vmul.f32 %v7910, 0.3275911
        %v7919 = vmul.f32 %v7911, 0.3275911
        %v7920 = vmul.f32 %v7912, 0.3275911
        %v7921 = vmul.f32 %v7913, 0.3275911
        %v7922 = vmul.f32 %v7914, 0.3275911
        %v7923 = vmul.f32 %v7915, 0.3275911
        %v7924 = vadd.f32 %v7916, 1.0
        %v7925 = vadd.f32 %v7917, 1.0
        %v7926 = vadd.f32 %v7918, 1.0
        %v7927 = vadd.f32 %v7919, 1.0
        %v7928 = vadd.f32 %v7920, 1.0
        %v7929 = vadd.f32 %v7921, 1.0
        %v7930 = vadd.f32 %v7922, 1.0
        %v7931 = vadd.f32 %v7923, 1.0
        %v7932 = vrcp.pop %v7924
        %v7933 = vmul.f32 %v7924, %v7932
        %v7934 = vsub.f32 1.0, %v7933
        %v7935 = vmul.f32 %v7932, %v7934
        %v7936 = vadd.f32 %v7932, %v7935
        %vm7937 = vweird.f32 %v7924
        %vm7938 = vweird.f32 %v7932
        %vm7939 = vmor %vm7937, %vm7938
        %v7940 = vsel %vm7939, %v7932, %v7936
        %v7941 = vand.u32 2147483647, %v7924
        %vm7942 = vcmp.eq.f32.partialorder %v7941, 8.507059e+37
        %v7943 = vand.u32 %v7924, 2147483648
        %v7944 = vor.u32 1.1754944e-38, %v7943
        %v7945 = vsel %vm7942, %v7944, %v7940
        %v7946 = vmul.f32 1.0, %v7945
        %v7947 = vrcp.pop %v7925
        %v7948 = vmul.f32 %v7925, %v7947
        %v7949 = vsub.f32 1.0, %v7948
        %v7950 = vmul.f32 %v7947, %v7949
        %v7951 = vadd.f32 %v7947, %v7950
        %vm7952 = vweird.f32 %v7925
        %vm7953 = vweird.f32 %v7947
        %vm7954 = vmor %vm7952, %vm7953
        %v7955 = vsel %vm7954, %v7947, %v7951
        %v7956 = vand.u32 2147483647, %v7925
        %vm7957 = vcmp.eq.f32.partialorder %v7956, 8.507059e+37
        %v7958 = vand.u32 %v7925, 2147483648
        %v7959 = vor.u32 1.1754944e-38, %v7958
        %v7960 = vsel %vm7957, %v7959, %v7955
        %v7961 = vmul.f32 1.0, %v7960
        %v7962 = vrcp.pop %v7926
        %v7963 = vmul.f32 %v7926, %v7962
        %v7964 = vsub.f32 1.0, %v7963
        %v7965 = vmul.f32 %v7962, %v7964
        %v7966 = vadd.f32 %v7962, %v7965
        %vm7967 = vweird.f32 %v7926
        %vm7968 = vweird.f32 %v7962
        %vm7969 = vmor %vm7967, %vm7968
        %v7970 = vsel %vm7969, %v7962, %v7966
        %v7971 = vand.u32 2147483647, %v7926
        %vm7972 = vcmp.eq.f32.partialorder %v7971, 8.507059e+37
        %v7973 = vand.u32 %v7926, 2147483648
        %v7974 = vor.u32 1.1754944e-38, %v7973
        %v7975 = vsel %vm7972, %v7974, %v7970
        %v7976 = vmul.f32 1.0, %v7975
        %v7977 = vrcp.pop %v7927
        %v7978 = vmul.f32 %v7927, %v7977
        %v7979 = vsub.f32 1.0, %v7978
        %v7980 = vmul.f32 %v7977, %v7979
        %v7981 = vadd.f32 %v7977, %v7980
        %vm7982 = vweird.f32 %v7927
        %vm7983 = vweird.f32 %v7977
        %vm7984 = vmor %vm7982, %vm7983
        %v7985 = vsel %vm7984, %v7977, %v7981
        %v7986 = vand.u32 2147483647, %v7927
        %vm7987 = vcmp.eq.f32.partialorder %v7986, 8.507059e+37
        %v7988 = vand.u32 %v7927, 2147483648
        %v7989 = vor.u32 1.1754944e-38, %v7988
        %v7990 = vsel %vm7987, %v7989, %v7985
        %v7991 = vmul.f32 1.0, %v7990
        %v7992 = vrcp.pop %v7928
        %v7993 = vmul.f32 %v7928, %v7992
        %v7994 = vsub.f32 1.0, %v7993
        %v7995 = vmul.f32 %v7992, %v7994
        %v7996 = vadd.f32 %v7992, %v7995
        %vm7997 = vweird.f32 %v7928
        %vm7998 = vweird.f32 %v7992
        %vm7999 = vmor %vm7997, %vm7998
        %v8000 = vsel %vm7999, %v7992, %v7996
        %v8001 = vand.u32 2147483647, %v7928
        %vm8002 = vcmp.eq.f32.partialorder %v8001, 8.507059e+37
        %v8003 = vand.u32 %v7928, 2147483648
        %v8004 = vor.u32 1.1754944e-38, %v8003
        %v8005 = vsel %vm8002, %v8004, %v8000
        %v8006 = vmul.f32 1.0, %v8005
        %v8007 = vrcp.pop %v7929
        %v8008 = vmul.f32 %v7929, %v8007
        %v8009 = vsub.f32 1.0, %v8008
        %v8010 = vmul.f32 %v8007, %v8009
        %v8011 = vadd.f32 %v8007, %v8010
        %vm8012 = vweird.f32 %v7929
        %vm8013 = vweird.f32 %v8007
        %vm8014 = vmor %vm8012, %vm8013
        %v8015 = vsel %vm8014, %v8007, %v8011
        %v8016 = vand.u32 2147483647, %v7929
        %vm8017 = vcmp.eq.f32.partialorder %v8016, 8.507059e+37
        %v8018 = vand.u32 %v7929, 2147483648
        %v8019 = vor.u32 1.1754944e-38, %v8018
        %v8020 = vsel %vm8017, %v8019, %v8015
        %v8021 = vmul.f32 1.0, %v8020
        %v8022 = vrcp.pop %v7930
        %v8023 = vmul.f32 %v7930, %v8022
        %v8024 = vsub.f32 1.0, %v8023
        %v8025 = vmul.f32 %v8022, %v8024
        %v8026 = vadd.f32 %v8022, %v8025
        %vm8027 = vweird.f32 %v7930
        %vm8028 = vweird.f32 %v8022
        %vm8029 = vmor %vm8027, %vm8028
        %v8030 = vsel %vm8029, %v8022, %v8026
        %v8031 = vand.u32 2147483647, %v7930
        %vm8032 = vcmp.eq.f32.partialorder %v8031, 8.507059e+37
        %v8033 = vand.u32 %v7930, 2147483648
        %v8034 = vor.u32 1.1754944e-38, %v8033
        %v8035 = vsel %vm8032, %v8034, %v8030
        %v8036 = vmul.f32 1.0, %v8035
        %v8037 = vrcp.pop %v7931
        %v8038 = vmul.f32 %v7931, %v8037
        %v8039 = vsub.f32 1.0, %v8038
        %v8040 = vmul.f32 %v8037, %v8039
        %v8041 = vadd.f32 %v8037, %v8040
        %vm8042 = vweird.f32 %v7931
        %vm8043 = vweird.f32 %v8037
        %vm8044 = vmor %vm8042, %vm8043
        %v8045 = vsel %vm8044, %v8037, %v8041
        %v8046 = vand.u32 2147483647, %v7931
        %vm8047 = vcmp.eq.f32.partialorder %v8046, 8.507059e+37
        %v8048 = vand.u32 %v7931, 2147483648
        %v8049 = vor.u32 1.1754944e-38, %v8048
        %v8050 = vsel %vm8047, %v8049, %v8045
        %v8051 = vmul.f32 1.0, %v8050
        %v8052 = vmul.f32 %v7946, 1.0614054
        %v8053 = vmul.f32 %v7961, 1.0614054
        %v8054 = vmul.f32 %v7976, 1.0614054
        %v8055 = vmul.f32 %v7991, 1.0614054
        %v8056 = vmul.f32 %v8006, 1.0614054
        %v8057 = vmul.f32 %v8021, 1.0614054
        %v8058 = vmul.f32 %v8036, 1.0614054
        %v8059 = vmul.f32 %v8051, 1.0614054
        %v8060 = vsub.f32 %v8052, 1.4531521
        %v8061 = vsub.f32 %v8053, 1.4531521
        %v8062 = vsub.f32 %v8054, 1.4531521
        %v8063 = vsub.f32 %v8055, 1.4531521
        %v8064 = vsub.f32 %v8056, 1.4531521
        %v8065 = vsub.f32 %v8057, 1.4531521
        %v8066 = vsub.f32 %v8058, 1.4531521
        %v8067 = vsub.f32 %v8059, 1.4531521
        %v8068 = vmul.f32 %v8060, %v7946
        %v8069 = vmul.f32 %v8061, %v7961
        %v8070 = vmul.f32 %v8062, %v7976
        %v8071 = vmul.f32 %v8063, %v7991
        %v8072 = vmul.f32 %v8064, %v8006
        %v8073 = vmul.f32 %v8065, %v8021
        %v8074 = vmul.f32 %v8066, %v8036
        %v8075 = vmul.f32 %v8067, %v8051
        %v8076 = vadd.f32 %v8068, 1.4214138
        %v8077 = vadd.f32 %v8069, 1.4214138
        %v8078 = vadd.f32 %v8070, 1.4214138
        %v8079 = vadd.f32 %v8071, 1.4214138
        %v8080 = vadd.f32 %v8072, 1.4214138
        %v8081 = vadd.f32 %v8073, 1.4214138
        %v8082 = vadd.f32 %v8074, 1.4214138
        %v8083 = vadd.f32 %v8075, 1.4214138
        %v8084 = vmul.f32 %v8076, %v7946
        %v8085 = vmul.f32 %v8077, %v7961
        %v8086 = vmul.f32 %v8078, %v7976
        %v8087 = vmul.f32 %v8079, %v7991
        %v8088 = vmul.f32 %v8080, %v8006
        %v8089 = vmul.f32 %v8081, %v8021
        %v8090 = vmul.f32 %v8082, %v8036
        %v8091 = vmul.f32 %v8083, %v8051
        %v8092 = vsub.f32 %v8084, 0.28449672
        %v8093 = vsub.f32 %v8085, 0.28449672
        %v8094 = vsub.f32 %v8086, 0.28449672
        %v8095 = vsub.f32 %v8087, 0.28449672
        %v8096 = vsub.f32 %v8088, 0.28449672
        %v8097 = vsub.f32 %v8089, 0.28449672
        %v8098 = vsub.f32 %v8090, 0.28449672
        %v8099 = vsub.f32 %v8091, 0.28449672
        %v8100 = vmul.f32 %v8092, %v7946
        %v8101 = vmul.f32 %v8093, %v7961
        %v8102 = vmul.f32 %v8094, %v7976
        %v8103 = vmul.f32 %v8095, %v7991
        %v8104 = vmul.f32 %v8096, %v8006
        %v8105 = vmul.f32 %v8097, %v8021
        %v8106 = vmul.f32 %v8098, %v8036
        %v8107 = vmul.f32 %v8099, %v8051
        %v8108 = vadd.f32 %v8100, 0.2548296
        %v8109 = vadd.f32 %v8101, 0.2548296
        %v8110 = vadd.f32 %v8102, 0.2548296
        %v8111 = vadd.f32 %v8103, 0.2548296
        %v8112 = vadd.f32 %v8104, 0.2548296
        %v8113 = vadd.f32 %v8105, 0.2548296
        %v8114 = vadd.f32 %v8106, 0.2548296
        %v8115 = vadd.f32 %v8107, 0.2548296
        %v8116 = vmul.f32 %v8108, %v7946
        %v8117 = vmul.f32 %v8109, %v7961
        %v8118 = vmul.f32 %v8110, %v7976
        %v8119 = vmul.f32 %v8111, %v7991
        %v8120 = vmul.f32 %v8112, %v8006
        %v8121 = vmul.f32 %v8113, %v8021
        %v8122 = vmul.f32 %v8114, %v8036
        %v8123 = vmul.f32 %v8115, %v8051
        %v8124 = vsub.f32 0.0, %v7900
        %v8125 = vsub.f32 0.0, %v7901
        %v8126 = vsub.f32 0.0, %v7902
        %v8127 = vsub.f32 0.0, %v7903
        %v8128 = vsub.f32 0.0, %v7904
        %v8129 = vsub.f32 0.0, %v7905
        %v8130 = vsub.f32 0.0, %v7906
        %v8131 = vsub.f32 0.0, %v7907
        %v8132 = vmul.f32 %v8124, %v7900
        %v8133 = vmul.f32 %v8125, %v7901
        %v8134 = vmul.f32 %v8126, %v7902
        %v8135 = vmul.f32 %v8127, %v7903
        %v8136 = vmul.f32 %v8128, %v7904
        %v8137 = vmul.f32 %v8129, %v7905
        %v8138 = vmul.f32 %v8130, %v7906
        %v8139 = vmul.f32 %v8131, %v7907
        %v8140 = vmul.f32 %v8132, 1.442695
        %v8141 = vpow.pop %v8140
        %v8142 = vmul.f32 %v8133, 1.442695
        %v8143 = vpow.pop %v8142
        %v8144 = vmul.f32 %v8134, 1.442695
        %v8145 = vpow.pop %v8144
        %v8146 = vmul.f32 %v8135, 1.442695
        %v8147 = vpow.pop %v8146
        %v8148 = vmul.f32 %v8136, 1.442695
        %v8149 = vpow.pop %v8148
        %v8150 = vmul.f32 %v8137, 1.442695
        %v8151 = vpow.pop %v8150
        %v8152 = vmul.f32 %v8138, 1.442695
        %v8153 = vpow.pop %v8152
        %v8154 = vmul.f32 %v8139, 1.442695
        %v8155 = vpow.pop %v8154
        %v8156 = vmul.f32 %v8116, %v8141
        %v8157 = vmul.f32 %v8117, %v8143
        %v8158 = vmul.f32 %v8118, %v8145
        %v8159 = vmul.f32 %v8119, %v8147
        %v8160 = vmul.f32 %v8120, %v8149
        %v8161 = vmul.f32 %v8121, %v8151
        %v8162 = vmul.f32 %v8122, %v8153
        %v8163 = vmul.f32 %v8123, %v8155
        %v8164 = vsub.f32 1.0, %v8156
        %v8165 = vsub.f32 1.0, %v8157
        %v8166 = vsub.f32 1.0, %v8158
        %v8167 = vsub.f32 1.0, %v8159
        %v8168 = vsub.f32 1.0, %v8160
        %v8169 = vsub.f32 1.0, %v8161
        %v8170 = vsub.f32 1.0, %v8162
        %v8171 = vsub.f32 1.0, %v8163
        %vm8172 = vcmp.ge.f32.partialorder %v7900, 0.0
        %vm8173 = vcmp.ge.f32.partialorder %v7901, 0.0
        %vm8174 = vcmp.ge.f32.partialorder %v7902, 0.0
        %vm8175 = vcmp.ge.f32.partialorder %v7903, 0.0
        %vm8176 = vcmp.ge.f32.partialorder %v7904, 0.0
        %vm8177 = vcmp.ge.f32.partialorder %v7905, 0.0
        %vm8178 = vcmp.ge.f32.partialorder %v7906, 0.0
        %vm8179 = vcmp.ge.f32.partialorder %v7907, 0.0
        %v8180 = vsub.f32 0.0, %v8164
        %v8181 = vsub.f32 0.0, %v8165
        %v8182 = vsub.f32 0.0, %v8166
        %v8183 = vsub.f32 0.0, %v8167
        %v8184 = vsub.f32 0.0, %v8168
        %v8185 = vsub.f32 0.0, %v8169
        %v8186 = vsub.f32 0.0, %v8170
        %v8187 = vsub.f32 0.0, %v8171
        %v8188 = vsel %vm8172, %v8164, %v8180
        %v8189 = vsel %vm8173, %v8165, %v8181
        %v8190 = vsel %vm8174, %v8166, %v8182
        %v8191 = vsel %vm8175, %v8167, %v8183
        %v8192 = vsel %vm8176, %v8168, %v8184
        %v8193 = vsel %vm8177, %v8169, %v8185
        %v8194 = vsel %vm8178, %v8170, %v8186
        %v8195 = vsel %vm8179, %v8171, %v8187
        %v8196 = vadd.f32 %v8188, 1.0
        %v8197 = vadd.f32 %v8189, 1.0
        %v8198 = vadd.f32 %v8190, 1.0
        %v8199 = vadd.f32 %v8191, 1.0
        %v8200 = vadd.f32 %v8192, 1.0
        %v8201 = vadd.f32 %v8193, 1.0
        %v8202 = vadd.f32 %v8194, 1.0
        %v8203 = vadd.f32 %v8195, 1.0
        %v8204 = vmul.f32 %v7892, %v8196
        %v8205 = vmul.f32 %v7893, %v8197
        %v8206 = vmul.f32 %v7894, %v8198
        %v8207 = vmul.f32 %v7895, %v8199
        %v8208 = vmul.f32 %v7896, %v8200
        %v8209 = vmul.f32 %v7897, %v8201
        %v8210 = vmul.f32 %v7898, %v8202
        %v8211 = vmul.f32 %v7899, %v8203
        %v8212 = vld [vmem:[%s55] sm:$0xff]
        %v8213 = vld [vmem:[%s55 + $0x8] sm:$0xff]
        %v8214 = vld [vmem:[%s55 + $0x10] sm:$0xff]
        %v8215 = vld [vmem:[%s55 + $0x18] sm:$0xff]
        %v8216 = vld [vmem:[%s55 + $0x20] sm:$0xff]
        %v8217 = vld [vmem:[%s55 + $0x28] sm:$0xff]
        %v8218 = vld [vmem:[%s55 + $0x30] sm:$0xff]
        %v8219 = vld [vmem:[%s55 + $0x38] sm:$0xff]
        %v8220 = vld [vmem:[%s55 + $0x40] sm:$0xff]
        %v8221 = vld [vmem:[%s55 + $0x48] sm:$0xff]
        %v8222 = vld [vmem:[%s55 + $0x50] sm:$0xff]
        %v8223 = vld [vmem:[%s55 + $0x58] sm:$0xff]
        %v8224 = vld [vmem:[%s55 + $0x60] sm:$0xff]
        %v8225 = vld [vmem:[%s55 + $0x68] sm:$0xff]
        %v8226 = vld [vmem:[%s55 + $0x70] sm:$0xff]
        %v8227 = vld [vmem:[%s55 + $0x78] sm:$0xff]
        %8228 = vmatpush.msra.mxu0 %v8227
        %8229 = vmatpush.msra.mxu0 %v8226
        %8230 = vmatpush.msra.mxu0 %v8225
        %8231 = vmatpush.msra.mxu0 %v8224
        %8232 = vmatpush.msra.mxu0 %v8223
        %8233 = vmatpush.msra.mxu0 %v8222
        %8234 = vmatpush.msra.mxu0 %v8221
        %8235 = vmatpush.msra.mxu0 %v8220
        %8236 = vmatpush.msra.mxu0 %v8219
        %8237 = vmatpush.msra.mxu0 %v8218
        %8238 = vmatpush.msra.mxu0 %v8217
        %8239 = vmatpush.msra.mxu0 %v8216
        %8240 = vmatpush.msra.mxu0 %v8215
        %8241 = vmatpush.msra.mxu0 %v8214
        %8242 = vmatpush.msra.mxu0 %v8213
        %8243 = vmatpush.msra.mxu0 %v8212
        %8244 = vmatmul.f32.gmra.mxu0 %v8204
        %v8245 = vpop.f32.mrf.mxu0
        %v8246 = vadd.f32 0.0, %v8245
        %8247 = vmatmul.f32.gmra.mxu0 %v8205
        %v8248 = vpop.f32.mrf.mxu0
        %v8249 = vadd.f32 0.0, %v8248
        %8250 = vmatmul.f32.gmra.mxu0 %v8206
        %v8251 = vpop.f32.mrf.mxu0
        %v8252 = vadd.f32 0.0, %v8251
        %8253 = vmatmul.f32.gmra.mxu0 %v8207
        %v8254 = vpop.f32.mrf.mxu0
        %v8255 = vadd.f32 0.0, %v8254
        %8256 = vmatmul.f32.gmra.mxu0 %v8208
        %v8257 = vpop.f32.mrf.mxu0
        %v8258 = vadd.f32 0.0, %v8257
        %8259 = vmatmul.f32.gmra.mxu0 %v8209
        %v8260 = vpop.f32.mrf.mxu0
        %v8261 = vadd.f32 0.0, %v8260
        %8262 = vmatmul.f32.gmra.mxu0 %v8210
        %v8263 = vpop.f32.mrf.mxu0
        %v8264 = vadd.f32 0.0, %v8263
        %8265 = vmatmul.f32.gmra.mxu0 %v8211
        %v8266 = vpop.f32.mrf.mxu0
        %v8267 = vadd.f32 0.0, %v8266
        %8268 = vdwg.mxu0
        %v8269 = vadd.f32 %v7815, %v8246
        %v8270 = vadd.f32 %v7816, %v8249
        %v8271 = vadd.f32 %v7817, %v8252
        %v8272 = vadd.f32 %v7818, %v8255
        %v8273 = vadd.f32 %v7819, %v8258
        %v8274 = vadd.f32 %v7820, %v8261
        %v8275 = vadd.f32 %v7821, %v8264
        %v8276 = vadd.f32 %v7822, %v8267
        %8277 = vmatpush.msra.mxu0 0.0
        %8278 = vmatpush.msra.mxu0 0.0
        %8279 = vmatpush.msra.mxu0 0.0
        %8280 = vmatpush.msra.mxu0 0.0
        %8281 = vmatpush.msra.mxu0 0.0
        %8282 = vmatpush.msra.mxu0 0.0
        %8283 = vmatpush.msra.mxu0 0.0
        %8284 = vmatpush.msra.mxu0 0.0
        %8285 = vmatpush.msra.mxu0 %v8276
        %8286 = vmatpush.msra.mxu0 %v8275
        %8287 = vmatpush.msra.mxu0 %v8274
        %8288 = vmatpush.msra.mxu0 %v8273
        %8289 = vmatpush.msra.mxu0 %v8272
        %8290 = vmatpush.msra.mxu0 %v8271
        %8291 = vmatpush.msra.mxu0 %v8270
        %8292 = vmatpush.msra.mxu0 %v8269
        %8293 = vmatmul.f32.gmra.mxu0 %v4820
        %v8294 = vpop.f32.mrf.mxu0
        %v8295 = vadd.f32 0.0, %v8294
        %8296 = vdwg.mxu0
        %v8297 = vmul.f32 %v8295, 0.0625
        %v8298 = vld [vmem:[%s61] sm:$0xff]
        %v8299 = vld [vmem:[%s61 + $0x8] sm:$0xff]
        %v8300 = vld [vmem:[%s61 + $0x10] sm:$0xff]
        %v8301 = vld [vmem:[%s61 + $0x18] sm:$0xff]
        %v8302 = vld [vmem:[%s63] sm:$0x1]
        %v8304 = vperm.slane %v8302, 0
        %v8307 = vsel %vm990, %v8297, 0
        %8309 = vmatpush.msra.mxu0 0.0
        %8310 = vmatpush.msra.mxu0 0.0
        %8311 = vmatpush.msra.mxu0 0.0
        %8312 = vmatpush.msra.mxu0 0.0
        %8313 = vmatpush.msra.mxu0 0.0
        %8314 = vmatpush.msra.mxu0 0.0
        %8315 = vmatpush.msra.mxu0 0.0
        %8316 = vmatpush.msra.mxu0 0.0
        %8317 = vmatpush.msra.mxu0 0.0
        %8318 = vmatpush.msra.mxu0 0.0
        %8319 = vmatpush.msra.mxu0 0.0
        %8320 = vmatpush.msra.mxu0 0.0
        %8321 = vmatpush.msra.mxu0 %v8301
        %8322 = vmatpush.msra.mxu0 %v8300
        %8323 = vmatpush.msra.mxu0 %v8299
        %8324 = vmatpush.msra.mxu0 %v8298
        %8325 = vmatmul.f32.gmra.mxu0 %v8307
        %v8326 = vpop.f32.mrf.mxu0
        %v8327 = vadd.f32 %v8304, %v8326
        %8328 = vdwg.mxu0
        %vm8329 = vcmask 76800
        %8330 = vst.msk [vmem:[%s982] sm:$0xf] %vm8329, %v8327
        %s8331 = sand.u32 %s764, 1
        %s8332 = scalar_lea.sflag [#allocation4], %s8331
        %s8333 = sand.u32 %s764, 1
        %s8334 = smul.addr %s8333, 4
        %s8335 = scalar_lea.vmem [#allocation3], %s8334
        // Predicated region
        $region149: #{edgevit_forward.1} parent=147 // pred_check
          %p8336 = pneg %p774
        $region150: #{edgevit_forward.1} parent=147 // pred_check_branch
          %8338 = sbr.rel (%p8336) target = $region152
        $region151: #{edgevit_forward.1} parent=147 // pred_region
          %8340 = vsyncadd %s8332, 0
          %s8341 = smul.addr %s79, 4
          %s8342 = scalar_lea.hbm %s65, %s8341
          %s8344 = sshll.u32 %s8335, 4
          %s8345 = int_to_ptr.vmem [resolvable:$true] %s8344
          %s8346 = sshll.u32 %s8342, 4
          %s8347 = int_to_ptr.hbm [resolvable:$true] %s8346
          %8349 = dma.vmem_to_hbm [thread:$0]  %s8345, 64, %s8347, %s8332
        $region152: #{edgevit_forward.1} parent=147 // pred_fallthru
          _
      $region148: #{edgevit_forward.1} parent=5 // pred_fallthru
        _
      %p8350 = scmp.le.s32.totalorder 2, %s74
      // Predicated region
      $region153: #{edgevit_forward.1} parent=5 // pred_check
        %p8351 = pneg %p8350
      $region154: #{edgevit_forward.1} parent=5 // pred_check_branch
        %8353 = sbr.rel (%p8351) target = $region156
      $region155: #{edgevit_forward.1} parent=5 // pred_region
        %s8354 = ssub.s32 %s74, 2
        // Predicated region
        $region157: #{edgevit_forward.1} parent=155 // pred_check
          %p8355 = pneg %p780
        $region158: #{edgevit_forward.1} parent=155 // pred_check_branch
          %8357 = sbr.rel (%p8355) target = $region160
        $region159: #{edgevit_forward.1} parent=155 // pred_region
          %s8358 = sand.u32 %s765, 1
          %s8359 = scalar_lea.sflag [#allocation4], %s8358
          %s8360 = sand.u32 %s765, 1
          %s8361 = smul.addr %s8360, 4
          %s8362 = scalar_lea.vmem [#allocation3], %s8361
          %8364 = dma.done %s8359, 64
        $region160: #{edgevit_forward.1} parent=155 // pred_fallthru
          _
      $region156: #{edgevit_forward.1} parent=5 // pred_fallthru
        _
    $region6: #{edgevit_forward.1} parent=1 // loop_footer
      %s78 = sadd.s32 1, %s74
    $region7: #{edgevit_forward.1} parent=1 // loop_footer_branch
      %73 = sbr.rel target = $region3
    $region8: #{edgevit_forward.1} parent=1 // loop_exit
      _
    %8365 = vsyncpa [#allocation4], 1
    %s8366 = scalar_lea.sflag [#allocation4], 1
    %8367 = vsyncpa %s8366, 1

</llo_original>
